<compile_context>
chip_gen: v6e
topology: v6e:2x2x1
jax: 0.10.0
libtpu: 0.0.40
codegen_flags: <defaults>
</compile_context>

<pallas_src>
import math

import jax
import jax.numpy as jnp
from jax.experimental import pallas as pl
from jax.experimental.pallas import tpu as pltpu

HIDDEN_SIZE = 23
INPUT_SIZE = 138
NUM_LAYERS = 3
GATE_PAD = 128                 # each gate's 23 lanes zero-padded to one full 128-lane block
PACKED_GATES = 4 * GATE_PAD    # packed gate width: [ i | f | g | o ], vreg-aligned


def _lstm_fused_kernel(x_ref, wih0_ref, wih12_ref, whh_ref, b_ref, out_ref,
                       xp_scr, hseq_scr):
    """All 3 LSTM layers + full time loop in a single kernel invocation (no grid).

    x_ref     : (B, S, D)           input sequence, batch-first (PyTorch layout)
    wih0_ref  : (D, 4*GP)           layer-0 input weights, gate-packed, lane-padded
    wih12_ref : (2, GP, 4*GP)       layer-1/2 input weights (rows >= H are zero)
    whh_ref   : (3, GP, 4*GP)       recurrent weights       (rows >= H are zero)
    b_ref     : (3, 1, 4*GP)        b_ih + b_hh, gate-packed, lane-padded
    out_ref   : (B, H)              hidden state of last layer at the last timestep
    xp_scr    : (B, S, 4*GP) VMEM   hoisted input projection (+bias) of current layer
    hseq_scr  : (B, S, GP)   VMEM   hidden sequence of current layer (next layer's input)

    Padded lanes (>= H inside each gate block) stay exactly zero through the whole
    recurrence: zero weights/bias -> preact 0 -> i=f=o=0.5, g=0 -> c_pad, h_pad stay 0.
    """
    B, S, D = x_ref.shape
    GP = GATE_PAD
    H = HIDDEN_SIZE

    h = None
    for layer in range(NUM_LAYERS):
        # ---- Hoisted input projection: one matmul over all B*S rows (off the
        #      sequential critical path), bias folded in. ----
        if layer == 0:
            inp2d = x_ref[...].reshape(B * S, D)          # (16, 138)
            w_ih = wih0_ref[...]                          # (138, 512)
        else:
            inp2d = hseq_scr[...].reshape(B * S, GP)      # (16, 128)
            w_ih = wih12_ref[layer - 1]                   # (128, 512)
        xp = jnp.dot(inp2d, w_ih, preferred_element_type=jnp.float32) + b_ref[layer]
        xp_scr[...] = xp.reshape(B, S, 4 * GP)

        w_hh = whh_ref[layer]                             # (128, 512)

        # ---- Sequential recurrence: only a tiny (B,128)x(128,512) matmul plus
        #      elementwise gate math remains on the serial chain per step. ----
        h = jnp.zeros((B, GP), jnp.float32)
        c = jnp.zeros((B, GP), jnp.float32)
        for t in range(S):                                # S=8, static unroll
            g = xp_scr[:, t, :] + jnp.dot(h, w_hh, preferred_element_type=jnp.float32)
            i_g = jax.nn.sigmoid(g[:, 0 * GP:1 * GP])     # vreg-aligned gate slices
            f_g = jax.nn.sigmoid(g[:, 1 * GP:2 * GP])
            g_g = jnp.tanh(g[:, 2 * GP:3 * GP])
            o_g = jax.nn.sigmoid(g[:, 3 * GP:4 * GP])
            c = f_g * c + i_g * g_g
            h = o_g * jnp.tanh(c)
            if layer < NUM_LAYERS - 1:
                hseq_scr[:, t, :] = h                     # feeds next layer's projection

    # forward() returns feature[:, -1, :]: write once, no per-timestep output DMA.
    out_ref[...] = h[:, :H]


def _pack_gate_weight(w, rows_pad):
    """PyTorch (4H, d_in) gate-row-packed -> (rows_pad, 4*GATE_PAD) gate-lane-packed."""
    H, GP = HIDDEN_SIZE, GATE_PAD
    d_in = w.shape[1]
    wk = jnp.transpose(w.reshape(4, H, d_in), (2, 0, 1))          # (d_in, 4, H)
    wk = jnp.pad(wk, ((0, rows_pad - d_in), (0, 0), (0, GP - H)))  # zero-pad K and lanes
    return wk.reshape(rows_pad, 4 * GP).astype(jnp.float32)


def _pack_bias(b_ih, b_hh):
    H, GP = HIDDEN_SIZE, GATE_PAD
    b = (b_ih + b_hh).reshape(4, H)
    b = jnp.pad(b, ((0, 0), (0, GP - H)))
    return b.reshape(1, 4 * GP).astype(jnp.float32)


def pack_params(params_pt):
    """Pack PyTorch nn.LSTM parameters (gate order i,f,g,o) into the kernel layout."""
    wih0 = _pack_gate_weight(params_pt[0][0], INPUT_SIZE)                         # (138, 512)
    wih12 = jnp.stack([_pack_gate_weight(params_pt[l][0], GATE_PAD) for l in (1, 2)])
    whh = jnp.stack([_pack_gate_weight(params_pt[l][1], GATE_PAD)
                     for l in range(NUM_LAYERS)])                                 # (3, 128, 512)
    b = jnp.stack([_pack_bias(params_pt[l][2], params_pt[l][3])
                   for l in range(NUM_LAYERS)])                                   # (3, 1, 512)
    return wih0, wih12, whh, b


@jax.jit
def lstm_forward(x, params_pt):
    """x: (B, S, INPUT_SIZE) batch-first f32.  Returns feature[:, -1, :] of shape (B, H)."""
    B, S, _ = x.shape
    wih0, wih12, whh, b = pack_params(params_pt)   # one-time packing, fused under jit
    return pl.pallas_call(
        _lstm_fused_kernel,
        out_shape=jax.ShapeDtypeStruct((B, HIDDEN_SIZE), jnp.float32),
        in_specs=[pl.BlockSpec(memory_space=pltpu.MemorySpace.VMEM) for _ in range(5)],
        out_specs=pl.BlockSpec(memory_space=pltpu.MemorySpace.VMEM),
        scratch_shapes=[
            pltpu.VMEM((B, S, PACKED_GATES), jnp.float32),  # hoisted projection buffer
            pltpu.VMEM((B, S, GATE_PAD), jnp.float32),      # inter-layer hidden sequence
        ],
    )(x, wih0, wih12, whh, b)
    # TODO(synk): the nn.Sequential(Linear, Linear) head is dead code in the reference
    # forward (its output is never returned), so it is not implemented.


def lstm_reference(x, params_pt):
    """Pure-JAX reference (lax.scan) for correctness checking."""
    B = x.shape[0]
    seq = jnp.transpose(x, (1, 0, 2))  # (S, B, D)
    for (w_ih, w_hh, b_ih, b_hh) in params_pt:
        H = w_hh.shape[1]

        def step(carry, x_t, w_ih=w_ih, w_hh=w_hh, b_ih=b_ih, b_hh=b_hh):
            h, c = carry
            gates = x_t @ w_ih.T + h @ w_hh.T + b_ih + b_hh
            i, f, g, o = jnp.split(gates, 4, axis=-1)
            c = jax.nn.sigmoid(f) * c + jax.nn.sigmoid(i) * jnp.tanh(g)
            h = jax.nn.sigmoid(o) * jnp.tanh(c)
            return (h, c), h

        init = (jnp.zeros((B, H), jnp.float32), jnp.zeros((B, H), jnp.float32))
        _, seq = jax.lax.scan(step, init, seq)
    return seq[-1]


if __name__ == "__main__":
    B, S = 2, 8
    key = jax.random.PRNGKey(0)
    keys = jax.random.split(key, 1 + 4 * NUM_LAYERS)

    x = jax.random.normal(keys[0], (B, S, INPUT_SIZE), dtype=jnp.float32)

    # Deterministic parameter init matching nn.LSTM's U(-1/sqrt(H), 1/sqrt(H)).
    bound = 1.0 / math.sqrt(HIDDEN_SIZE)
    params_pt = []
    ki = 1
    for layer in range(NUM_LAYERS):
        d_in = INPUT_SIZE if layer == 0 else HIDDEN_SIZE
        w_ih = jax.random.uniform(keys[ki], (4 * HIDDEN_SIZE, d_in),
                                  minval=-bound, maxval=bound, dtype=jnp.float32)
        w_hh = jax.random.uniform(keys[ki + 1], (4 * HIDDEN_SIZE, HIDDEN_SIZE),
                                  minval=-bound, maxval=bound, dtype=jnp.float32)
        b_ih = jax.random.uniform(keys[ki + 2], (4 * HIDDEN_SIZE,),
                                  minval=-bound, maxval=bound, dtype=jnp.float32)
        b_hh = jax.random.uniform(keys[ki + 3], (4 * HIDDEN_SIZE,),
                                  minval=-bound, maxval=bound, dtype=jnp.float32)
        params_pt.append((w_ih, w_hh, b_ih, b_hh))
        ki += 4

    out = jax.block_until_ready(lstm_forward(x, params_pt))
    ref = jax.block_until_ready(lstm_reference(x, params_pt))

    assert out.shape == (B, HIDDEN_SIZE), out.shape
    max_err = float(jnp.max(jnp.abs(out - ref)))
    assert max_err < 2e-4, f"mismatch vs reference: {max_err}"
    print("KERNEL_OK")
</pallas_src>

<mosaic_0001>
module attributes {stable_mosaic.version = 11 : i64} {
  func.func @_lstm_fused_kernel(%arg0: memref<2x8x138xf32, #tpu.memory_space<vmem>>, %arg1: memref<138x512xf32, #tpu.memory_space<vmem>>, %arg2: memref<2x128x512xf32, #tpu.memory_space<vmem>>, %arg3: memref<3x128x512xf32, #tpu.memory_space<vmem>>, %arg4: memref<3x1x512xf32, #tpu.memory_space<vmem>>, %arg5: memref<2x23xf32, #tpu.memory_space<vmem>>, %arg6: memref<2x8x512xf32, #tpu.memory_space<vmem>>, %arg7: memref<2x8x128xf32, #tpu.memory_space<vmem>>) attributes {dimension_semantics = [], scalar_prefetch = 0 : i64, scratch_operands = 2 : i64, tpu.core_type = #tpu.core_type<tc>} {
    %c0 = arith.constant 0 : index
    %c0_0 = arith.constant 0 : index
    %c0_1 = arith.constant 0 : index
    %0 = vector.load %arg0[%c0, %c0_0, %c0_1] : memref<2x8x138xf32, #tpu.memory_space<vmem>>, vector<2x8x138xf32>
    %1 = vector.shape_cast %0 : vector<2x8x138xf32> to vector<16x138xf32>
    %c0_2 = arith.constant 0 : index
    %c0_3 = arith.constant 0 : index
    %2 = vector.load %arg1[%c0_2, %c0_3] : memref<138x512xf32, #tpu.memory_space<vmem>>, vector<138x512xf32>
    %cst = arith.constant dense<0.000000e+00> : vector<16x512xf32>
    %3 = tpu.matmul %1, %2, %cst {dimension_numbers = #tpu.dot_dimension_numbers<[1], [0], [0], [1], [0, 0, 1, 1], [], []>} : vector<16x138xf32>, vector<138x512xf32>, vector<16x512xf32> -> vector<16x512xf32>
    %c0_4 = arith.constant 0 : index
    %c0_5 = arith.constant 0 : index
    %c0_6 = arith.constant 0 : index
    %4 = vector.load %arg4[%c0_4, %c0_5, %c0_6] : memref<3x1x512xf32, #tpu.memory_space<vmem>>, vector<1x1x512xf32>
    %5 = vector.shape_cast %4 : vector<1x1x512xf32> to vector<1x512xf32>
    %6 = vector.broadcast %5 : vector<1x512xf32> to vector<16x512xf32>
    %7 = arith.addf %3, %6 : vector<16x512xf32>
    %8 = vector.shape_cast %7 : vector<16x512xf32> to vector<2x8x512xf32>
    %c0_7 = arith.constant 0 : index
    %c0_8 = arith.constant 0 : index
    %c0_9 = arith.constant 0 : index
    %9 = vector.load %arg6[%c0_7, %c0_8, %c0_9] : memref<2x8x512xf32, #tpu.memory_space<vmem>>, vector<2x8x512xf32>
    tpu.vector_store %arg6[%c0_7, %c0_8, %c0_9], %8 {strides = array<i32>} : memref<2x8x512xf32, #tpu.memory_space<vmem>>, vector<2x8x512xf32>,
    %c0_10 = arith.constant 0 : index
    %c0_11 = arith.constant 0 : index
    %c0_12 = arith.constant 0 : index
    %10 = vector.load %arg3[%c0_10, %c0_11, %c0_12] : memref<3x128x512xf32, #tpu.memory_space<vmem>>, vector<1x128x512xf32>
    %11 = vector.shape_cast %10 : vector<1x128x512xf32> to vector<128x512xf32>
    %cst_13 = arith.constant 0.000000e+00 : f32
    %12 = vector.broadcast %cst_13 : f32 to vector<2x128xf32>
    %cst_14 = arith.constant 0.000000e+00 : f32
    %13 = vector.broadcast %cst_14 : f32 to vector<2x128xf32>
    %c0_15 = arith.constant 0 : index
    %c0_16 = arith.constant 0 : index
    %c0_17 = arith.constant 0 : index
    %14 = vector.load %arg6[%c0_15, %c0_16, %c0_17] : memref<2x8x512xf32, #tpu.memory_space<vmem>>, vector<2x1x512xf32>
    %15 = vector.shape_cast %14 : vector<2x1x512xf32> to vector<2x512xf32>
    %cst_18 = arith.constant dense<0.000000e+00> : vector<2x512xf32>
    %16 = tpu.matmul %12, %11, %cst_18 {dimension_numbers = #tpu.dot_dimension_numbers<[1], [0], [0], [1], [0, 0, 1, 1], [], []>} : vector<2x128xf32>, vector<128x512xf32>, vector<2x512xf32> -> vector<2x512xf32>
    %17 = arith.addf %15, %16 : vector<2x512xf32>
    %18 = vector.extract_strided_slice %17 {offsets = [0, 0], sizes = [2, 128], strides = [1, 1]} : vector<2x512xf32> to vector<2x128xf32>
    %19 = arith.negf %18 : vector<2x128xf32>
    %20 = math.exp %19 : vector<2x128xf32>
    %cst_19 = arith.constant 1.000000e+00 : f32
    %21 = vector.broadcast %cst_19 : f32 to vector<2x128xf32>
    %22 = arith.addf %21, %20 : vector<2x128xf32>
    %23 = arith.divf %21, %22 : vector<2x128xf32>
    %24 = vector.extract_strided_slice %17 {offsets = [0, 128], sizes = [2, 128], strides = [1, 1]} : vector<2x512xf32> to vector<2x128xf32>
    %25 = arith.negf %24 : vector<2x128xf32>
    %26 = math.exp %25 : vector<2x128xf32>
    %cst_20 = arith.constant 1.000000e+00 : f32
    %27 = vector.broadcast %cst_20 : f32 to vector<2x128xf32>
    %28 = arith.addf %27, %26 : vector<2x128xf32>
    %29 = arith.divf %27, %28 : vector<2x128xf32>
    %30 = vector.extract_strided_slice %17 {offsets = [0, 256], sizes = [2, 128], strides = [1, 1]} : vector<2x512xf32> to vector<2x128xf32>
    %31 = math.tanh %30 : vector<2x128xf32>
    %32 = vector.extract_strided_slice %17 {offsets = [0, 384], sizes = [2, 128], strides = [1, 1]} : vector<2x512xf32> to vector<2x128xf32>
    %33 = arith.negf %32 : vector<2x128xf32>
    %34 = math.exp %33 : vector<2x128xf32>
    %cst_21 = arith.constant 1.000000e+00 : f32
    %35 = vector.broadcast %cst_21 : f32 to vector<2x128xf32>
    %36 = arith.addf %35, %34 : vector<2x128xf32>
    %37 = arith.divf %35, %36 : vector<2x128xf32>
    %38 = arith.mulf %29, %13 : vector<2x128xf32>
    %39 = arith.mulf %23, %31 : vector<2x128xf32>
    %40 = arith.addf %38, %39 : vector<2x128xf32>
    %41 = math.tanh %40 : vector<2x128xf32>
    %42 = arith.mulf %37, %41 : vector<2x128xf32>
    %c0_22 = arith.constant 0 : index
    %c0_23 = arith.constant 0 : index
    %c0_24 = arith.constant 0 : index
    %43 = vector.load %arg7[%c0_22, %c0_23, %c0_24] : memref<2x8x128xf32, #tpu.memory_space<vmem>>, vector<2x1x128xf32>
    %44 = vector.shape_cast %43 : vector<2x1x128xf32> to vector<2x128xf32>
    %45 = vector.shape_cast %42 : vector<2x128xf32> to vector<2x1x128xf32>
    tpu.vector_store %arg7[%c0_22, %c0_23, %c0_24], %45 {strides = array<i32>} : memref<2x8x128xf32, #tpu.memory_space<vmem>>, vector<2x1x128xf32>,
    %c0_25 = arith.constant 0 : index
    %c1 = arith.constant 1 : index
    %c0_26 = arith.constant 0 : index
    %46 = vector.load %arg6[%c0_25, %c1, %c0_26] : memref<2x8x512xf32, #tpu.memory_space<vmem>>, vector<2x1x512xf32>
    %47 = vector.shape_cast %46 : vector<2x1x512xf32> to vector<2x512xf32>
    %cst_27 = arith.constant dense<0.000000e+00> : vector<2x512xf32>
    %48 = tpu.matmul %42, %11, %cst_27 {dimension_numbers = #tpu.dot_dimension_numbers<[1], [0], [0], [1], [0, 0, 1, 1], [], []>} : vector<2x128xf32>, vector<128x512xf32>, vector<2x512xf32> -> vector<2x512xf32>
    %49 = arith.addf %47, %48 : vector<2x512xf32>
    %50 = vector.extract_strided_slice %49 {offsets = [0, 0], sizes = [2, 128], strides = [1, 1]} : vector<2x512xf32> to vector<2x128xf32>
    %51 = arith.negf %50 : vector<2x128xf32>
    %52 = math.exp %51 : vector<2x128xf32>
    %cst_28 = arith.constant 1.000000e+00 : f32
    %53 = vector.broadcast %cst_28 : f32 to vector<2x128xf32>
    %54 = arith.addf %53, %52 : vector<2x128xf32>
    %55 = arith.divf %53, %54 : vector<2x128xf32>
    %56 = vector.extract_strided_slice %49 {offsets = [0, 128], sizes = [2, 128], strides = [1, 1]} : vector<2x512xf32> to vector<2x128xf32>
    %57 = arith.negf %56 : vector<2x128xf32>
    %58 = math.exp %57 : vector<2x128xf32>
    %cst_29 = arith.constant 1.000000e+00 : f32
    %59 = vector.broadcast %cst_29 : f32 to vector<2x128xf32>
    %60 = arith.addf %59, %58 : vector<2x128xf32>
    %61 = arith.divf %59, %60 : vector<2x128xf32>
    %62 = vector.extract_strided_slice %49 {offsets = [0, 256], sizes = [2, 128], strides = [1, 1]} : vector<2x512xf32> to vector<2x128xf32>
    %63 = math.tanh %62 : vector<2x128xf32>
    %64 = vector.extract_strided_slice %49 {offsets = [0, 384], sizes = [2, 128], strides = [1, 1]} : vector<2x512xf32> to vector<2x128xf32>
    %65 = arith.negf %64 : vector<2x128xf32>
    %66 = math.exp %65 : vector<2x128xf32>
    %cst_30 = arith.constant 1.000000e+00 : f32
    %67 = vector.broadcast %cst_30 : f32 to vector<2x128xf32>
    %68 = arith.addf %67, %66 : vector<2x128xf32>
    %69 = arith.divf %67, %68 : vector<2x128xf32>
    %70 = arith.mulf %61, %40 : vector<2x128xf32>
    %71 = arith.mulf %55, %63 : vector<2x128xf32>
    %72 = arith.addf %70, %71 : vector<2x128xf32>
    %73 = math.tanh %72 : vector<2x128xf32>
    %74 = arith.mulf %69, %73 : vector<2x128xf32>
    %c0_31 = arith.constant 0 : index
    %c1_32 = arith.constant 1 : index
    %c0_33 = arith.constant 0 : index
    %75 = vector.load %arg7[%c0_31, %c1_32, %c0_33] : memref<2x8x128xf32, #tpu.memory_space<vmem>>, vector<2x1x128xf32>
    %76 = vector.shape_cast %75 : vector<2x1x128xf32> to vector<2x128xf32>
    %77 = vector.shape_cast %74 : vector<2x128xf32> to vector<2x1x128xf32>
    tpu.vector_store %arg7[%c0_31, %c1_32, %c0_33], %77 {strides = array<i32>} : memref<2x8x128xf32, #tpu.memory_space<vmem>>, vector<2x1x128xf32>,
    %c0_34 = arith.constant 0 : index
    %c2 = arith.constant 2 : index
    %c0_35 = arith.constant 0 : index
    %78 = vector.load %arg6[%c0_34, %c2, %c0_35] : memref<2x8x512xf32, #tpu.memory_space<vmem>>, vector<2x1x512xf32>
    %79 = vector.shape_cast %78 : vector<2x1x512xf32> to vector<2x512xf32>
    %cst_36 = arith.constant dense<0.000000e+00> : vector<2x512xf32>
    %80 = tpu.matmul %74, %11, %cst_36 {dimension_numbers = #tpu.dot_dimension_numbers<[1], [0], [0], [1], [0, 0, 1, 1], [], []>} : vector<2x128xf32>, vector<128x512xf32>, vector<2x512xf32> -> vector<2x512xf32>
    %81 = arith.addf %79, %80 : vector<2x512xf32>
    %82 = vector.extract_strided_slice %81 {offsets = [0, 0], sizes = [2, 128], strides = [1, 1]} : vector<2x512xf32> to vector<2x128xf32>
    %83 = arith.negf %82 : vector<2x128xf32>
    %84 = math.exp %83 : vector<2x128xf32>
    %cst_37 = arith.constant 1.000000e+00 : f32
    %85 = vector.broadcast %cst_37 : f32 to vector<2x128xf32>
    %86 = arith.addf %85, %84 : vector<2x128xf32>
    %87 = arith.divf %85, %86 : vector<2x128xf32>
    %88 = vector.extract_strided_slice %81 {offsets = [0, 128], sizes = [2, 128], strides = [1, 1]} : vector<2x512xf32> to vector<2x128xf32>
    %89 = arith.negf %88 : vector<2x128xf32>
    %90 = math.exp %89 : vector<2x128xf32>
    %cst_38 = arith.constant 1.000000e+00 : f32
    %91 = vector.broadcast %cst_38 : f32 to vector<2x128xf32>
    %92 = arith.addf %91, %90 : vector<2x128xf32>
    %93 = arith.divf %91, %92 : vector<2x128xf32>
    %94 = vector.extract_strided_slice %81 {offsets = [0, 256], sizes = [2, 128], strides = [1, 1]} : vector<2x512xf32> to vector<2x128xf32>
    %95 = math.tanh %94 : vector<2x128xf32>
    %96 = vector.extract_strided_slice %81 {offsets = [0, 384], sizes = [2, 128], strides = [1, 1]} : vector<2x512xf32> to vector<2x128xf32>
    %97 = arith.negf %96 : vector<2x128xf32>
    %98 = math.exp %97 : vector<2x128xf32>
    %cst_39 = arith.constant 1.000000e+00 : f32
    %99 = vector.broadcast %cst_39 : f32 to vector<2x128xf32>
    %100 = arith.addf %99, %98 : vector<2x128xf32>
    %101 = arith.divf %99, %100 : vector<2x128xf32>
    %102 = arith.mulf %93, %72 : vector<2x128xf32>
    %103 = arith.mulf %87, %95 : vector<2x128xf32>
    %104 = arith.addf %102, %103 : vector<2x128xf32>
    %105 = math.tanh %104 : vector<2x128xf32>
    %106 = arith.mulf %101, %105 : vector<2x128xf32>
    %c0_40 = arith.constant 0 : index
    %c2_41 = arith.constant 2 : index
    %c0_42 = arith.constant 0 : index
    %107 = vector.load %arg7[%c0_40, %c2_41, %c0_42] : memref<2x8x128xf32, #tpu.memory_space<vmem>>, vector<2x1x128xf32>
    %108 = vector.shape_cast %107 : vector<2x1x128xf32> to vector<2x128xf32>
    %109 = vector.shape_cast %106 : vector<2x128xf32> to vector<2x1x128xf32>
    tpu.vector_store %arg7[%c0_40, %c2_41, %c0_42], %109 {strides = array<i32>} : memref<2x8x128xf32, #tpu.memory_space<vmem>>, vector<2x1x128xf32>,
    %c0_43 = arith.constant 0 : index
    %c3 = arith.constant 3 : index
    %c0_44 = arith.constant 0 : index
    %110 = vector.load %arg6[%c0_43, %c3, %c0_44] : memref<2x8x512xf32, #tpu.memory_space<vmem>>, vector<2x1x512xf32>
    %111 = vector.shape_cast %110 : vector<2x1x512xf32> to vector<2x512xf32>
    %cst_45 = arith.constant dense<0.000000e+00> : vector<2x512xf32>
    %112 = tpu.matmul %106, %11, %cst_45 {dimension_numbers = #tpu.dot_dimension_numbers<[1], [0], [0], [1], [0, 0, 1, 1], [], []>} : vector<2x128xf32>, vector<128x512xf32>, vector<2x512xf32> -> vector<2x512xf32>
    %113 = arith.addf %111, %112 : vector<2x512xf32>
    %114 = vector.extract_strided_slice %113 {offsets = [0, 0], sizes = [2, 128], strides = [1, 1]} : vector<2x512xf32> to vector<2x128xf32>
    %115 = arith.negf %114 : vector<2x128xf32>
    %116 = math.exp %115 : vector<2x128xf32>
    %cst_46 = arith.constant 1.000000e+00 : f32
    %117 = vector.broadcast %cst_46 : f32 to vector<2x128xf32>
    %118 = arith.addf %117, %116 : vector<2x128xf32>
    %119 = arith.divf %117, %118 : vector<2x128xf32>
    %120 = vector.extract_strided_slice %113 {offsets = [0, 128], sizes = [2, 128], strides = [1, 1]} : vector<2x512xf32> to vector<2x128xf32>
    %121 = arith.negf %120 : vector<2x128xf32>
    %122 = math.exp %121 : vector<2x128xf32>
    %cst_47 = arith.constant 1.000000e+00 : f32
    %123 = vector.broadcast %cst_47 : f32 to vector<2x128xf32>
    %124 = arith.addf %123, %122 : vector<2x128xf32>
    %125 = arith.divf %123, %124 : vector<2x128xf32>
    %126 = vector.extract_strided_slice %113 {offsets = [0, 256], sizes = [2, 128], strides = [1, 1]} : vector<2x512xf32> to vector<2x128xf32>
    %127 = math.tanh %126 : vector<2x128xf32>
    %128 = vector.extract_strided_slice %113 {offsets = [0, 384], sizes = [2, 128], strides = [1, 1]} : vector<2x512xf32> to vector<2x128xf32>
    %129 = arith.negf %128 : vector<2x128xf32>
    %130 = math.exp %129 : vector<2x128xf32>
    %cst_48 = arith.constant 1.000000e+00 : f32
    %131 = vector.broadcast %cst_48 : f32 to vector<2x128xf32>
    %132 = arith.addf %131, %130 : vector<2x128xf32>
    %133 = arith.divf %131, %132 : vector<2x128xf32>
    %134 = arith.mulf %125, %104 : vector<2x128xf32>
    %135 = arith.mulf %119, %127 : vector<2x128xf32>
    %136 = arith.addf %134, %135 : vector<2x128xf32>
    %137 = math.tanh %136 : vector<2x128xf32>
    %138 = arith.mulf %133, %137 : vector<2x128xf32>
    %c0_49 = arith.constant 0 : index
    %c3_50 = arith.constant 3 : index
    %c0_51 = arith.constant 0 : index
    %139 = vector.load %arg7[%c0_49, %c3_50, %c0_51] : memref<2x8x128xf32, #tpu.memory_space<vmem>>, vector<2x1x128xf32>
    %140 = vector.shape_cast %139 : vector<2x1x128xf32> to vector<2x128xf32>
    %141 = vector.shape_cast %138 : vector<2x128xf32> to vector<2x1x128xf32>
    tpu.vector_store %arg7[%c0_49, %c3_50, %c0_51], %141 {strides = array<i32>} : memref<2x8x128xf32, #tpu.memory_space<vmem>>, vector<2x1x128xf32>,
    %c0_52 = arith.constant 0 : index
    %c4 = arith.constant 4 : index
    %c0_53 = arith.constant 0 : index
    %142 = vector.load %arg6[%c0_52, %c4, %c0_53] : memref<2x8x512xf32, #tpu.memory_space<vmem>>, vector<2x1x512xf32>
    %143 = vector.shape_cast %142 : vector<2x1x512xf32> to vector<2x512xf32>
    %cst_54 = arith.constant dense<0.000000e+00> : vector<2x512xf32>
    %144 = tpu.matmul %138, %11, %cst_54 {dimension_numbers = #tpu.dot_dimension_numbers<[1], [0], [0], [1], [0, 0, 1, 1], [], []>} : vector<2x128xf32>, vector<128x512xf32>, vector<2x512xf32> -> vector<2x512xf32>
    %145 = arith.addf %143, %144 : vector<2x512xf32>
    %146 = vector.extract_strided_slice %145 {offsets = [0, 0], sizes = [2, 128], strides = [1, 1]} : vector<2x512xf32> to vector<2x128xf32>
    %147 = arith.negf %146 : vector<2x128xf32>
    %148 = math.exp %147 : vector<2x128xf32>
    %cst_55 = arith.constant 1.000000e+00 : f32
    %149 = vector.broadcast %cst_55 : f32 to vector<2x128xf32>
    %150 = arith.addf %149, %148 : vector<2x128xf32>
    %151 = arith.divf %149, %150 : vector<2x128xf32>
    %152 = vector.extract_strided_slice %145 {offsets = [0, 128], sizes = [2, 128], strides = [1, 1]} : vector<2x512xf32> to vector<2x128xf32>
    %153 = arith.negf %152 : vector<2x128xf32>
    %154 = math.exp %153 : vector<2x128xf32>
    %cst_56 = arith.constant 1.000000e+00 : f32
    %155 = vector.broadcast %cst_56 : f32 to vector<2x128xf32>
    %156 = arith.addf %155, %154 : vector<2x128xf32>
    %157 = arith.divf %155, %156 : vector<2x128xf32>
    %158 = vector.extract_strided_slice %145 {offsets = [0, 256], sizes = [2, 128], strides = [1, 1]} : vector<2x512xf32> to vector<2x128xf32>
    %159 = math.tanh %158 : vector<2x128xf32>
    %160 = vector.extract_strided_slice %145 {offsets = [0, 384], sizes = [2, 128], strides = [1, 1]} : vector<2x512xf32> to vector<2x128xf32>
    %161 = arith.negf %160 : vector<2x128xf32>
    %162 = math.exp %161 : vector<2x128xf32>
    %cst_57 = arith.constant 1.000000e+00 : f32
    %163 = vector.broadcast %cst_57 : f32 to vector<2x128xf32>
    %164 = arith.addf %163, %162 : vector<2x128xf32>
    %165 = arith.divf %163, %164 : vector<2x128xf32>
    %166 = arith.mulf %157, %136 : vector<2x128xf32>
    %167 = arith.mulf %151, %159 : vector<2x128xf32>
    %168 = arith.addf %166, %167 : vector<2x128xf32>
    %169 = math.tanh %168 : vector<2x128xf32>
    %170 = arith.mulf %165, %169 : vector<2x128xf32>
    %c0_58 = arith.constant 0 : index
    %c4_59 = arith.constant 4 : index
    %c0_60 = arith.constant 0 : index
    %171 = vector.load %arg7[%c0_58, %c4_59, %c0_60] : memref<2x8x128xf32, #tpu.memory_space<vmem>>, vector<2x1x128xf32>
    %172 = vector.shape_cast %171 : vector<2x1x128xf32> to vector<2x128xf32>
    %173 = vector.shape_cast %170 : vector<2x128xf32> to vector<2x1x128xf32>
    tpu.vector_store %arg7[%c0_58, %c4_59, %c0_60], %173 {strides = array<i32>} : memref<2x8x128xf32, #tpu.memory_space<vmem>>, vector<2x1x128xf32>,
    %c0_61 = arith.constant 0 : index
    %c5 = arith.constant 5 : index
    %c0_62 = arith.constant 0 : index
    %174 = vector.load %arg6[%c0_61, %c5, %c0_62] : memref<2x8x512xf32, #tpu.memory_space<vmem>>, vector<2x1x512xf32>
    %175 = vector.shape_cast %174 : vector<2x1x512xf32> to vector<2x512xf32>
    %cst_63 = arith.constant dense<0.000000e+00> : vector<2x512xf32>
    %176 = tpu.matmul %170, %11, %cst_63 {dimension_numbers = #tpu.dot_dimension_numbers<[1], [0], [0], [1], [0, 0, 1, 1], [], []>} : vector<2x128xf32>, vector<128x512xf32>, vector<2x512xf32> -> vector<2x512xf32>
    %177 = arith.addf %175, %176 : vector<2x512xf32>
    %178 = vector.extract_strided_slice %177 {offsets = [0, 0], sizes = [2, 128], strides = [1, 1]} : vector<2x512xf32> to vector<2x128xf32>
    %179 = arith.negf %178 : vector<2x128xf32>
    %180 = math.exp %179 : vector<2x128xf32>
    %cst_64 = arith.constant 1.000000e+00 : f32
    %181 = vector.broadcast %cst_64 : f32 to vector<2x128xf32>
    %182 = arith.addf %181, %180 : vector<2x128xf32>
    %183 = arith.divf %181, %182 : vector<2x128xf32>
    %184 = vector.extract_strided_slice %177 {offsets = [0, 128], sizes = [2, 128], strides = [1, 1]} : vector<2x512xf32> to vector<2x128xf32>
    %185 = arith.negf %184 : vector<2x128xf32>
    %186 = math.exp %185 : vector<2x128xf32>
    %cst_65 = arith.constant 1.000000e+00 : f32
    %187 = vector.broadcast %cst_65 : f32 to vector<2x128xf32>
    %188 = arith.addf %187, %186 : vector<2x128xf32>
    %189 = arith.divf %187, %188 : vector<2x128xf32>
    %190 = vector.extract_strided_slice %177 {offsets = [0, 256], sizes = [2, 128], strides = [1, 1]} : vector<2x512xf32> to vector<2x128xf32>
    %191 = math.tanh %190 : vector<2x128xf32>
    %192 = vector.extract_strided_slice %177 {offsets = [0, 384], sizes = [2, 128], strides = [1, 1]} : vector<2x512xf32> to vector<2x128xf32>
    %193 = arith.negf %192 : vector<2x128xf32>
    %194 = math.exp %193 : vector<2x128xf32>
    %cst_66 = arith.constant 1.000000e+00 : f32
    %195 = vector.broadcast %cst_66 : f32 to vector<2x128xf32>
    %196 = arith.addf %195, %194 : vector<2x128xf32>
    %197 = arith.divf %195, %196 : vector<2x128xf32>
    %198 = arith.mulf %189, %168 : vector<2x128xf32>
    %199 = arith.mulf %183, %191 : vector<2x128xf32>
    %200 = arith.addf %198, %199 : vector<2x128xf32>
    %201 = math.tanh %200 : vector<2x128xf32>
    %202 = arith.mulf %197, %201 : vector<2x128xf32>
    %c0_67 = arith.constant 0 : index
    %c5_68 = arith.constant 5 : index
    %c0_69 = arith.constant 0 : index
    %203 = vector.load %arg7[%c0_67, %c5_68, %c0_69] : memref<2x8x128xf32, #tpu.memory_space<vmem>>, vector<2x1x128xf32>
    %204 = vector.shape_cast %203 : vector<2x1x128xf32> to vector<2x128xf32>
    %205 = vector.shape_cast %202 : vector<2x128xf32> to vector<2x1x128xf32>
    tpu.vector_store %arg7[%c0_67, %c5_68, %c0_69], %205 {strides = array<i32>} : memref<2x8x128xf32, #tpu.memory_space<vmem>>, vector<2x1x128xf32>,
    %c0_70 = arith.constant 0 : index
    %c6 = arith.constant 6 : index
    %c0_71 = arith.constant 0 : index
    %206 = vector.load %arg6[%c0_70, %c6, %c0_71] : memref<2x8x512xf32, #tpu.memory_space<vmem>>, vector<2x1x512xf32>
    %207 = vector.shape_cast %206 : vector<2x1x512xf32> to vector<2x512xf32>
    %cst_72 = arith.constant dense<0.000000e+00> : vector<2x512xf32>
    %208 = tpu.matmul %202, %11, %cst_72 {dimension_numbers = #tpu.dot_dimension_numbers<[1], [0], [0], [1], [0, 0, 1, 1], [], []>} : vector<2x128xf32>, vector<128x512xf32>, vector<2x512xf32> -> vector<2x512xf32>
    %209 = arith.addf %207, %208 : vector<2x512xf32>
    %210 = vector.extract_strided_slice %209 {offsets = [0, 0], sizes = [2, 128], strides = [1, 1]} : vector<2x512xf32> to vector<2x128xf32>
    %211 = arith.negf %210 : vector<2x128xf32>
    %212 = math.exp %211 : vector<2x128xf32>
    %cst_73 = arith.constant 1.000000e+00 : f32
    %213 = vector.broadcast %cst_73 : f32 to vector<2x128xf32>
    %214 = arith.addf %213, %212 : vector<2x128xf32>
    %215 = arith.divf %213, %214 : vector<2x128xf32>
    %216 = vector.extract_strided_slice %209 {offsets = [0, 128], sizes = [2, 128], strides = [1, 1]} : vector<2x512xf32> to vector<2x128xf32>
    %217 = arith.negf %216 : vector<2x128xf32>
    %218 = math.exp %217 : vector<2x128xf32>
    %cst_74 = arith.constant 1.000000e+00 : f32
    %219 = vector.broadcast %cst_74 : f32 to vector<2x128xf32>
    %220 = arith.addf %219, %218 : vector<2x128xf32>
    %221 = arith.divf %219, %220 : vector<2x128xf32>
    %222 = vector.extract_strided_slice %209 {offsets = [0, 256], sizes = [2, 128], strides = [1, 1]} : vector<2x512xf32> to vector<2x128xf32>
    %223 = math.tanh %222 : vector<2x128xf32>
    %224 = vector.extract_strided_slice %209 {offsets = [0, 384], sizes = [2, 128], strides = [1, 1]} : vector<2x512xf32> to vector<2x128xf32>
    %225 = arith.negf %224 : vector<2x128xf32>
    %226 = math.exp %225 : vector<2x128xf32>
    %cst_75 = arith.constant 1.000000e+00 : f32
    %227 = vector.broadcast %cst_75 : f32 to vector<2x128xf32>
    %228 = arith.addf %227, %226 : vector<2x128xf32>
    %229 = arith.divf %227, %228 : vector<2x128xf32>
    %230 = arith.mulf %221, %200 : vector<2x128xf32>
    %231 = arith.mulf %215, %223 : vector<2x128xf32>
    %232 = arith.addf %230, %231 : vector<2x128xf32>
    %233 = math.tanh %232 : vector<2x128xf32>
    %234 = arith.mulf %229, %233 : vector<2x128xf32>
    %c0_76 = arith.constant 0 : index
    %c6_77 = arith.constant 6 : index
    %c0_78 = arith.constant 0 : index
    %235 = vector.load %arg7[%c0_76, %c6_77, %c0_78] : memref<2x8x128xf32, #tpu.memory_space<vmem>>, vector<2x1x128xf32>
    %236 = vector.shape_cast %235 : vector<2x1x128xf32> to vector<2x128xf32>
    %237 = vector.shape_cast %234 : vector<2x128xf32> to vector<2x1x128xf32>
    tpu.vector_store %arg7[%c0_76, %c6_77, %c0_78], %237 {strides = array<i32>} : memref<2x8x128xf32, #tpu.memory_space<vmem>>, vector<2x1x128xf32>,
    %c0_79 = arith.constant 0 : index
    %c7 = arith.constant 7 : index
    %c0_80 = arith.constant 0 : index
    %238 = vector.load %arg6[%c0_79, %c7, %c0_80] : memref<2x8x512xf32, #tpu.memory_space<vmem>>, vector<2x1x512xf32>
    %239 = vector.shape_cast %238 : vector<2x1x512xf32> to vector<2x512xf32>
    %cst_81 = arith.constant dense<0.000000e+00> : vector<2x512xf32>
    %240 = tpu.matmul %234, %11, %cst_81 {dimension_numbers = #tpu.dot_dimension_numbers<[1], [0], [0], [1], [0, 0, 1, 1], [], []>} : vector<2x128xf32>, vector<128x512xf32>, vector<2x512xf32> -> vector<2x512xf32>
    %241 = arith.addf %239, %240 : vector<2x512xf32>
    %242 = vector.extract_strided_slice %241 {offsets = [0, 0], sizes = [2, 128], strides = [1, 1]} : vector<2x512xf32> to vector<2x128xf32>
    %243 = arith.negf %242 : vector<2x128xf32>
    %244 = math.exp %243 : vector<2x128xf32>
    %cst_82 = arith.constant 1.000000e+00 : f32
    %245 = vector.broadcast %cst_82 : f32 to vector<2x128xf32>
    %246 = arith.addf %245, %244 : vector<2x128xf32>
    %247 = arith.divf %245, %246 : vector<2x128xf32>
    %248 = vector.extract_strided_slice %241 {offsets = [0, 128], sizes = [2, 128], strides = [1, 1]} : vector<2x512xf32> to vector<2x128xf32>
    %249 = arith.negf %248 : vector<2x128xf32>
    %250 = math.exp %249 : vector<2x128xf32>
    %cst_83 = arith.constant 1.000000e+00 : f32
    %251 = vector.broadcast %cst_83 : f32 to vector<2x128xf32>
    %252 = arith.addf %251, %250 : vector<2x128xf32>
    %253 = arith.divf %251, %252 : vector<2x128xf32>
    %254 = vector.extract_strided_slice %241 {offsets = [0, 256], sizes = [2, 128], strides = [1, 1]} : vector<2x512xf32> to vector<2x128xf32>
    %255 = math.tanh %254 : vector<2x128xf32>
    %256 = vector.extract_strided_slice %241 {offsets = [0, 384], sizes = [2, 128], strides = [1, 1]} : vector<2x512xf32> to vector<2x128xf32>
    %257 = arith.negf %256 : vector<2x128xf32>
    %258 = math.exp %257 : vector<2x128xf32>
    %cst_84 = arith.constant 1.000000e+00 : f32
    %259 = vector.broadcast %cst_84 : f32 to vector<2x128xf32>
    %260 = arith.addf %259, %258 : vector<2x128xf32>
    %261 = arith.divf %259, %260 : vector<2x128xf32>
    %262 = arith.mulf %253, %232 : vector<2x128xf32>
    %263 = arith.mulf %247, %255 : vector<2x128xf32>
    %264 = arith.addf %262, %263 : vector<2x128xf32>
    %265 = math.tanh %264 : vector<2x128xf32>
    %266 = arith.mulf %261, %265 : vector<2x128xf32>
    %c0_85 = arith.constant 0 : index
    %c7_86 = arith.constant 7 : index
    %c0_87 = arith.constant 0 : index
    %267 = vector.load %arg7[%c0_85, %c7_86, %c0_87] : memref<2x8x128xf32, #tpu.memory_space<vmem>>, vector<2x1x128xf32>
    %268 = vector.shape_cast %267 : vector<2x1x128xf32> to vector<2x128xf32>
    %269 = vector.shape_cast %266 : vector<2x128xf32> to vector<2x1x128xf32>
    tpu.vector_store %arg7[%c0_85, %c7_86, %c0_87], %269 {strides = array<i32>} : memref<2x8x128xf32, #tpu.memory_space<vmem>>, vector<2x1x128xf32>,
    %c0_88 = arith.constant 0 : index
    %c0_89 = arith.constant 0 : index
    %c0_90 = arith.constant 0 : index
    %270 = vector.load %arg7[%c0_88, %c0_89, %c0_90] : memref<2x8x128xf32, #tpu.memory_space<vmem>>, vector<2x8x128xf32>
    %271 = vector.shape_cast %270 : vector<2x8x128xf32> to vector<16x128xf32>
    %c0_91 = arith.constant 0 : index
    %c0_92 = arith.constant 0 : index
    %c0_93 = arith.constant 0 : index
    %272 = vector.load %arg2[%c0_91, %c0_92, %c0_93] : memref<2x128x512xf32, #tpu.memory_space<vmem>>, vector<1x128x512xf32>
    %273 = vector.shape_cast %272 : vector<1x128x512xf32> to vector<128x512xf32>
    %cst_94 = arith.constant dense<0.000000e+00> : vector<16x512xf32>
    %274 = tpu.matmul %271, %273, %cst_94 {dimension_numbers = #tpu.dot_dimension_numbers<[1], [0], [0], [1], [0, 0, 1, 1], [], []>} : vector<16x128xf32>, vector<128x512xf32>, vector<16x512xf32> -> vector<16x512xf32>
    %c1_95 = arith.constant 1 : index
    %c0_96 = arith.constant 0 : index
    %c0_97 = arith.constant 0 : index
    %275 = vector.load %arg4[%c1_95, %c0_96, %c0_97] : memref<3x1x512xf32, #tpu.memory_space<vmem>>, vector<1x1x512xf32>
    %276 = vector.shape_cast %275 : vector<1x1x512xf32> to vector<1x512xf32>
    %277 = vector.broadcast %276 : vector<1x512xf32> to vector<16x512xf32>
    %278 = arith.addf %274, %277 : vector<16x512xf32>
    %279 = vector.shape_cast %278 : vector<16x512xf32> to vector<2x8x512xf32>
    %c0_98 = arith.constant 0 : index
    %c0_99 = arith.constant 0 : index
    %c0_100 = arith.constant 0 : index
    %280 = vector.load %arg6[%c0_98, %c0_99, %c0_100] : memref<2x8x512xf32, #tpu.memory_space<vmem>>, vector<2x8x512xf32>
    tpu.vector_store %arg6[%c0_98, %c0_99, %c0_100], %279 {strides = array<i32>} : memref<2x8x512xf32, #tpu.memory_space<vmem>>, vector<2x8x512xf32>,
    %c1_101 = arith.constant 1 : index
    %c0_102 = arith.constant 0 : index
    %c0_103 = arith.constant 0 : index
    %281 = vector.load %arg3[%c1_101, %c0_102, %c0_103] : memref<3x128x512xf32, #tpu.memory_space<vmem>>, vector<1x128x512xf32>
    %282 = vector.shape_cast %281 : vector<1x128x512xf32> to vector<128x512xf32>
    %cst_104 = arith.constant 0.000000e+00 : f32
    %283 = vector.broadcast %cst_104 : f32 to vector<2x128xf32>
    %cst_105 = arith.constant 0.000000e+00 : f32
    %284 = vector.broadcast %cst_105 : f32 to vector<2x128xf32>
    %c0_106 = arith.constant 0 : index
    %c0_107 = arith.constant 0 : index
    %c0_108 = arith.constant 0 : index
    %285 = vector.load %arg6[%c0_106, %c0_107, %c0_108] : memref<2x8x512xf32, #tpu.memory_space<vmem>>, vector<2x1x512xf32>
    %286 = vector.shape_cast %285 : vector<2x1x512xf32> to vector<2x512xf32>
    %cst_109 = arith.constant dense<0.000000e+00> : vector<2x512xf32>
    %287 = tpu.matmul %283, %282, %cst_109 {dimension_numbers = #tpu.dot_dimension_numbers<[1], [0], [0], [1], [0, 0, 1, 1], [], []>} : vector<2x128xf32>, vector<128x512xf32>, vector<2x512xf32> -> vector<2x512xf32>
    %288 = arith.addf %286, %287 : vector<2x512xf32>
    %289 = vector.extract_strided_slice %288 {offsets = [0, 0], sizes = [2, 128], strides = [1, 1]} : vector<2x512xf32> to vector<2x128xf32>
    %290 = arith.negf %289 : vector<2x128xf32>
    %291 = math.exp %290 : vector<2x128xf32>
    %cst_110 = arith.constant 1.000000e+00 : f32
    %292 = vector.broadcast %cst_110 : f32 to vector<2x128xf32>
    %293 = arith.addf %292, %291 : vector<2x128xf32>
    %294 = arith.divf %292, %293 : vector<2x128xf32>
    %295 = vector.extract_strided_slice %288 {offsets = [0, 128], sizes = [2, 128], strides = [1, 1]} : vector<2x512xf32> to vector<2x128xf32>
    %296 = arith.negf %295 : vector<2x128xf32>
    %297 = math.exp %296 : vector<2x128xf32>
    %cst_111 = arith.constant 1.000000e+00 : f32
    %298 = vector.broadcast %cst_111 : f32 to vector<2x128xf32>
    %299 = arith.addf %298, %297 : vector<2x128xf32>
    %300 = arith.divf %298, %299 : vector<2x128xf32>
    %301 = vector.extract_strided_slice %288 {offsets = [0, 256], sizes = [2, 128], strides = [1, 1]} : vector<2x512xf32> to vector<2x128xf32>
    %302 = math.tanh %301 : vector<2x128xf32>
    %303 = vector.extract_strided_slice %288 {offsets = [0, 384], sizes = [2, 128], strides = [1, 1]} : vector<2x512xf32> to vector<2x128xf32>
    %304 = arith.negf %303 : vector<2x128xf32>
    %305 = math.exp %304 : vector<2x128xf32>
    %cst_112 = arith.constant 1.000000e+00 : f32
    %306 = vector.broadcast %cst_112 : f32 to vector<2x128xf32>
    %307 = arith.addf %306, %305 : vector<2x128xf32>
    %308 = arith.divf %306, %307 : vector<2x128xf32>
    %309 = arith.mulf %300, %284 : vector<2x128xf32>
    %310 = arith.mulf %294, %302 : vector<2x128xf32>
    %311 = arith.addf %309, %310 : vector<2x128xf32>
    %312 = math.tanh %311 : vector<2x128xf32>
    %313 = arith.mulf %308, %312 : vector<2x128xf32>
    %c0_113 = arith.constant 0 : index
    %c0_114 = arith.constant 0 : index
    %c0_115 = arith.constant 0 : index
    %314 = vector.load %arg7[%c0_113, %c0_114, %c0_115] : memref<2x8x128xf32, #tpu.memory_space<vmem>>, vector<2x1x128xf32>
    %315 = vector.shape_cast %314 : vector<2x1x128xf32> to vector<2x128xf32>
    %316 = vector.shape_cast %313 : vector<2x128xf32> to vector<2x1x128xf32>
    tpu.vector_store %arg7[%c0_113, %c0_114, %c0_115], %316 {strides = array<i32>} : memref<2x8x128xf32, #tpu.memory_space<vmem>>, vector<2x1x128xf32>,
    %c0_116 = arith.constant 0 : index
    %c1_117 = arith.constant 1 : index
    %c0_118 = arith.constant 0 : index
    %317 = vector.load %arg6[%c0_116, %c1_117, %c0_118] : memref<2x8x512xf32, #tpu.memory_space<vmem>>, vector<2x1x512xf32>
    %318 = vector.shape_cast %317 : vector<2x1x512xf32> to vector<2x512xf32>
    %cst_119 = arith.constant dense<0.000000e+00> : vector<2x512xf32>
    %319 = tpu.matmul %313, %282, %cst_119 {dimension_numbers = #tpu.dot_dimension_numbers<[1], [0], [0], [1], [0, 0, 1, 1], [], []>} : vector<2x128xf32>, vector<128x512xf32>, vector<2x512xf32> -> vector<2x512xf32>
    %320 = arith.addf %318, %319 : vector<2x512xf32>
    %321 = vector.extract_strided_slice %320 {offsets = [0, 0], sizes = [2, 128], strides = [1, 1]} : vector<2x512xf32> to vector<2x128xf32>
    %322 = arith.negf %321 : vector<2x128xf32>
    %323 = math.exp %322 : vector<2x128xf32>
    %cst_120 = arith.constant 1.000000e+00 : f32
    %324 = vector.broadcast %cst_120 : f32 to vector<2x128xf32>
    %325 = arith.addf %324, %323 : vector<2x128xf32>
    %326 = arith.divf %324, %325 : vector<2x128xf32>
    %327 = vector.extract_strided_slice %320 {offsets = [0, 128], sizes = [2, 128], strides = [1, 1]} : vector<2x512xf32> to vector<2x128xf32>
    %328 = arith.negf %327 : vector<2x128xf32>
    %329 = math.exp %328 : vector<2x128xf32>
    %cst_121 = arith.constant 1.000000e+00 : f32
    %330 = vector.broadcast %cst_121 : f32 to vector<2x128xf32>
    %331 = arith.addf %330, %329 : vector<2x128xf32>
    %332 = arith.divf %330, %331 : vector<2x128xf32>
    %333 = vector.extract_strided_slice %320 {offsets = [0, 256], sizes = [2, 128], strides = [1, 1]} : vector<2x512xf32> to vector<2x128xf32>
    %334 = math.tanh %333 : vector<2x128xf32>
    %335 = vector.extract_strided_slice %320 {offsets = [0, 384], sizes = [2, 128], strides = [1, 1]} : vector<2x512xf32> to vector<2x128xf32>
    %336 = arith.negf %335 : vector<2x128xf32>
    %337 = math.exp %336 : vector<2x128xf32>
    %cst_122 = arith.constant 1.000000e+00 : f32
    %338 = vector.broadcast %cst_122 : f32 to vector<2x128xf32>
    %339 = arith.addf %338, %337 : vector<2x128xf32>
    %340 = arith.divf %338, %339 : vector<2x128xf32>
    %341 = arith.mulf %332, %311 : vector<2x128xf32>
    %342 = arith.mulf %326, %334 : vector<2x128xf32>
    %343 = arith.addf %341, %342 : vector<2x128xf32>
    %344 = math.tanh %343 : vector<2x128xf32>
    %345 = arith.mulf %340, %344 : vector<2x128xf32>
    %c0_123 = arith.constant 0 : index
    %c1_124 = arith.constant 1 : index
    %c0_125 = arith.constant 0 : index
    %346 = vector.load %arg7[%c0_123, %c1_124, %c0_125] : memref<2x8x128xf32, #tpu.memory_space<vmem>>, vector<2x1x128xf32>
    %347 = vector.shape_cast %346 : vector<2x1x128xf32> to vector<2x128xf32>
    %348 = vector.shape_cast %345 : vector<2x128xf32> to vector<2x1x128xf32>
    tpu.vector_store %arg7[%c0_123, %c1_124, %c0_125], %348 {strides = array<i32>} : memref<2x8x128xf32, #tpu.memory_space<vmem>>, vector<2x1x128xf32>,
    %c0_126 = arith.constant 0 : index
    %c2_127 = arith.constant 2 : index
    %c0_128 = arith.constant 0 : index
    %349 = vector.load %arg6[%c0_126, %c2_127, %c0_128] : memref<2x8x512xf32, #tpu.memory_space<vmem>>, vector<2x1x512xf32>
    %350 = vector.shape_cast %349 : vector<2x1x512xf32> to vector<2x512xf32>
    %cst_129 = arith.constant dense<0.000000e+00> : vector<2x512xf32>
    %351 = tpu.matmul %345, %282, %cst_129 {dimension_numbers = #tpu.dot_dimension_numbers<[1], [0], [0], [1], [0, 0, 1, 1], [], []>} : vector<2x128xf32>, vector<128x512xf32>, vector<2x512xf32> -> vector<2x512xf32>
    %352 = arith.addf %350, %351 : vector<2x512xf32>
    %353 = vector.extract_strided_slice %352 {offsets = [0, 0], sizes = [2, 128], strides = [1, 1]} : vector<2x512xf32> to vector<2x128xf32>
    %354 = arith.negf %353 : vector<2x128xf32>
    %355 = math.exp %354 : vector<2x128xf32>
    %cst_130 = arith.constant 1.000000e+00 : f32
    %356 = vector.broadcast %cst_130 : f32 to vector<2x128xf32>
    %357 = arith.addf %356, %355 : vector<2x128xf32>
    %358 = arith.divf %356, %357 : vector<2x128xf32>
    %359 = vector.extract_strided_slice %352 {offsets = [0, 128], sizes = [2, 128], strides = [1, 1]} : vector<2x512xf32> to vector<2x128xf32>
    %360 = arith.negf %359 : vector<2x128xf32>
    %361 = math.exp %360 : vector<2x128xf32>
    %cst_131 = arith.constant 1.000000e+00 : f32
    %362 = vector.broadcast %cst_131 : f32 to vector<2x128xf32>
    %363 = arith.addf %362, %361 : vector<2x128xf32>
    %364 = arith.divf %362, %363 : vector<2x128xf32>
    %365 = vector.extract_strided_slice %352 {offsets = [0, 256], sizes = [2, 128], strides = [1, 1]} : vector<2x512xf32> to vector<2x128xf32>
    %366 = math.tanh %365 : vector<2x128xf32>
    %367 = vector.extract_strided_slice %352 {offsets = [0, 384], sizes = [2, 128], strides = [1, 1]} : vector<2x512xf32> to vector<2x128xf32>
    %368 = arith.negf %367 : vector<2x128xf32>
    %369 = math.exp %368 : vector<2x128xf32>
    %cst_132 = arith.constant 1.000000e+00 : f32
    %370 = vector.broadcast %cst_132 : f32 to vector<2x128xf32>
    %371 = arith.addf %370, %369 : vector<2x128xf32>
    %372 = arith.divf %370, %371 : vector<2x128xf32>
    %373 = arith.mulf %364, %343 : vector<2x128xf32>
    %374 = arith.mulf %358, %366 : vector<2x128xf32>
    %375 = arith.addf %373, %374 : vector<2x128xf32>
    %376 = math.tanh %375 : vector<2x128xf32>
    %377 = arith.mulf %372, %376 : vector<2x128xf32>
    %c0_133 = arith.constant 0 : index
    %c2_134 = arith.constant 2 : index
    %c0_135 = arith.constant 0 : index
    %378 = vector.load %arg7[%c0_133, %c2_134, %c0_135] : memref<2x8x128xf32, #tpu.memory_space<vmem>>, vector<2x1x128xf32>
    %379 = vector.shape_cast %378 : vector<2x1x128xf32> to vector<2x128xf32>
    %380 = vector.shape_cast %377 : vector<2x128xf32> to vector<2x1x128xf32>
    tpu.vector_store %arg7[%c0_133, %c2_134, %c0_135], %380 {strides = array<i32>} : memref<2x8x128xf32, #tpu.memory_space<vmem>>, vector<2x1x128xf32>,
    %c0_136 = arith.constant 0 : index
    %c3_137 = arith.constant 3 : index
    %c0_138 = arith.constant 0 : index
    %381 = vector.load %arg6[%c0_136, %c3_137, %c0_138] : memref<2x8x512xf32, #tpu.memory_space<vmem>>, vector<2x1x512xf32>
    %382 = vector.shape_cast %381 : vector<2x1x512xf32> to vector<2x512xf32>
    %cst_139 = arith.constant dense<0.000000e+00> : vector<2x512xf32>
    %383 = tpu.matmul %377, %282, %cst_139 {dimension_numbers = #tpu.dot_dimension_numbers<[1], [0], [0], [1], [0, 0, 1, 1], [], []>} : vector<2x128xf32>, vector<128x512xf32>, vector<2x512xf32> -> vector<2x512xf32>
    %384 = arith.addf %382, %383 : vector<2x512xf32>
    %385 = vector.extract_strided_slice %384 {offsets = [0, 0], sizes = [2, 128], strides = [1, 1]} : vector<2x512xf32> to vector<2x128xf32>
    %386 = arith.negf %385 : vector<2x128xf32>
    %387 = math.exp %386 : vector<2x128xf32>
    %cst_140 = arith.constant 1.000000e+00 : f32
    %388 = vector.broadcast %cst_140 : f32 to vector<2x128xf32>
    %389 = arith.addf %388, %387 : vector<2x128xf32>
    %390 = arith.divf %388, %389 : vector<2x128xf32>
    %391 = vector.extract_strided_slice %384 {offsets = [0, 128], sizes = [2, 128], strides = [1, 1]} : vector<2x512xf32> to vector<2x128xf32>
    %392 = arith.negf %391 : vector<2x128xf32>
    %393 = math.exp %392 : vector<2x128xf32>
    %cst_141 = arith.constant 1.000000e+00 : f32
    %394 = vector.broadcast %cst_141 : f32 to vector<2x128xf32>
    %395 = arith.addf %394, %393 : vector<2x128xf32>
    %396 = arith.divf %394, %395 : vector<2x128xf32>
    %397 = vector.extract_strided_slice %384 {offsets = [0, 256], sizes = [2, 128], strides = [1, 1]} : vector<2x512xf32> to vector<2x128xf32>
    %398 = math.tanh %397 : vector<2x128xf32>
    %399 = vector.extract_strided_slice %384 {offsets = [0, 384], sizes = [2, 128], strides = [1, 1]} : vector<2x512xf32> to vector<2x128xf32>
    %400 = arith.negf %399 : vector<2x128xf32>
    %401 = math.exp %400 : vector<2x128xf32>
    %cst_142 = arith.constant 1.000000e+00 : f32
    %402 = vector.broadcast %cst_142 : f32 to vector<2x128xf32>
    %403 = arith.addf %402, %401 : vector<2x128xf32>
    %404 = arith.divf %402, %403 : vector<2x128xf32>
    %405 = arith.mulf %396, %375 : vector<2x128xf32>
    %406 = arith.mulf %390, %398 : vector<2x128xf32>
    %407 = arith.addf %405, %406 : vector<2x128xf32>
    %408 = math.tanh %407 : vector<2x128xf32>
    %409 = arith.mulf %404, %408 : vector<2x128xf32>
    %c0_143 = arith.constant 0 : index
    %c3_144 = arith.constant 3 : index
    %c0_145 = arith.constant 0 : index
    %410 = vector.load %arg7[%c0_143, %c3_144, %c0_145] : memref<2x8x128xf32, #tpu.memory_space<vmem>>, vector<2x1x128xf32>
    %411 = vector.shape_cast %410 : vector<2x1x128xf32> to vector<2x128xf32>
    %412 = vector.shape_cast %409 : vector<2x128xf32> to vector<2x1x128xf32>
    tpu.vector_store %arg7[%c0_143, %c3_144, %c0_145], %412 {strides = array<i32>} : memref<2x8x128xf32, #tpu.memory_space<vmem>>, vector<2x1x128xf32>,
    %c0_146 = arith.constant 0 : index
    %c4_147 = arith.constant 4 : index
    %c0_148 = arith.constant 0 : index
    %413 = vector.load %arg6[%c0_146, %c4_147, %c0_148] : memref<2x8x512xf32, #tpu.memory_space<vmem>>, vector<2x1x512xf32>
    %414 = vector.shape_cast %413 : vector<2x1x512xf32> to vector<2x512xf32>
    %cst_149 = arith.constant dense<0.000000e+00> : vector<2x512xf32>
    %415 = tpu.matmul %409, %282, %cst_149 {dimension_numbers = #tpu.dot_dimension_numbers<[1], [0], [0], [1], [0, 0, 1, 1], [], []>} : vector<2x128xf32>, vector<128x512xf32>, vector<2x512xf32> -> vector<2x512xf32>
    %416 = arith.addf %414, %415 : vector<2x512xf32>
    %417 = vector.extract_strided_slice %416 {offsets = [0, 0], sizes = [2, 128], strides = [1, 1]} : vector<2x512xf32> to vector<2x128xf32>
    %418 = arith.negf %417 : vector<2x128xf32>
    %419 = math.exp %418 : vector<2x128xf32>
    %cst_150 = arith.constant 1.000000e+00 : f32
    %420 = vector.broadcast %cst_150 : f32 to vector<2x128xf32>
    %421 = arith.addf %420, %419 : vector<2x128xf32>
    %422 = arith.divf %420, %421 : vector<2x128xf32>
    %423 = vector.extract_strided_slice %416 {offsets = [0, 128], sizes = [2, 128], strides = [1, 1]} : vector<2x512xf32> to vector<2x128xf32>
    %424 = arith.negf %423 : vector<2x128xf32>
    %425 = math.exp %424 : vector<2x128xf32>
    %cst_151 = arith.constant 1.000000e+00 : f32
    %426 = vector.broadcast %cst_151 : f32 to vector<2x128xf32>
    %427 = arith.addf %426, %425 : vector<2x128xf32>
    %428 = arith.divf %426, %427 : vector<2x128xf32>
    %429 = vector.extract_strided_slice %416 {offsets = [0, 256], sizes = [2, 128], strides = [1, 1]} : vector<2x512xf32> to vector<2x128xf32>
    %430 = math.tanh %429 : vector<2x128xf32>
    %431 = vector.extract_strided_slice %416 {offsets = [0, 384], sizes = [2, 128], strides = [1, 1]} : vector<2x512xf32> to vector<2x128xf32>
    %432 = arith.negf %431 : vector<2x128xf32>
    %433 = math.exp %432 : vector<2x128xf32>
    %cst_152 = arith.constant 1.000000e+00 : f32
    %434 = vector.broadcast %cst_152 : f32 to vector<2x128xf32>
    %435 = arith.addf %434, %433 : vector<2x128xf32>
    %436 = arith.divf %434, %435 : vector<2x128xf32>
    %437 = arith.mulf %428, %407 : vector<2x128xf32>
    %438 = arith.mulf %422, %430 : vector<2x128xf32>
    %439 = arith.addf %437, %438 : vector<2x128xf32>
    %440 = math.tanh %439 : vector<2x128xf32>
    %441 = arith.mulf %436, %440 : vector<2x128xf32>
    %c0_153 = arith.constant 0 : index
    %c4_154 = arith.constant 4 : index
    %c0_155 = arith.constant 0 : index
    %442 = vector.load %arg7[%c0_153, %c4_154, %c0_155] : memref<2x8x128xf32, #tpu.memory_space<vmem>>, vector<2x1x128xf32>
    %443 = vector.shape_cast %442 : vector<2x1x128xf32> to vector<2x128xf32>
    %444 = vector.shape_cast %441 : vector<2x128xf32> to vector<2x1x128xf32>
    tpu.vector_store %arg7[%c0_153, %c4_154, %c0_155], %444 {strides = array<i32>} : memref<2x8x128xf32, #tpu.memory_space<vmem>>, vector<2x1x128xf32>,
    %c0_156 = arith.constant 0 : index
    %c5_157 = arith.constant 5 : index
    %c0_158 = arith.constant 0 : index
    %445 = vector.load %arg6[%c0_156, %c5_157, %c0_158] : memref<2x8x512xf32, #tpu.memory_space<vmem>>, vector<2x1x512xf32>
    %446 = vector.shape_cast %445 : vector<2x1x512xf32> to vector<2x512xf32>
    %cst_159 = arith.constant dense<0.000000e+00> : vector<2x512xf32>
    %447 = tpu.matmul %441, %282, %cst_159 {dimension_numbers = #tpu.dot_dimension_numbers<[1], [0], [0], [1], [0, 0, 1, 1], [], []>} : vector<2x128xf32>, vector<128x512xf32>, vector<2x512xf32> -> vector<2x512xf32>
    %448 = arith.addf %446, %447 : vector<2x512xf32>
    %449 = vector.extract_strided_slice %448 {offsets = [0, 0], sizes = [2, 128], strides = [1, 1]} : vector<2x512xf32> to vector<2x128xf32>
    %450 = arith.negf %449 : vector<2x128xf32>
    %451 = math.exp %450 : vector<2x128xf32>
    %cst_160 = arith.constant 1.000000e+00 : f32
    %452 = vector.broadcast %cst_160 : f32 to vector<2x128xf32>
    %453 = arith.addf %452, %451 : vector<2x128xf32>
    %454 = arith.divf %452, %453 : vector<2x128xf32>
    %455 = vector.extract_strided_slice %448 {offsets = [0, 128], sizes = [2, 128], strides = [1, 1]} : vector<2x512xf32> to vector<2x128xf32>
    %456 = arith.negf %455 : vector<2x128xf32>
    %457 = math.exp %456 : vector<2x128xf32>
    %cst_161 = arith.constant 1.000000e+00 : f32
    %458 = vector.broadcast %cst_161 : f32 to vector<2x128xf32>
    %459 = arith.addf %458, %457 : vector<2x128xf32>
    %460 = arith.divf %458, %459 : vector<2x128xf32>
    %461 = vector.extract_strided_slice %448 {offsets = [0, 256], sizes = [2, 128], strides = [1, 1]} : vector<2x512xf32> to vector<2x128xf32>
    %462 = math.tanh %461 : vector<2x128xf32>
    %463 = vector.extract_strided_slice %448 {offsets = [0, 384], sizes = [2, 128], strides = [1, 1]} : vector<2x512xf32> to vector<2x128xf32>
    %464 = arith.negf %463 : vector<2x128xf32>
    %465 = math.exp %464 : vector<2x128xf32>
    %cst_162 = arith.constant 1.000000e+00 : f32
    %466 = vector.broadcast %cst_162 : f32 to vector<2x128xf32>
    %467 = arith.addf %466, %465 : vector<2x128xf32>
    %468 = arith.divf %466, %467 : vector<2x128xf32>
    %469 = arith.mulf %460, %439 : vector<2x128xf32>
    %470 = arith.mulf %454, %462 : vector<2x128xf32>
    %471 = arith.addf %469, %470 : vector<2x128xf32>
    %472 = math.tanh %471 : vector<2x128xf32>
    %473 = arith.mulf %468, %472 : vector<2x128xf32>
    %c0_163 = arith.constant 0 : index
    %c5_164 = arith.constant 5 : index
    %c0_165 = arith.constant 0 : index
    %474 = vector.load %arg7[%c0_163, %c5_164, %c0_165] : memref<2x8x128xf32, #tpu.memory_space<vmem>>, vector<2x1x128xf32>
    %475 = vector.shape_cast %474 : vector<2x1x128xf32> to vector<2x128xf32>
    %476 = vector.shape_cast %473 : vector<2x128xf32> to vector<2x1x128xf32>
    tpu.vector_store %arg7[%c0_163, %c5_164, %c0_165], %476 {strides = array<i32>} : memref<2x8x128xf32, #tpu.memory_space<vmem>>, vector<2x1x128xf32>,
    %c0_166 = arith.constant 0 : index
    %c6_167 = arith.constant 6 : index
    %c0_168 = arith.constant 0 : index
    %477 = vector.load %arg6[%c0_166, %c6_167, %c0_168] : memref<2x8x512xf32, #tpu.memory_space<vmem>>, vector<2x1x512xf32>
    %478 = vector.shape_cast %477 : vector<2x1x512xf32> to vector<2x512xf32>
    %cst_169 = arith.constant dense<0.000000e+00> : vector<2x512xf32>
    %479 = tpu.matmul %473, %282, %cst_169 {dimension_numbers = #tpu.dot_dimension_numbers<[1], [0], [0], [1], [0, 0, 1, 1], [], []>} : vector<2x128xf32>, vector<128x512xf32>, vector<2x512xf32> -> vector<2x512xf32>
    %480 = arith.addf %478, %479 : vector<2x512xf32>
    %481 = vector.extract_strided_slice %480 {offsets = [0, 0], sizes = [2, 128], strides = [1, 1]} : vector<2x512xf32> to vector<2x128xf32>
    %482 = arith.negf %481 : vector<2x128xf32>
    %483 = math.exp %482 : vector<2x128xf32>
    %cst_170 = arith.constant 1.000000e+00 : f32
    %484 = vector.broadcast %cst_170 : f32 to vector<2x128xf32>
    %485 = arith.addf %484, %483 : vector<2x128xf32>
    %486 = arith.divf %484, %485 : vector<2x128xf32>
    %487 = vector.extract_strided_slice %480 {offsets = [0, 128], sizes = [2, 128], strides = [1, 1]} : vector<2x512xf32> to vector<2x128xf32>
    %488 = arith.negf %487 : vector<2x128xf32>
    %489 = math.exp %488 : vector<2x128xf32>
    %cst_171 = arith.constant 1.000000e+00 : f32
    %490 = vector.broadcast %cst_171 : f32 to vector<2x128xf32>
    %491 = arith.addf %490, %489 : vector<2x128xf32>
    %492 = arith.divf %490, %491 : vector<2x128xf32>
    %493 = vector.extract_strided_slice %480 {offsets = [0, 256], sizes = [2, 128], strides = [1, 1]} : vector<2x512xf32> to vector<2x128xf32>
    %494 = math.tanh %493 : vector<2x128xf32>
    %495 = vector.extract_strided_slice %480 {offsets = [0, 384], sizes = [2, 128], strides = [1, 1]} : vector<2x512xf32> to vector<2x128xf32>
    %496 = arith.negf %495 : vector<2x128xf32>
    %497 = math.exp %496 : vector<2x128xf32>
    %cst_172 = arith.constant 1.000000e+00 : f32
    %498 = vector.broadcast %cst_172 : f32 to vector<2x128xf32>
    %499 = arith.addf %498, %497 : vector<2x128xf32>
    %500 = arith.divf %498, %499 : vector<2x128xf32>
    %501 = arith.mulf %492, %471 : vector<2x128xf32>
    %502 = arith.mulf %486, %494 : vector<2x128xf32>
    %503 = arith.addf %501, %502 : vector<2x128xf32>
    %504 = math.tanh %503 : vector<2x128xf32>
    %505 = arith.mulf %500, %504 : vector<2x128xf32>
    %c0_173 = arith.constant 0 : index
    %c6_174 = arith.constant 6 : index
    %c0_175 = arith.constant 0 : index
    %506 = vector.load %arg7[%c0_173, %c6_174, %c0_175] : memref<2x8x128xf32, #tpu.memory_space<vmem>>, vector<2x1x128xf32>
    %507 = vector.shape_cast %506 : vector<2x1x128xf32> to vector<2x128xf32>
    %508 = vector.shape_cast %505 : vector<2x128xf32> to vector<2x1x128xf32>
    tpu.vector_store %arg7[%c0_173, %c6_174, %c0_175], %508 {strides = array<i32>} : memref<2x8x128xf32, #tpu.memory_space<vmem>>, vector<2x1x128xf32>,
    %c0_176 = arith.constant 0 : index
    %c7_177 = arith.constant 7 : index
    %c0_178 = arith.constant 0 : index
    %509 = vector.load %arg6[%c0_176, %c7_177, %c0_178] : memref<2x8x512xf32, #tpu.memory_space<vmem>>, vector<2x1x512xf32>
    %510 = vector.shape_cast %509 : vector<2x1x512xf32> to vector<2x512xf32>
    %cst_179 = arith.constant dense<0.000000e+00> : vector<2x512xf32>
    %511 = tpu.matmul %505, %282, %cst_179 {dimension_numbers = #tpu.dot_dimension_numbers<[1], [0], [0], [1], [0, 0, 1, 1], [], []>} : vector<2x128xf32>, vector<128x512xf32>, vector<2x512xf32> -> vector<2x512xf32>
    %512 = arith.addf %510, %511 : vector<2x512xf32>
    %513 = vector.extract_strided_slice %512 {offsets = [0, 0], sizes = [2, 128], strides = [1, 1]} : vector<2x512xf32> to vector<2x128xf32>
    %514 = arith.negf %513 : vector<2x128xf32>
    %515 = math.exp %514 : vector<2x128xf32>
    %cst_180 = arith.constant 1.000000e+00 : f32
    %516 = vector.broadcast %cst_180 : f32 to vector<2x128xf32>
    %517 = arith.addf %516, %515 : vector<2x128xf32>
    %518 = arith.divf %516, %517 : vector<2x128xf32>
    %519 = vector.extract_strided_slice %512 {offsets = [0, 128], sizes = [2, 128], strides = [1, 1]} : vector<2x512xf32> to vector<2x128xf32>
    %520 = arith.negf %519 : vector<2x128xf32>
    %521 = math.exp %520 : vector<2x128xf32>
    %cst_181 = arith.constant 1.000000e+00 : f32
    %522 = vector.broadcast %cst_181 : f32 to vector<2x128xf32>
    %523 = arith.addf %522, %521 : vector<2x128xf32>
    %524 = arith.divf %522, %523 : vector<2x128xf32>
    %525 = vector.extract_strided_slice %512 {offsets = [0, 256], sizes = [2, 128], strides = [1, 1]} : vector<2x512xf32> to vector<2x128xf32>
    %526 = math.tanh %525 : vector<2x128xf32>
    %527 = vector.extract_strided_slice %512 {offsets = [0, 384], sizes = [2, 128], strides = [1, 1]} : vector<2x512xf32> to vector<2x128xf32>
    %528 = arith.negf %527 : vector<2x128xf32>
    %529 = math.exp %528 : vector<2x128xf32>
    %cst_182 = arith.constant 1.000000e+00 : f32
    %530 = vector.broadcast %cst_182 : f32 to vector<2x128xf32>
    %531 = arith.addf %530, %529 : vector<2x128xf32>
    %532 = arith.divf %530, %531 : vector<2x128xf32>
    %533 = arith.mulf %524, %503 : vector<2x128xf32>
    %534 = arith.mulf %518, %526 : vector<2x128xf32>
    %535 = arith.addf %533, %534 : vector<2x128xf32>
    %536 = math.tanh %535 : vector<2x128xf32>
    %537 = arith.mulf %532, %536 : vector<2x128xf32>
    %c0_183 = arith.constant 0 : index
    %c7_184 = arith.constant 7 : index
    %c0_185 = arith.constant 0 : index
    %538 = vector.load %arg7[%c0_183, %c7_184, %c0_185] : memref<2x8x128xf32, #tpu.memory_space<vmem>>, vector<2x1x128xf32>
    %539 = vector.shape_cast %538 : vector<2x1x128xf32> to vector<2x128xf32>
    %540 = vector.shape_cast %537 : vector<2x128xf32> to vector<2x1x128xf32>
    tpu.vector_store %arg7[%c0_183, %c7_184, %c0_185], %540 {strides = array<i32>} : memref<2x8x128xf32, #tpu.memory_space<vmem>>, vector<2x1x128xf32>,
    %c0_186 = arith.constant 0 : index
    %c0_187 = arith.constant 0 : index
    %c0_188 = arith.constant 0 : index
    %541 = vector.load %arg7[%c0_186, %c0_187, %c0_188] : memref<2x8x128xf32, #tpu.memory_space<vmem>>, vector<2x8x128xf32>
    %542 = vector.shape_cast %541 : vector<2x8x128xf32> to vector<16x128xf32>
    %c1_189 = arith.constant 1 : index
    %c0_190 = arith.constant 0 : index
    %c0_191 = arith.constant 0 : index
    %543 = vector.load %arg2[%c1_189, %c0_190, %c0_191] : memref<2x128x512xf32, #tpu.memory_space<vmem>>, vector<1x128x512xf32>
    %544 = vector.shape_cast %543 : vector<1x128x512xf32> to vector<128x512xf32>
    %cst_192 = arith.constant dense<0.000000e+00> : vector<16x512xf32>
    %545 = tpu.matmul %542, %544, %cst_192 {dimension_numbers = #tpu.dot_dimension_numbers<[1], [0], [0], [1], [0, 0, 1, 1], [], []>} : vector<16x128xf32>, vector<128x512xf32>, vector<16x512xf32> -> vector<16x512xf32>
    %c2_193 = arith.constant 2 : index
    %c0_194 = arith.constant 0 : index
    %c0_195 = arith.constant 0 : index
    %546 = vector.load %arg4[%c2_193, %c0_194, %c0_195] : memref<3x1x512xf32, #tpu.memory_space<vmem>>, vector<1x1x512xf32>
    %547 = vector.shape_cast %546 : vector<1x1x512xf32> to vector<1x512xf32>
    %548 = vector.broadcast %547 : vector<1x512xf32> to vector<16x512xf32>
    %549 = arith.addf %545, %548 : vector<16x512xf32>
    %550 = vector.shape_cast %549 : vector<16x512xf32> to vector<2x8x512xf32>
    %c0_196 = arith.constant 0 : index
    %c0_197 = arith.constant 0 : index
    %c0_198 = arith.constant 0 : index
    %551 = vector.load %arg6[%c0_196, %c0_197, %c0_198] : memref<2x8x512xf32, #tpu.memory_space<vmem>>, vector<2x8x512xf32>
    tpu.vector_store %arg6[%c0_196, %c0_197, %c0_198], %550 {strides = array<i32>} : memref<2x8x512xf32, #tpu.memory_space<vmem>>, vector<2x8x512xf32>,
    %c2_199 = arith.constant 2 : index
    %c0_200 = arith.constant 0 : index
    %c0_201 = arith.constant 0 : index
    %552 = vector.load %arg3[%c2_199, %c0_200, %c0_201] : memref<3x128x512xf32, #tpu.memory_space<vmem>>, vector<1x128x512xf32>
    %553 = vector.shape_cast %552 : vector<1x128x512xf32> to vector<128x512xf32>
    %cst_202 = arith.constant 0.000000e+00 : f32
    %554 = vector.broadcast %cst_202 : f32 to vector<2x128xf32>
    %cst_203 = arith.constant 0.000000e+00 : f32
    %555 = vector.broadcast %cst_203 : f32 to vector<2x128xf32>
    %c0_204 = arith.constant 0 : index
    %c0_205 = arith.constant 0 : index
    %c0_206 = arith.constant 0 : index
    %556 = vector.load %arg6[%c0_204, %c0_205, %c0_206] : memref<2x8x512xf32, #tpu.memory_space<vmem>>, vector<2x1x512xf32>
    %557 = vector.shape_cast %556 : vector<2x1x512xf32> to vector<2x512xf32>
    %cst_207 = arith.constant dense<0.000000e+00> : vector<2x512xf32>
    %558 = tpu.matmul %554, %553, %cst_207 {dimension_numbers = #tpu.dot_dimension_numbers<[1], [0], [0], [1], [0, 0, 1, 1], [], []>} : vector<2x128xf32>, vector<128x512xf32>, vector<2x512xf32> -> vector<2x512xf32>
    %559 = arith.addf %557, %558 : vector<2x512xf32>
    %560 = vector.extract_strided_slice %559 {offsets = [0, 0], sizes = [2, 128], strides = [1, 1]} : vector<2x512xf32> to vector<2x128xf32>
    %561 = arith.negf %560 : vector<2x128xf32>
    %562 = math.exp %561 : vector<2x128xf32>
    %cst_208 = arith.constant 1.000000e+00 : f32
    %563 = vector.broadcast %cst_208 : f32 to vector<2x128xf32>
    %564 = arith.addf %563, %562 : vector<2x128xf32>
    %565 = arith.divf %563, %564 : vector<2x128xf32>
    %566 = vector.extract_strided_slice %559 {offsets = [0, 128], sizes = [2, 128], strides = [1, 1]} : vector<2x512xf32> to vector<2x128xf32>
    %567 = arith.negf %566 : vector<2x128xf32>
    %568 = math.exp %567 : vector<2x128xf32>
    %cst_209 = arith.constant 1.000000e+00 : f32
    %569 = vector.broadcast %cst_209 : f32 to vector<2x128xf32>
    %570 = arith.addf %569, %568 : vector<2x128xf32>
    %571 = arith.divf %569, %570 : vector<2x128xf32>
    %572 = vector.extract_strided_slice %559 {offsets = [0, 256], sizes = [2, 128], strides = [1, 1]} : vector<2x512xf32> to vector<2x128xf32>
    %573 = math.tanh %572 : vector<2x128xf32>
    %574 = vector.extract_strided_slice %559 {offsets = [0, 384], sizes = [2, 128], strides = [1, 1]} : vector<2x512xf32> to vector<2x128xf32>
    %575 = arith.negf %574 : vector<2x128xf32>
    %576 = math.exp %575 : vector<2x128xf32>
    %cst_210 = arith.constant 1.000000e+00 : f32
    %577 = vector.broadcast %cst_210 : f32 to vector<2x128xf32>
    %578 = arith.addf %577, %576 : vector<2x128xf32>
    %579 = arith.divf %577, %578 : vector<2x128xf32>
    %580 = arith.mulf %571, %555 : vector<2x128xf32>
    %581 = arith.mulf %565, %573 : vector<2x128xf32>
    %582 = arith.addf %580, %581 : vector<2x128xf32>
    %583 = math.tanh %582 : vector<2x128xf32>
    %584 = arith.mulf %579, %583 : vector<2x128xf32>
    %c0_211 = arith.constant 0 : index
    %c1_212 = arith.constant 1 : index
    %c0_213 = arith.constant 0 : index
    %585 = vector.load %arg6[%c0_211, %c1_212, %c0_213] : memref<2x8x512xf32, #tpu.memory_space<vmem>>, vector<2x1x512xf32>
    %586 = vector.shape_cast %585 : vector<2x1x512xf32> to vector<2x512xf32>
    %cst_214 = arith.constant dense<0.000000e+00> : vector<2x512xf32>
    %587 = tpu.matmul %584, %553, %cst_214 {dimension_numbers = #tpu.dot_dimension_numbers<[1], [0], [0], [1], [0, 0, 1, 1], [], []>} : vector<2x128xf32>, vector<128x512xf32>, vector<2x512xf32> -> vector<2x512xf32>
    %588 = arith.addf %586, %587 : vector<2x512xf32>
    %589 = vector.extract_strided_slice %588 {offsets = [0, 0], sizes = [2, 128], strides = [1, 1]} : vector<2x512xf32> to vector<2x128xf32>
    %590 = arith.negf %589 : vector<2x128xf32>
    %591 = math.exp %590 : vector<2x128xf32>
    %cst_215 = arith.constant 1.000000e+00 : f32
    %592 = vector.broadcast %cst_215 : f32 to vector<2x128xf32>
    %593 = arith.addf %592, %591 : vector<2x128xf32>
    %594 = arith.divf %592, %593 : vector<2x128xf32>
    %595 = vector.extract_strided_slice %588 {offsets = [0, 128], sizes = [2, 128], strides = [1, 1]} : vector<2x512xf32> to vector<2x128xf32>
    %596 = arith.negf %595 : vector<2x128xf32>
    %597 = math.exp %596 : vector<2x128xf32>
    %cst_216 = arith.constant 1.000000e+00 : f32
    %598 = vector.broadcast %cst_216 : f32 to vector<2x128xf32>
    %599 = arith.addf %598, %597 : vector<2x128xf32>
    %600 = arith.divf %598, %599 : vector<2x128xf32>
    %601 = vector.extract_strided_slice %588 {offsets = [0, 256], sizes = [2, 128], strides = [1, 1]} : vector<2x512xf32> to vector<2x128xf32>
    %602 = math.tanh %601 : vector<2x128xf32>
    %603 = vector.extract_strided_slice %588 {offsets = [0, 384], sizes = [2, 128], strides = [1, 1]} : vector<2x512xf32> to vector<2x128xf32>
    %604 = arith.negf %603 : vector<2x128xf32>
    %605 = math.exp %604 : vector<2x128xf32>
    %cst_217 = arith.constant 1.000000e+00 : f32
    %606 = vector.broadcast %cst_217 : f32 to vector<2x128xf32>
    %607 = arith.addf %606, %605 : vector<2x128xf32>
    %608 = arith.divf %606, %607 : vector<2x128xf32>
    %609 = arith.mulf %600, %582 : vector<2x128xf32>
    %610 = arith.mulf %594, %602 : vector<2x128xf32>
    %611 = arith.addf %609, %610 : vector<2x128xf32>
    %612 = math.tanh %611 : vector<2x128xf32>
    %613 = arith.mulf %608, %612 : vector<2x128xf32>
    %c0_218 = arith.constant 0 : index
    %c2_219 = arith.constant 2 : index
    %c0_220 = arith.constant 0 : index
    %614 = vector.load %arg6[%c0_218, %c2_219, %c0_220] : memref<2x8x512xf32, #tpu.memory_space<vmem>>, vector<2x1x512xf32>
    %615 = vector.shape_cast %614 : vector<2x1x512xf32> to vector<2x512xf32>
    %cst_221 = arith.constant dense<0.000000e+00> : vector<2x512xf32>
    %616 = tpu.matmul %613, %553, %cst_221 {dimension_numbers = #tpu.dot_dimension_numbers<[1], [0], [0], [1], [0, 0, 1, 1], [], []>} : vector<2x128xf32>, vector<128x512xf32>, vector<2x512xf32> -> vector<2x512xf32>
    %617 = arith.addf %615, %616 : vector<2x512xf32>
    %618 = vector.extract_strided_slice %617 {offsets = [0, 0], sizes = [2, 128], strides = [1, 1]} : vector<2x512xf32> to vector<2x128xf32>
    %619 = arith.negf %618 : vector<2x128xf32>
    %620 = math.exp %619 : vector<2x128xf32>
    %cst_222 = arith.constant 1.000000e+00 : f32
    %621 = vector.broadcast %cst_222 : f32 to vector<2x128xf32>
    %622 = arith.addf %621, %620 : vector<2x128xf32>
    %623 = arith.divf %621, %622 : vector<2x128xf32>
    %624 = vector.extract_strided_slice %617 {offsets = [0, 128], sizes = [2, 128], strides = [1, 1]} : vector<2x512xf32> to vector<2x128xf32>
    %625 = arith.negf %624 : vector<2x128xf32>
    %626 = math.exp %625 : vector<2x128xf32>
    %cst_223 = arith.constant 1.000000e+00 : f32
    %627 = vector.broadcast %cst_223 : f32 to vector<2x128xf32>
    %628 = arith.addf %627, %626 : vector<2x128xf32>
    %629 = arith.divf %627, %628 : vector<2x128xf32>
    %630 = vector.extract_strided_slice %617 {offsets = [0, 256], sizes = [2, 128], strides = [1, 1]} : vector<2x512xf32> to vector<2x128xf32>
    %631 = math.tanh %630 : vector<2x128xf32>
    %632 = vector.extract_strided_slice %617 {offsets = [0, 384], sizes = [2, 128], strides = [1, 1]} : vector<2x512xf32> to vector<2x128xf32>
    %633 = arith.negf %632 : vector<2x128xf32>
    %634 = math.exp %633 : vector<2x128xf32>
    %cst_224 = arith.constant 1.000000e+00 : f32
    %635 = vector.broadcast %cst_224 : f32 to vector<2x128xf32>
    %636 = arith.addf %635, %634 : vector<2x128xf32>
    %637 = arith.divf %635, %636 : vector<2x128xf32>
    %638 = arith.mulf %629, %611 : vector<2x128xf32>
    %639 = arith.mulf %623, %631 : vector<2x128xf32>
    %640 = arith.addf %638, %639 : vector<2x128xf32>
    %641 = math.tanh %640 : vector<2x128xf32>
    %642 = arith.mulf %637, %641 : vector<2x128xf32>
    %c0_225 = arith.constant 0 : index
    %c3_226 = arith.constant 3 : index
    %c0_227 = arith.constant 0 : index
    %643 = vector.load %arg6[%c0_225, %c3_226, %c0_227] : memref<2x8x512xf32, #tpu.memory_space<vmem>>, vector<2x1x512xf32>
    %644 = vector.shape_cast %643 : vector<2x1x512xf32> to vector<2x512xf32>
    %cst_228 = arith.constant dense<0.000000e+00> : vector<2x512xf32>
    %645 = tpu.matmul %642, %553, %cst_228 {dimension_numbers = #tpu.dot_dimension_numbers<[1], [0], [0], [1], [0, 0, 1, 1], [], []>} : vector<2x128xf32>, vector<128x512xf32>, vector<2x512xf32> -> vector<2x512xf32>
    %646 = arith.addf %644, %645 : vector<2x512xf32>
    %647 = vector.extract_strided_slice %646 {offsets = [0, 0], sizes = [2, 128], strides = [1, 1]} : vector<2x512xf32> to vector<2x128xf32>
    %648 = arith.negf %647 : vector<2x128xf32>
    %649 = math.exp %648 : vector<2x128xf32>
    %cst_229 = arith.constant 1.000000e+00 : f32
    %650 = vector.broadcast %cst_229 : f32 to vector<2x128xf32>
    %651 = arith.addf %650, %649 : vector<2x128xf32>
    %652 = arith.divf %650, %651 : vector<2x128xf32>
    %653 = vector.extract_strided_slice %646 {offsets = [0, 128], sizes = [2, 128], strides = [1, 1]} : vector<2x512xf32> to vector<2x128xf32>
    %654 = arith.negf %653 : vector<2x128xf32>
    %655 = math.exp %654 : vector<2x128xf32>
    %cst_230 = arith.constant 1.000000e+00 : f32
    %656 = vector.broadcast %cst_230 : f32 to vector<2x128xf32>
    %657 = arith.addf %656, %655 : vector<2x128xf32>
    %658 = arith.divf %656, %657 : vector<2x128xf32>
    %659 = vector.extract_strided_slice %646 {offsets = [0, 256], sizes = [2, 128], strides = [1, 1]} : vector<2x512xf32> to vector<2x128xf32>
    %660 = math.tanh %659 : vector<2x128xf32>
    %661 = vector.extract_strided_slice %646 {offsets = [0, 384], sizes = [2, 128], strides = [1, 1]} : vector<2x512xf32> to vector<2x128xf32>
    %662 = arith.negf %661 : vector<2x128xf32>
    %663 = math.exp %662 : vector<2x128xf32>
    %cst_231 = arith.constant 1.000000e+00 : f32
    %664 = vector.broadcast %cst_231 : f32 to vector<2x128xf32>
    %665 = arith.addf %664, %663 : vector<2x128xf32>
    %666 = arith.divf %664, %665 : vector<2x128xf32>
    %667 = arith.mulf %658, %640 : vector<2x128xf32>
    %668 = arith.mulf %652, %660 : vector<2x128xf32>
    %669 = arith.addf %667, %668 : vector<2x128xf32>
    %670 = math.tanh %669 : vector<2x128xf32>
    %671 = arith.mulf %666, %670 : vector<2x128xf32>
    %c0_232 = arith.constant 0 : index
    %c4_233 = arith.constant 4 : index
    %c0_234 = arith.constant 0 : index
    %672 = vector.load %arg6[%c0_232, %c4_233, %c0_234] : memref<2x8x512xf32, #tpu.memory_space<vmem>>, vector<2x1x512xf32>
    %673 = vector.shape_cast %672 : vector<2x1x512xf32> to vector<2x512xf32>
    %cst_235 = arith.constant dense<0.000000e+00> : vector<2x512xf32>
    %674 = tpu.matmul %671, %553, %cst_235 {dimension_numbers = #tpu.dot_dimension_numbers<[1], [0], [0], [1], [0, 0, 1, 1], [], []>} : vector<2x128xf32>, vector<128x512xf32>, vector<2x512xf32> -> vector<2x512xf32>
    %675 = arith.addf %673, %674 : vector<2x512xf32>
    %676 = vector.extract_strided_slice %675 {offsets = [0, 0], sizes = [2, 128], strides = [1, 1]} : vector<2x512xf32> to vector<2x128xf32>
    %677 = arith.negf %676 : vector<2x128xf32>
    %678 = math.exp %677 : vector<2x128xf32>
    %cst_236 = arith.constant 1.000000e+00 : f32
    %679 = vector.broadcast %cst_236 : f32 to vector<2x128xf32>
    %680 = arith.addf %679, %678 : vector<2x128xf32>
    %681 = arith.divf %679, %680 : vector<2x128xf32>
    %682 = vector.extract_strided_slice %675 {offsets = [0, 128], sizes = [2, 128], strides = [1, 1]} : vector<2x512xf32> to vector<2x128xf32>
    %683 = arith.negf %682 : vector<2x128xf32>
    %684 = math.exp %683 : vector<2x128xf32>
    %cst_237 = arith.constant 1.000000e+00 : f32
    %685 = vector.broadcast %cst_237 : f32 to vector<2x128xf32>
    %686 = arith.addf %685, %684 : vector<2x128xf32>
    %687 = arith.divf %685, %686 : vector<2x128xf32>
    %688 = vector.extract_strided_slice %675 {offsets = [0, 256], sizes = [2, 128], strides = [1, 1]} : vector<2x512xf32> to vector<2x128xf32>
    %689 = math.tanh %688 : vector<2x128xf32>
    %690 = vector.extract_strided_slice %675 {offsets = [0, 384], sizes = [2, 128], strides = [1, 1]} : vector<2x512xf32> to vector<2x128xf32>
    %691 = arith.negf %690 : vector<2x128xf32>
    %692 = math.exp %691 : vector<2x128xf32>
    %cst_238 = arith.constant 1.000000e+00 : f32
    %693 = vector.broadcast %cst_238 : f32 to vector<2x128xf32>
    %694 = arith.addf %693, %692 : vector<2x128xf32>
    %695 = arith.divf %693, %694 : vector<2x128xf32>
    %696 = arith.mulf %687, %669 : vector<2x128xf32>
    %697 = arith.mulf %681, %689 : vector<2x128xf32>
    %698 = arith.addf %696, %697 : vector<2x128xf32>
    %699 = math.tanh %698 : vector<2x128xf32>
    %700 = arith.mulf %695, %699 : vector<2x128xf32>
    %c0_239 = arith.constant 0 : index
    %c5_240 = arith.constant 5 : index
    %c0_241 = arith.constant 0 : index
    %701 = vector.load %arg6[%c0_239, %c5_240, %c0_241] : memref<2x8x512xf32, #tpu.memory_space<vmem>>, vector<2x1x512xf32>
    %702 = vector.shape_cast %701 : vector<2x1x512xf32> to vector<2x512xf32>
    %cst_242 = arith.constant dense<0.000000e+00> : vector<2x512xf32>
    %703 = tpu.matmul %700, %553, %cst_242 {dimension_numbers = #tpu.dot_dimension_numbers<[1], [0], [0], [1], [0, 0, 1, 1], [], []>} : vector<2x128xf32>, vector<128x512xf32>, vector<2x512xf32> -> vector<2x512xf32>
    %704 = arith.addf %702, %703 : vector<2x512xf32>
    %705 = vector.extract_strided_slice %704 {offsets = [0, 0], sizes = [2, 128], strides = [1, 1]} : vector<2x512xf32> to vector<2x128xf32>
    %706 = arith.negf %705 : vector<2x128xf32>
    %707 = math.exp %706 : vector<2x128xf32>
    %cst_243 = arith.constant 1.000000e+00 : f32
    %708 = vector.broadcast %cst_243 : f32 to vector<2x128xf32>
    %709 = arith.addf %708, %707 : vector<2x128xf32>
    %710 = arith.divf %708, %709 : vector<2x128xf32>
    %711 = vector.extract_strided_slice %704 {offsets = [0, 128], sizes = [2, 128], strides = [1, 1]} : vector<2x512xf32> to vector<2x128xf32>
    %712 = arith.negf %711 : vector<2x128xf32>
    %713 = math.exp %712 : vector<2x128xf32>
    %cst_244 = arith.constant 1.000000e+00 : f32
    %714 = vector.broadcast %cst_244 : f32 to vector<2x128xf32>
    %715 = arith.addf %714, %713 : vector<2x128xf32>
    %716 = arith.divf %714, %715 : vector<2x128xf32>
    %717 = vector.extract_strided_slice %704 {offsets = [0, 256], sizes = [2, 128], strides = [1, 1]} : vector<2x512xf32> to vector<2x128xf32>
    %718 = math.tanh %717 : vector<2x128xf32>
    %719 = vector.extract_strided_slice %704 {offsets = [0, 384], sizes = [2, 128], strides = [1, 1]} : vector<2x512xf32> to vector<2x128xf32>
    %720 = arith.negf %719 : vector<2x128xf32>
    %721 = math.exp %720 : vector<2x128xf32>
    %cst_245 = arith.constant 1.000000e+00 : f32
    %722 = vector.broadcast %cst_245 : f32 to vector<2x128xf32>
    %723 = arith.addf %722, %721 : vector<2x128xf32>
    %724 = arith.divf %722, %723 : vector<2x128xf32>
    %725 = arith.mulf %716, %698 : vector<2x128xf32>
    %726 = arith.mulf %710, %718 : vector<2x128xf32>
    %727 = arith.addf %725, %726 : vector<2x128xf32>
    %728 = math.tanh %727 : vector<2x128xf32>
    %729 = arith.mulf %724, %728 : vector<2x128xf32>
    %c0_246 = arith.constant 0 : index
    %c6_247 = arith.constant 6 : index
    %c0_248 = arith.constant 0 : index
    %730 = vector.load %arg6[%c0_246, %c6_247, %c0_248] : memref<2x8x512xf32, #tpu.memory_space<vmem>>, vector<2x1x512xf32>
    %731 = vector.shape_cast %730 : vector<2x1x512xf32> to vector<2x512xf32>
    %cst_249 = arith.constant dense<0.000000e+00> : vector<2x512xf32>
    %732 = tpu.matmul %729, %553, %cst_249 {dimension_numbers = #tpu.dot_dimension_numbers<[1], [0], [0], [1], [0, 0, 1, 1], [], []>} : vector<2x128xf32>, vector<128x512xf32>, vector<2x512xf32> -> vector<2x512xf32>
    %733 = arith.addf %731, %732 : vector<2x512xf32>
    %734 = vector.extract_strided_slice %733 {offsets = [0, 0], sizes = [2, 128], strides = [1, 1]} : vector<2x512xf32> to vector<2x128xf32>
    %735 = arith.negf %734 : vector<2x128xf32>
    %736 = math.exp %735 : vector<2x128xf32>
    %cst_250 = arith.constant 1.000000e+00 : f32
    %737 = vector.broadcast %cst_250 : f32 to vector<2x128xf32>
    %738 = arith.addf %737, %736 : vector<2x128xf32>
    %739 = arith.divf %737, %738 : vector<2x128xf32>
    %740 = vector.extract_strided_slice %733 {offsets = [0, 128], sizes = [2, 128], strides = [1, 1]} : vector<2x512xf32> to vector<2x128xf32>
    %741 = arith.negf %740 : vector<2x128xf32>
    %742 = math.exp %741 : vector<2x128xf32>
    %cst_251 = arith.constant 1.000000e+00 : f32
    %743 = vector.broadcast %cst_251 : f32 to vector<2x128xf32>
    %744 = arith.addf %743, %742 : vector<2x128xf32>
    %745 = arith.divf %743, %744 : vector<2x128xf32>
    %746 = vector.extract_strided_slice %733 {offsets = [0, 256], sizes = [2, 128], strides = [1, 1]} : vector<2x512xf32> to vector<2x128xf32>
    %747 = math.tanh %746 : vector<2x128xf32>
    %748 = vector.extract_strided_slice %733 {offsets = [0, 384], sizes = [2, 128], strides = [1, 1]} : vector<2x512xf32> to vector<2x128xf32>
    %749 = arith.negf %748 : vector<2x128xf32>
    %750 = math.exp %749 : vector<2x128xf32>
    %cst_252 = arith.constant 1.000000e+00 : f32
    %751 = vector.broadcast %cst_252 : f32 to vector<2x128xf32>
    %752 = arith.addf %751, %750 : vector<2x128xf32>
    %753 = arith.divf %751, %752 : vector<2x128xf32>
    %754 = arith.mulf %745, %727 : vector<2x128xf32>
    %755 = arith.mulf %739, %747 : vector<2x128xf32>
    %756 = arith.addf %754, %755 : vector<2x128xf32>
    %757 = math.tanh %756 : vector<2x128xf32>
    %758 = arith.mulf %753, %757 : vector<2x128xf32>
    %c0_253 = arith.constant 0 : index
    %c7_254 = arith.constant 7 : index
    %c0_255 = arith.constant 0 : index
    %759 = vector.load %arg6[%c0_253, %c7_254, %c0_255] : memref<2x8x512xf32, #tpu.memory_space<vmem>>, vector<2x1x512xf32>
    %760 = vector.shape_cast %759 : vector<2x1x512xf32> to vector<2x512xf32>
    %cst_256 = arith.constant dense<0.000000e+00> : vector<2x512xf32>
    %761 = tpu.matmul %758, %553, %cst_256 {dimension_numbers = #tpu.dot_dimension_numbers<[1], [0], [0], [1], [0, 0, 1, 1], [], []>} : vector<2x128xf32>, vector<128x512xf32>, vector<2x512xf32> -> vector<2x512xf32>
    %762 = arith.addf %760, %761 : vector<2x512xf32>
    %763 = vector.extract_strided_slice %762 {offsets = [0, 0], sizes = [2, 128], strides = [1, 1]} : vector<2x512xf32> to vector<2x128xf32>
    %764 = arith.negf %763 : vector<2x128xf32>
    %765 = math.exp %764 : vector<2x128xf32>
    %cst_257 = arith.constant 1.000000e+00 : f32
    %766 = vector.broadcast %cst_257 : f32 to vector<2x128xf32>
    %767 = arith.addf %766, %765 : vector<2x128xf32>
    %768 = arith.divf %766, %767 : vector<2x128xf32>
    %769 = vector.extract_strided_slice %762 {offsets = [0, 128], sizes = [2, 128], strides = [1, 1]} : vector<2x512xf32> to vector<2x128xf32>
    %770 = arith.negf %769 : vector<2x128xf32>
    %771 = math.exp %770 : vector<2x128xf32>
    %cst_258 = arith.constant 1.000000e+00 : f32
    %772 = vector.broadcast %cst_258 : f32 to vector<2x128xf32>
    %773 = arith.addf %772, %771 : vector<2x128xf32>
    %774 = arith.divf %772, %773 : vector<2x128xf32>
    %775 = vector.extract_strided_slice %762 {offsets = [0, 256], sizes = [2, 128], strides = [1, 1]} : vector<2x512xf32> to vector<2x128xf32>
    %776 = math.tanh %775 : vector<2x128xf32>
    %777 = vector.extract_strided_slice %762 {offsets = [0, 384], sizes = [2, 128], strides = [1, 1]} : vector<2x512xf32> to vector<2x128xf32>
    %778 = arith.negf %777 : vector<2x128xf32>
    %779 = math.exp %778 : vector<2x128xf32>
    %cst_259 = arith.constant 1.000000e+00 : f32
    %780 = vector.broadcast %cst_259 : f32 to vector<2x128xf32>
    %781 = arith.addf %780, %779 : vector<2x128xf32>
    %782 = arith.divf %780, %781 : vector<2x128xf32>
    %783 = arith.mulf %774, %756 : vector<2x128xf32>
    %784 = arith.mulf %768, %776 : vector<2x128xf32>
    %785 = arith.addf %783, %784 : vector<2x128xf32>
    %786 = math.tanh %785 : vector<2x128xf32>
    %787 = arith.mulf %782, %786 : vector<2x128xf32>
    %788 = vector.extract_strided_slice %787 {offsets = [0, 0], sizes = [2, 23], strides = [1, 1]} : vector<2x128xf32> to vector<2x23xf32>
    %c0_260 = arith.constant 0 : index
    %c0_261 = arith.constant 0 : index
    %789 = vector.load %arg5[%c0_260, %c0_261] : memref<2x23xf32, #tpu.memory_space<vmem>>, vector<2x23xf32>
    tpu.vector_store %arg5[%c0_260, %c0_261], %788 {strides = array<i32>} : memref<2x23xf32, #tpu.memory_space<vmem>>, vector<2x23xf32>,
    return
  }
}

</mosaic_0001>

<llo_original>
// kernel: lstm_forward.1
$region0: #{lstm_forward.1}
  #allocation0 [shape = 'u32[]', space=smem, size = 0x4, offset = 0x4, fixed_abs, tag = 'smem constant byte address 0x4 - core index']
  #allocation1 [shape = 'u32[144,128]{1,0:T(1,128)}', space=vmem, size = 0x12000, scoped, tag = 'internal scratch']
  #allocation2 [shape = 'f32[2,8,512]{2,1,0:T(8,128)}', space=vmem, size = 0x8000, scoped, tag = 'scratch operand']
  #allocation3 [shape = 'f32[2,8,128]{2,1,0:T(8,128)}', space=vmem, size = 0x2000, scoped, tag = 'scratch operand']
  %s0 = inlined_call_operand.vmem [shape: f32[2,8,138], index: 0, kind: input, shape index: {}]
  %s1 = inlined_call_operand.vmem [shape: f32[138,512], index: 1, kind: input, shape index: {}]
  %s2 = inlined_call_operand.vmem [shape: f32[2,128,512], index: 2, kind: input, shape index: {}]
  %s3 = inlined_call_operand.vmem [shape: f32[3,128,512], index: 3, kind: input, shape index: {}]
  %s4 = inlined_call_operand.vmem [shape: f32[3,1,512], index: 4, kind: input, shape index: {}]
  %s5 = inlined_call_operand.hbm [shape: f32[2,23], index: 5, kind: output, shape index: {}]
  %s6 = sld [smem:[#allocation0]]
  $region30: #{lstm_forward.1} parent=0
    _
  %s8 = ssub.s32 1, %s6
  %s9 = scalar_select 0, %s8, %s6
  $region1: #{lstm_forward.1} parent=0
    #allocation4 [shape = 'u8[1024]{0}', space=vmem, size = 0x400, scoped, tag = 'output window, operand 0, single buffered']
    #allocation5 [shape = 's32[1]{0}', space=sflag, size = 0x4, scoped, tag = 'scoped memory for lstm_forward.1']
    %10 = vsyncpa [#allocation5], 0
    // Predicated region
    $region2: #{lstm_forward.1} parent=1 // pred_check
      _
    $region3: #{lstm_forward.1} parent=1 // pred_check_branch
      %12 = sbr.rel (0) target = $region5
    $region4: #{lstm_forward.1} parent=1 // pred_region
      _
    $region5: #{lstm_forward.1} parent=1 // pred_fallthru
      _
    // Predicated region
    $region6: #{lstm_forward.1} parent=1 // pred_check
      _
    $region7: #{lstm_forward.1} parent=1 // pred_check_branch
      %14 = sbr.rel (0) target = $region9
    $region8: #{lstm_forward.1} parent=1 // pred_region
      _
    $region9: #{lstm_forward.1} parent=1 // pred_fallthru
      _
    // Predicated region
    $region10: #{lstm_forward.1} parent=1 // pred_check
      _
    $region11: #{lstm_forward.1} parent=1 // pred_check_branch
      %16 = sbr.rel (0) target = $region13
    $region12: #{lstm_forward.1} parent=1 // pred_region
      _
    $region13: #{lstm_forward.1} parent=1 // pred_fallthru
      _
    // Predicated region
    $region14: #{lstm_forward.1} parent=1 // pred_check
      _
    $region15: #{lstm_forward.1} parent=1 // pred_check_branch
      %18 = sbr.rel (0) target = $region17
    $region16: #{lstm_forward.1} parent=1 // pred_region
      _
    $region17: #{lstm_forward.1} parent=1 // pred_fallthru
      _
    // Predicated region
    $region18: #{lstm_forward.1} parent=1 // pred_check
      _
    $region19: #{lstm_forward.1} parent=1 // pred_check_branch
      %20 = sbr.rel (0) target = $region21
    $region20: #{lstm_forward.1} parent=1 // pred_region
      _
    $region21: #{lstm_forward.1} parent=1 // pred_fallthru
      _
    %v21 = vld [vmem:[%s0] sm:$0xff]
    %v22 = vld [vmem:[%s0 + $0x8] sm:$0xff]
    %v23 = vld [vmem:[%s0 + $0x10] sm:$0xff]
    %v24 = vld [vmem:[%s0 + $0x18] sm:$0xff]
    %v25 = vld [vmem:[%s1] sm:$0xff]
    %v26 = vld [vmem:[%s1 + $0x8] sm:$0xff]
    %v27 = vld [vmem:[%s1 + $0x10] sm:$0xff]
    %v28 = vld [vmem:[%s1 + $0x18] sm:$0xff]
    %v29 = vld [vmem:[%s1 + $0x20] sm:$0xff]
    %v30 = vld [vmem:[%s1 + $0x28] sm:$0xff]
    %v31 = vld [vmem:[%s1 + $0x30] sm:$0xff]
    %v32 = vld [vmem:[%s1 + $0x38] sm:$0xff]
    %v33 = vld [vmem:[%s1 + $0x40] sm:$0xff]
    %v34 = vld [vmem:[%s1 + $0x48] sm:$0xff]
    %v35 = vld [vmem:[%s1 + $0x50] sm:$0xff]
    %v36 = vld [vmem:[%s1 + $0x58] sm:$0xff]
    %v37 = vld [vmem:[%s1 + $0x60] sm:$0xff]
    %v38 = vld [vmem:[%s1 + $0x68] sm:$0xff]
    %v39 = vld [vmem:[%s1 + $0x70] sm:$0xff]
    %v40 = vld [vmem:[%s1 + $0x78] sm:$0xff]
    %v41 = vld [vmem:[%s1 + $0x80] sm:$0xff]
    %v42 = vld [vmem:[%s1 + $0x88] sm:$0xff]
    %v43 = vld [vmem:[%s1 + $0x90] sm:$0xff]
    %v44 = vld [vmem:[%s1 + $0x98] sm:$0xff]
    %v45 = vld [vmem:[%s1 + $0xa0] sm:$0xff]
    %v46 = vld [vmem:[%s1 + $0xa8] sm:$0xff]
    %v47 = vld [vmem:[%s1 + $0xb0] sm:$0xff]
    %v48 = vld [vmem:[%s1 + $0xb8] sm:$0xff]
    %v49 = vld [vmem:[%s1 + $0xc0] sm:$0xff]
    %v50 = vld [vmem:[%s1 + $0xc8] sm:$0xff]
    %v51 = vld [vmem:[%s1 + $0xd0] sm:$0xff]
    %v52 = vld [vmem:[%s1 + $0xd8] sm:$0xff]
    %v53 = vld [vmem:[%s1 + $0xe0] sm:$0xff]
    %v54 = vld [vmem:[%s1 + $0xe8] sm:$0xff]
    %v55 = vld [vmem:[%s1 + $0xf0] sm:$0xff]
    %v56 = vld [vmem:[%s1 + $0xf8] sm:$0xff]
    %v57 = vld [vmem:[%s1 + $0x100] sm:$0xff]
    %v58 = vld [vmem:[%s1 + $0x108] sm:$0xff]
    %v59 = vld [vmem:[%s1 + $0x110] sm:$0xff]
    %v60 = vld [vmem:[%s1 + $0x118] sm:$0xff]
    %v61 = vld [vmem:[%s1 + $0x120] sm:$0xff]
    %v62 = vld [vmem:[%s1 + $0x128] sm:$0xff]
    %v63 = vld [vmem:[%s1 + $0x130] sm:$0xff]
    %v64 = vld [vmem:[%s1 + $0x138] sm:$0xff]
    %v65 = vld [vmem:[%s1 + $0x140] sm:$0xff]
    %v66 = vld [vmem:[%s1 + $0x148] sm:$0xff]
    %v67 = vld [vmem:[%s1 + $0x150] sm:$0xff]
    %v68 = vld [vmem:[%s1 + $0x158] sm:$0xff]
    %v69 = vld [vmem:[%s1 + $0x160] sm:$0xff]
    %v70 = vld [vmem:[%s1 + $0x168] sm:$0xff]
    %v71 = vld [vmem:[%s1 + $0x170] sm:$0xff]
    %v72 = vld [vmem:[%s1 + $0x178] sm:$0xff]
    %v73 = vld [vmem:[%s1 + $0x180] sm:$0xff]
    %v74 = vld [vmem:[%s1 + $0x188] sm:$0xff]
    %v75 = vld [vmem:[%s1 + $0x190] sm:$0xff]
    %v76 = vld [vmem:[%s1 + $0x198] sm:$0xff]
    %v77 = vld [vmem:[%s1 + $0x1a0] sm:$0xff]
    %v78 = vld [vmem:[%s1 + $0x1a8] sm:$0xff]
    %v79 = vld [vmem:[%s1 + $0x1b0] sm:$0xff]
    %v80 = vld [vmem:[%s1 + $0x1b8] sm:$0xff]
    %v81 = vld [vmem:[%s1 + $0x1c0] sm:$0xff]
    %v82 = vld [vmem:[%s1 + $0x1c8] sm:$0xff]
    %v83 = vld [vmem:[%s1 + $0x1d0] sm:$0xff]
    %v84 = vld [vmem:[%s1 + $0x1d8] sm:$0xff]
    %v85 = vld [vmem:[%s1 + $0x1e0] sm:$0xff]
    %v86 = vld [vmem:[%s1 + $0x1e8] sm:$0xff]
    %v87 = vld [vmem:[%s1 + $0x1f0] sm:$0xff]
    %v88 = vld [vmem:[%s1 + $0x1f8] sm:$0xff]
    %v89 = vld [vmem:[%s1 + $0x200] sm:$0xff]
    %v90 = vld [vmem:[%s1 + $0x208] sm:$0xff]
    %v91 = vld [vmem:[%s1 + $0x210] sm:$0xff]
    %v92 = vld [vmem:[%s1 + $0x218] sm:$0xff]
    %v93 = vld [vmem:[%s1 + $0x220] sm:$0x3]
    %v94 = vld [vmem:[%s1 + $0x228] sm:$0x3]
    %v95 = vld [vmem:[%s1 + $0x230] sm:$0x3]
    %v96 = vld [vmem:[%s1 + $0x238] sm:$0x3]
    %v97 = vld [vmem:[%s4] sm:$0xf]
    %v99 = vlaneseq
    %v100 = vshrl.u32 %v99, 7
    %v101 = vsub.s32 0, %v100
    %v102 = vrot.slane %v97, %v101
    %v103 = vlaneseq
    %v104 = vshrl.u32 %v103, 7
    %v105 = vsub.s32 1, %v104
    %v106 = vrot.slane %v97, %v105
    %v107 = vlaneseq
    %v108 = vshrl.u32 %v107, 7
    %v109 = vsub.s32 2, %v108
    %v110 = vrot.slane %v97, %v109
    %v111 = vlaneseq
    %v112 = vshrl.u32 %v111, 7
    %v113 = vsub.s32 3, %v112
    %v114 = vrot.slane %v97, %v113
    %vm119 = vcmask 80896
    %v121 = vsel %vm119, %v22, 0
    %v124 = vsel %vm119, %v24, 0
    %vm126 = vcmask 1041408
    %v128 = vsel %vm126, %v93, 0
    %v131 = vsel %vm126, %v94, 0
    %v134 = vsel %vm126, %v95, 0
    %v137 = vsel %vm126, %v96, 0
    %139 = vmatprep.subr.mxu0 %v86
    %140 = vmatpush1.msra.mxu0 %v85
    %141 = vmatprep.subr.mxu0 %v82
    %142 = vmatpush1.msra.mxu0 %v81
    %143 = vmatprep.subr.mxu0 %v78
    %144 = vmatpush1.msra.mxu0 %v77
    %145 = vmatprep.subr.mxu0 %v74
    %146 = vmatpush1.msra.mxu0 %v73
    %147 = vmatprep.subr.mxu0 %v70
    %148 = vmatpush1.msra.mxu0 %v69
    %149 = vmatprep.subr.mxu0 %v66
    %150 = vmatpush1.msra.mxu0 %v65
    %151 = vmatprep.subr.mxu0 %v62
    %152 = vmatpush1.msra.mxu0 %v61
    %153 = vmatprep.subr.mxu0 %v58
    %154 = vmatpush1.msra.mxu0 %v57
    %155 = vmatprep.subr.mxu0 %v54
    %156 = vmatpush1.msra.mxu0 %v53
    %157 = vmatprep.subr.mxu0 %v50
    %158 = vmatpush1.msra.mxu0 %v49
    %159 = vmatprep.subr.mxu0 %v46
    %160 = vmatpush1.msra.mxu0 %v45
    %161 = vmatprep.subr.mxu0 %v42
    %162 = vmatpush1.msra.mxu0 %v41
    %163 = vmatprep.subr.mxu0 %v38
    %164 = vmatpush1.msra.mxu0 %v37
    %165 = vmatprep.subr.mxu0 %v34
    %166 = vmatpush1.msra.mxu0 %v33
    %167 = vmatprep.subr.mxu0 %v30
    %168 = vmatpush1.msra.mxu0 %v29
    %169 = vmatprep.subr.mxu0 %v26
    %170 = vmatpush1.msra.mxu0 %v25
    %171 = vmatprep.subr.mxu0 0.0
    %172 = vmatpush2.msra.mxu0 0.0
    %173 = vmatprep.subr.mxu0 0.0
    %174 = vmatpush2.msra.mxu0 0.0
    %175 = vmatprep.subr.mxu0 0.0
    %176 = vmatpush2.msra.mxu0 0.0
    %177 = vmatprep.subr.mxu0 0.0
    %178 = vmatpush2.msra.mxu0 0.0
    %179 = vmatprep.subr.mxu0 0.0
    %180 = vmatpush2.msra.mxu0 0.0
    %181 = vmatprep.subr.mxu0 0.0
    %182 = vmatpush2.msra.mxu0 0.0
    %183 = vmatprep.subr.mxu0 0.0
    %184 = vmatpush2.msra.mxu0 0.0
    %185 = vmatprep.subr.mxu0 0.0
    %186 = vmatpush2.msra.mxu0 0.0
    %187 = vmatprep.subr.mxu0 0.0
    %188 = vmatpush2.msra.mxu0 0.0
    %189 = vmatprep.subr.mxu0 0.0
    %190 = vmatpush2.msra.mxu0 0.0
    %191 = vmatprep.subr.mxu0 0.0
    %192 = vmatpush2.msra.mxu0 0.0
    %193 = vmatprep.subr.mxu0 0.0
    %194 = vmatpush2.msra.mxu0 0.0
    %195 = vmatprep.subr.mxu0 0.0
    %196 = vmatpush2.msra.mxu0 0.0
    %197 = vmatprep.subr.mxu0 0.0
    %198 = vmatpush2.msra.mxu0 0.0
    %199 = vmatprep.subr.mxu0 %v131
    %200 = vmatpush2.msra.mxu0 %v128
    %201 = vmatprep.subr.mxu0 %v90
    %202 = vmatpush2.msra.mxu0 %v89
    %203 = vmatprep.mubr.f32.mxu0 %v121
    %204 = vmatmul.mubr.f32.gmra.mxu0 %v21
    %v205 = vpop.f32.mrf.mxu0
    %v206 = vadd.f32 %v102, %v205
    %v207 = vpop.f32.mrf.mxu0
    %v208 = vadd.f32 %v106, %v207
    %209 = vmatprep.mubr.f32.mxu0 %v124
    %210 = vmatmul.mubr.f32.gmra.mxu0 %v23
    %v211 = vpop.f32.mrf.mxu0
    %v212 = vadd.f32 %v102, %v211
    %v213 = vpop.f32.mrf.mxu0
    %v214 = vadd.f32 %v106, %v213
    %215 = vdwg.mxu0
    %216 = vmatprep.subr.mxu0 %v88
    %217 = vmatpush1.msra.mxu0 %v87
    %218 = vmatprep.subr.mxu0 %v84
    %219 = vmatpush1.msra.mxu0 %v83
    %220 = vmatprep.subr.mxu0 %v80
    %221 = vmatpush1.msra.mxu0 %v79
    %222 = vmatprep.subr.mxu0 %v76
    %223 = vmatpush1.msra.mxu0 %v75
    %224 = vmatprep.subr.mxu0 %v72
    %225 = vmatpush1.msra.mxu0 %v71
    %226 = vmatprep.subr.mxu0 %v68
    %227 = vmatpush1.msra.mxu0 %v67
    %228 = vmatprep.subr.mxu0 %v64
    %229 = vmatpush1.msra.mxu0 %v63
    %230 = vmatprep.subr.mxu0 %v60
    %231 = vmatpush1.msra.mxu0 %v59
    %232 = vmatprep.subr.mxu0 %v56
    %233 = vmatpush1.msra.mxu0 %v55
    %234 = vmatprep.subr.mxu0 %v52
    %235 = vmatpush1.msra.mxu0 %v51
    %236 = vmatprep.subr.mxu0 %v48
    %237 = vmatpush1.msra.mxu0 %v47
    %238 = vmatprep.subr.mxu0 %v44
    %239 = vmatpush1.msra.mxu0 %v43
    %240 = vmatprep.subr.mxu0 %v40
    %241 = vmatpush1.msra.mxu0 %v39
    %242 = vmatprep.subr.mxu0 %v36
    %243 = vmatpush1.msra.mxu0 %v35
    %244 = vmatprep.subr.mxu0 %v32
    %245 = vmatpush1.msra.mxu0 %v31
    %246 = vmatprep.subr.mxu0 %v28
    %247 = vmatpush1.msra.mxu0 %v27
    %248 = vmatprep.subr.mxu0 0.0
    %249 = vmatpush2.msra.mxu0 0.0
    %250 = vmatprep.subr.mxu0 0.0
    %251 = vmatpush2.msra.mxu0 0.0
    %252 = vmatprep.subr.mxu0 0.0
    %253 = vmatpush2.msra.mxu0 0.0
    %254 = vmatprep.subr.mxu0 0.0
    %255 = vmatpush2.msra.mxu0 0.0
    %256 = vmatprep.subr.mxu0 0.0
    %257 = vmatpush2.msra.mxu0 0.0
    %258 = vmatprep.subr.mxu0 0.0
    %259 = vmatpush2.msra.mxu0 0.0
    %260 = vmatprep.subr.mxu0 0.0
    %261 = vmatpush2.msra.mxu0 0.0
    %262 = vmatprep.subr.mxu0 0.0
    %263 = vmatpush2.msra.mxu0 0.0
    %264 = vmatprep.subr.mxu0 0.0
    %265 = vmatpush2.msra.mxu0 0.0
    %266 = vmatprep.subr.mxu0 0.0
    %267 = vmatpush2.msra.mxu0 0.0
    %268 = vmatprep.subr.mxu0 0.0
    %269 = vmatpush2.msra.mxu0 0.0
    %270 = vmatprep.subr.mxu0 0.0
    %271 = vmatpush2.msra.mxu0 0.0
    %272 = vmatprep.subr.mxu0 0.0
    %273 = vmatpush2.msra.mxu0 0.0
    %274 = vmatprep.subr.mxu0 0.0
    %275 = vmatpush2.msra.mxu0 0.0
    %276 = vmatprep.subr.mxu0 %v137
    %277 = vmatpush2.msra.mxu0 %v134
    %278 = vmatprep.subr.mxu0 %v92
    %279 = vmatpush2.msra.mxu0 %v91
    %280 = vmatprep.mubr.f32.mxu0 %v121
    %281 = vmatmul.mubr.f32.gmra.mxu0 %v21
    %v282 = vpop.f32.mrf.mxu0
    %v283 = vadd.f32 %v110, %v282
    %v284 = vpop.f32.mrf.mxu0
    %v285 = vadd.f32 %v114, %v284
    %286 = vmatprep.mubr.f32.mxu0 %v124
    %287 = vmatmul.mubr.f32.gmra.mxu0 %v23
    %v288 = vpop.f32.mrf.mxu0
    %v289 = vadd.f32 %v110, %v288
    %v290 = vpop.f32.mrf.mxu0
    %v291 = vadd.f32 %v114, %v290
    %292 = vdwg.mxu0
    %293 = vst [vmem:[#allocation2] sm:$0xff] %v206
    %294 = vst [vmem:[#allocation2 + $0x8] sm:$0xff] %v208
    %295 = vst [vmem:[#allocation2 + $0x10] sm:$0xff] %v283
    %296 = vst [vmem:[#allocation2 + $0x18] sm:$0xff] %v285
    %297 = vst [vmem:[#allocation2 + $0x20] sm:$0xff] %v212
    %298 = vst [vmem:[#allocation2 + $0x28] sm:$0xff] %v214
    %299 = vst [vmem:[#allocation2 + $0x30] sm:$0xff] %v289
    %300 = vst [vmem:[#allocation2 + $0x38] sm:$0xff] %v291
    %v301 = vld [vmem:[%s3] sm:$0xff]
    %v302 = vld [vmem:[%s3 + $0x8] sm:$0xff]
    %v303 = vld [vmem:[%s3 + $0x10] sm:$0xff]
    %v304 = vld [vmem:[%s3 + $0x18] sm:$0xff]
    %v305 = vld [vmem:[%s3 + $0x20] sm:$0xff]
    %v306 = vld [vmem:[%s3 + $0x28] sm:$0xff]
    %v307 = vld [vmem:[%s3 + $0x30] sm:$0xff]
    %v308 = vld [vmem:[%s3 + $0x38] sm:$0xff]
    %v309 = vld [vmem:[%s3 + $0x40] sm:$0xff]
    %v310 = vld [vmem:[%s3 + $0x48] sm:$0xff]
    %v311 = vld [vmem:[%s3 + $0x50] sm:$0xff]
    %v312 = vld [vmem:[%s3 + $0x58] sm:$0xff]
    %v313 = vld [vmem:[%s3 + $0x60] sm:$0xff]
    %v314 = vld [vmem:[%s3 + $0x68] sm:$0xff]
    %v315 = vld [vmem:[%s3 + $0x70] sm:$0xff]
    %v316 = vld [vmem:[%s3 + $0x78] sm:$0xff]
    %v317 = vld [vmem:[%s3 + $0x80] sm:$0xff]
    %v318 = vld [vmem:[%s3 + $0x88] sm:$0xff]
    %v319 = vld [vmem:[%s3 + $0x90] sm:$0xff]
    %v320 = vld [vmem:[%s3 + $0x98] sm:$0xff]
    %v321 = vld [vmem:[%s3 + $0xa0] sm:$0xff]
    %v322 = vld [vmem:[%s3 + $0xa8] sm:$0xff]
    %v323 = vld [vmem:[%s3 + $0xb0] sm:$0xff]
    %v324 = vld [vmem:[%s3 + $0xb8] sm:$0xff]
    %v325 = vld [vmem:[%s3 + $0xc0] sm:$0xff]
    %v326 = vld [vmem:[%s3 + $0xc8] sm:$0xff]
    %v327 = vld [vmem:[%s3 + $0xd0] sm:$0xff]
    %v328 = vld [vmem:[%s3 + $0xd8] sm:$0xff]
    %v329 = vld [vmem:[%s3 + $0xe0] sm:$0xff]
    %v330 = vld [vmem:[%s3 + $0xe8] sm:$0xff]
    %v331 = vld [vmem:[%s3 + $0xf0] sm:$0xff]
    %v332 = vld [vmem:[%s3 + $0xf8] sm:$0xff]
    %v333 = vld [vmem:[%s3 + $0x100] sm:$0xff]
    %v334 = vld [vmem:[%s3 + $0x108] sm:$0xff]
    %v335 = vld [vmem:[%s3 + $0x110] sm:$0xff]
    %v336 = vld [vmem:[%s3 + $0x118] sm:$0xff]
    %v337 = vld [vmem:[%s3 + $0x120] sm:$0xff]
    %v338 = vld [vmem:[%s3 + $0x128] sm:$0xff]
    %v339 = vld [vmem:[%s3 + $0x130] sm:$0xff]
    %v340 = vld [vmem:[%s3 + $0x138] sm:$0xff]
    %v341 = vld [vmem:[%s3 + $0x140] sm:$0xff]
    %v342 = vld [vmem:[%s3 + $0x148] sm:$0xff]
    %v343 = vld [vmem:[%s3 + $0x150] sm:$0xff]
    %v344 = vld [vmem:[%s3 + $0x158] sm:$0xff]
    %v345 = vld [vmem:[%s3 + $0x160] sm:$0xff]
    %v346 = vld [vmem:[%s3 + $0x168] sm:$0xff]
    %v347 = vld [vmem:[%s3 + $0x170] sm:$0xff]
    %v348 = vld [vmem:[%s3 + $0x178] sm:$0xff]
    %v349 = vld [vmem:[%s3 + $0x180] sm:$0xff]
    %v350 = vld [vmem:[%s3 + $0x188] sm:$0xff]
    %v351 = vld [vmem:[%s3 + $0x190] sm:$0xff]
    %v352 = vld [vmem:[%s3 + $0x198] sm:$0xff]
    %v353 = vld [vmem:[%s3 + $0x1a0] sm:$0xff]
    %v354 = vld [vmem:[%s3 + $0x1a8] sm:$0xff]
    %v355 = vld [vmem:[%s3 + $0x1b0] sm:$0xff]
    %v356 = vld [vmem:[%s3 + $0x1b8] sm:$0xff]
    %v357 = vld [vmem:[%s3 + $0x1c0] sm:$0xff]
    %v358 = vld [vmem:[%s3 + $0x1c8] sm:$0xff]
    %v359 = vld [vmem:[%s3 + $0x1d0] sm:$0xff]
    %v360 = vld [vmem:[%s3 + $0x1d8] sm:$0xff]
    %v361 = vld [vmem:[%s3 + $0x1e0] sm:$0xff]
    %v362 = vld [vmem:[%s3 + $0x1e8] sm:$0xff]
    %v363 = vld [vmem:[%s3 + $0x1f0] sm:$0xff]
    %v364 = vld [vmem:[%s3 + $0x1f8] sm:$0xff]
    %v365 = vld [vmem:[#allocation2] ss:$8 sm:$0xf]
    %s366 = scalar_lea.vmem [#allocation2], 32
    %v367 = vld [vmem:[%s366] ss:$8 sm:$0xf]
    %368 = vmatprep.subr.mxu0 %v362
    %369 = vmatpush1.msra.mxu0 %v361
    %370 = vmatprep.subr.mxu0 %v358
    %371 = vmatpush1.msra.mxu0 %v357
    %372 = vmatprep.subr.mxu0 %v354
    %373 = vmatpush1.msra.mxu0 %v353
    %374 = vmatprep.subr.mxu0 %v350
    %375 = vmatpush1.msra.mxu0 %v349
    %376 = vmatprep.subr.mxu0 %v346
    %377 = vmatpush1.msra.mxu0 %v345
    %378 = vmatprep.subr.mxu0 %v342
    %379 = vmatpush1.msra.mxu0 %v341
    %380 = vmatprep.subr.mxu0 %v338
    %381 = vmatpush1.msra.mxu0 %v337
    %382 = vmatprep.subr.mxu0 %v334
    %383 = vmatpush1.msra.mxu0 %v333
    %384 = vmatprep.subr.mxu0 %v330
    %385 = vmatpush1.msra.mxu0 %v329
    %386 = vmatprep.subr.mxu0 %v326
    %387 = vmatpush1.msra.mxu0 %v325
    %388 = vmatprep.subr.mxu0 %v322
    %389 = vmatpush1.msra.mxu0 %v321
    %390 = vmatprep.subr.mxu0 %v318
    %391 = vmatpush1.msra.mxu0 %v317
    %392 = vmatprep.subr.mxu0 %v314
    %393 = vmatpush1.msra.mxu0 %v313
    %394 = vmatprep.subr.mxu0 %v310
    %395 = vmatpush1.msra.mxu0 %v309
    %396 = vmatprep.subr.mxu0 %v306
    %397 = vmatpush1.msra.mxu0 %v305
    %398 = vmatprep.subr.mxu0 %v302
    %399 = vmatpush1.msra.mxu0 %v301
    %400 = vmatprep.subr.mxu0 0.0
    %401 = vmatpush2.msra.mxu0 0.0
    %402 = vmatprep.subr.mxu0 0.0
    %403 = vmatpush2.msra.mxu0 0.0
    %404 = vmatprep.subr.mxu0 0.0
    %405 = vmatpush2.msra.mxu0 0.0
    %406 = vmatprep.subr.mxu0 0.0
    %407 = vmatpush2.msra.mxu0 0.0
    %408 = vmatprep.subr.mxu0 0.0
    %409 = vmatpush2.msra.mxu0 0.0
    %410 = vmatprep.subr.mxu0 0.0
    %411 = vmatpush2.msra.mxu0 0.0
    %412 = vmatprep.subr.mxu0 0.0
    %413 = vmatpush2.msra.mxu0 0.0
    %414 = vmatprep.subr.mxu0 0.0
    %415 = vmatpush2.msra.mxu0 0.0
    %416 = vmatprep.subr.mxu0 0.0
    %417 = vmatpush2.msra.mxu0 0.0
    %418 = vmatprep.subr.mxu0 0.0
    %419 = vmatpush2.msra.mxu0 0.0
    %420 = vmatprep.subr.mxu0 0.0
    %421 = vmatpush2.msra.mxu0 0.0
    %422 = vmatprep.subr.mxu0 0.0
    %423 = vmatpush2.msra.mxu0 0.0
    %424 = vmatprep.subr.mxu0 0.0
    %425 = vmatpush2.msra.mxu0 0.0
    %426 = vmatprep.subr.mxu0 0.0
    %427 = vmatpush2.msra.mxu0 0.0
    %428 = vmatprep.subr.mxu0 0.0
    %429 = vmatpush2.msra.mxu0 0.0
    %430 = vmatprep.subr.mxu0 0.0
    %431 = vmatpush2.msra.mxu0 0.0
    %432 = vmatprep.mubr.f32.mxu0 0.0
    %433 = vmatmul.mubr.f32.gmra.mxu0 0.0
    %v434 = vpop.f32.mrf.mxu0
    %v435 = vadd.f32 0.0, %v434
    %v436 = vpop.f32.mrf.mxu0
    %v437 = vadd.f32 0.0, %v436
    %438 = vdwg.mxu0
    %439 = vmatprep.subr.mxu0 %v364
    %440 = vmatpush1.msra.mxu0 %v363
    %441 = vmatprep.subr.mxu0 %v360
    %442 = vmatpush1.msra.mxu0 %v359
    %443 = vmatprep.subr.mxu0 %v356
    %444 = vmatpush1.msra.mxu0 %v355
    %445 = vmatprep.subr.mxu0 %v352
    %446 = vmatpush1.msra.mxu0 %v351
    %447 = vmatprep.subr.mxu0 %v348
    %448 = vmatpush1.msra.mxu0 %v347
    %449 = vmatprep.subr.mxu0 %v344
    %450 = vmatpush1.msra.mxu0 %v343
    %451 = vmatprep.subr.mxu0 %v340
    %452 = vmatpush1.msra.mxu0 %v339
    %453 = vmatprep.subr.mxu0 %v336
    %454 = vmatpush1.msra.mxu0 %v335
    %455 = vmatprep.subr.mxu0 %v332
    %456 = vmatpush1.msra.mxu0 %v331
    %457 = vmatprep.subr.mxu0 %v328
    %458 = vmatpush1.msra.mxu0 %v327
    %459 = vmatprep.subr.mxu0 %v324
    %460 = vmatpush1.msra.mxu0 %v323
    %461 = vmatprep.subr.mxu0 %v320
    %462 = vmatpush1.msra.mxu0 %v319
    %463 = vmatprep.subr.mxu0 %v316
    %464 = vmatpush1.msra.mxu0 %v315
    %465 = vmatprep.subr.mxu0 %v312
    %466 = vmatpush1.msra.mxu0 %v311
    %467 = vmatprep.subr.mxu0 %v308
    %468 = vmatpush1.msra.mxu0 %v307
    %469 = vmatprep.subr.mxu0 %v304
    %470 = vmatpush1.msra.mxu0 %v303
    %471 = vmatprep.subr.mxu0 0.0
    %472 = vmatpush2.msra.mxu0 0.0
    %473 = vmatprep.subr.mxu0 0.0
    %474 = vmatpush2.msra.mxu0 0.0
    %475 = vmatprep.subr.mxu0 0.0
    %476 = vmatpush2.msra.mxu0 0.0
    %477 = vmatprep.subr.mxu0 0.0
    %478 = vmatpush2.msra.mxu0 0.0
    %479 = vmatprep.subr.mxu0 0.0
    %480 = vmatpush2.msra.mxu0 0.0
    %481 = vmatprep.subr.mxu0 0.0
    %482 = vmatpush2.msra.mxu0 0.0
    %483 = vmatprep.subr.mxu0 0.0
    %484 = vmatpush2.msra.mxu0 0.0
    %485 = vmatprep.subr.mxu0 0.0
    %486 = vmatpush2.msra.mxu0 0.0
    %487 = vmatprep.subr.mxu0 0.0
    %488 = vmatpush2.msra.mxu0 0.0
    %489 = vmatprep.subr.mxu0 0.0
    %490 = vmatpush2.msra.mxu0 0.0
    %491 = vmatprep.subr.mxu0 0.0
    %492 = vmatpush2.msra.mxu0 0.0
    %493 = vmatprep.subr.mxu0 0.0
    %494 = vmatpush2.msra.mxu0 0.0
    %495 = vmatprep.subr.mxu0 0.0
    %496 = vmatpush2.msra.mxu0 0.0
    %497 = vmatprep.subr.mxu0 0.0
    %498 = vmatpush2.msra.mxu0 0.0
    %499 = vmatprep.subr.mxu0 0.0
    %500 = vmatpush2.msra.mxu0 0.0
    %501 = vmatprep.subr.mxu0 0.0
    %502 = vmatpush2.msra.mxu0 0.0
    %503 = vmatprep.mubr.f32.mxu0 0.0
    %504 = vmatmul.mubr.f32.gmra.mxu0 0.0
    %v505 = vpop.f32.mrf.mxu0
    %v506 = vadd.f32 0.0, %v505
    %v507 = vpop.f32.mrf.mxu0
    %v508 = vadd.f32 0.0, %v507
    %509 = vdwg.mxu0
    %v514 = vcombine.low %v435, %v437
    %v515 = vcombine.low %v506, %v508
    %v517 = vunpack.c.l.s4 1966171168
    %v518 = vunpack.c.0.s8 %v517
    %v519 = vlaneseq
    %v520 = vshrl.u32 %v519, 7
    %v521 = vsub.s32 %v518, %v520
    %v522 = vrot.slane %v514, %v521
    %v524 = vunpack.c.l.s4 1966171168
    %v525 = vunpack.c.0.s8 %v524
    %v526 = vlaneseq
    %v527 = vshrl.u32 %v526, 7
    %v528 = vsub.s32 %v525, %v527
    %v529 = vrot.slane %v515, %v528
    %v530 = vcombine.low %v522, %v529
    %v531 = vcombine.high %v522, %v529
    %v533 = vunpack.c.l.s4 1966171168
    %v534 = vunpack.c.0.s8 %v533
    %v535 = vlaneseq
    %v536 = vshrl.u32 %v535, 7
    %v537 = vsub.s32 %v534, %v536
    %v538 = vrot.slane %v530, %v537
    %v540 = vunpack.c.l.s4 1966171168
    %v541 = vunpack.c.0.s8 %v540
    %v542 = vlaneseq
    %v543 = vshrl.u32 %v542, 7
    %v544 = vsub.s32 %v541, %v543
    %v545 = vrot.slane %v531, %v544
    %v548 = vadd.f32 %v365, %v538
    %v549 = vadd.f32 %v367, %v545
    %v550 = vxor.u32 %v548, 2147483648
    %v551 = vxor.u32 %v549, 2147483648
    %v552 = vmul.f32 %v550, 1.442695
    %v553 = vpow.pop %v552
    %v554 = vmul.f32 %v551, 1.442695
    %v555 = vpow.pop %v554
    %v556 = vadd.f32 %v553, 1.0
    %v557 = vadd.f32 %v555, 1.0
    %v558 = vrcp.pop %v556
    %v559 = vmul.f32 1.0, %v558
    %v560 = vrcp.pop %v557
    %v561 = vmul.f32 1.0, %v560
    %v564 = vrot.slane %v548, 1
    %v565 = vrot.slane %v549, 1
    %v568 = vxor.u32 %v564, 2147483648
    %v569 = vxor.u32 %v565, 2147483648
    %v570 = vmul.f32 %v568, 1.442695
    %v571 = vpow.pop %v570
    %v572 = vmul.f32 %v569, 1.442695
    %v573 = vpow.pop %v572
    %v574 = vadd.f32 %v571, 1.0
    %v575 = vadd.f32 %v573, 1.0
    %v576 = vrcp.pop %v574
    %v577 = vmul.f32 1.0, %v576
    %v578 = vrcp.pop %v575
    %v579 = vmul.f32 1.0, %v578
    %v580 = vrot.slane %v548, 2
    %v581 = vrot.slane %v549, 2
    %v584 = vtanh.pop %v580
    %v585 = vtanh.pop %v581
    %v586 = vrot.slane %v548, 3
    %v587 = vrot.slane %v549, 3
    %v590 = vxor.u32 %v586, 2147483648
    %v591 = vxor.u32 %v587, 2147483648
    %v592 = vmul.f32 %v590, 1.442695
    %v593 = vpow.pop %v592
    %v594 = vmul.f32 %v591, 1.442695
    %v595 = vpow.pop %v594
    %v596 = vadd.f32 %v593, 1.0
    %v597 = vadd.f32 %v595, 1.0
    %v598 = vrcp.pop %v596
    %v599 = vmul.f32 1.0, %v598
    %v600 = vrcp.pop %v597
    %v601 = vmul.f32 1.0, %v600
    %v602 = vmul.f32 %v577, 0.0
    %v603 = vmul.f32 %v579, 0.0
    %v604 = vmul.f32 %v559, %v584
    %v605 = vmul.f32 %v561, %v585
    %v606 = vadd.f32 %v602, %v604
    %v607 = vadd.f32 %v603, %v605
    %v608 = vtanh.pop %v606
    %v609 = vtanh.pop %v607
    %v610 = vmul.f32 %v599, %v608
    %v611 = vmul.f32 %v601, %v609
    %612 = vst [vmem:[#allocation3] sm:$0x1] %v610
    %613 = vst [vmem:[#allocation3 + $0x8] sm:$0x1] %v611
    %s614 = scalar_lea.vmem [#allocation2], 1
    %v615 = vld [vmem:[%s614] ss:$8 sm:$0xf]
    %s616 = scalar_lea.vmem [#allocation2], 33
    %v617 = vld [vmem:[%s616] ss:$8 sm:$0xf]
    %v620 = vcombine.low %v610, %v611
    %v622 = vunpack.c.l.s4 1966171168
    %v623 = vunpack.c.0.s8 %v622
    %v624 = vlaneseq
    %v625 = vshrl.u32 %v624, 7
    %v626 = vsub.s32 %v623, %v625
    %v627 = vrot.slane %v620, %v626
    %v629 = vunpack.c.l.s4 1966171168
    %v630 = vunpack.c.0.s8 %v629
    %v631 = vlaneseq
    %v632 = vshrl.u32 %v631, 7
    %v633 = vsub.s32 %v630, %v632
    %v634 = vrot.slane %v627, %v633
    %636 = vmatprep.subr.mxu0 %v362
    %637 = vmatpush1.msra.mxu0 %v361
    %638 = vmatprep.subr.mxu0 %v358
    %639 = vmatpush1.msra.mxu0 %v357
    %640 = vmatprep.subr.mxu0 %v354
    %641 = vmatpush1.msra.mxu0 %v353
    %642 = vmatprep.subr.mxu0 %v350
    %643 = vmatpush1.msra.mxu0 %v349
    %644 = vmatprep.subr.mxu0 %v346
    %645 = vmatpush1.msra.mxu0 %v345
    %646 = vmatprep.subr.mxu0 %v342
    %647 = vmatpush1.msra.mxu0 %v341
    %648 = vmatprep.subr.mxu0 %v338
    %649 = vmatpush1.msra.mxu0 %v337
    %650 = vmatprep.subr.mxu0 %v334
    %651 = vmatpush1.msra.mxu0 %v333
    %652 = vmatprep.subr.mxu0 %v330
    %653 = vmatpush1.msra.mxu0 %v329
    %654 = vmatprep.subr.mxu0 %v326
    %655 = vmatpush1.msra.mxu0 %v325
    %656 = vmatprep.subr.mxu0 %v322
    %657 = vmatpush1.msra.mxu0 %v321
    %658 = vmatprep.subr.mxu0 %v318
    %659 = vmatpush1.msra.mxu0 %v317
    %660 = vmatprep.subr.mxu0 %v314
    %661 = vmatpush1.msra.mxu0 %v313
    %662 = vmatprep.subr.mxu0 %v310
    %663 = vmatpush1.msra.mxu0 %v309
    %664 = vmatprep.subr.mxu0 %v306
    %665 = vmatpush1.msra.mxu0 %v305
    %666 = vmatprep.subr.mxu0 %v302
    %667 = vmatpush1.msra.mxu0 %v301
    %668 = vmatprep.subr.mxu0 0.0
    %669 = vmatpush2.msra.mxu0 0.0
    %670 = vmatprep.subr.mxu0 0.0
    %671 = vmatpush2.msra.mxu0 0.0
    %672 = vmatprep.subr.mxu0 0.0
    %673 = vmatpush2.msra.mxu0 0.0
    %674 = vmatprep.subr.mxu0 0.0
    %675 = vmatpush2.msra.mxu0 0.0
    %676 = vmatprep.subr.mxu0 0.0
    %677 = vmatpush2.msra.mxu0 0.0
    %678 = vmatprep.subr.mxu0 0.0
    %679 = vmatpush2.msra.mxu0 0.0
    %680 = vmatprep.subr.mxu0 0.0
    %681 = vmatpush2.msra.mxu0 0.0
    %682 = vmatprep.subr.mxu0 0.0
    %683 = vmatpush2.msra.mxu0 0.0
    %684 = vmatprep.subr.mxu0 0.0
    %685 = vmatpush2.msra.mxu0 0.0
    %686 = vmatprep.subr.mxu0 0.0
    %687 = vmatpush2.msra.mxu0 0.0
    %688 = vmatprep.subr.mxu0 0.0
    %689 = vmatpush2.msra.mxu0 0.0
    %690 = vmatprep.subr.mxu0 0.0
    %691 = vmatpush2.msra.mxu0 0.0
    %692 = vmatprep.subr.mxu0 0.0
    %693 = vmatpush2.msra.mxu0 0.0
    %694 = vmatprep.subr.mxu0 0.0
    %695 = vmatpush2.msra.mxu0 0.0
    %696 = vmatprep.subr.mxu0 0.0
    %697 = vmatpush2.msra.mxu0 0.0
    %698 = vmatprep.subr.mxu0 0.0
    %699 = vmatpush2.msra.mxu0 0.0
    %700 = vmatprep.mubr.f32.mxu0 0.0
    %701 = vmatmul.mubr.f32.gmra.mxu0 %v634
    %v702 = vpop.f32.mrf.mxu0
    %v703 = vadd.f32 0.0, %v702
    %v704 = vpop.f32.mrf.mxu0
    %v705 = vadd.f32 0.0, %v704
    %706 = vdwg.mxu0
    %707 = vmatprep.subr.mxu0 %v364
    %708 = vmatpush1.msra.mxu0 %v363
    %709 = vmatprep.subr.mxu0 %v360
    %710 = vmatpush1.msra.mxu0 %v359
    %711 = vmatprep.subr.mxu0 %v356
    %712 = vmatpush1.msra.mxu0 %v355
    %713 = vmatprep.subr.mxu0 %v352
    %714 = vmatpush1.msra.mxu0 %v351
    %715 = vmatprep.subr.mxu0 %v348
    %716 = vmatpush1.msra.mxu0 %v347
    %717 = vmatprep.subr.mxu0 %v344
    %718 = vmatpush1.msra.mxu0 %v343
    %719 = vmatprep.subr.mxu0 %v340
    %720 = vmatpush1.msra.mxu0 %v339
    %721 = vmatprep.subr.mxu0 %v336
    %722 = vmatpush1.msra.mxu0 %v335
    %723 = vmatprep.subr.mxu0 %v332
    %724 = vmatpush1.msra.mxu0 %v331
    %725 = vmatprep.subr.mxu0 %v328
    %726 = vmatpush1.msra.mxu0 %v327
    %727 = vmatprep.subr.mxu0 %v324
    %728 = vmatpush1.msra.mxu0 %v323
    %729 = vmatprep.subr.mxu0 %v320
    %730 = vmatpush1.msra.mxu0 %v319
    %731 = vmatprep.subr.mxu0 %v316
    %732 = vmatpush1.msra.mxu0 %v315
    %733 = vmatprep.subr.mxu0 %v312
    %734 = vmatpush1.msra.mxu0 %v311
    %735 = vmatprep.subr.mxu0 %v308
    %736 = vmatpush1.msra.mxu0 %v307
    %737 = vmatprep.subr.mxu0 %v304
    %738 = vmatpush1.msra.mxu0 %v303
    %739 = vmatprep.subr.mxu0 0.0
    %740 = vmatpush2.msra.mxu0 0.0
    %741 = vmatprep.subr.mxu0 0.0
    %742 = vmatpush2.msra.mxu0 0.0
    %743 = vmatprep.subr.mxu0 0.0
    %744 = vmatpush2.msra.mxu0 0.0
    %745 = vmatprep.subr.mxu0 0.0
    %746 = vmatpush2.msra.mxu0 0.0
    %747 = vmatprep.subr.mxu0 0.0
    %748 = vmatpush2.msra.mxu0 0.0
    %749 = vmatprep.subr.mxu0 0.0
    %750 = vmatpush2.msra.mxu0 0.0
    %751 = vmatprep.subr.mxu0 0.0
    %752 = vmatpush2.msra.mxu0 0.0
    %753 = vmatprep.subr.mxu0 0.0
    %754 = vmatpush2.msra.mxu0 0.0
    %755 = vmatprep.subr.mxu0 0.0
    %756 = vmatpush2.msra.mxu0 0.0
    %757 = vmatprep.subr.mxu0 0.0
    %758 = vmatpush2.msra.mxu0 0.0
    %759 = vmatprep.subr.mxu0 0.0
    %760 = vmatpush2.msra.mxu0 0.0
    %761 = vmatprep.subr.mxu0 0.0
    %762 = vmatpush2.msra.mxu0 0.0
    %763 = vmatprep.subr.mxu0 0.0
    %764 = vmatpush2.msra.mxu0 0.0
    %765 = vmatprep.subr.mxu0 0.0
    %766 = vmatpush2.msra.mxu0 0.0
    %767 = vmatprep.subr.mxu0 0.0
    %768 = vmatpush2.msra.mxu0 0.0
    %769 = vmatprep.subr.mxu0 0.0
    %770 = vmatpush2.msra.mxu0 0.0
    %771 = vmatprep.mubr.f32.mxu0 0.0
    %772 = vmatmul.mubr.f32.gmra.mxu0 %v634
    %v773 = vpop.f32.mrf.mxu0
    %v774 = vadd.f32 0.0, %v773
    %v775 = vpop.f32.mrf.mxu0
    %v776 = vadd.f32 0.0, %v775
    %777 = vdwg.mxu0
    %v782 = vcombine.low %v703, %v705
    %v783 = vcombine.low %v774, %v776
    %v785 = vunpack.c.l.s4 1966171168
    %v786 = vunpack.c.0.s8 %v785
    %v787 = vlaneseq
    %v788 = vshrl.u32 %v787, 7
    %v789 = vsub.s32 %v786, %v788
    %v790 = vrot.slane %v782, %v789
    %v792 = vunpack.c.l.s4 1966171168
    %v793 = vunpack.c.0.s8 %v792
    %v794 = vlaneseq
    %v795 = vshrl.u32 %v794, 7
    %v796 = vsub.s32 %v793, %v795
    %v797 = vrot.slane %v783, %v796
    %v798 = vcombine.low %v790, %v797
    %v799 = vcombine.high %v790, %v797
    %v801 = vunpack.c.l.s4 1966171168
    %v802 = vunpack.c.0.s8 %v801
    %v803 = vlaneseq
    %v804 = vshrl.u32 %v803, 7
    %v805 = vsub.s32 %v802, %v804
    %v806 = vrot.slane %v798, %v805
    %v808 = vunpack.c.l.s4 1966171168
    %v809 = vunpack.c.0.s8 %v808
    %v810 = vlaneseq
    %v811 = vshrl.u32 %v810, 7
    %v812 = vsub.s32 %v809, %v811
    %v813 = vrot.slane %v799, %v812
    %v816 = vadd.f32 %v615, %v806
    %v817 = vadd.f32 %v617, %v813
    %v818 = vxor.u32 %v816, 2147483648
    %v819 = vxor.u32 %v817, 2147483648
    %v820 = vmul.f32 %v818, 1.442695
    %v821 = vpow.pop %v820
    %v822 = vmul.f32 %v819, 1.442695
    %v823 = vpow.pop %v822
    %v824 = vadd.f32 %v821, 1.0
    %v825 = vadd.f32 %v823, 1.0
    %v826 = vrcp.pop %v824
    %v827 = vmul.f32 1.0, %v826
    %v828 = vrcp.pop %v825
    %v829 = vmul.f32 1.0, %v828
    %v832 = vrot.slane %v816, 1
    %v833 = vrot.slane %v817, 1
    %v836 = vxor.u32 %v832, 2147483648
    %v837 = vxor.u32 %v833, 2147483648
    %v838 = vmul.f32 %v836, 1.442695
    %v839 = vpow.pop %v838
    %v840 = vmul.f32 %v837, 1.442695
    %v841 = vpow.pop %v840
    %v842 = vadd.f32 %v839, 1.0
    %v843 = vadd.f32 %v841, 1.0
    %v844 = vrcp.pop %v842
    %v845 = vmul.f32 1.0, %v844
    %v846 = vrcp.pop %v843
    %v847 = vmul.f32 1.0, %v846
    %v848 = vrot.slane %v816, 2
    %v849 = vrot.slane %v817, 2
    %v852 = vtanh.pop %v848
    %v853 = vtanh.pop %v849
    %v854 = vrot.slane %v816, 3
    %v855 = vrot.slane %v817, 3
    %v858 = vxor.u32 %v854, 2147483648
    %v859 = vxor.u32 %v855, 2147483648
    %v860 = vmul.f32 %v858, 1.442695
    %v861 = vpow.pop %v860
    %v862 = vmul.f32 %v859, 1.442695
    %v863 = vpow.pop %v862
    %v864 = vadd.f32 %v861, 1.0
    %v865 = vadd.f32 %v863, 1.0
    %v866 = vrcp.pop %v864
    %v867 = vmul.f32 1.0, %v866
    %v868 = vrcp.pop %v865
    %v869 = vmul.f32 1.0, %v868
    %v870 = vmul.f32 %v845, %v606
    %v871 = vmul.f32 %v847, %v607
    %v872 = vmul.f32 %v827, %v852
    %v873 = vmul.f32 %v829, %v853
    %v874 = vadd.f32 %v870, %v872
    %v875 = vadd.f32 %v871, %v873
    %v876 = vtanh.pop %v874
    %v877 = vtanh.pop %v875
    %v878 = vmul.f32 %v867, %v876
    %v879 = vmul.f32 %v869, %v877
    %880 = vst [vmem:[#allocation3 + $0x1] sm:$0x1] %v878
    %881 = vst [vmem:[#allocation3 + $0x9] sm:$0x1] %v879
    %s882 = scalar_lea.vmem [#allocation2], 2
    %v883 = vld [vmem:[%s882] ss:$8 sm:$0xf]
    %s884 = scalar_lea.vmem [#allocation2], 34
    %v885 = vld [vmem:[%s884] ss:$8 sm:$0xf]
    %v888 = vcombine.low %v878, %v879
    %v890 = vunpack.c.l.s4 1966171168
    %v891 = vunpack.c.0.s8 %v890
    %v892 = vlaneseq
    %v893 = vshrl.u32 %v892, 7
    %v894 = vsub.s32 %v891, %v893
    %v895 = vrot.slane %v888, %v894
    %v897 = vunpack.c.l.s4 1966171168
    %v898 = vunpack.c.0.s8 %v897
    %v899 = vlaneseq
    %v900 = vshrl.u32 %v899, 7
    %v901 = vsub.s32 %v898, %v900
    %v902 = vrot.slane %v895, %v901
    %904 = vmatprep.subr.mxu0 %v362
    %905 = vmatpush1.msra.mxu0 %v361
    %906 = vmatprep.subr.mxu0 %v358
    %907 = vmatpush1.msra.mxu0 %v357
    %908 = vmatprep.subr.mxu0 %v354
    %909 = vmatpush1.msra.mxu0 %v353
    %910 = vmatprep.subr.mxu0 %v350
    %911 = vmatpush1.msra.mxu0 %v349
    %912 = vmatprep.subr.mxu0 %v346
    %913 = vmatpush1.msra.mxu0 %v345
    %914 = vmatprep.subr.mxu0 %v342
    %915 = vmatpush1.msra.mxu0 %v341
    %916 = vmatprep.subr.mxu0 %v338
    %917 = vmatpush1.msra.mxu0 %v337
    %918 = vmatprep.subr.mxu0 %v334
    %919 = vmatpush1.msra.mxu0 %v333
    %920 = vmatprep.subr.mxu0 %v330
    %921 = vmatpush1.msra.mxu0 %v329
    %922 = vmatprep.subr.mxu0 %v326
    %923 = vmatpush1.msra.mxu0 %v325
    %924 = vmatprep.subr.mxu0 %v322
    %925 = vmatpush1.msra.mxu0 %v321
    %926 = vmatprep.subr.mxu0 %v318
    %927 = vmatpush1.msra.mxu0 %v317
    %928 = vmatprep.subr.mxu0 %v314
    %929 = vmatpush1.msra.mxu0 %v313
    %930 = vmatprep.subr.mxu0 %v310
    %931 = vmatpush1.msra.mxu0 %v309
    %932 = vmatprep.subr.mxu0 %v306
    %933 = vmatpush1.msra.mxu0 %v305
    %934 = vmatprep.subr.mxu0 %v302
    %935 = vmatpush1.msra.mxu0 %v301
    %936 = vmatprep.subr.mxu0 0.0
    %937 = vmatpush2.msra.mxu0 0.0
    %938 = vmatprep.subr.mxu0 0.0
    %939 = vmatpush2.msra.mxu0 0.0
    %940 = vmatprep.subr.mxu0 0.0
    %941 = vmatpush2.msra.mxu0 0.0
    %942 = vmatprep.subr.mxu0 0.0
    %943 = vmatpush2.msra.mxu0 0.0
    %944 = vmatprep.subr.mxu0 0.0
    %945 = vmatpush2.msra.mxu0 0.0
    %946 = vmatprep.subr.mxu0 0.0
    %947 = vmatpush2.msra.mxu0 0.0
    %948 = vmatprep.subr.mxu0 0.0
    %949 = vmatpush2.msra.mxu0 0.0
    %950 = vmatprep.subr.mxu0 0.0
    %951 = vmatpush2.msra.mxu0 0.0
    %952 = vmatprep.subr.mxu0 0.0
    %953 = vmatpush2.msra.mxu0 0.0
    %954 = vmatprep.subr.mxu0 0.0
    %955 = vmatpush2.msra.mxu0 0.0
    %956 = vmatprep.subr.mxu0 0.0
    %957 = vmatpush2.msra.mxu0 0.0
    %958 = vmatprep.subr.mxu0 0.0
    %959 = vmatpush2.msra.mxu0 0.0
    %960 = vmatprep.subr.mxu0 0.0
    %961 = vmatpush2.msra.mxu0 0.0
    %962 = vmatprep.subr.mxu0 0.0
    %963 = vmatpush2.msra.mxu0 0.0
    %964 = vmatprep.subr.mxu0 0.0
    %965 = vmatpush2.msra.mxu0 0.0
    %966 = vmatprep.subr.mxu0 0.0
    %967 = vmatpush2.msra.mxu0 0.0
    %968 = vmatprep.mubr.f32.mxu0 0.0
    %969 = vmatmul.mubr.f32.gmra.mxu0 %v902
    %v970 = vpop.f32.mrf.mxu0
    %v971 = vadd.f32 0.0, %v970
    %v972 = vpop.f32.mrf.mxu0
    %v973 = vadd.f32 0.0, %v972
    %974 = vdwg.mxu0
    %975 = vmatprep.subr.mxu0 %v364
    %976 = vmatpush1.msra.mxu0 %v363
    %977 = vmatprep.subr.mxu0 %v360
    %978 = vmatpush1.msra.mxu0 %v359
    %979 = vmatprep.subr.mxu0 %v356
    %980 = vmatpush1.msra.mxu0 %v355
    %981 = vmatprep.subr.mxu0 %v352
    %982 = vmatpush1.msra.mxu0 %v351
    %983 = vmatprep.subr.mxu0 %v348
    %984 = vmatpush1.msra.mxu0 %v347
    %985 = vmatprep.subr.mxu0 %v344
    %986 = vmatpush1.msra.mxu0 %v343
    %987 = vmatprep.subr.mxu0 %v340
    %988 = vmatpush1.msra.mxu0 %v339
    %989 = vmatprep.subr.mxu0 %v336
    %990 = vmatpush1.msra.mxu0 %v335
    %991 = vmatprep.subr.mxu0 %v332
    %992 = vmatpush1.msra.mxu0 %v331
    %993 = vmatprep.subr.mxu0 %v328
    %994 = vmatpush1.msra.mxu0 %v327
    %995 = vmatprep.subr.mxu0 %v324
    %996 = vmatpush1.msra.mxu0 %v323
    %997 = vmatprep.subr.mxu0 %v320
    %998 = vmatpush1.msra.mxu0 %v319
    %999 = vmatprep.subr.mxu0 %v316
    %1000 = vmatpush1.msra.mxu0 %v315
    %1001 = vmatprep.subr.mxu0 %v312
    %1002 = vmatpush1.msra.mxu0 %v311
    %1003 = vmatprep.subr.mxu0 %v308
    %1004 = vmatpush1.msra.mxu0 %v307
    %1005 = vmatprep.subr.mxu0 %v304
    %1006 = vmatpush1.msra.mxu0 %v303
    %1007 = vmatprep.subr.mxu0 0.0
    %1008 = vmatpush2.msra.mxu0 0.0
    %1009 = vmatprep.subr.mxu0 0.0
    %1010 = vmatpush2.msra.mxu0 0.0
    %1011 = vmatprep.subr.mxu0 0.0
    %1012 = vmatpush2.msra.mxu0 0.0
    %1013 = vmatprep.subr.mxu0 0.0
    %1014 = vmatpush2.msra.mxu0 0.0
    %1015 = vmatprep.subr.mxu0 0.0
    %1016 = vmatpush2.msra.mxu0 0.0
    %1017 = vmatprep.subr.mxu0 0.0
    %1018 = vmatpush2.msra.mxu0 0.0
    %1019 = vmatprep.subr.mxu0 0.0
    %1020 = vmatpush2.msra.mxu0 0.0
    %1021 = vmatprep.subr.mxu0 0.0
    %1022 = vmatpush2.msra.mxu0 0.0
    %1023 = vmatprep.subr.mxu0 0.0
    %1024 = vmatpush2.msra.mxu0 0.0
    %1025 = vmatprep.subr.mxu0 0.0
    %1026 = vmatpush2.msra.mxu0 0.0
    %1027 = vmatprep.subr.mxu0 0.0
    %1028 = vmatpush2.msra.mxu0 0.0
    %1029 = vmatprep.subr.mxu0 0.0
    %1030 = vmatpush2.msra.mxu0 0.0
    %1031 = vmatprep.subr.mxu0 0.0
    %1032 = vmatpush2.msra.mxu0 0.0
    %1033 = vmatprep.subr.mxu0 0.0
    %1034 = vmatpush2.msra.mxu0 0.0
    %1035 = vmatprep.subr.mxu0 0.0
    %1036 = vmatpush2.msra.mxu0 0.0
    %1037 = vmatprep.subr.mxu0 0.0
    %1038 = vmatpush2.msra.mxu0 0.0
    %1039 = vmatprep.mubr.f32.mxu0 0.0
    %1040 = vmatmul.mubr.f32.gmra.mxu0 %v902
    %v1041 = vpop.f32.mrf.mxu0
    %v1042 = vadd.f32 0.0, %v1041
    %v1043 = vpop.f32.mrf.mxu0
    %v1044 = vadd.f32 0.0, %v1043
    %1045 = vdwg.mxu0
    %v1050 = vcombine.low %v971, %v973
    %v1051 = vcombine.low %v1042, %v1044
    %v1053 = vunpack.c.l.s4 1966171168
    %v1054 = vunpack.c.0.s8 %v1053
    %v1055 = vlaneseq
    %v1056 = vshrl.u32 %v1055, 7
    %v1057 = vsub.s32 %v1054, %v1056
    %v1058 = vrot.slane %v1050, %v1057
    %v1060 = vunpack.c.l.s4 1966171168
    %v1061 = vunpack.c.0.s8 %v1060
    %v1062 = vlaneseq
    %v1063 = vshrl.u32 %v1062, 7
    %v1064 = vsub.s32 %v1061, %v1063
    %v1065 = vrot.slane %v1051, %v1064
    %v1066 = vcombine.low %v1058, %v1065
    %v1067 = vcombine.high %v1058, %v1065
    %v1069 = vunpack.c.l.s4 1966171168
    %v1070 = vunpack.c.0.s8 %v1069
    %v1071 = vlaneseq
    %v1072 = vshrl.u32 %v1071, 7
    %v1073 = vsub.s32 %v1070, %v1072
    %v1074 = vrot.slane %v1066, %v1073
    %v1076 = vunpack.c.l.s4 1966171168
    %v1077 = vunpack.c.0.s8 %v1076
    %v1078 = vlaneseq
    %v1079 = vshrl.u32 %v1078, 7
    %v1080 = vsub.s32 %v1077, %v1079
    %v1081 = vrot.slane %v1067, %v1080
    %v1084 = vadd.f32 %v883, %v1074
    %v1085 = vadd.f32 %v885, %v1081
    %v1086 = vxor.u32 %v1084, 2147483648
    %v1087 = vxor.u32 %v1085, 2147483648
    %v1088 = vmul.f32 %v1086, 1.442695
    %v1089 = vpow.pop %v1088
    %v1090 = vmul.f32 %v1087, 1.442695
    %v1091 = vpow.pop %v1090
    %v1092 = vadd.f32 %v1089, 1.0
    %v1093 = vadd.f32 %v1091, 1.0
    %v1094 = vrcp.pop %v1092
    %v1095 = vmul.f32 1.0, %v1094
    %v1096 = vrcp.pop %v1093
    %v1097 = vmul.f32 1.0, %v1096
    %v1100 = vrot.slane %v1084, 1
    %v1101 = vrot.slane %v1085, 1
    %v1104 = vxor.u32 %v1100, 2147483648
    %v1105 = vxor.u32 %v1101, 2147483648
    %v1106 = vmul.f32 %v1104, 1.442695
    %v1107 = vpow.pop %v1106
    %v1108 = vmul.f32 %v1105, 1.442695
    %v1109 = vpow.pop %v1108
    %v1110 = vadd.f32 %v1107, 1.0
    %v1111 = vadd.f32 %v1109, 1.0
    %v1112 = vrcp.pop %v1110
    %v1113 = vmul.f32 1.0, %v1112
    %v1114 = vrcp.pop %v1111
    %v1115 = vmul.f32 1.0, %v1114
    %v1116 = vrot.slane %v1084, 2
    %v1117 = vrot.slane %v1085, 2
    %v1120 = vtanh.pop %v1116
    %v1121 = vtanh.pop %v1117
    %v1122 = vrot.slane %v1084, 3
    %v1123 = vrot.slane %v1085, 3
    %v1126 = vxor.u32 %v1122, 2147483648
    %v1127 = vxor.u32 %v1123, 2147483648
    %v1128 = vmul.f32 %v1126, 1.442695
    %v1129 = vpow.pop %v1128
    %v1130 = vmul.f32 %v1127, 1.442695
    %v1131 = vpow.pop %v1130
    %v1132 = vadd.f32 %v1129, 1.0
    %v1133 = vadd.f32 %v1131, 1.0
    %v1134 = vrcp.pop %v1132
    %v1135 = vmul.f32 1.0, %v1134
    %v1136 = vrcp.pop %v1133
    %v1137 = vmul.f32 1.0, %v1136
    %v1138 = vmul.f32 %v1113, %v874
    %v1139 = vmul.f32 %v1115, %v875
    %v1140 = vmul.f32 %v1095, %v1120
    %v1141 = vmul.f32 %v1097, %v1121
    %v1142 = vadd.f32 %v1138, %v1140
    %v1143 = vadd.f32 %v1139, %v1141
    %v1144 = vtanh.pop %v1142
    %v1145 = vtanh.pop %v1143
    %v1146 = vmul.f32 %v1135, %v1144
    %v1147 = vmul.f32 %v1137, %v1145
    %1148 = vst [vmem:[#allocation3 + $0x2] sm:$0x1] %v1146
    %1149 = vst [vmem:[#allocation3 + $0xa] sm:$0x1] %v1147
    %s1150 = scalar_lea.vmem [#allocation2], 3
    %v1151 = vld [vmem:[%s1150] ss:$8 sm:$0xf]
    %s1152 = scalar_lea.vmem [#allocation2], 35
    %v1153 = vld [vmem:[%s1152] ss:$8 sm:$0xf]
    %v1156 = vcombine.low %v1146, %v1147
    %v1158 = vunpack.c.l.s4 1966171168
    %v1159 = vunpack.c.0.s8 %v1158
    %v1160 = vlaneseq
    %v1161 = vshrl.u32 %v1160, 7
    %v1162 = vsub.s32 %v1159, %v1161
    %v1163 = vrot.slane %v1156, %v1162
    %v1165 = vunpack.c.l.s4 1966171168
    %v1166 = vunpack.c.0.s8 %v1165
    %v1167 = vlaneseq
    %v1168 = vshrl.u32 %v1167, 7
    %v1169 = vsub.s32 %v1166, %v1168
    %v1170 = vrot.slane %v1163, %v1169
    %1172 = vmatprep.subr.mxu0 %v362
    %1173 = vmatpush1.msra.mxu0 %v361
    %1174 = vmatprep.subr.mxu0 %v358
    %1175 = vmatpush1.msra.mxu0 %v357
    %1176 = vmatprep.subr.mxu0 %v354
    %1177 = vmatpush1.msra.mxu0 %v353
    %1178 = vmatprep.subr.mxu0 %v350
    %1179 = vmatpush1.msra.mxu0 %v349
    %1180 = vmatprep.subr.mxu0 %v346
    %1181 = vmatpush1.msra.mxu0 %v345
    %1182 = vmatprep.subr.mxu0 %v342
    %1183 = vmatpush1.msra.mxu0 %v341
    %1184 = vmatprep.subr.mxu0 %v338
    %1185 = vmatpush1.msra.mxu0 %v337
    %1186 = vmatprep.subr.mxu0 %v334
    %1187 = vmatpush1.msra.mxu0 %v333
    %1188 = vmatprep.subr.mxu0 %v330
    %1189 = vmatpush1.msra.mxu0 %v329
    %1190 = vmatprep.subr.mxu0 %v326
    %1191 = vmatpush1.msra.mxu0 %v325
    %1192 = vmatprep.subr.mxu0 %v322
    %1193 = vmatpush1.msra.mxu0 %v321
    %1194 = vmatprep.subr.mxu0 %v318
    %1195 = vmatpush1.msra.mxu0 %v317
    %1196 = vmatprep.subr.mxu0 %v314
    %1197 = vmatpush1.msra.mxu0 %v313
    %1198 = vmatprep.subr.mxu0 %v310
    %1199 = vmatpush1.msra.mxu0 %v309
    %1200 = vmatprep.subr.mxu0 %v306
    %1201 = vmatpush1.msra.mxu0 %v305
    %1202 = vmatprep.subr.mxu0 %v302
    %1203 = vmatpush1.msra.mxu0 %v301
    %1204 = vmatprep.subr.mxu0 0.0
    %1205 = vmatpush2.msra.mxu0 0.0
    %1206 = vmatprep.subr.mxu0 0.0
    %1207 = vmatpush2.msra.mxu0 0.0
    %1208 = vmatprep.subr.mxu0 0.0
    %1209 = vmatpush2.msra.mxu0 0.0
    %1210 = vmatprep.subr.mxu0 0.0
    %1211 = vmatpush2.msra.mxu0 0.0
    %1212 = vmatprep.subr.mxu0 0.0
    %1213 = vmatpush2.msra.mxu0 0.0
    %1214 = vmatprep.subr.mxu0 0.0
    %1215 = vmatpush2.msra.mxu0 0.0
    %1216 = vmatprep.subr.mxu0 0.0
    %1217 = vmatpush2.msra.mxu0 0.0
    %1218 = vmatprep.subr.mxu0 0.0
    %1219 = vmatpush2.msra.mxu0 0.0
    %1220 = vmatprep.subr.mxu0 0.0
    %1221 = vmatpush2.msra.mxu0 0.0
    %1222 = vmatprep.subr.mxu0 0.0
    %1223 = vmatpush2.msra.mxu0 0.0
    %1224 = vmatprep.subr.mxu0 0.0
    %1225 = vmatpush2.msra.mxu0 0.0
    %1226 = vmatprep.subr.mxu0 0.0
    %1227 = vmatpush2.msra.mxu0 0.0
    %1228 = vmatprep.subr.mxu0 0.0
    %1229 = vmatpush2.msra.mxu0 0.0
    %1230 = vmatprep.subr.mxu0 0.0
    %1231 = vmatpush2.msra.mxu0 0.0
    %1232 = vmatprep.subr.mxu0 0.0
    %1233 = vmatpush2.msra.mxu0 0.0
    %1234 = vmatprep.subr.mxu0 0.0
    %1235 = vmatpush2.msra.mxu0 0.0
    %1236 = vmatprep.mubr.f32.mxu0 0.0
    %1237 = vmatmul.mubr.f32.gmra.mxu0 %v1170
    %v1238 = vpop.f32.mrf.mxu0
    %v1239 = vadd.f32 0.0, %v1238
    %v1240 = vpop.f32.mrf.mxu0
    %v1241 = vadd.f32 0.0, %v1240
    %1242 = vdwg.mxu0
    %1243 = vmatprep.subr.mxu0 %v364
    %1244 = vmatpush1.msra.mxu0 %v363
    %1245 = vmatprep.subr.mxu0 %v360
    %1246 = vmatpush1.msra.mxu0 %v359
    %1247 = vmatprep.subr.mxu0 %v356
    %1248 = vmatpush1.msra.mxu0 %v355
    %1249 = vmatprep.subr.mxu0 %v352
    %1250 = vmatpush1.msra.mxu0 %v351
    %1251 = vmatprep.subr.mxu0 %v348
    %1252 = vmatpush1.msra.mxu0 %v347
    %1253 = vmatprep.subr.mxu0 %v344
    %1254 = vmatpush1.msra.mxu0 %v343
    %1255 = vmatprep.subr.mxu0 %v340
    %1256 = vmatpush1.msra.mxu0 %v339
    %1257 = vmatprep.subr.mxu0 %v336
    %1258 = vmatpush1.msra.mxu0 %v335
    %1259 = vmatprep.subr.mxu0 %v332
    %1260 = vmatpush1.msra.mxu0 %v331
    %1261 = vmatprep.subr.mxu0 %v328
    %1262 = vmatpush1.msra.mxu0 %v327
    %1263 = vmatprep.subr.mxu0 %v324
    %1264 = vmatpush1.msra.mxu0 %v323
    %1265 = vmatprep.subr.mxu0 %v320
    %1266 = vmatpush1.msra.mxu0 %v319
    %1267 = vmatprep.subr.mxu0 %v316
    %1268 = vmatpush1.msra.mxu0 %v315
    %1269 = vmatprep.subr.mxu0 %v312
    %1270 = vmatpush1.msra.mxu0 %v311
    %1271 = vmatprep.subr.mxu0 %v308
    %1272 = vmatpush1.msra.mxu0 %v307
    %1273 = vmatprep.subr.mxu0 %v304
    %1274 = vmatpush1.msra.mxu0 %v303
    %1275 = vmatprep.subr.mxu0 0.0
    %1276 = vmatpush2.msra.mxu0 0.0
    %1277 = vmatprep.subr.mxu0 0.0
    %1278 = vmatpush2.msra.mxu0 0.0
    %1279 = vmatprep.subr.mxu0 0.0
    %1280 = vmatpush2.msra.mxu0 0.0
    %1281 = vmatprep.subr.mxu0 0.0
    %1282 = vmatpush2.msra.mxu0 0.0
    %1283 = vmatprep.subr.mxu0 0.0
    %1284 = vmatpush2.msra.mxu0 0.0
    %1285 = vmatprep.subr.mxu0 0.0
    %1286 = vmatpush2.msra.mxu0 0.0
    %1287 = vmatprep.subr.mxu0 0.0
    %1288 = vmatpush2.msra.mxu0 0.0
    %1289 = vmatprep.subr.mxu0 0.0
    %1290 = vmatpush2.msra.mxu0 0.0
    %1291 = vmatprep.subr.mxu0 0.0
    %1292 = vmatpush2.msra.mxu0 0.0
    %1293 = vmatprep.subr.mxu0 0.0
    %1294 = vmatpush2.msra.mxu0 0.0
    %1295 = vmatprep.subr.mxu0 0.0
    %1296 = vmatpush2.msra.mxu0 0.0
    %1297 = vmatprep.subr.mxu0 0.0
    %1298 = vmatpush2.msra.mxu0 0.0
    %1299 = vmatprep.subr.mxu0 0.0
    %1300 = vmatpush2.msra.mxu0 0.0
    %1301 = vmatprep.subr.mxu0 0.0
    %1302 = vmatpush2.msra.mxu0 0.0
    %1303 = vmatprep.subr.mxu0 0.0
    %1304 = vmatpush2.msra.mxu0 0.0
    %1305 = vmatprep.subr.mxu0 0.0
    %1306 = vmatpush2.msra.mxu0 0.0
    %1307 = vmatprep.mubr.f32.mxu0 0.0
    %1308 = vmatmul.mubr.f32.gmra.mxu0 %v1170
    %v1309 = vpop.f32.mrf.mxu0
    %v1310 = vadd.f32 0.0, %v1309
    %v1311 = vpop.f32.mrf.mxu0
    %v1312 = vadd.f32 0.0, %v1311
    %1313 = vdwg.mxu0
    %v1318 = vcombine.low %v1239, %v1241
    %v1319 = vcombine.low %v1310, %v1312
    %v1321 = vunpack.c.l.s4 1966171168
    %v1322 = vunpack.c.0.s8 %v1321
    %v1323 = vlaneseq
    %v1324 = vshrl.u32 %v1323, 7
    %v1325 = vsub.s32 %v1322, %v1324
    %v1326 = vrot.slane %v1318, %v1325
    %v1328 = vunpack.c.l.s4 1966171168
    %v1329 = vunpack.c.0.s8 %v1328
    %v1330 = vlaneseq
    %v1331 = vshrl.u32 %v1330, 7
    %v1332 = vsub.s32 %v1329, %v1331
    %v1333 = vrot.slane %v1319, %v1332
    %v1334 = vcombine.low %v1326, %v1333
    %v1335 = vcombine.high %v1326, %v1333
    %v1337 = vunpack.c.l.s4 1966171168
    %v1338 = vunpack.c.0.s8 %v1337
    %v1339 = vlaneseq
    %v1340 = vshrl.u32 %v1339, 7
    %v1341 = vsub.s32 %v1338, %v1340
    %v1342 = vrot.slane %v1334, %v1341
    %v1344 = vunpack.c.l.s4 1966171168
    %v1345 = vunpack.c.0.s8 %v1344
    %v1346 = vlaneseq
    %v1347 = vshrl.u32 %v1346, 7
    %v1348 = vsub.s32 %v1345, %v1347
    %v1349 = vrot.slane %v1335, %v1348
    %v1352 = vadd.f32 %v1151, %v1342
    %v1353 = vadd.f32 %v1153, %v1349
    %v1354 = vxor.u32 %v1352, 2147483648
    %v1355 = vxor.u32 %v1353, 2147483648
    %v1356 = vmul.f32 %v1354, 1.442695
    %v1357 = vpow.pop %v1356
    %v1358 = vmul.f32 %v1355, 1.442695
    %v1359 = vpow.pop %v1358
    %v1360 = vadd.f32 %v1357, 1.0
    %v1361 = vadd.f32 %v1359, 1.0
    %v1362 = vrcp.pop %v1360
    %v1363 = vmul.f32 1.0, %v1362
    %v1364 = vrcp.pop %v1361
    %v1365 = vmul.f32 1.0, %v1364
    %v1368 = vrot.slane %v1352, 1
    %v1369 = vrot.slane %v1353, 1
    %v1372 = vxor.u32 %v1368, 2147483648
    %v1373 = vxor.u32 %v1369, 2147483648
    %v1374 = vmul.f32 %v1372, 1.442695
    %v1375 = vpow.pop %v1374
    %v1376 = vmul.f32 %v1373, 1.442695
    %v1377 = vpow.pop %v1376
    %v1378 = vadd.f32 %v1375, 1.0
    %v1379 = vadd.f32 %v1377, 1.0
    %v1380 = vrcp.pop %v1378
    %v1381 = vmul.f32 1.0, %v1380
    %v1382 = vrcp.pop %v1379
    %v1383 = vmul.f32 1.0, %v1382
    %v1384 = vrot.slane %v1352, 2
    %v1385 = vrot.slane %v1353, 2
    %v1388 = vtanh.pop %v1384
    %v1389 = vtanh.pop %v1385
    %v1390 = vrot.slane %v1352, 3
    %v1391 = vrot.slane %v1353, 3
    %v1394 = vxor.u32 %v1390, 2147483648
    %v1395 = vxor.u32 %v1391, 2147483648
    %v1396 = vmul.f32 %v1394, 1.442695
    %v1397 = vpow.pop %v1396
    %v1398 = vmul.f32 %v1395, 1.442695
    %v1399 = vpow.pop %v1398
    %v1400 = vadd.f32 %v1397, 1.0
    %v1401 = vadd.f32 %v1399, 1.0
    %v1402 = vrcp.pop %v1400
    %v1403 = vmul.f32 1.0, %v1402
    %v1404 = vrcp.pop %v1401
    %v1405 = vmul.f32 1.0, %v1404
    %v1406 = vmul.f32 %v1381, %v1142
    %v1407 = vmul.f32 %v1383, %v1143
    %v1408 = vmul.f32 %v1363, %v1388
    %v1409 = vmul.f32 %v1365, %v1389
    %v1410 = vadd.f32 %v1406, %v1408
    %v1411 = vadd.f32 %v1407, %v1409
    %v1412 = vtanh.pop %v1410
    %v1413 = vtanh.pop %v1411
    %v1414 = vmul.f32 %v1403, %v1412
    %v1415 = vmul.f32 %v1405, %v1413
    %1416 = vst [vmem:[#allocation3 + $0x3] sm:$0x1] %v1414
    %1417 = vst [vmem:[#allocation3 + $0xb] sm:$0x1] %v1415
    %s1418 = scalar_lea.vmem [#allocation2], 4
    %v1419 = vld [vmem:[%s1418] ss:$8 sm:$0xf]
    %s1420 = scalar_lea.vmem [#allocation2], 36
    %v1421 = vld [vmem:[%s1420] ss:$8 sm:$0xf]
    %v1424 = vcombine.low %v1414, %v1415
    %v1426 = vunpack.c.l.s4 1966171168
    %v1427 = vunpack.c.0.s8 %v1426
    %v1428 = vlaneseq
    %v1429 = vshrl.u32 %v1428, 7
    %v1430 = vsub.s32 %v1427, %v1429
    %v1431 = vrot.slane %v1424, %v1430
    %v1433 = vunpack.c.l.s4 1966171168
    %v1434 = vunpack.c.0.s8 %v1433
    %v1435 = vlaneseq
    %v1436 = vshrl.u32 %v1435, 7
    %v1437 = vsub.s32 %v1434, %v1436
    %v1438 = vrot.slane %v1431, %v1437
    %1440 = vmatprep.subr.mxu0 %v362
    %1441 = vmatpush1.msra.mxu0 %v361
    %1442 = vmatprep.subr.mxu0 %v358
    %1443 = vmatpush1.msra.mxu0 %v357
    %1444 = vmatprep.subr.mxu0 %v354
    %1445 = vmatpush1.msra.mxu0 %v353
    %1446 = vmatprep.subr.mxu0 %v350
    %1447 = vmatpush1.msra.mxu0 %v349
    %1448 = vmatprep.subr.mxu0 %v346
    %1449 = vmatpush1.msra.mxu0 %v345
    %1450 = vmatprep.subr.mxu0 %v342
    %1451 = vmatpush1.msra.mxu0 %v341
    %1452 = vmatprep.subr.mxu0 %v338
    %1453 = vmatpush1.msra.mxu0 %v337
    %1454 = vmatprep.subr.mxu0 %v334
    %1455 = vmatpush1.msra.mxu0 %v333
    %1456 = vmatprep.subr.mxu0 %v330
    %1457 = vmatpush1.msra.mxu0 %v329
    %1458 = vmatprep.subr.mxu0 %v326
    %1459 = vmatpush1.msra.mxu0 %v325
    %1460 = vmatprep.subr.mxu0 %v322
    %1461 = vmatpush1.msra.mxu0 %v321
    %1462 = vmatprep.subr.mxu0 %v318
    %1463 = vmatpush1.msra.mxu0 %v317
    %1464 = vmatprep.subr.mxu0 %v314
    %1465 = vmatpush1.msra.mxu0 %v313
    %1466 = vmatprep.subr.mxu0 %v310
    %1467 = vmatpush1.msra.mxu0 %v309
    %1468 = vmatprep.subr.mxu0 %v306
    %1469 = vmatpush1.msra.mxu0 %v305
    %1470 = vmatprep.subr.mxu0 %v302
    %1471 = vmatpush1.msra.mxu0 %v301
    %1472 = vmatprep.subr.mxu0 0.0
    %1473 = vmatpush2.msra.mxu0 0.0
    %1474 = vmatprep.subr.mxu0 0.0
    %1475 = vmatpush2.msra.mxu0 0.0
    %1476 = vmatprep.subr.mxu0 0.0
    %1477 = vmatpush2.msra.mxu0 0.0
    %1478 = vmatprep.subr.mxu0 0.0
    %1479 = vmatpush2.msra.mxu0 0.0
    %1480 = vmatprep.subr.mxu0 0.0
    %1481 = vmatpush2.msra.mxu0 0.0
    %1482 = vmatprep.subr.mxu0 0.0
    %1483 = vmatpush2.msra.mxu0 0.0
    %1484 = vmatprep.subr.mxu0 0.0
    %1485 = vmatpush2.msra.mxu0 0.0
    %1486 = vmatprep.subr.mxu0 0.0
    %1487 = vmatpush2.msra.mxu0 0.0
    %1488 = vmatprep.subr.mxu0 0.0
    %1489 = vmatpush2.msra.mxu0 0.0
    %1490 = vmatprep.subr.mxu0 0.0
    %1491 = vmatpush2.msra.mxu0 0.0
    %1492 = vmatprep.subr.mxu0 0.0
    %1493 = vmatpush2.msra.mxu0 0.0
    %1494 = vmatprep.subr.mxu0 0.0
    %1495 = vmatpush2.msra.mxu0 0.0
    %1496 = vmatprep.subr.mxu0 0.0
    %1497 = vmatpush2.msra.mxu0 0.0
    %1498 = vmatprep.subr.mxu0 0.0
    %1499 = vmatpush2.msra.mxu0 0.0
    %1500 = vmatprep.subr.mxu0 0.0
    %1501 = vmatpush2.msra.mxu0 0.0
    %1502 = vmatprep.subr.mxu0 0.0
    %1503 = vmatpush2.msra.mxu0 0.0
    %1504 = vmatprep.mubr.f32.mxu0 0.0
    %1505 = vmatmul.mubr.f32.gmra.mxu0 %v1438
    %v1506 = vpop.f32.mrf.mxu0
    %v1507 = vadd.f32 0.0, %v1506
    %v1508 = vpop.f32.mrf.mxu0
    %v1509 = vadd.f32 0.0, %v1508
    %1510 = vdwg.mxu0
    %1511 = vmatprep.subr.mxu0 %v364
    %1512 = vmatpush1.msra.mxu0 %v363
    %1513 = vmatprep.subr.mxu0 %v360
    %1514 = vmatpush1.msra.mxu0 %v359
    %1515 = vmatprep.subr.mxu0 %v356
    %1516 = vmatpush1.msra.mxu0 %v355
    %1517 = vmatprep.subr.mxu0 %v352
    %1518 = vmatpush1.msra.mxu0 %v351
    %1519 = vmatprep.subr.mxu0 %v348
    %1520 = vmatpush1.msra.mxu0 %v347
    %1521 = vmatprep.subr.mxu0 %v344
    %1522 = vmatpush1.msra.mxu0 %v343
    %1523 = vmatprep.subr.mxu0 %v340
    %1524 = vmatpush1.msra.mxu0 %v339
    %1525 = vmatprep.subr.mxu0 %v336
    %1526 = vmatpush1.msra.mxu0 %v335
    %1527 = vmatprep.subr.mxu0 %v332
    %1528 = vmatpush1.msra.mxu0 %v331
    %1529 = vmatprep.subr.mxu0 %v328
    %1530 = vmatpush1.msra.mxu0 %v327
    %1531 = vmatprep.subr.mxu0 %v324
    %1532 = vmatpush1.msra.mxu0 %v323
    %1533 = vmatprep.subr.mxu0 %v320
    %1534 = vmatpush1.msra.mxu0 %v319
    %1535 = vmatprep.subr.mxu0 %v316
    %1536 = vmatpush1.msra.mxu0 %v315
    %1537 = vmatprep.subr.mxu0 %v312
    %1538 = vmatpush1.msra.mxu0 %v311
    %1539 = vmatprep.subr.mxu0 %v308
    %1540 = vmatpush1.msra.mxu0 %v307
    %1541 = vmatprep.subr.mxu0 %v304
    %1542 = vmatpush1.msra.mxu0 %v303
    %1543 = vmatprep.subr.mxu0 0.0
    %1544 = vmatpush2.msra.mxu0 0.0
    %1545 = vmatprep.subr.mxu0 0.0
    %1546 = vmatpush2.msra.mxu0 0.0
    %1547 = vmatprep.subr.mxu0 0.0
    %1548 = vmatpush2.msra.mxu0 0.0
    %1549 = vmatprep.subr.mxu0 0.0
    %1550 = vmatpush2.msra.mxu0 0.0
    %1551 = vmatprep.subr.mxu0 0.0
    %1552 = vmatpush2.msra.mxu0 0.0
    %1553 = vmatprep.subr.mxu0 0.0
    %1554 = vmatpush2.msra.mxu0 0.0
    %1555 = vmatprep.subr.mxu0 0.0
    %1556 = vmatpush2.msra.mxu0 0.0
    %1557 = vmatprep.subr.mxu0 0.0
    %1558 = vmatpush2.msra.mxu0 0.0
    %1559 = vmatprep.subr.mxu0 0.0
    %1560 = vmatpush2.msra.mxu0 0.0
    %1561 = vmatprep.subr.mxu0 0.0
    %1562 = vmatpush2.msra.mxu0 0.0
    %1563 = vmatprep.subr.mxu0 0.0
    %1564 = vmatpush2.msra.mxu0 0.0
    %1565 = vmatprep.subr.mxu0 0.0
    %1566 = vmatpush2.msra.mxu0 0.0
    %1567 = vmatprep.subr.mxu0 0.0
    %1568 = vmatpush2.msra.mxu0 0.0
    %1569 = vmatprep.subr.mxu0 0.0
    %1570 = vmatpush2.msra.mxu0 0.0
    %1571 = vmatprep.subr.mxu0 0.0
    %1572 = vmatpush2.msra.mxu0 0.0
    %1573 = vmatprep.subr.mxu0 0.0
    %1574 = vmatpush2.msra.mxu0 0.0
    %1575 = vmatprep.mubr.f32.mxu0 0.0
    %1576 = vmatmul.mubr.f32.gmra.mxu0 %v1438
    %v1577 = vpop.f32.mrf.mxu0
    %v1578 = vadd.f32 0.0, %v1577
    %v1579 = vpop.f32.mrf.mxu0
    %v1580 = vadd.f32 0.0, %v1579
    %1581 = vdwg.mxu0
    %v1586 = vcombine.low %v1507, %v1509
    %v1587 = vcombine.low %v1578, %v1580
    %v1589 = vunpack.c.l.s4 1966171168
    %v1590 = vunpack.c.0.s8 %v1589
    %v1591 = vlaneseq
    %v1592 = vshrl.u32 %v1591, 7
    %v1593 = vsub.s32 %v1590, %v1592
    %v1594 = vrot.slane %v1586, %v1593
    %v1596 = vunpack.c.l.s4 1966171168
    %v1597 = vunpack.c.0.s8 %v1596
    %v1598 = vlaneseq
    %v1599 = vshrl.u32 %v1598, 7
    %v1600 = vsub.s32 %v1597, %v1599
    %v1601 = vrot.slane %v1587, %v1600
    %v1602 = vcombine.low %v1594, %v1601
    %v1603 = vcombine.high %v1594, %v1601
    %v1605 = vunpack.c.l.s4 1966171168
    %v1606 = vunpack.c.0.s8 %v1605
    %v1607 = vlaneseq
    %v1608 = vshrl.u32 %v1607, 7
    %v1609 = vsub.s32 %v1606, %v1608
    %v1610 = vrot.slane %v1602, %v1609
    %v1612 = vunpack.c.l.s4 1966171168
    %v1613 = vunpack.c.0.s8 %v1612
    %v1614 = vlaneseq
    %v1615 = vshrl.u32 %v1614, 7
    %v1616 = vsub.s32 %v1613, %v1615
    %v1617 = vrot.slane %v1603, %v1616
    %v1620 = vadd.f32 %v1419, %v1610
    %v1621 = vadd.f32 %v1421, %v1617
    %v1622 = vxor.u32 %v1620, 2147483648
    %v1623 = vxor.u32 %v1621, 2147483648
    %v1624 = vmul.f32 %v1622, 1.442695
    %v1625 = vpow.pop %v1624
    %v1626 = vmul.f32 %v1623, 1.442695
    %v1627 = vpow.pop %v1626
    %v1628 = vadd.f32 %v1625, 1.0
    %v1629 = vadd.f32 %v1627, 1.0
    %v1630 = vrcp.pop %v1628
    %v1631 = vmul.f32 1.0, %v1630
    %v1632 = vrcp.pop %v1629
    %v1633 = vmul.f32 1.0, %v1632
    %v1636 = vrot.slane %v1620, 1
    %v1637 = vrot.slane %v1621, 1
    %v1640 = vxor.u32 %v1636, 2147483648
    %v1641 = vxor.u32 %v1637, 2147483648
    %v1642 = vmul.f32 %v1640, 1.442695
    %v1643 = vpow.pop %v1642
    %v1644 = vmul.f32 %v1641, 1.442695
    %v1645 = vpow.pop %v1644
    %v1646 = vadd.f32 %v1643, 1.0
    %v1647 = vadd.f32 %v1645, 1.0
    %v1648 = vrcp.pop %v1646
    %v1649 = vmul.f32 1.0, %v1648
    %v1650 = vrcp.pop %v1647
    %v1651 = vmul.f32 1.0, %v1650
    %v1652 = vrot.slane %v1620, 2
    %v1653 = vrot.slane %v1621, 2
    %v1656 = vtanh.pop %v1652
    %v1657 = vtanh.pop %v1653
    %v1658 = vrot.slane %v1620, 3
    %v1659 = vrot.slane %v1621, 3
    %v1662 = vxor.u32 %v1658, 2147483648
    %v1663 = vxor.u32 %v1659, 2147483648
    %v1664 = vmul.f32 %v1662, 1.442695
    %v1665 = vpow.pop %v1664
    %v1666 = vmul.f32 %v1663, 1.442695
    %v1667 = vpow.pop %v1666
    %v1668 = vadd.f32 %v1665, 1.0
    %v1669 = vadd.f32 %v1667, 1.0
    %v1670 = vrcp.pop %v1668
    %v1671 = vmul.f32 1.0, %v1670
    %v1672 = vrcp.pop %v1669
    %v1673 = vmul.f32 1.0, %v1672
    %v1674 = vmul.f32 %v1649, %v1410
    %v1675 = vmul.f32 %v1651, %v1411
    %v1676 = vmul.f32 %v1631, %v1656
    %v1677 = vmul.f32 %v1633, %v1657
    %v1678 = vadd.f32 %v1674, %v1676
    %v1679 = vadd.f32 %v1675, %v1677
    %v1680 = vtanh.pop %v1678
    %v1681 = vtanh.pop %v1679
    %v1682 = vmul.f32 %v1671, %v1680
    %v1683 = vmul.f32 %v1673, %v1681
    %1684 = vst [vmem:[#allocation3 + $0x4] sm:$0x1] %v1682
    %1685 = vst [vmem:[#allocation3 + $0xc] sm:$0x1] %v1683
    %s1686 = scalar_lea.vmem [#allocation2], 5
    %v1687 = vld [vmem:[%s1686] ss:$8 sm:$0xf]
    %s1688 = scalar_lea.vmem [#allocation2], 37
    %v1689 = vld [vmem:[%s1688] ss:$8 sm:$0xf]
    %v1692 = vcombine.low %v1682, %v1683
    %v1694 = vunpack.c.l.s4 1966171168
    %v1695 = vunpack.c.0.s8 %v1694
    %v1696 = vlaneseq
    %v1697 = vshrl.u32 %v1696, 7
    %v1698 = vsub.s32 %v1695, %v1697
    %v1699 = vrot.slane %v1692, %v1698
    %v1701 = vunpack.c.l.s4 1966171168
    %v1702 = vunpack.c.0.s8 %v1701
    %v1703 = vlaneseq
    %v1704 = vshrl.u32 %v1703, 7
    %v1705 = vsub.s32 %v1702, %v1704
    %v1706 = vrot.slane %v1699, %v1705
    %1708 = vmatprep.subr.mxu0 %v362
    %1709 = vmatpush1.msra.mxu0 %v361
    %1710 = vmatprep.subr.mxu0 %v358
    %1711 = vmatpush1.msra.mxu0 %v357
    %1712 = vmatprep.subr.mxu0 %v354
    %1713 = vmatpush1.msra.mxu0 %v353
    %1714 = vmatprep.subr.mxu0 %v350
    %1715 = vmatpush1.msra.mxu0 %v349
    %1716 = vmatprep.subr.mxu0 %v346
    %1717 = vmatpush1.msra.mxu0 %v345
    %1718 = vmatprep.subr.mxu0 %v342
    %1719 = vmatpush1.msra.mxu0 %v341
    %1720 = vmatprep.subr.mxu0 %v338
    %1721 = vmatpush1.msra.mxu0 %v337
    %1722 = vmatprep.subr.mxu0 %v334
    %1723 = vmatpush1.msra.mxu0 %v333
    %1724 = vmatprep.subr.mxu0 %v330
    %1725 = vmatpush1.msra.mxu0 %v329
    %1726 = vmatprep.subr.mxu0 %v326
    %1727 = vmatpush1.msra.mxu0 %v325
    %1728 = vmatprep.subr.mxu0 %v322
    %1729 = vmatpush1.msra.mxu0 %v321
    %1730 = vmatprep.subr.mxu0 %v318
    %1731 = vmatpush1.msra.mxu0 %v317
    %1732 = vmatprep.subr.mxu0 %v314
    %1733 = vmatpush1.msra.mxu0 %v313
    %1734 = vmatprep.subr.mxu0 %v310
    %1735 = vmatpush1.msra.mxu0 %v309
    %1736 = vmatprep.subr.mxu0 %v306
    %1737 = vmatpush1.msra.mxu0 %v305
    %1738 = vmatprep.subr.mxu0 %v302
    %1739 = vmatpush1.msra.mxu0 %v301
    %1740 = vmatprep.subr.mxu0 0.0
    %1741 = vmatpush2.msra.mxu0 0.0
    %1742 = vmatprep.subr.mxu0 0.0
    %1743 = vmatpush2.msra.mxu0 0.0
    %1744 = vmatprep.subr.mxu0 0.0
    %1745 = vmatpush2.msra.mxu0 0.0
    %1746 = vmatprep.subr.mxu0 0.0
    %1747 = vmatpush2.msra.mxu0 0.0
    %1748 = vmatprep.subr.mxu0 0.0
    %1749 = vmatpush2.msra.mxu0 0.0
    %1750 = vmatprep.subr.mxu0 0.0
    %1751 = vmatpush2.msra.mxu0 0.0
    %1752 = vmatprep.subr.mxu0 0.0
    %1753 = vmatpush2.msra.mxu0 0.0
    %1754 = vmatprep.subr.mxu0 0.0
    %1755 = vmatpush2.msra.mxu0 0.0
    %1756 = vmatprep.subr.mxu0 0.0
    %1757 = vmatpush2.msra.mxu0 0.0
    %1758 = vmatprep.subr.mxu0 0.0
    %1759 = vmatpush2.msra.mxu0 0.0
    %1760 = vmatprep.subr.mxu0 0.0
    %1761 = vmatpush2.msra.mxu0 0.0
    %1762 = vmatprep.subr.mxu0 0.0
    %1763 = vmatpush2.msra.mxu0 0.0
    %1764 = vmatprep.subr.mxu0 0.0
    %1765 = vmatpush2.msra.mxu0 0.0
    %1766 = vmatprep.subr.mxu0 0.0
    %1767 = vmatpush2.msra.mxu0 0.0
    %1768 = vmatprep.subr.mxu0 0.0
    %1769 = vmatpush2.msra.mxu0 0.0
    %1770 = vmatprep.subr.mxu0 0.0
    %1771 = vmatpush2.msra.mxu0 0.0
    %1772 = vmatprep.mubr.f32.mxu0 0.0
    %1773 = vmatmul.mubr.f32.gmra.mxu0 %v1706
    %v1774 = vpop.f32.mrf.mxu0
    %v1775 = vadd.f32 0.0, %v1774
    %v1776 = vpop.f32.mrf.mxu0
    %v1777 = vadd.f32 0.0, %v1776
    %1778 = vdwg.mxu0
    %1779 = vmatprep.subr.mxu0 %v364
    %1780 = vmatpush1.msra.mxu0 %v363
    %1781 = vmatprep.subr.mxu0 %v360
    %1782 = vmatpush1.msra.mxu0 %v359
    %1783 = vmatprep.subr.mxu0 %v356
    %1784 = vmatpush1.msra.mxu0 %v355
    %1785 = vmatprep.subr.mxu0 %v352
    %1786 = vmatpush1.msra.mxu0 %v351
    %1787 = vmatprep.subr.mxu0 %v348
    %1788 = vmatpush1.msra.mxu0 %v347
    %1789 = vmatprep.subr.mxu0 %v344
    %1790 = vmatpush1.msra.mxu0 %v343
    %1791 = vmatprep.subr.mxu0 %v340
    %1792 = vmatpush1.msra.mxu0 %v339
    %1793 = vmatprep.subr.mxu0 %v336
    %1794 = vmatpush1.msra.mxu0 %v335
    %1795 = vmatprep.subr.mxu0 %v332
    %1796 = vmatpush1.msra.mxu0 %v331
    %1797 = vmatprep.subr.mxu0 %v328
    %1798 = vmatpush1.msra.mxu0 %v327
    %1799 = vmatprep.subr.mxu0 %v324
    %1800 = vmatpush1.msra.mxu0 %v323
    %1801 = vmatprep.subr.mxu0 %v320
    %1802 = vmatpush1.msra.mxu0 %v319
    %1803 = vmatprep.subr.mxu0 %v316
    %1804 = vmatpush1.msra.mxu0 %v315
    %1805 = vmatprep.subr.mxu0 %v312
    %1806 = vmatpush1.msra.mxu0 %v311
    %1807 = vmatprep.subr.mxu0 %v308
    %1808 = vmatpush1.msra.mxu0 %v307
    %1809 = vmatprep.subr.mxu0 %v304
    %1810 = vmatpush1.msra.mxu0 %v303
    %1811 = vmatprep.subr.mxu0 0.0
    %1812 = vmatpush2.msra.mxu0 0.0
    %1813 = vmatprep.subr.mxu0 0.0
    %1814 = vmatpush2.msra.mxu0 0.0
    %1815 = vmatprep.subr.mxu0 0.0
    %1816 = vmatpush2.msra.mxu0 0.0
    %1817 = vmatprep.subr.mxu0 0.0
    %1818 = vmatpush2.msra.mxu0 0.0
    %1819 = vmatprep.subr.mxu0 0.0
    %1820 = vmatpush2.msra.mxu0 0.0
    %1821 = vmatprep.subr.mxu0 0.0
    %1822 = vmatpush2.msra.mxu0 0.0
    %1823 = vmatprep.subr.mxu0 0.0
    %1824 = vmatpush2.msra.mxu0 0.0
    %1825 = vmatprep.subr.mxu0 0.0
    %1826 = vmatpush2.msra.mxu0 0.0
    %1827 = vmatprep.subr.mxu0 0.0
    %1828 = vmatpush2.msra.mxu0 0.0
    %1829 = vmatprep.subr.mxu0 0.0
    %1830 = vmatpush2.msra.mxu0 0.0
    %1831 = vmatprep.subr.mxu0 0.0
    %1832 = vmatpush2.msra.mxu0 0.0
    %1833 = vmatprep.subr.mxu0 0.0
    %1834 = vmatpush2.msra.mxu0 0.0
    %1835 = vmatprep.subr.mxu0 0.0
    %1836 = vmatpush2.msra.mxu0 0.0
    %1837 = vmatprep.subr.mxu0 0.0
    %1838 = vmatpush2.msra.mxu0 0.0
    %1839 = vmatprep.subr.mxu0 0.0
    %1840 = vmatpush2.msra.mxu0 0.0
    %1841 = vmatprep.subr.mxu0 0.0
    %1842 = vmatpush2.msra.mxu0 0.0
    %1843 = vmatprep.mubr.f32.mxu0 0.0
    %1844 = vmatmul.mubr.f32.gmra.mxu0 %v1706
    %v1845 = vpop.f32.mrf.mxu0
    %v1846 = vadd.f32 0.0, %v1845
    %v1847 = vpop.f32.mrf.mxu0
    %v1848 = vadd.f32 0.0, %v1847
    %1849 = vdwg.mxu0
    %v1854 = vcombine.low %v1775, %v1777
    %v1855 = vcombine.low %v1846, %v1848
    %v1857 = vunpack.c.l.s4 1966171168
    %v1858 = vunpack.c.0.s8 %v1857
    %v1859 = vlaneseq
    %v1860 = vshrl.u32 %v1859, 7
    %v1861 = vsub.s32 %v1858, %v1860
    %v1862 = vrot.slane %v1854, %v1861
    %v1864 = vunpack.c.l.s4 1966171168
    %v1865 = vunpack.c.0.s8 %v1864
    %v1866 = vlaneseq
    %v1867 = vshrl.u32 %v1866, 7
    %v1868 = vsub.s32 %v1865, %v1867
    %v1869 = vrot.slane %v1855, %v1868
    %v1870 = vcombine.low %v1862, %v1869
    %v1871 = vcombine.high %v1862, %v1869
    %v1873 = vunpack.c.l.s4 1966171168
    %v1874 = vunpack.c.0.s8 %v1873
    %v1875 = vlaneseq
    %v1876 = vshrl.u32 %v1875, 7
    %v1877 = vsub.s32 %v1874, %v1876
    %v1878 = vrot.slane %v1870, %v1877
    %v1880 = vunpack.c.l.s4 1966171168
    %v1881 = vunpack.c.0.s8 %v1880
    %v1882 = vlaneseq
    %v1883 = vshrl.u32 %v1882, 7
    %v1884 = vsub.s32 %v1881, %v1883
    %v1885 = vrot.slane %v1871, %v1884
    %v1888 = vadd.f32 %v1687, %v1878
    %v1889 = vadd.f32 %v1689, %v1885
    %v1890 = vxor.u32 %v1888, 2147483648
    %v1891 = vxor.u32 %v1889, 2147483648
    %v1892 = vmul.f32 %v1890, 1.442695
    %v1893 = vpow.pop %v1892
    %v1894 = vmul.f32 %v1891, 1.442695
    %v1895 = vpow.pop %v1894
    %v1896 = vadd.f32 %v1893, 1.0
    %v1897 = vadd.f32 %v1895, 1.0
    %v1898 = vrcp.pop %v1896
    %v1899 = vmul.f32 1.0, %v1898
    %v1900 = vrcp.pop %v1897
    %v1901 = vmul.f32 1.0, %v1900
    %v1904 = vrot.slane %v1888, 1
    %v1905 = vrot.slane %v1889, 1
    %v1908 = vxor.u32 %v1904, 2147483648
    %v1909 = vxor.u32 %v1905, 2147483648
    %v1910 = vmul.f32 %v1908, 1.442695
    %v1911 = vpow.pop %v1910
    %v1912 = vmul.f32 %v1909, 1.442695
    %v1913 = vpow.pop %v1912
    %v1914 = vadd.f32 %v1911, 1.0
    %v1915 = vadd.f32 %v1913, 1.0
    %v1916 = vrcp.pop %v1914
    %v1917 = vmul.f32 1.0, %v1916
    %v1918 = vrcp.pop %v1915
    %v1919 = vmul.f32 1.0, %v1918
    %v1920 = vrot.slane %v1888, 2
    %v1921 = vrot.slane %v1889, 2
    %v1924 = vtanh.pop %v1920
    %v1925 = vtanh.pop %v1921
    %v1926 = vrot.slane %v1888, 3
    %v1927 = vrot.slane %v1889, 3
    %v1930 = vxor.u32 %v1926, 2147483648
    %v1931 = vxor.u32 %v1927, 2147483648
    %v1932 = vmul.f32 %v1930, 1.442695
    %v1933 = vpow.pop %v1932
    %v1934 = vmul.f32 %v1931, 1.442695
    %v1935 = vpow.pop %v1934
    %v1936 = vadd.f32 %v1933, 1.0
    %v1937 = vadd.f32 %v1935, 1.0
    %v1938 = vrcp.pop %v1936
    %v1939 = vmul.f32 1.0, %v1938
    %v1940 = vrcp.pop %v1937
    %v1941 = vmul.f32 1.0, %v1940
    %v1942 = vmul.f32 %v1917, %v1678
    %v1943 = vmul.f32 %v1919, %v1679
    %v1944 = vmul.f32 %v1899, %v1924
    %v1945 = vmul.f32 %v1901, %v1925
    %v1946 = vadd.f32 %v1942, %v1944
    %v1947 = vadd.f32 %v1943, %v1945
    %v1948 = vtanh.pop %v1946
    %v1949 = vtanh.pop %v1947
    %v1950 = vmul.f32 %v1939, %v1948
    %v1951 = vmul.f32 %v1941, %v1949
    %1952 = vst [vmem:[#allocation3 + $0x5] sm:$0x1] %v1950
    %1953 = vst [vmem:[#allocation3 + $0xd] sm:$0x1] %v1951
    %s1954 = scalar_lea.vmem [#allocation2], 6
    %v1955 = vld [vmem:[%s1954] ss:$8 sm:$0xf]
    %s1956 = scalar_lea.vmem [#allocation2], 38
    %v1957 = vld [vmem:[%s1956] ss:$8 sm:$0xf]
    %v1960 = vcombine.low %v1950, %v1951
    %v1962 = vunpack.c.l.s4 1966171168
    %v1963 = vunpack.c.0.s8 %v1962
    %v1964 = vlaneseq
    %v1965 = vshrl.u32 %v1964, 7
    %v1966 = vsub.s32 %v1963, %v1965
    %v1967 = vrot.slane %v1960, %v1966
    %v1969 = vunpack.c.l.s4 1966171168
    %v1970 = vunpack.c.0.s8 %v1969
    %v1971 = vlaneseq
    %v1972 = vshrl.u32 %v1971, 7
    %v1973 = vsub.s32 %v1970, %v1972
    %v1974 = vrot.slane %v1967, %v1973
    %1976 = vmatprep.subr.mxu0 %v362
    %1977 = vmatpush1.msra.mxu0 %v361
    %1978 = vmatprep.subr.mxu0 %v358
    %1979 = vmatpush1.msra.mxu0 %v357
    %1980 = vmatprep.subr.mxu0 %v354
    %1981 = vmatpush1.msra.mxu0 %v353
    %1982 = vmatprep.subr.mxu0 %v350
    %1983 = vmatpush1.msra.mxu0 %v349
    %1984 = vmatprep.subr.mxu0 %v346
    %1985 = vmatpush1.msra.mxu0 %v345
    %1986 = vmatprep.subr.mxu0 %v342
    %1987 = vmatpush1.msra.mxu0 %v341
    %1988 = vmatprep.subr.mxu0 %v338
    %1989 = vmatpush1.msra.mxu0 %v337
    %1990 = vmatprep.subr.mxu0 %v334
    %1991 = vmatpush1.msra.mxu0 %v333
    %1992 = vmatprep.subr.mxu0 %v330
    %1993 = vmatpush1.msra.mxu0 %v329
    %1994 = vmatprep.subr.mxu0 %v326
    %1995 = vmatpush1.msra.mxu0 %v325
    %1996 = vmatprep.subr.mxu0 %v322
    %1997 = vmatpush1.msra.mxu0 %v321
    %1998 = vmatprep.subr.mxu0 %v318
    %1999 = vmatpush1.msra.mxu0 %v317
    %2000 = vmatprep.subr.mxu0 %v314
    %2001 = vmatpush1.msra.mxu0 %v313
    %2002 = vmatprep.subr.mxu0 %v310
    %2003 = vmatpush1.msra.mxu0 %v309
    %2004 = vmatprep.subr.mxu0 %v306
    %2005 = vmatpush1.msra.mxu0 %v305
    %2006 = vmatprep.subr.mxu0 %v302
    %2007 = vmatpush1.msra.mxu0 %v301
    %2008 = vmatprep.subr.mxu0 0.0
    %2009 = vmatpush2.msra.mxu0 0.0
    %2010 = vmatprep.subr.mxu0 0.0
    %2011 = vmatpush2.msra.mxu0 0.0
    %2012 = vmatprep.subr.mxu0 0.0
    %2013 = vmatpush2.msra.mxu0 0.0
    %2014 = vmatprep.subr.mxu0 0.0
    %2015 = vmatpush2.msra.mxu0 0.0
    %2016 = vmatprep.subr.mxu0 0.0
    %2017 = vmatpush2.msra.mxu0 0.0
    %2018 = vmatprep.subr.mxu0 0.0
    %2019 = vmatpush2.msra.mxu0 0.0
    %2020 = vmatprep.subr.mxu0 0.0
    %2021 = vmatpush2.msra.mxu0 0.0
    %2022 = vmatprep.subr.mxu0 0.0
    %2023 = vmatpush2.msra.mxu0 0.0
    %2024 = vmatprep.subr.mxu0 0.0
    %2025 = vmatpush2.msra.mxu0 0.0
    %2026 = vmatprep.subr.mxu0 0.0
    %2027 = vmatpush2.msra.mxu0 0.0
    %2028 = vmatprep.subr.mxu0 0.0
    %2029 = vmatpush2.msra.mxu0 0.0
    %2030 = vmatprep.subr.mxu0 0.0
    %2031 = vmatpush2.msra.mxu0 0.0
    %2032 = vmatprep.subr.mxu0 0.0
    %2033 = vmatpush2.msra.mxu0 0.0
    %2034 = vmatprep.subr.mxu0 0.0
    %2035 = vmatpush2.msra.mxu0 0.0
    %2036 = vmatprep.subr.mxu0 0.0
    %2037 = vmatpush2.msra.mxu0 0.0
    %2038 = vmatprep.subr.mxu0 0.0
    %2039 = vmatpush2.msra.mxu0 0.0
    %2040 = vmatprep.mubr.f32.mxu0 0.0
    %2041 = vmatmul.mubr.f32.gmra.mxu0 %v1974
    %v2042 = vpop.f32.mrf.mxu0
    %v2043 = vadd.f32 0.0, %v2042
    %v2044 = vpop.f32.mrf.mxu0
    %v2045 = vadd.f32 0.0, %v2044
    %2046 = vdwg.mxu0
    %2047 = vmatprep.subr.mxu0 %v364
    %2048 = vmatpush1.msra.mxu0 %v363
    %2049 = vmatprep.subr.mxu0 %v360
    %2050 = vmatpush1.msra.mxu0 %v359
    %2051 = vmatprep.subr.mxu0 %v356
    %2052 = vmatpush1.msra.mxu0 %v355
    %2053 = vmatprep.subr.mxu0 %v352
    %2054 = vmatpush1.msra.mxu0 %v351
    %2055 = vmatprep.subr.mxu0 %v348
    %2056 = vmatpush1.msra.mxu0 %v347
    %2057 = vmatprep.subr.mxu0 %v344
    %2058 = vmatpush1.msra.mxu0 %v343
    %2059 = vmatprep.subr.mxu0 %v340
    %2060 = vmatpush1.msra.mxu0 %v339
    %2061 = vmatprep.subr.mxu0 %v336
    %2062 = vmatpush1.msra.mxu0 %v335
    %2063 = vmatprep.subr.mxu0 %v332
    %2064 = vmatpush1.msra.mxu0 %v331
    %2065 = vmatprep.subr.mxu0 %v328
    %2066 = vmatpush1.msra.mxu0 %v327
    %2067 = vmatprep.subr.mxu0 %v324
    %2068 = vmatpush1.msra.mxu0 %v323
    %2069 = vmatprep.subr.mxu0 %v320
    %2070 = vmatpush1.msra.mxu0 %v319
    %2071 = vmatprep.subr.mxu0 %v316
    %2072 = vmatpush1.msra.mxu0 %v315
    %2073 = vmatprep.subr.mxu0 %v312
    %2074 = vmatpush1.msra.mxu0 %v311
    %2075 = vmatprep.subr.mxu0 %v308
    %2076 = vmatpush1.msra.mxu0 %v307
    %2077 = vmatprep.subr.mxu0 %v304
    %2078 = vmatpush1.msra.mxu0 %v303
    %2079 = vmatprep.subr.mxu0 0.0
    %2080 = vmatpush2.msra.mxu0 0.0
    %2081 = vmatprep.subr.mxu0 0.0
    %2082 = vmatpush2.msra.mxu0 0.0
    %2083 = vmatprep.subr.mxu0 0.0
    %2084 = vmatpush2.msra.mxu0 0.0
    %2085 = vmatprep.subr.mxu0 0.0
    %2086 = vmatpush2.msra.mxu0 0.0
    %2087 = vmatprep.subr.mxu0 0.0
    %2088 = vmatpush2.msra.mxu0 0.0
    %2089 = vmatprep.subr.mxu0 0.0
    %2090 = vmatpush2.msra.mxu0 0.0
    %2091 = vmatprep.subr.mxu0 0.0
    %2092 = vmatpush2.msra.mxu0 0.0
    %2093 = vmatprep.subr.mxu0 0.0
    %2094 = vmatpush2.msra.mxu0 0.0
    %2095 = vmatprep.subr.mxu0 0.0
    %2096 = vmatpush2.msra.mxu0 0.0
    %2097 = vmatprep.subr.mxu0 0.0
    %2098 = vmatpush2.msra.mxu0 0.0
    %2099 = vmatprep.subr.mxu0 0.0
    %2100 = vmatpush2.msra.mxu0 0.0
    %2101 = vmatprep.subr.mxu0 0.0
    %2102 = vmatpush2.msra.mxu0 0.0
    %2103 = vmatprep.subr.mxu0 0.0
    %2104 = vmatpush2.msra.mxu0 0.0
    %2105 = vmatprep.subr.mxu0 0.0
    %2106 = vmatpush2.msra.mxu0 0.0
    %2107 = vmatprep.subr.mxu0 0.0
    %2108 = vmatpush2.msra.mxu0 0.0
    %2109 = vmatprep.subr.mxu0 0.0
    %2110 = vmatpush2.msra.mxu0 0.0
    %2111 = vmatprep.mubr.f32.mxu0 0.0
    %2112 = vmatmul.mubr.f32.gmra.mxu0 %v1974
    %v2113 = vpop.f32.mrf.mxu0
    %v2114 = vadd.f32 0.0, %v2113
    %v2115 = vpop.f32.mrf.mxu0
    %v2116 = vadd.f32 0.0, %v2115
    %2117 = vdwg.mxu0
    %v2122 = vcombine.low %v2043, %v2045
    %v2123 = vcombine.low %v2114, %v2116
    %v2125 = vunpack.c.l.s4 1966171168
    %v2126 = vunpack.c.0.s8 %v2125
    %v2127 = vlaneseq
    %v2128 = vshrl.u32 %v2127, 7
    %v2129 = vsub.s32 %v2126, %v2128
    %v2130 = vrot.slane %v2122, %v2129
    %v2132 = vunpack.c.l.s4 1966171168
    %v2133 = vunpack.c.0.s8 %v2132
    %v2134 = vlaneseq
    %v2135 = vshrl.u32 %v2134, 7
    %v2136 = vsub.s32 %v2133, %v2135
    %v2137 = vrot.slane %v2123, %v2136
    %v2138 = vcombine.low %v2130, %v2137
    %v2139 = vcombine.high %v2130, %v2137
    %v2141 = vunpack.c.l.s4 1966171168
    %v2142 = vunpack.c.0.s8 %v2141
    %v2143 = vlaneseq
    %v2144 = vshrl.u32 %v2143, 7
    %v2145 = vsub.s32 %v2142, %v2144
    %v2146 = vrot.slane %v2138, %v2145
    %v2148 = vunpack.c.l.s4 1966171168
    %v2149 = vunpack.c.0.s8 %v2148
    %v2150 = vlaneseq
    %v2151 = vshrl.u32 %v2150, 7
    %v2152 = vsub.s32 %v2149, %v2151
    %v2153 = vrot.slane %v2139, %v2152
    %v2156 = vadd.f32 %v1955, %v2146
    %v2157 = vadd.f32 %v1957, %v2153
    %v2158 = vxor.u32 %v2156, 2147483648
    %v2159 = vxor.u32 %v2157, 2147483648
    %v2160 = vmul.f32 %v2158, 1.442695
    %v2161 = vpow.pop %v2160
    %v2162 = vmul.f32 %v2159, 1.442695
    %v2163 = vpow.pop %v2162
    %v2164 = vadd.f32 %v2161, 1.0
    %v2165 = vadd.f32 %v2163, 1.0
    %v2166 = vrcp.pop %v2164
    %v2167 = vmul.f32 1.0, %v2166
    %v2168 = vrcp.pop %v2165
    %v2169 = vmul.f32 1.0, %v2168
    %v2172 = vrot.slane %v2156, 1
    %v2173 = vrot.slane %v2157, 1
    %v2176 = vxor.u32 %v2172, 2147483648
    %v2177 = vxor.u32 %v2173, 2147483648
    %v2178 = vmul.f32 %v2176, 1.442695
    %v2179 = vpow.pop %v2178
    %v2180 = vmul.f32 %v2177, 1.442695
    %v2181 = vpow.pop %v2180
    %v2182 = vadd.f32 %v2179, 1.0
    %v2183 = vadd.f32 %v2181, 1.0
    %v2184 = vrcp.pop %v2182
    %v2185 = vmul.f32 1.0, %v2184
    %v2186 = vrcp.pop %v2183
    %v2187 = vmul.f32 1.0, %v2186
    %v2188 = vrot.slane %v2156, 2
    %v2189 = vrot.slane %v2157, 2
    %v2192 = vtanh.pop %v2188
    %v2193 = vtanh.pop %v2189
    %v2194 = vrot.slane %v2156, 3
    %v2195 = vrot.slane %v2157, 3
    %v2198 = vxor.u32 %v2194, 2147483648
    %v2199 = vxor.u32 %v2195, 2147483648
    %v2200 = vmul.f32 %v2198, 1.442695
    %v2201 = vpow.pop %v2200
    %v2202 = vmul.f32 %v2199, 1.442695
    %v2203 = vpow.pop %v2202
    %v2204 = vadd.f32 %v2201, 1.0
    %v2205 = vadd.f32 %v2203, 1.0
    %v2206 = vrcp.pop %v2204
    %v2207 = vmul.f32 1.0, %v2206
    %v2208 = vrcp.pop %v2205
    %v2209 = vmul.f32 1.0, %v2208
    %v2210 = vmul.f32 %v2185, %v1946
    %v2211 = vmul.f32 %v2187, %v1947
    %v2212 = vmul.f32 %v2167, %v2192
    %v2213 = vmul.f32 %v2169, %v2193
    %v2214 = vadd.f32 %v2210, %v2212
    %v2215 = vadd.f32 %v2211, %v2213
    %v2216 = vtanh.pop %v2214
    %v2217 = vtanh.pop %v2215
    %v2218 = vmul.f32 %v2207, %v2216
    %v2219 = vmul.f32 %v2209, %v2217
    %2220 = vst [vmem:[#allocation3 + $0x6] sm:$0x1] %v2218
    %2221 = vst [vmem:[#allocation3 + $0xe] sm:$0x1] %v2219
    %s2222 = scalar_lea.vmem [#allocation2], 7
    %v2223 = vld [vmem:[%s2222] ss:$8 sm:$0xf]
    %s2224 = scalar_lea.vmem [#allocation2], 39
    %v2225 = vld [vmem:[%s2224] ss:$8 sm:$0xf]
    %v2228 = vcombine.low %v2218, %v2219
    %v2230 = vunpack.c.l.s4 1966171168
    %v2231 = vunpack.c.0.s8 %v2230
    %v2232 = vlaneseq
    %v2233 = vshrl.u32 %v2232, 7
    %v2234 = vsub.s32 %v2231, %v2233
    %v2235 = vrot.slane %v2228, %v2234
    %v2237 = vunpack.c.l.s4 1966171168
    %v2238 = vunpack.c.0.s8 %v2237
    %v2239 = vlaneseq
    %v2240 = vshrl.u32 %v2239, 7
    %v2241 = vsub.s32 %v2238, %v2240
    %v2242 = vrot.slane %v2235, %v2241
    %2244 = vmatprep.subr.mxu0 %v362
    %2245 = vmatpush1.msra.mxu0 %v361
    %2246 = vmatprep.subr.mxu0 %v358
    %2247 = vmatpush1.msra.mxu0 %v357
    %2248 = vmatprep.subr.mxu0 %v354
    %2249 = vmatpush1.msra.mxu0 %v353
    %2250 = vmatprep.subr.mxu0 %v350
    %2251 = vmatpush1.msra.mxu0 %v349
    %2252 = vmatprep.subr.mxu0 %v346
    %2253 = vmatpush1.msra.mxu0 %v345
    %2254 = vmatprep.subr.mxu0 %v342
    %2255 = vmatpush1.msra.mxu0 %v341
    %2256 = vmatprep.subr.mxu0 %v338
    %2257 = vmatpush1.msra.mxu0 %v337
    %2258 = vmatprep.subr.mxu0 %v334
    %2259 = vmatpush1.msra.mxu0 %v333
    %2260 = vmatprep.subr.mxu0 %v330
    %2261 = vmatpush1.msra.mxu0 %v329
    %2262 = vmatprep.subr.mxu0 %v326
    %2263 = vmatpush1.msra.mxu0 %v325
    %2264 = vmatprep.subr.mxu0 %v322
    %2265 = vmatpush1.msra.mxu0 %v321
    %2266 = vmatprep.subr.mxu0 %v318
    %2267 = vmatpush1.msra.mxu0 %v317
    %2268 = vmatprep.subr.mxu0 %v314
    %2269 = vmatpush1.msra.mxu0 %v313
    %2270 = vmatprep.subr.mxu0 %v310
    %2271 = vmatpush1.msra.mxu0 %v309
    %2272 = vmatprep.subr.mxu0 %v306
    %2273 = vmatpush1.msra.mxu0 %v305
    %2274 = vmatprep.subr.mxu0 %v302
    %2275 = vmatpush1.msra.mxu0 %v301
    %2276 = vmatprep.subr.mxu0 0.0
    %2277 = vmatpush2.msra.mxu0 0.0
    %2278 = vmatprep.subr.mxu0 0.0
    %2279 = vmatpush2.msra.mxu0 0.0
    %2280 = vmatprep.subr.mxu0 0.0
    %2281 = vmatpush2.msra.mxu0 0.0
    %2282 = vmatprep.subr.mxu0 0.0
    %2283 = vmatpush2.msra.mxu0 0.0
    %2284 = vmatprep.subr.mxu0 0.0
    %2285 = vmatpush2.msra.mxu0 0.0
    %2286 = vmatprep.subr.mxu0 0.0
    %2287 = vmatpush2.msra.mxu0 0.0
    %2288 = vmatprep.subr.mxu0 0.0
    %2289 = vmatpush2.msra.mxu0 0.0
    %2290 = vmatprep.subr.mxu0 0.0
    %2291 = vmatpush2.msra.mxu0 0.0
    %2292 = vmatprep.subr.mxu0 0.0
    %2293 = vmatpush2.msra.mxu0 0.0
    %2294 = vmatprep.subr.mxu0 0.0
    %2295 = vmatpush2.msra.mxu0 0.0
    %2296 = vmatprep.subr.mxu0 0.0
    %2297 = vmatpush2.msra.mxu0 0.0
    %2298 = vmatprep.subr.mxu0 0.0
    %2299 = vmatpush2.msra.mxu0 0.0
    %2300 = vmatprep.subr.mxu0 0.0
    %2301 = vmatpush2.msra.mxu0 0.0
    %2302 = vmatprep.subr.mxu0 0.0
    %2303 = vmatpush2.msra.mxu0 0.0
    %2304 = vmatprep.subr.mxu0 0.0
    %2305 = vmatpush2.msra.mxu0 0.0
    %2306 = vmatprep.subr.mxu0 0.0
    %2307 = vmatpush2.msra.mxu0 0.0
    %2308 = vmatprep.mubr.f32.mxu0 0.0
    %2309 = vmatmul.mubr.f32.gmra.mxu0 %v2242
    %v2310 = vpop.f32.mrf.mxu0
    %v2311 = vadd.f32 0.0, %v2310
    %v2312 = vpop.f32.mrf.mxu0
    %v2313 = vadd.f32 0.0, %v2312
    %2314 = vdwg.mxu0
    %2315 = vmatprep.subr.mxu0 %v364
    %2316 = vmatpush1.msra.mxu0 %v363
    %2317 = vmatprep.subr.mxu0 %v360
    %2318 = vmatpush1.msra.mxu0 %v359
    %2319 = vmatprep.subr.mxu0 %v356
    %2320 = vmatpush1.msra.mxu0 %v355
    %2321 = vmatprep.subr.mxu0 %v352
    %2322 = vmatpush1.msra.mxu0 %v351
    %2323 = vmatprep.subr.mxu0 %v348
    %2324 = vmatpush1.msra.mxu0 %v347
    %2325 = vmatprep.subr.mxu0 %v344
    %2326 = vmatpush1.msra.mxu0 %v343
    %2327 = vmatprep.subr.mxu0 %v340
    %2328 = vmatpush1.msra.mxu0 %v339
    %2329 = vmatprep.subr.mxu0 %v336
    %2330 = vmatpush1.msra.mxu0 %v335
    %2331 = vmatprep.subr.mxu0 %v332
    %2332 = vmatpush1.msra.mxu0 %v331
    %2333 = vmatprep.subr.mxu0 %v328
    %2334 = vmatpush1.msra.mxu0 %v327
    %2335 = vmatprep.subr.mxu0 %v324
    %2336 = vmatpush1.msra.mxu0 %v323
    %2337 = vmatprep.subr.mxu0 %v320
    %2338 = vmatpush1.msra.mxu0 %v319
    %2339 = vmatprep.subr.mxu0 %v316
    %2340 = vmatpush1.msra.mxu0 %v315
    %2341 = vmatprep.subr.mxu0 %v312
    %2342 = vmatpush1.msra.mxu0 %v311
    %2343 = vmatprep.subr.mxu0 %v308
    %2344 = vmatpush1.msra.mxu0 %v307
    %2345 = vmatprep.subr.mxu0 %v304
    %2346 = vmatpush1.msra.mxu0 %v303
    %2347 = vmatprep.subr.mxu0 0.0
    %2348 = vmatpush2.msra.mxu0 0.0
    %2349 = vmatprep.subr.mxu0 0.0
    %2350 = vmatpush2.msra.mxu0 0.0
    %2351 = vmatprep.subr.mxu0 0.0
    %2352 = vmatpush2.msra.mxu0 0.0
    %2353 = vmatprep.subr.mxu0 0.0
    %2354 = vmatpush2.msra.mxu0 0.0
    %2355 = vmatprep.subr.mxu0 0.0
    %2356 = vmatpush2.msra.mxu0 0.0
    %2357 = vmatprep.subr.mxu0 0.0
    %2358 = vmatpush2.msra.mxu0 0.0
    %2359 = vmatprep.subr.mxu0 0.0
    %2360 = vmatpush2.msra.mxu0 0.0
    %2361 = vmatprep.subr.mxu0 0.0
    %2362 = vmatpush2.msra.mxu0 0.0
    %2363 = vmatprep.subr.mxu0 0.0
    %2364 = vmatpush2.msra.mxu0 0.0
    %2365 = vmatprep.subr.mxu0 0.0
    %2366 = vmatpush2.msra.mxu0 0.0
    %2367 = vmatprep.subr.mxu0 0.0
    %2368 = vmatpush2.msra.mxu0 0.0
    %2369 = vmatprep.subr.mxu0 0.0
    %2370 = vmatpush2.msra.mxu0 0.0
    %2371 = vmatprep.subr.mxu0 0.0
    %2372 = vmatpush2.msra.mxu0 0.0
    %2373 = vmatprep.subr.mxu0 0.0
    %2374 = vmatpush2.msra.mxu0 0.0
    %2375 = vmatprep.subr.mxu0 0.0
    %2376 = vmatpush2.msra.mxu0 0.0
    %2377 = vmatprep.subr.mxu0 0.0
    %2378 = vmatpush2.msra.mxu0 0.0
    %2379 = vmatprep.mubr.f32.mxu0 0.0
    %2380 = vmatmul.mubr.f32.gmra.mxu0 %v2242
    %v2381 = vpop.f32.mrf.mxu0
    %v2382 = vadd.f32 0.0, %v2381
    %v2383 = vpop.f32.mrf.mxu0
    %v2384 = vadd.f32 0.0, %v2383
    %2385 = vdwg.mxu0
    %v2390 = vcombine.low %v2311, %v2313
    %v2391 = vcombine.low %v2382, %v2384
    %v2393 = vunpack.c.l.s4 1966171168
    %v2394 = vunpack.c.0.s8 %v2393
    %v2395 = vlaneseq
    %v2396 = vshrl.u32 %v2395, 7
    %v2397 = vsub.s32 %v2394, %v2396
    %v2398 = vrot.slane %v2390, %v2397
    %v2400 = vunpack.c.l.s4 1966171168
    %v2401 = vunpack.c.0.s8 %v2400
    %v2402 = vlaneseq
    %v2403 = vshrl.u32 %v2402, 7
    %v2404 = vsub.s32 %v2401, %v2403
    %v2405 = vrot.slane %v2391, %v2404
    %v2406 = vcombine.low %v2398, %v2405
    %v2407 = vcombine.high %v2398, %v2405
    %v2409 = vunpack.c.l.s4 1966171168
    %v2410 = vunpack.c.0.s8 %v2409
    %v2411 = vlaneseq
    %v2412 = vshrl.u32 %v2411, 7
    %v2413 = vsub.s32 %v2410, %v2412
    %v2414 = vrot.slane %v2406, %v2413
    %v2416 = vunpack.c.l.s4 1966171168
    %v2417 = vunpack.c.0.s8 %v2416
    %v2418 = vlaneseq
    %v2419 = vshrl.u32 %v2418, 7
    %v2420 = vsub.s32 %v2417, %v2419
    %v2421 = vrot.slane %v2407, %v2420
    %v2424 = vadd.f32 %v2223, %v2414
    %v2425 = vadd.f32 %v2225, %v2421
    %v2426 = vxor.u32 %v2424, 2147483648
    %v2427 = vxor.u32 %v2425, 2147483648
    %v2428 = vmul.f32 %v2426, 1.442695
    %v2429 = vpow.pop %v2428
    %v2430 = vmul.f32 %v2427, 1.442695
    %v2431 = vpow.pop %v2430
    %v2432 = vadd.f32 %v2429, 1.0
    %v2433 = vadd.f32 %v2431, 1.0
    %v2434 = vrcp.pop %v2432
    %v2435 = vmul.f32 1.0, %v2434
    %v2436 = vrcp.pop %v2433
    %v2437 = vmul.f32 1.0, %v2436
    %v2440 = vrot.slane %v2424, 1
    %v2441 = vrot.slane %v2425, 1
    %v2444 = vxor.u32 %v2440, 2147483648
    %v2445 = vxor.u32 %v2441, 2147483648
    %v2446 = vmul.f32 %v2444, 1.442695
    %v2447 = vpow.pop %v2446
    %v2448 = vmul.f32 %v2445, 1.442695
    %v2449 = vpow.pop %v2448
    %v2450 = vadd.f32 %v2447, 1.0
    %v2451 = vadd.f32 %v2449, 1.0
    %v2452 = vrcp.pop %v2450
    %v2453 = vmul.f32 1.0, %v2452
    %v2454 = vrcp.pop %v2451
    %v2455 = vmul.f32 1.0, %v2454
    %v2456 = vrot.slane %v2424, 2
    %v2457 = vrot.slane %v2425, 2
    %v2460 = vtanh.pop %v2456
    %v2461 = vtanh.pop %v2457
    %v2462 = vrot.slane %v2424, 3
    %v2463 = vrot.slane %v2425, 3
    %v2466 = vxor.u32 %v2462, 2147483648
    %v2467 = vxor.u32 %v2463, 2147483648
    %v2468 = vmul.f32 %v2466, 1.442695
    %v2469 = vpow.pop %v2468
    %v2470 = vmul.f32 %v2467, 1.442695
    %v2471 = vpow.pop %v2470
    %v2472 = vadd.f32 %v2469, 1.0
    %v2473 = vadd.f32 %v2471, 1.0
    %v2474 = vrcp.pop %v2472
    %v2475 = vmul.f32 1.0, %v2474
    %v2476 = vrcp.pop %v2473
    %v2477 = vmul.f32 1.0, %v2476
    %v2478 = vmul.f32 %v2453, %v2214
    %v2479 = vmul.f32 %v2455, %v2215
    %v2480 = vmul.f32 %v2435, %v2460
    %v2481 = vmul.f32 %v2437, %v2461
    %v2482 = vadd.f32 %v2478, %v2480
    %v2483 = vadd.f32 %v2479, %v2481
    %v2484 = vtanh.pop %v2482
    %v2485 = vtanh.pop %v2483
    %v2486 = vmul.f32 %v2475, %v2484
    %v2487 = vmul.f32 %v2477, %v2485
    %2488 = vst [vmem:[#allocation3 + $0x7] sm:$0x1] %v2486
    %2489 = vst [vmem:[#allocation3 + $0xf] sm:$0x1] %v2487
    %v2490 = vld [vmem:[#allocation3] sm:$0xff]
    %v2491 = vld [vmem:[#allocation3 + $0x8] sm:$0xff]
    %v2492 = vld [vmem:[%s2] sm:$0xff]
    %v2493 = vld [vmem:[%s2 + $0x8] sm:$0xff]
    %v2494 = vld [vmem:[%s2 + $0x10] sm:$0xff]
    %v2495 = vld [vmem:[%s2 + $0x18] sm:$0xff]
    %v2496 = vld [vmem:[%s2 + $0x20] sm:$0xff]
    %v2497 = vld [vmem:[%s2 + $0x28] sm:$0xff]
    %v2498 = vld [vmem:[%s2 + $0x30] sm:$0xff]
    %v2499 = vld [vmem:[%s2 + $0x38] sm:$0xff]
    %v2500 = vld [vmem:[%s2 + $0x40] sm:$0xff]
    %v2501 = vld [vmem:[%s2 + $0x48] sm:$0xff]
    %v2502 = vld [vmem:[%s2 + $0x50] sm:$0xff]
    %v2503 = vld [vmem:[%s2 + $0x58] sm:$0xff]
    %v2504 = vld [vmem:[%s2 + $0x60] sm:$0xff]
    %v2505 = vld [vmem:[%s2 + $0x68] sm:$0xff]
    %v2506 = vld [vmem:[%s2 + $0x70] sm:$0xff]
    %v2507 = vld [vmem:[%s2 + $0x78] sm:$0xff]
    %v2508 = vld [vmem:[%s2 + $0x80] sm:$0xff]
    %v2509 = vld [vmem:[%s2 + $0x88] sm:$0xff]
    %v2510 = vld [vmem:[%s2 + $0x90] sm:$0xff]
    %v2511 = vld [vmem:[%s2 + $0x98] sm:$0xff]
    %v2512 = vld [vmem:[%s2 + $0xa0] sm:$0xff]
    %v2513 = vld [vmem:[%s2 + $0xa8] sm:$0xff]
    %v2514 = vld [vmem:[%s2 + $0xb0] sm:$0xff]
    %v2515 = vld [vmem:[%s2 + $0xb8] sm:$0xff]
    %v2516 = vld [vmem:[%s2 + $0xc0] sm:$0xff]
    %v2517 = vld [vmem:[%s2 + $0xc8] sm:$0xff]
    %v2518 = vld [vmem:[%s2 + $0xd0] sm:$0xff]
    %v2519 = vld [vmem:[%s2 + $0xd8] sm:$0xff]
    %v2520 = vld [vmem:[%s2 + $0xe0] sm:$0xff]
    %v2521 = vld [vmem:[%s2 + $0xe8] sm:$0xff]
    %v2522 = vld [vmem:[%s2 + $0xf0] sm:$0xff]
    %v2523 = vld [vmem:[%s2 + $0xf8] sm:$0xff]
    %v2524 = vld [vmem:[%s2 + $0x100] sm:$0xff]
    %v2525 = vld [vmem:[%s2 + $0x108] sm:$0xff]
    %v2526 = vld [vmem:[%s2 + $0x110] sm:$0xff]
    %v2527 = vld [vmem:[%s2 + $0x118] sm:$0xff]
    %v2528 = vld [vmem:[%s2 + $0x120] sm:$0xff]
    %v2529 = vld [vmem:[%s2 + $0x128] sm:$0xff]
    %v2530 = vld [vmem:[%s2 + $0x130] sm:$0xff]
    %v2531 = vld [vmem:[%s2 + $0x138] sm:$0xff]
    %v2532 = vld [vmem:[%s2 + $0x140] sm:$0xff]
    %v2533 = vld [vmem:[%s2 + $0x148] sm:$0xff]
    %v2534 = vld [vmem:[%s2 + $0x150] sm:$0xff]
    %v2535 = vld [vmem:[%s2 + $0x158] sm:$0xff]
    %v2536 = vld [vmem:[%s2 + $0x160] sm:$0xff]
    %v2537 = vld [vmem:[%s2 + $0x168] sm:$0xff]
    %v2538 = vld [vmem:[%s2 + $0x170] sm:$0xff]
    %v2539 = vld [vmem:[%s2 + $0x178] sm:$0xff]
    %v2540 = vld [vmem:[%s2 + $0x180] sm:$0xff]
    %v2541 = vld [vmem:[%s2 + $0x188] sm:$0xff]
    %v2542 = vld [vmem:[%s2 + $0x190] sm:$0xff]
    %v2543 = vld [vmem:[%s2 + $0x198] sm:$0xff]
    %v2544 = vld [vmem:[%s2 + $0x1a0] sm:$0xff]
    %v2545 = vld [vmem:[%s2 + $0x1a8] sm:$0xff]
    %v2546 = vld [vmem:[%s2 + $0x1b0] sm:$0xff]
    %v2547 = vld [vmem:[%s2 + $0x1b8] sm:$0xff]
    %v2548 = vld [vmem:[%s2 + $0x1c0] sm:$0xff]
    %v2549 = vld [vmem:[%s2 + $0x1c8] sm:$0xff]
    %v2550 = vld [vmem:[%s2 + $0x1d0] sm:$0xff]
    %v2551 = vld [vmem:[%s2 + $0x1d8] sm:$0xff]
    %v2552 = vld [vmem:[%s2 + $0x1e0] sm:$0xff]
    %v2553 = vld [vmem:[%s2 + $0x1e8] sm:$0xff]
    %v2554 = vld [vmem:[%s2 + $0x1f0] sm:$0xff]
    %v2555 = vld [vmem:[%s2 + $0x1f8] sm:$0xff]
    %s2556 = scalar_lea.vmem %s4, 4
    %v2557 = vld [vmem:[%s2556] sm:$0xf]
    %v2559 = vlaneseq
    %v2560 = vshrl.u32 %v2559, 7
    %v2561 = vsub.s32 0, %v2560
    %v2562 = vrot.slane %v2557, %v2561
    %v2563 = vlaneseq
    %v2564 = vshrl.u32 %v2563, 7
    %v2565 = vsub.s32 1, %v2564
    %v2566 = vrot.slane %v2557, %v2565
    %v2567 = vlaneseq
    %v2568 = vshrl.u32 %v2567, 7
    %v2569 = vsub.s32 2, %v2568
    %v2570 = vrot.slane %v2557, %v2569
    %v2571 = vlaneseq
    %v2572 = vshrl.u32 %v2571, 7
    %v2573 = vsub.s32 3, %v2572
    %v2574 = vrot.slane %v2557, %v2573
    %2579 = vmatprep.subr.mxu0 %v2553
    %2580 = vmatpush1.msra.mxu0 %v2552
    %2581 = vmatprep.subr.mxu0 %v2549
    %2582 = vmatpush1.msra.mxu0 %v2548
    %2583 = vmatprep.subr.mxu0 %v2545
    %2584 = vmatpush1.msra.mxu0 %v2544
    %2585 = vmatprep.subr.mxu0 %v2541
    %2586 = vmatpush1.msra.mxu0 %v2540
    %2587 = vmatprep.subr.mxu0 %v2537
    %2588 = vmatpush1.msra.mxu0 %v2536
    %2589 = vmatprep.subr.mxu0 %v2533
    %2590 = vmatpush1.msra.mxu0 %v2532
    %2591 = vmatprep.subr.mxu0 %v2529
    %2592 = vmatpush1.msra.mxu0 %v2528
    %2593 = vmatprep.subr.mxu0 %v2525
    %2594 = vmatpush1.msra.mxu0 %v2524
    %2595 = vmatprep.subr.mxu0 %v2521
    %2596 = vmatpush1.msra.mxu0 %v2520
    %2597 = vmatprep.subr.mxu0 %v2517
    %2598 = vmatpush1.msra.mxu0 %v2516
    %2599 = vmatprep.subr.mxu0 %v2513
    %2600 = vmatpush1.msra.mxu0 %v2512
    %2601 = vmatprep.subr.mxu0 %v2509
    %2602 = vmatpush1.msra.mxu0 %v2508
    %2603 = vmatprep.subr.mxu0 %v2505
    %2604 = vmatpush1.msra.mxu0 %v2504
    %2605 = vmatprep.subr.mxu0 %v2501
    %2606 = vmatpush1.msra.mxu0 %v2500
    %2607 = vmatprep.subr.mxu0 %v2497
    %2608 = vmatpush1.msra.mxu0 %v2496
    %2609 = vmatprep.subr.mxu0 %v2493
    %2610 = vmatpush1.msra.mxu0 %v2492
    %2611 = vmatprep.subr.mxu0 0.0
    %2612 = vmatpush2.msra.mxu0 0.0
    %2613 = vmatprep.subr.mxu0 0.0
    %2614 = vmatpush2.msra.mxu0 0.0
    %2615 = vmatprep.subr.mxu0 0.0
    %2616 = vmatpush2.msra.mxu0 0.0
    %2617 = vmatprep.subr.mxu0 0.0
    %2618 = vmatpush2.msra.mxu0 0.0
    %2619 = vmatprep.subr.mxu0 0.0
    %2620 = vmatpush2.msra.mxu0 0.0
    %2621 = vmatprep.subr.mxu0 0.0
    %2622 = vmatpush2.msra.mxu0 0.0
    %2623 = vmatprep.subr.mxu0 0.0
    %2624 = vmatpush2.msra.mxu0 0.0
    %2625 = vmatprep.subr.mxu0 0.0
    %2626 = vmatpush2.msra.mxu0 0.0
    %2627 = vmatprep.subr.mxu0 0.0
    %2628 = vmatpush2.msra.mxu0 0.0
    %2629 = vmatprep.subr.mxu0 0.0
    %2630 = vmatpush2.msra.mxu0 0.0
    %2631 = vmatprep.subr.mxu0 0.0
    %2632 = vmatpush2.msra.mxu0 0.0
    %2633 = vmatprep.subr.mxu0 0.0
    %2634 = vmatpush2.msra.mxu0 0.0
    %2635 = vmatprep.subr.mxu0 0.0
    %2636 = vmatpush2.msra.mxu0 0.0
    %2637 = vmatprep.subr.mxu0 0.0
    %2638 = vmatpush2.msra.mxu0 0.0
    %2639 = vmatprep.subr.mxu0 0.0
    %2640 = vmatpush2.msra.mxu0 0.0
    %2641 = vmatprep.subr.mxu0 0.0
    %2642 = vmatpush2.msra.mxu0 0.0
    %2643 = vmatprep.mubr.f32.mxu0 0.0
    %2644 = vmatmul.mubr.f32.gmra.mxu0 %v2490
    %v2645 = vpop.f32.mrf.mxu0
    %v2646 = vadd.f32 %v2562, %v2645
    %v2647 = vpop.f32.mrf.mxu0
    %v2648 = vadd.f32 %v2566, %v2647
    %2649 = vmatprep.mubr.f32.mxu0 0.0
    %2650 = vmatmul.mubr.f32.gmra.mxu0 %v2491
    %v2651 = vpop.f32.mrf.mxu0
    %v2652 = vadd.f32 %v2562, %v2651
    %v2653 = vpop.f32.mrf.mxu0
    %v2654 = vadd.f32 %v2566, %v2653
    %2655 = vdwg.mxu0
    %2656 = vmatprep.subr.mxu0 %v2555
    %2657 = vmatpush1.msra.mxu0 %v2554
    %2658 = vmatprep.subr.mxu0 %v2551
    %2659 = vmatpush1.msra.mxu0 %v2550
    %2660 = vmatprep.subr.mxu0 %v2547
    %2661 = vmatpush1.msra.mxu0 %v2546
    %2662 = vmatprep.subr.mxu0 %v2543
    %2663 = vmatpush1.msra.mxu0 %v2542
    %2664 = vmatprep.subr.mxu0 %v2539
    %2665 = vmatpush1.msra.mxu0 %v2538
    %2666 = vmatprep.subr.mxu0 %v2535
    %2667 = vmatpush1.msra.mxu0 %v2534
    %2668 = vmatprep.subr.mxu0 %v2531
    %2669 = vmatpush1.msra.mxu0 %v2530
    %2670 = vmatprep.subr.mxu0 %v2527
    %2671 = vmatpush1.msra.mxu0 %v2526
    %2672 = vmatprep.subr.mxu0 %v2523
    %2673 = vmatpush1.msra.mxu0 %v2522
    %2674 = vmatprep.subr.mxu0 %v2519
    %2675 = vmatpush1.msra.mxu0 %v2518
    %2676 = vmatprep.subr.mxu0 %v2515
    %2677 = vmatpush1.msra.mxu0 %v2514
    %2678 = vmatprep.subr.mxu0 %v2511
    %2679 = vmatpush1.msra.mxu0 %v2510
    %2680 = vmatprep.subr.mxu0 %v2507
    %2681 = vmatpush1.msra.mxu0 %v2506
    %2682 = vmatprep.subr.mxu0 %v2503
    %2683 = vmatpush1.msra.mxu0 %v2502
    %2684 = vmatprep.subr.mxu0 %v2499
    %2685 = vmatpush1.msra.mxu0 %v2498
    %2686 = vmatprep.subr.mxu0 %v2495
    %2687 = vmatpush1.msra.mxu0 %v2494
    %2688 = vmatprep.subr.mxu0 0.0
    %2689 = vmatpush2.msra.mxu0 0.0
    %2690 = vmatprep.subr.mxu0 0.0
    %2691 = vmatpush2.msra.mxu0 0.0
    %2692 = vmatprep.subr.mxu0 0.0
    %2693 = vmatpush2.msra.mxu0 0.0
    %2694 = vmatprep.subr.mxu0 0.0
    %2695 = vmatpush2.msra.mxu0 0.0
    %2696 = vmatprep.subr.mxu0 0.0
    %2697 = vmatpush2.msra.mxu0 0.0
    %2698 = vmatprep.subr.mxu0 0.0
    %2699 = vmatpush2.msra.mxu0 0.0
    %2700 = vmatprep.subr.mxu0 0.0
    %2701 = vmatpush2.msra.mxu0 0.0
    %2702 = vmatprep.subr.mxu0 0.0
    %2703 = vmatpush2.msra.mxu0 0.0
    %2704 = vmatprep.subr.mxu0 0.0
    %2705 = vmatpush2.msra.mxu0 0.0
    %2706 = vmatprep.subr.mxu0 0.0
    %2707 = vmatpush2.msra.mxu0 0.0
    %2708 = vmatprep.subr.mxu0 0.0
    %2709 = vmatpush2.msra.mxu0 0.0
    %2710 = vmatprep.subr.mxu0 0.0
    %2711 = vmatpush2.msra.mxu0 0.0
    %2712 = vmatprep.subr.mxu0 0.0
    %2713 = vmatpush2.msra.mxu0 0.0
    %2714 = vmatprep.subr.mxu0 0.0
    %2715 = vmatpush2.msra.mxu0 0.0
    %2716 = vmatprep.subr.mxu0 0.0
    %2717 = vmatpush2.msra.mxu0 0.0
    %2718 = vmatprep.subr.mxu0 0.0
    %2719 = vmatpush2.msra.mxu0 0.0
    %2720 = vmatprep.mubr.f32.mxu0 0.0
    %2721 = vmatmul.mubr.f32.gmra.mxu0 %v2490
    %v2722 = vpop.f32.mrf.mxu0
    %v2723 = vadd.f32 %v2570, %v2722
    %v2724 = vpop.f32.mrf.mxu0
    %v2725 = vadd.f32 %v2574, %v2724
    %2726 = vmatprep.mubr.f32.mxu0 0.0
    %2727 = vmatmul.mubr.f32.gmra.mxu0 %v2491
    %v2728 = vpop.f32.mrf.mxu0
    %v2729 = vadd.f32 %v2570, %v2728
    %v2730 = vpop.f32.mrf.mxu0
    %v2731 = vadd.f32 %v2574, %v2730
    %2732 = vdwg.mxu0
    %2733 = vst [vmem:[#allocation2] sm:$0xff] %v2646
    %2734 = vst [vmem:[#allocation2 + $0x8] sm:$0xff] %v2648
    %2735 = vst [vmem:[#allocation2 + $0x10] sm:$0xff] %v2723
    %2736 = vst [vmem:[#allocation2 + $0x18] sm:$0xff] %v2725
    %2737 = vst [vmem:[#allocation2 + $0x20] sm:$0xff] %v2652
    %2738 = vst [vmem:[#allocation2 + $0x28] sm:$0xff] %v2654
    %2739 = vst [vmem:[#allocation2 + $0x30] sm:$0xff] %v2729
    %2740 = vst [vmem:[#allocation2 + $0x38] sm:$0xff] %v2731
    %s2741 = scalar_lea.vmem %s3, 512
    %v2742 = vld [vmem:[%s2741] sm:$0xff]
    %v2743 = vld [vmem:[%s2741 + $0x8] sm:$0xff]
    %v2744 = vld [vmem:[%s2741 + $0x10] sm:$0xff]
    %v2745 = vld [vmem:[%s2741 + $0x18] sm:$0xff]
    %v2746 = vld [vmem:[%s2741 + $0x20] sm:$0xff]
    %v2747 = vld [vmem:[%s2741 + $0x28] sm:$0xff]
    %v2748 = vld [vmem:[%s2741 + $0x30] sm:$0xff]
    %v2749 = vld [vmem:[%s2741 + $0x38] sm:$0xff]
    %v2750 = vld [vmem:[%s2741 + $0x40] sm:$0xff]
    %v2751 = vld [vmem:[%s2741 + $0x48] sm:$0xff]
    %v2752 = vld [vmem:[%s2741 + $0x50] sm:$0xff]
    %v2753 = vld [vmem:[%s2741 + $0x58] sm:$0xff]
    %v2754 = vld [vmem:[%s2741 + $0x60] sm:$0xff]
    %v2755 = vld [vmem:[%s2741 + $0x68] sm:$0xff]
    %v2756 = vld [vmem:[%s2741 + $0x70] sm:$0xff]
    %v2757 = vld [vmem:[%s2741 + $0x78] sm:$0xff]
    %v2758 = vld [vmem:[%s2741 + $0x80] sm:$0xff]
    %v2759 = vld [vmem:[%s2741 + $0x88] sm:$0xff]
    %v2760 = vld [vmem:[%s2741 + $0x90] sm:$0xff]
    %v2761 = vld [vmem:[%s2741 + $0x98] sm:$0xff]
    %v2762 = vld [vmem:[%s2741 + $0xa0] sm:$0xff]
    %v2763 = vld [vmem:[%s2741 + $0xa8] sm:$0xff]
    %v2764 = vld [vmem:[%s2741 + $0xb0] sm:$0xff]
    %v2765 = vld [vmem:[%s2741 + $0xb8] sm:$0xff]
    %v2766 = vld [vmem:[%s2741 + $0xc0] sm:$0xff]
    %v2767 = vld [vmem:[%s2741 + $0xc8] sm:$0xff]
    %v2768 = vld [vmem:[%s2741 + $0xd0] sm:$0xff]
    %v2769 = vld [vmem:[%s2741 + $0xd8] sm:$0xff]
    %v2770 = vld [vmem:[%s2741 + $0xe0] sm:$0xff]
    %v2771 = vld [vmem:[%s2741 + $0xe8] sm:$0xff]
    %v2772 = vld [vmem:[%s2741 + $0xf0] sm:$0xff]
    %v2773 = vld [vmem:[%s2741 + $0xf8] sm:$0xff]
    %v2774 = vld [vmem:[%s2741 + $0x100] sm:$0xff]
    %v2775 = vld [vmem:[%s2741 + $0x108] sm:$0xff]
    %v2776 = vld [vmem:[%s2741 + $0x110] sm:$0xff]
    %v2777 = vld [vmem:[%s2741 + $0x118] sm:$0xff]
    %v2778 = vld [vmem:[%s2741 + $0x120] sm:$0xff]
    %v2779 = vld [vmem:[%s2741 + $0x128] sm:$0xff]
    %v2780 = vld [vmem:[%s2741 + $0x130] sm:$0xff]
    %v2781 = vld [vmem:[%s2741 + $0x138] sm:$0xff]
    %v2782 = vld [vmem:[%s2741 + $0x140] sm:$0xff]
    %v2783 = vld [vmem:[%s2741 + $0x148] sm:$0xff]
    %v2784 = vld [vmem:[%s2741 + $0x150] sm:$0xff]
    %v2785 = vld [vmem:[%s2741 + $0x158] sm:$0xff]
    %v2786 = vld [vmem:[%s2741 + $0x160] sm:$0xff]
    %v2787 = vld [vmem:[%s2741 + $0x168] sm:$0xff]
    %v2788 = vld [vmem:[%s2741 + $0x170] sm:$0xff]
    %v2789 = vld [vmem:[%s2741 + $0x178] sm:$0xff]
    %v2790 = vld [vmem:[%s2741 + $0x180] sm:$0xff]
    %v2791 = vld [vmem:[%s2741 + $0x188] sm:$0xff]
    %v2792 = vld [vmem:[%s2741 + $0x190] sm:$0xff]
    %v2793 = vld [vmem:[%s2741 + $0x198] sm:$0xff]
    %v2794 = vld [vmem:[%s2741 + $0x1a0] sm:$0xff]
    %v2795 = vld [vmem:[%s2741 + $0x1a8] sm:$0xff]
    %v2796 = vld [vmem:[%s2741 + $0x1b0] sm:$0xff]
    %v2797 = vld [vmem:[%s2741 + $0x1b8] sm:$0xff]
    %v2798 = vld [vmem:[%s2741 + $0x1c0] sm:$0xff]
    %v2799 = vld [vmem:[%s2741 + $0x1c8] sm:$0xff]
    %v2800 = vld [vmem:[%s2741 + $0x1d0] sm:$0xff]
    %v2801 = vld [vmem:[%s2741 + $0x1d8] sm:$0xff]
    %v2802 = vld [vmem:[%s2741 + $0x1e0] sm:$0xff]
    %v2803 = vld [vmem:[%s2741 + $0x1e8] sm:$0xff]
    %v2804 = vld [vmem:[%s2741 + $0x1f0] sm:$0xff]
    %v2805 = vld [vmem:[%s2741 + $0x1f8] sm:$0xff]
    %v2806 = vld [vmem:[#allocation2] ss:$8 sm:$0xf]
    %v2807 = vld [vmem:[%s366] ss:$8 sm:$0xf]
    %2808 = vmatprep.subr.mxu0 %v2803
    %2809 = vmatpush1.msra.mxu0 %v2802
    %2810 = vmatprep.subr.mxu0 %v2799
    %2811 = vmatpush1.msra.mxu0 %v2798
    %2812 = vmatprep.subr.mxu0 %v2795
    %2813 = vmatpush1.msra.mxu0 %v2794
    %2814 = vmatprep.subr.mxu0 %v2791
    %2815 = vmatpush1.msra.mxu0 %v2790
    %2816 = vmatprep.subr.mxu0 %v2787
    %2817 = vmatpush1.msra.mxu0 %v2786
    %2818 = vmatprep.subr.mxu0 %v2783
    %2819 = vmatpush1.msra.mxu0 %v2782
    %2820 = vmatprep.subr.mxu0 %v2779
    %2821 = vmatpush1.msra.mxu0 %v2778
    %2822 = vmatprep.subr.mxu0 %v2775
    %2823 = vmatpush1.msra.mxu0 %v2774
    %2824 = vmatprep.subr.mxu0 %v2771
    %2825 = vmatpush1.msra.mxu0 %v2770
    %2826 = vmatprep.subr.mxu0 %v2767
    %2827 = vmatpush1.msra.mxu0 %v2766
    %2828 = vmatprep.subr.mxu0 %v2763
    %2829 = vmatpush1.msra.mxu0 %v2762
    %2830 = vmatprep.subr.mxu0 %v2759
    %2831 = vmatpush1.msra.mxu0 %v2758
    %2832 = vmatprep.subr.mxu0 %v2755
    %2833 = vmatpush1.msra.mxu0 %v2754
    %2834 = vmatprep.subr.mxu0 %v2751
    %2835 = vmatpush1.msra.mxu0 %v2750
    %2836 = vmatprep.subr.mxu0 %v2747
    %2837 = vmatpush1.msra.mxu0 %v2746
    %2838 = vmatprep.subr.mxu0 %v2743
    %2839 = vmatpush1.msra.mxu0 %v2742
    %2840 = vmatprep.subr.mxu0 0.0
    %2841 = vmatpush2.msra.mxu0 0.0
    %2842 = vmatprep.subr.mxu0 0.0
    %2843 = vmatpush2.msra.mxu0 0.0
    %2844 = vmatprep.subr.mxu0 0.0
    %2845 = vmatpush2.msra.mxu0 0.0
    %2846 = vmatprep.subr.mxu0 0.0
    %2847 = vmatpush2.msra.mxu0 0.0
    %2848 = vmatprep.subr.mxu0 0.0
    %2849 = vmatpush2.msra.mxu0 0.0
    %2850 = vmatprep.subr.mxu0 0.0
    %2851 = vmatpush2.msra.mxu0 0.0
    %2852 = vmatprep.subr.mxu0 0.0
    %2853 = vmatpush2.msra.mxu0 0.0
    %2854 = vmatprep.subr.mxu0 0.0
    %2855 = vmatpush2.msra.mxu0 0.0
    %2856 = vmatprep.subr.mxu0 0.0
    %2857 = vmatpush2.msra.mxu0 0.0
    %2858 = vmatprep.subr.mxu0 0.0
    %2859 = vmatpush2.msra.mxu0 0.0
    %2860 = vmatprep.subr.mxu0 0.0
    %2861 = vmatpush2.msra.mxu0 0.0
    %2862 = vmatprep.subr.mxu0 0.0
    %2863 = vmatpush2.msra.mxu0 0.0
    %2864 = vmatprep.subr.mxu0 0.0
    %2865 = vmatpush2.msra.mxu0 0.0
    %2866 = vmatprep.subr.mxu0 0.0
    %2867 = vmatpush2.msra.mxu0 0.0
    %2868 = vmatprep.subr.mxu0 0.0
    %2869 = vmatpush2.msra.mxu0 0.0
    %2870 = vmatprep.subr.mxu0 0.0
    %2871 = vmatpush2.msra.mxu0 0.0
    %2872 = vmatprep.mubr.f32.mxu0 0.0
    %2873 = vmatmul.mubr.f32.gmra.mxu0 0.0
    %v2874 = vpop.f32.mrf.mxu0
    %v2875 = vadd.f32 0.0, %v2874
    %v2876 = vpop.f32.mrf.mxu0
    %v2877 = vadd.f32 0.0, %v2876
    %2878 = vdwg.mxu0
    %2879 = vmatprep.subr.mxu0 %v2805
    %2880 = vmatpush1.msra.mxu0 %v2804
    %2881 = vmatprep.subr.mxu0 %v2801
    %2882 = vmatpush1.msra.mxu0 %v2800
    %2883 = vmatprep.subr.mxu0 %v2797
    %2884 = vmatpush1.msra.mxu0 %v2796
    %2885 = vmatprep.subr.mxu0 %v2793
    %2886 = vmatpush1.msra.mxu0 %v2792
    %2887 = vmatprep.subr.mxu0 %v2789
    %2888 = vmatpush1.msra.mxu0 %v2788
    %2889 = vmatprep.subr.mxu0 %v2785
    %2890 = vmatpush1.msra.mxu0 %v2784
    %2891 = vmatprep.subr.mxu0 %v2781
    %2892 = vmatpush1.msra.mxu0 %v2780
    %2893 = vmatprep.subr.mxu0 %v2777
    %2894 = vmatpush1.msra.mxu0 %v2776
    %2895 = vmatprep.subr.mxu0 %v2773
    %2896 = vmatpush1.msra.mxu0 %v2772
    %2897 = vmatprep.subr.mxu0 %v2769
    %2898 = vmatpush1.msra.mxu0 %v2768
    %2899 = vmatprep.subr.mxu0 %v2765
    %2900 = vmatpush1.msra.mxu0 %v2764
    %2901 = vmatprep.subr.mxu0 %v2761
    %2902 = vmatpush1.msra.mxu0 %v2760
    %2903 = vmatprep.subr.mxu0 %v2757
    %2904 = vmatpush1.msra.mxu0 %v2756
    %2905 = vmatprep.subr.mxu0 %v2753
    %2906 = vmatpush1.msra.mxu0 %v2752
    %2907 = vmatprep.subr.mxu0 %v2749
    %2908 = vmatpush1.msra.mxu0 %v2748
    %2909 = vmatprep.subr.mxu0 %v2745
    %2910 = vmatpush1.msra.mxu0 %v2744
    %2911 = vmatprep.subr.mxu0 0.0
    %2912 = vmatpush2.msra.mxu0 0.0
    %2913 = vmatprep.subr.mxu0 0.0
    %2914 = vmatpush2.msra.mxu0 0.0
    %2915 = vmatprep.subr.mxu0 0.0
    %2916 = vmatpush2.msra.mxu0 0.0
    %2917 = vmatprep.subr.mxu0 0.0
    %2918 = vmatpush2.msra.mxu0 0.0
    %2919 = vmatprep.subr.mxu0 0.0
    %2920 = vmatpush2.msra.mxu0 0.0
    %2921 = vmatprep.subr.mxu0 0.0
    %2922 = vmatpush2.msra.mxu0 0.0
    %2923 = vmatprep.subr.mxu0 0.0
    %2924 = vmatpush2.msra.mxu0 0.0
    %2925 = vmatprep.subr.mxu0 0.0
    %2926 = vmatpush2.msra.mxu0 0.0
    %2927 = vmatprep.subr.mxu0 0.0
    %2928 = vmatpush2.msra.mxu0 0.0
    %2929 = vmatprep.subr.mxu0 0.0
    %2930 = vmatpush2.msra.mxu0 0.0
    %2931 = vmatprep.subr.mxu0 0.0
    %2932 = vmatpush2.msra.mxu0 0.0
    %2933 = vmatprep.subr.mxu0 0.0
    %2934 = vmatpush2.msra.mxu0 0.0
    %2935 = vmatprep.subr.mxu0 0.0
    %2936 = vmatpush2.msra.mxu0 0.0
    %2937 = vmatprep.subr.mxu0 0.0
    %2938 = vmatpush2.msra.mxu0 0.0
    %2939 = vmatprep.subr.mxu0 0.0
    %2940 = vmatpush2.msra.mxu0 0.0
    %2941 = vmatprep.subr.mxu0 0.0
    %2942 = vmatpush2.msra.mxu0 0.0
    %2943 = vmatprep.mubr.f32.mxu0 0.0
    %2944 = vmatmul.mubr.f32.gmra.mxu0 0.0
    %v2945 = vpop.f32.mrf.mxu0
    %v2946 = vadd.f32 0.0, %v2945
    %v2947 = vpop.f32.mrf.mxu0
    %v2948 = vadd.f32 0.0, %v2947
    %2949 = vdwg.mxu0
    %v2954 = vcombine.low %v2875, %v2877
    %v2955 = vcombine.low %v2946, %v2948
    %v2957 = vunpack.c.l.s4 1966171168
    %v2958 = vunpack.c.0.s8 %v2957
    %v2959 = vlaneseq
    %v2960 = vshrl.u32 %v2959, 7
    %v2961 = vsub.s32 %v2958, %v2960
    %v2962 = vrot.slane %v2954, %v2961
    %v2964 = vunpack.c.l.s4 1966171168
    %v2965 = vunpack.c.0.s8 %v2964
    %v2966 = vlaneseq
    %v2967 = vshrl.u32 %v2966, 7
    %v2968 = vsub.s32 %v2965, %v2967
    %v2969 = vrot.slane %v2955, %v2968
    %v2970 = vcombine.low %v2962, %v2969
    %v2971 = vcombine.high %v2962, %v2969
    %v2973 = vunpack.c.l.s4 1966171168
    %v2974 = vunpack.c.0.s8 %v2973
    %v2975 = vlaneseq
    %v2976 = vshrl.u32 %v2975, 7
    %v2977 = vsub.s32 %v2974, %v2976
    %v2978 = vrot.slane %v2970, %v2977
    %v2980 = vunpack.c.l.s4 1966171168
    %v2981 = vunpack.c.0.s8 %v2980
    %v2982 = vlaneseq
    %v2983 = vshrl.u32 %v2982, 7
    %v2984 = vsub.s32 %v2981, %v2983
    %v2985 = vrot.slane %v2971, %v2984
    %v2988 = vadd.f32 %v2806, %v2978
    %v2989 = vadd.f32 %v2807, %v2985
    %v2990 = vxor.u32 %v2988, 2147483648
    %v2991 = vxor.u32 %v2989, 2147483648
    %v2992 = vmul.f32 %v2990, 1.442695
    %v2993 = vpow.pop %v2992
    %v2994 = vmul.f32 %v2991, 1.442695
    %v2995 = vpow.pop %v2994
    %v2996 = vadd.f32 %v2993, 1.0
    %v2997 = vadd.f32 %v2995, 1.0
    %v2998 = vrcp.pop %v2996
    %v2999 = vmul.f32 1.0, %v2998
    %v3000 = vrcp.pop %v2997
    %v3001 = vmul.f32 1.0, %v3000
    %v3004 = vrot.slane %v2988, 1
    %v3005 = vrot.slane %v2989, 1
    %v3008 = vxor.u32 %v3004, 2147483648
    %v3009 = vxor.u32 %v3005, 2147483648
    %v3010 = vmul.f32 %v3008, 1.442695
    %v3011 = vpow.pop %v3010
    %v3012 = vmul.f32 %v3009, 1.442695
    %v3013 = vpow.pop %v3012
    %v3014 = vadd.f32 %v3011, 1.0
    %v3015 = vadd.f32 %v3013, 1.0
    %v3016 = vrcp.pop %v3014
    %v3017 = vmul.f32 1.0, %v3016
    %v3018 = vrcp.pop %v3015
    %v3019 = vmul.f32 1.0, %v3018
    %v3020 = vrot.slane %v2988, 2
    %v3021 = vrot.slane %v2989, 2
    %v3024 = vtanh.pop %v3020
    %v3025 = vtanh.pop %v3021
    %v3026 = vrot.slane %v2988, 3
    %v3027 = vrot.slane %v2989, 3
    %v3030 = vxor.u32 %v3026, 2147483648
    %v3031 = vxor.u32 %v3027, 2147483648
    %v3032 = vmul.f32 %v3030, 1.442695
    %v3033 = vpow.pop %v3032
    %v3034 = vmul.f32 %v3031, 1.442695
    %v3035 = vpow.pop %v3034
    %v3036 = vadd.f32 %v3033, 1.0
    %v3037 = vadd.f32 %v3035, 1.0
    %v3038 = vrcp.pop %v3036
    %v3039 = vmul.f32 1.0, %v3038
    %v3040 = vrcp.pop %v3037
    %v3041 = vmul.f32 1.0, %v3040
    %v3042 = vmul.f32 %v3017, 0.0
    %v3043 = vmul.f32 %v3019, 0.0
    %v3044 = vmul.f32 %v2999, %v3024
    %v3045 = vmul.f32 %v3001, %v3025
    %v3046 = vadd.f32 %v3042, %v3044
    %v3047 = vadd.f32 %v3043, %v3045
    %v3048 = vtanh.pop %v3046
    %v3049 = vtanh.pop %v3047
    %v3050 = vmul.f32 %v3039, %v3048
    %v3051 = vmul.f32 %v3041, %v3049
    %3052 = vst [vmem:[#allocation3] sm:$0x1] %v3050
    %3053 = vst [vmem:[#allocation3 + $0x8] sm:$0x1] %v3051
    %v3054 = vld [vmem:[%s614] ss:$8 sm:$0xf]
    %v3055 = vld [vmem:[%s616] ss:$8 sm:$0xf]
    %v3058 = vcombine.low %v3050, %v3051
    %v3060 = vunpack.c.l.s4 1966171168
    %v3061 = vunpack.c.0.s8 %v3060
    %v3062 = vlaneseq
    %v3063 = vshrl.u32 %v3062, 7
    %v3064 = vsub.s32 %v3061, %v3063
    %v3065 = vrot.slane %v3058, %v3064
    %v3067 = vunpack.c.l.s4 1966171168
    %v3068 = vunpack.c.0.s8 %v3067
    %v3069 = vlaneseq
    %v3070 = vshrl.u32 %v3069, 7
    %v3071 = vsub.s32 %v3068, %v3070
    %v3072 = vrot.slane %v3065, %v3071
    %3074 = vmatprep.subr.mxu0 %v2803
    %3075 = vmatpush1.msra.mxu0 %v2802
    %3076 = vmatprep.subr.mxu0 %v2799
    %3077 = vmatpush1.msra.mxu0 %v2798
    %3078 = vmatprep.subr.mxu0 %v2795
    %3079 = vmatpush1.msra.mxu0 %v2794
    %3080 = vmatprep.subr.mxu0 %v2791
    %3081 = vmatpush1.msra.mxu0 %v2790
    %3082 = vmatprep.subr.mxu0 %v2787
    %3083 = vmatpush1.msra.mxu0 %v2786
    %3084 = vmatprep.subr.mxu0 %v2783
    %3085 = vmatpush1.msra.mxu0 %v2782
    %3086 = vmatprep.subr.mxu0 %v2779
    %3087 = vmatpush1.msra.mxu0 %v2778
    %3088 = vmatprep.subr.mxu0 %v2775
    %3089 = vmatpush1.msra.mxu0 %v2774
    %3090 = vmatprep.subr.mxu0 %v2771
    %3091 = vmatpush1.msra.mxu0 %v2770
    %3092 = vmatprep.subr.mxu0 %v2767
    %3093 = vmatpush1.msra.mxu0 %v2766
    %3094 = vmatprep.subr.mxu0 %v2763
    %3095 = vmatpush1.msra.mxu0 %v2762
    %3096 = vmatprep.subr.mxu0 %v2759
    %3097 = vmatpush1.msra.mxu0 %v2758
    %3098 = vmatprep.subr.mxu0 %v2755
    %3099 = vmatpush1.msra.mxu0 %v2754
    %3100 = vmatprep.subr.mxu0 %v2751
    %3101 = vmatpush1.msra.mxu0 %v2750
    %3102 = vmatprep.subr.mxu0 %v2747
    %3103 = vmatpush1.msra.mxu0 %v2746
    %3104 = vmatprep.subr.mxu0 %v2743
    %3105 = vmatpush1.msra.mxu0 %v2742
    %3106 = vmatprep.subr.mxu0 0.0
    %3107 = vmatpush2.msra.mxu0 0.0
    %3108 = vmatprep.subr.mxu0 0.0
    %3109 = vmatpush2.msra.mxu0 0.0
    %3110 = vmatprep.subr.mxu0 0.0
    %3111 = vmatpush2.msra.mxu0 0.0
    %3112 = vmatprep.subr.mxu0 0.0
    %3113 = vmatpush2.msra.mxu0 0.0
    %3114 = vmatprep.subr.mxu0 0.0
    %3115 = vmatpush2.msra.mxu0 0.0
    %3116 = vmatprep.subr.mxu0 0.0
    %3117 = vmatpush2.msra.mxu0 0.0
    %3118 = vmatprep.subr.mxu0 0.0
    %3119 = vmatpush2.msra.mxu0 0.0
    %3120 = vmatprep.subr.mxu0 0.0
    %3121 = vmatpush2.msra.mxu0 0.0
    %3122 = vmatprep.subr.mxu0 0.0
    %3123 = vmatpush2.msra.mxu0 0.0
    %3124 = vmatprep.subr.mxu0 0.0
    %3125 = vmatpush2.msra.mxu0 0.0
    %3126 = vmatprep.subr.mxu0 0.0
    %3127 = vmatpush2.msra.mxu0 0.0
    %3128 = vmatprep.subr.mxu0 0.0
    %3129 = vmatpush2.msra.mxu0 0.0
    %3130 = vmatprep.subr.mxu0 0.0
    %3131 = vmatpush2.msra.mxu0 0.0
    %3132 = vmatprep.subr.mxu0 0.0
    %3133 = vmatpush2.msra.mxu0 0.0
    %3134 = vmatprep.subr.mxu0 0.0
    %3135 = vmatpush2.msra.mxu0 0.0
    %3136 = vmatprep.subr.mxu0 0.0
    %3137 = vmatpush2.msra.mxu0 0.0
    %3138 = vmatprep.mubr.f32.mxu0 0.0
    %3139 = vmatmul.mubr.f32.gmra.mxu0 %v3072
    %v3140 = vpop.f32.mrf.mxu0
    %v3141 = vadd.f32 0.0, %v3140
    %v3142 = vpop.f32.mrf.mxu0
    %v3143 = vadd.f32 0.0, %v3142
    %3144 = vdwg.mxu0
    %3145 = vmatprep.subr.mxu0 %v2805
    %3146 = vmatpush1.msra.mxu0 %v2804
    %3147 = vmatprep.subr.mxu0 %v2801
    %3148 = vmatpush1.msra.mxu0 %v2800
    %3149 = vmatprep.subr.mxu0 %v2797
    %3150 = vmatpush1.msra.mxu0 %v2796
    %3151 = vmatprep.subr.mxu0 %v2793
    %3152 = vmatpush1.msra.mxu0 %v2792
    %3153 = vmatprep.subr.mxu0 %v2789
    %3154 = vmatpush1.msra.mxu0 %v2788
    %3155 = vmatprep.subr.mxu0 %v2785
    %3156 = vmatpush1.msra.mxu0 %v2784
    %3157 = vmatprep.subr.mxu0 %v2781
    %3158 = vmatpush1.msra.mxu0 %v2780
    %3159 = vmatprep.subr.mxu0 %v2777
    %3160 = vmatpush1.msra.mxu0 %v2776
    %3161 = vmatprep.subr.mxu0 %v2773
    %3162 = vmatpush1.msra.mxu0 %v2772
    %3163 = vmatprep.subr.mxu0 %v2769
    %3164 = vmatpush1.msra.mxu0 %v2768
    %3165 = vmatprep.subr.mxu0 %v2765
    %3166 = vmatpush1.msra.mxu0 %v2764
    %3167 = vmatprep.subr.mxu0 %v2761
    %3168 = vmatpush1.msra.mxu0 %v2760
    %3169 = vmatprep.subr.mxu0 %v2757
    %3170 = vmatpush1.msra.mxu0 %v2756
    %3171 = vmatprep.subr.mxu0 %v2753
    %3172 = vmatpush1.msra.mxu0 %v2752
    %3173 = vmatprep.subr.mxu0 %v2749
    %3174 = vmatpush1.msra.mxu0 %v2748
    %3175 = vmatprep.subr.mxu0 %v2745
    %3176 = vmatpush1.msra.mxu0 %v2744
    %3177 = vmatprep.subr.mxu0 0.0
    %3178 = vmatpush2.msra.mxu0 0.0
    %3179 = vmatprep.subr.mxu0 0.0
    %3180 = vmatpush2.msra.mxu0 0.0
    %3181 = vmatprep.subr.mxu0 0.0
    %3182 = vmatpush2.msra.mxu0 0.0
    %3183 = vmatprep.subr.mxu0 0.0
    %3184 = vmatpush2.msra.mxu0 0.0
    %3185 = vmatprep.subr.mxu0 0.0
    %3186 = vmatpush2.msra.mxu0 0.0
    %3187 = vmatprep.subr.mxu0 0.0
    %3188 = vmatpush2.msra.mxu0 0.0
    %3189 = vmatprep.subr.mxu0 0.0
    %3190 = vmatpush2.msra.mxu0 0.0
    %3191 = vmatprep.subr.mxu0 0.0
    %3192 = vmatpush2.msra.mxu0 0.0
    %3193 = vmatprep.subr.mxu0 0.0
    %3194 = vmatpush2.msra.mxu0 0.0
    %3195 = vmatprep.subr.mxu0 0.0
    %3196 = vmatpush2.msra.mxu0 0.0
    %3197 = vmatprep.subr.mxu0 0.0
    %3198 = vmatpush2.msra.mxu0 0.0
    %3199 = vmatprep.subr.mxu0 0.0
    %3200 = vmatpush2.msra.mxu0 0.0
    %3201 = vmatprep.subr.mxu0 0.0
    %3202 = vmatpush2.msra.mxu0 0.0
    %3203 = vmatprep.subr.mxu0 0.0
    %3204 = vmatpush2.msra.mxu0 0.0
    %3205 = vmatprep.subr.mxu0 0.0
    %3206 = vmatpush2.msra.mxu0 0.0
    %3207 = vmatprep.subr.mxu0 0.0
    %3208 = vmatpush2.msra.mxu0 0.0
    %3209 = vmatprep.mubr.f32.mxu0 0.0
    %3210 = vmatmul.mubr.f32.gmra.mxu0 %v3072
    %v3211 = vpop.f32.mrf.mxu0
    %v3212 = vadd.f32 0.0, %v3211
    %v3213 = vpop.f32.mrf.mxu0
    %v3214 = vadd.f32 0.0, %v3213
    %3215 = vdwg.mxu0
    %v3220 = vcombine.low %v3141, %v3143
    %v3221 = vcombine.low %v3212, %v3214
    %v3223 = vunpack.c.l.s4 1966171168
    %v3224 = vunpack.c.0.s8 %v3223
    %v3225 = vlaneseq
    %v3226 = vshrl.u32 %v3225, 7
    %v3227 = vsub.s32 %v3224, %v3226
    %v3228 = vrot.slane %v3220, %v3227
    %v3230 = vunpack.c.l.s4 1966171168
    %v3231 = vunpack.c.0.s8 %v3230
    %v3232 = vlaneseq
    %v3233 = vshrl.u32 %v3232, 7
    %v3234 = vsub.s32 %v3231, %v3233
    %v3235 = vrot.slane %v3221, %v3234
    %v3236 = vcombine.low %v3228, %v3235
    %v3237 = vcombine.high %v3228, %v3235
    %v3239 = vunpack.c.l.s4 1966171168
    %v3240 = vunpack.c.0.s8 %v3239
    %v3241 = vlaneseq
    %v3242 = vshrl.u32 %v3241, 7
    %v3243 = vsub.s32 %v3240, %v3242
    %v3244 = vrot.slane %v3236, %v3243
    %v3246 = vunpack.c.l.s4 1966171168
    %v3247 = vunpack.c.0.s8 %v3246
    %v3248 = vlaneseq
    %v3249 = vshrl.u32 %v3248, 7
    %v3250 = vsub.s32 %v3247, %v3249
    %v3251 = vrot.slane %v3237, %v3250
    %v3254 = vadd.f32 %v3054, %v3244
    %v3255 = vadd.f32 %v3055, %v3251
    %v3256 = vxor.u32 %v3254, 2147483648
    %v3257 = vxor.u32 %v3255, 2147483648
    %v3258 = vmul.f32 %v3256, 1.442695
    %v3259 = vpow.pop %v3258
    %v3260 = vmul.f32 %v3257, 1.442695
    %v3261 = vpow.pop %v3260
    %v3262 = vadd.f32 %v3259, 1.0
    %v3263 = vadd.f32 %v3261, 1.0
    %v3264 = vrcp.pop %v3262
    %v3265 = vmul.f32 1.0, %v3264
    %v3266 = vrcp.pop %v3263
    %v3267 = vmul.f32 1.0, %v3266
    %v3270 = vrot.slane %v3254, 1
    %v3271 = vrot.slane %v3255, 1
    %v3274 = vxor.u32 %v3270, 2147483648
    %v3275 = vxor.u32 %v3271, 2147483648
    %v3276 = vmul.f32 %v3274, 1.442695
    %v3277 = vpow.pop %v3276
    %v3278 = vmul.f32 %v3275, 1.442695
    %v3279 = vpow.pop %v3278
    %v3280 = vadd.f32 %v3277, 1.0
    %v3281 = vadd.f32 %v3279, 1.0
    %v3282 = vrcp.pop %v3280
    %v3283 = vmul.f32 1.0, %v3282
    %v3284 = vrcp.pop %v3281
    %v3285 = vmul.f32 1.0, %v3284
    %v3286 = vrot.slane %v3254, 2
    %v3287 = vrot.slane %v3255, 2
    %v3290 = vtanh.pop %v3286
    %v3291 = vtanh.pop %v3287
    %v3292 = vrot.slane %v3254, 3
    %v3293 = vrot.slane %v3255, 3
    %v3296 = vxor.u32 %v3292, 2147483648
    %v3297 = vxor.u32 %v3293, 2147483648
    %v3298 = vmul.f32 %v3296, 1.442695
    %v3299 = vpow.pop %v3298
    %v3300 = vmul.f32 %v3297, 1.442695
    %v3301 = vpow.pop %v3300
    %v3302 = vadd.f32 %v3299, 1.0
    %v3303 = vadd.f32 %v3301, 1.0
    %v3304 = vrcp.pop %v3302
    %v3305 = vmul.f32 1.0, %v3304
    %v3306 = vrcp.pop %v3303
    %v3307 = vmul.f32 1.0, %v3306
    %v3308 = vmul.f32 %v3283, %v3046
    %v3309 = vmul.f32 %v3285, %v3047
    %v3310 = vmul.f32 %v3265, %v3290
    %v3311 = vmul.f32 %v3267, %v3291
    %v3312 = vadd.f32 %v3308, %v3310
    %v3313 = vadd.f32 %v3309, %v3311
    %v3314 = vtanh.pop %v3312
    %v3315 = vtanh.pop %v3313
    %v3316 = vmul.f32 %v3305, %v3314
    %v3317 = vmul.f32 %v3307, %v3315
    %3318 = vst [vmem:[#allocation3 + $0x1] sm:$0x1] %v3316
    %3319 = vst [vmem:[#allocation3 + $0x9] sm:$0x1] %v3317
    %v3320 = vld [vmem:[%s882] ss:$8 sm:$0xf]
    %v3321 = vld [vmem:[%s884] ss:$8 sm:$0xf]
    %v3324 = vcombine.low %v3316, %v3317
    %v3326 = vunpack.c.l.s4 1966171168
    %v3327 = vunpack.c.0.s8 %v3326
    %v3328 = vlaneseq
    %v3329 = vshrl.u32 %v3328, 7
    %v3330 = vsub.s32 %v3327, %v3329
    %v3331 = vrot.slane %v3324, %v3330
    %v3333 = vunpack.c.l.s4 1966171168
    %v3334 = vunpack.c.0.s8 %v3333
    %v3335 = vlaneseq
    %v3336 = vshrl.u32 %v3335, 7
    %v3337 = vsub.s32 %v3334, %v3336
    %v3338 = vrot.slane %v3331, %v3337
    %3340 = vmatprep.subr.mxu0 %v2803
    %3341 = vmatpush1.msra.mxu0 %v2802
    %3342 = vmatprep.subr.mxu0 %v2799
    %3343 = vmatpush1.msra.mxu0 %v2798
    %3344 = vmatprep.subr.mxu0 %v2795
    %3345 = vmatpush1.msra.mxu0 %v2794
    %3346 = vmatprep.subr.mxu0 %v2791
    %3347 = vmatpush1.msra.mxu0 %v2790
    %3348 = vmatprep.subr.mxu0 %v2787
    %3349 = vmatpush1.msra.mxu0 %v2786
    %3350 = vmatprep.subr.mxu0 %v2783
    %3351 = vmatpush1.msra.mxu0 %v2782
    %3352 = vmatprep.subr.mxu0 %v2779
    %3353 = vmatpush1.msra.mxu0 %v2778
    %3354 = vmatprep.subr.mxu0 %v2775
    %3355 = vmatpush1.msra.mxu0 %v2774
    %3356 = vmatprep.subr.mxu0 %v2771
    %3357 = vmatpush1.msra.mxu0 %v2770
    %3358 = vmatprep.subr.mxu0 %v2767
    %3359 = vmatpush1.msra.mxu0 %v2766
    %3360 = vmatprep.subr.mxu0 %v2763
    %3361 = vmatpush1.msra.mxu0 %v2762
    %3362 = vmatprep.subr.mxu0 %v2759
    %3363 = vmatpush1.msra.mxu0 %v2758
    %3364 = vmatprep.subr.mxu0 %v2755
    %3365 = vmatpush1.msra.mxu0 %v2754
    %3366 = vmatprep.subr.mxu0 %v2751
    %3367 = vmatpush1.msra.mxu0 %v2750
    %3368 = vmatprep.subr.mxu0 %v2747
    %3369 = vmatpush1.msra.mxu0 %v2746
    %3370 = vmatprep.subr.mxu0 %v2743
    %3371 = vmatpush1.msra.mxu0 %v2742
    %3372 = vmatprep.subr.mxu0 0.0
    %3373 = vmatpush2.msra.mxu0 0.0
    %3374 = vmatprep.subr.mxu0 0.0
    %3375 = vmatpush2.msra.mxu0 0.0
    %3376 = vmatprep.subr.mxu0 0.0
    %3377 = vmatpush2.msra.mxu0 0.0
    %3378 = vmatprep.subr.mxu0 0.0
    %3379 = vmatpush2.msra.mxu0 0.0
    %3380 = vmatprep.subr.mxu0 0.0
    %3381 = vmatpush2.msra.mxu0 0.0
    %3382 = vmatprep.subr.mxu0 0.0
    %3383 = vmatpush2.msra.mxu0 0.0
    %3384 = vmatprep.subr.mxu0 0.0
    %3385 = vmatpush2.msra.mxu0 0.0
    %3386 = vmatprep.subr.mxu0 0.0
    %3387 = vmatpush2.msra.mxu0 0.0
    %3388 = vmatprep.subr.mxu0 0.0
    %3389 = vmatpush2.msra.mxu0 0.0
    %3390 = vmatprep.subr.mxu0 0.0
    %3391 = vmatpush2.msra.mxu0 0.0
    %3392 = vmatprep.subr.mxu0 0.0
    %3393 = vmatpush2.msra.mxu0 0.0
    %3394 = vmatprep.subr.mxu0 0.0
    %3395 = vmatpush2.msra.mxu0 0.0
    %3396 = vmatprep.subr.mxu0 0.0
    %3397 = vmatpush2.msra.mxu0 0.0
    %3398 = vmatprep.subr.mxu0 0.0
    %3399 = vmatpush2.msra.mxu0 0.0
    %3400 = vmatprep.subr.mxu0 0.0
    %3401 = vmatpush2.msra.mxu0 0.0
    %3402 = vmatprep.subr.mxu0 0.0
    %3403 = vmatpush2.msra.mxu0 0.0
    %3404 = vmatprep.mubr.f32.mxu0 0.0
    %3405 = vmatmul.mubr.f32.gmra.mxu0 %v3338
    %v3406 = vpop.f32.mrf.mxu0
    %v3407 = vadd.f32 0.0, %v3406
    %v3408 = vpop.f32.mrf.mxu0
    %v3409 = vadd.f32 0.0, %v3408
    %3410 = vdwg.mxu0
    %3411 = vmatprep.subr.mxu0 %v2805
    %3412 = vmatpush1.msra.mxu0 %v2804
    %3413 = vmatprep.subr.mxu0 %v2801
    %3414 = vmatpush1.msra.mxu0 %v2800
    %3415 = vmatprep.subr.mxu0 %v2797
    %3416 = vmatpush1.msra.mxu0 %v2796
    %3417 = vmatprep.subr.mxu0 %v2793
    %3418 = vmatpush1.msra.mxu0 %v2792
    %3419 = vmatprep.subr.mxu0 %v2789
    %3420 = vmatpush1.msra.mxu0 %v2788
    %3421 = vmatprep.subr.mxu0 %v2785
    %3422 = vmatpush1.msra.mxu0 %v2784
    %3423 = vmatprep.subr.mxu0 %v2781
    %3424 = vmatpush1.msra.mxu0 %v2780
    %3425 = vmatprep.subr.mxu0 %v2777
    %3426 = vmatpush1.msra.mxu0 %v2776
    %3427 = vmatprep.subr.mxu0 %v2773
    %3428 = vmatpush1.msra.mxu0 %v2772
    %3429 = vmatprep.subr.mxu0 %v2769
    %3430 = vmatpush1.msra.mxu0 %v2768
    %3431 = vmatprep.subr.mxu0 %v2765
    %3432 = vmatpush1.msra.mxu0 %v2764
    %3433 = vmatprep.subr.mxu0 %v2761
    %3434 = vmatpush1.msra.mxu0 %v2760
    %3435 = vmatprep.subr.mxu0 %v2757
    %3436 = vmatpush1.msra.mxu0 %v2756
    %3437 = vmatprep.subr.mxu0 %v2753
    %3438 = vmatpush1.msra.mxu0 %v2752
    %3439 = vmatprep.subr.mxu0 %v2749
    %3440 = vmatpush1.msra.mxu0 %v2748
    %3441 = vmatprep.subr.mxu0 %v2745
    %3442 = vmatpush1.msra.mxu0 %v2744
    %3443 = vmatprep.subr.mxu0 0.0
    %3444 = vmatpush2.msra.mxu0 0.0
    %3445 = vmatprep.subr.mxu0 0.0
    %3446 = vmatpush2.msra.mxu0 0.0
    %3447 = vmatprep.subr.mxu0 0.0
    %3448 = vmatpush2.msra.mxu0 0.0
    %3449 = vmatprep.subr.mxu0 0.0
    %3450 = vmatpush2.msra.mxu0 0.0
    %3451 = vmatprep.subr.mxu0 0.0
    %3452 = vmatpush2.msra.mxu0 0.0
    %3453 = vmatprep.subr.mxu0 0.0
    %3454 = vmatpush2.msra.mxu0 0.0
    %3455 = vmatprep.subr.mxu0 0.0
    %3456 = vmatpush2.msra.mxu0 0.0
    %3457 = vmatprep.subr.mxu0 0.0
    %3458 = vmatpush2.msra.mxu0 0.0
    %3459 = vmatprep.subr.mxu0 0.0
    %3460 = vmatpush2.msra.mxu0 0.0
    %3461 = vmatprep.subr.mxu0 0.0
    %3462 = vmatpush2.msra.mxu0 0.0
    %3463 = vmatprep.subr.mxu0 0.0
    %3464 = vmatpush2.msra.mxu0 0.0
    %3465 = vmatprep.subr.mxu0 0.0
    %3466 = vmatpush2.msra.mxu0 0.0
    %3467 = vmatprep.subr.mxu0 0.0
    %3468 = vmatpush2.msra.mxu0 0.0
    %3469 = vmatprep.subr.mxu0 0.0
    %3470 = vmatpush2.msra.mxu0 0.0
    %3471 = vmatprep.subr.mxu0 0.0
    %3472 = vmatpush2.msra.mxu0 0.0
    %3473 = vmatprep.subr.mxu0 0.0
    %3474 = vmatpush2.msra.mxu0 0.0
    %3475 = vmatprep.mubr.f32.mxu0 0.0
    %3476 = vmatmul.mubr.f32.gmra.mxu0 %v3338
    %v3477 = vpop.f32.mrf.mxu0
    %v3478 = vadd.f32 0.0, %v3477
    %v3479 = vpop.f32.mrf.mxu0
    %v3480 = vadd.f32 0.0, %v3479
    %3481 = vdwg.mxu0
    %v3486 = vcombine.low %v3407, %v3409
    %v3487 = vcombine.low %v3478, %v3480
    %v3489 = vunpack.c.l.s4 1966171168
    %v3490 = vunpack.c.0.s8 %v3489
    %v3491 = vlaneseq
    %v3492 = vshrl.u32 %v3491, 7
    %v3493 = vsub.s32 %v3490, %v3492
    %v3494 = vrot.slane %v3486, %v3493
    %v3496 = vunpack.c.l.s4 1966171168
    %v3497 = vunpack.c.0.s8 %v3496
    %v3498 = vlaneseq
    %v3499 = vshrl.u32 %v3498, 7
    %v3500 = vsub.s32 %v3497, %v3499
    %v3501 = vrot.slane %v3487, %v3500
    %v3502 = vcombine.low %v3494, %v3501
    %v3503 = vcombine.high %v3494, %v3501
    %v3505 = vunpack.c.l.s4 1966171168
    %v3506 = vunpack.c.0.s8 %v3505
    %v3507 = vlaneseq
    %v3508 = vshrl.u32 %v3507, 7
    %v3509 = vsub.s32 %v3506, %v3508
    %v3510 = vrot.slane %v3502, %v3509
    %v3512 = vunpack.c.l.s4 1966171168
    %v3513 = vunpack.c.0.s8 %v3512
    %v3514 = vlaneseq
    %v3515 = vshrl.u32 %v3514, 7
    %v3516 = vsub.s32 %v3513, %v3515
    %v3517 = vrot.slane %v3503, %v3516
    %v3520 = vadd.f32 %v3320, %v3510
    %v3521 = vadd.f32 %v3321, %v3517
    %v3522 = vxor.u32 %v3520, 2147483648
    %v3523 = vxor.u32 %v3521, 2147483648
    %v3524 = vmul.f32 %v3522, 1.442695
    %v3525 = vpow.pop %v3524
    %v3526 = vmul.f32 %v3523, 1.442695
    %v3527 = vpow.pop %v3526
    %v3528 = vadd.f32 %v3525, 1.0
    %v3529 = vadd.f32 %v3527, 1.0
    %v3530 = vrcp.pop %v3528
    %v3531 = vmul.f32 1.0, %v3530
    %v3532 = vrcp.pop %v3529
    %v3533 = vmul.f32 1.0, %v3532
    %v3536 = vrot.slane %v3520, 1
    %v3537 = vrot.slane %v3521, 1
    %v3540 = vxor.u32 %v3536, 2147483648
    %v3541 = vxor.u32 %v3537, 2147483648
    %v3542 = vmul.f32 %v3540, 1.442695
    %v3543 = vpow.pop %v3542
    %v3544 = vmul.f32 %v3541, 1.442695
    %v3545 = vpow.pop %v3544
    %v3546 = vadd.f32 %v3543, 1.0
    %v3547 = vadd.f32 %v3545, 1.0
    %v3548 = vrcp.pop %v3546
    %v3549 = vmul.f32 1.0, %v3548
    %v3550 = vrcp.pop %v3547
    %v3551 = vmul.f32 1.0, %v3550
    %v3552 = vrot.slane %v3520, 2
    %v3553 = vrot.slane %v3521, 2
    %v3556 = vtanh.pop %v3552
    %v3557 = vtanh.pop %v3553
    %v3558 = vrot.slane %v3520, 3
    %v3559 = vrot.slane %v3521, 3
    %v3562 = vxor.u32 %v3558, 2147483648
    %v3563 = vxor.u32 %v3559, 2147483648
    %v3564 = vmul.f32 %v3562, 1.442695
    %v3565 = vpow.pop %v3564
    %v3566 = vmul.f32 %v3563, 1.442695
    %v3567 = vpow.pop %v3566
    %v3568 = vadd.f32 %v3565, 1.0
    %v3569 = vadd.f32 %v3567, 1.0
    %v3570 = vrcp.pop %v3568
    %v3571 = vmul.f32 1.0, %v3570
    %v3572 = vrcp.pop %v3569
    %v3573 = vmul.f32 1.0, %v3572
    %v3574 = vmul.f32 %v3549, %v3312
    %v3575 = vmul.f32 %v3551, %v3313
    %v3576 = vmul.f32 %v3531, %v3556
    %v3577 = vmul.f32 %v3533, %v3557
    %v3578 = vadd.f32 %v3574, %v3576
    %v3579 = vadd.f32 %v3575, %v3577
    %v3580 = vtanh.pop %v3578
    %v3581 = vtanh.pop %v3579
    %v3582 = vmul.f32 %v3571, %v3580
    %v3583 = vmul.f32 %v3573, %v3581
    %3584 = vst [vmem:[#allocation3 + $0x2] sm:$0x1] %v3582
    %3585 = vst [vmem:[#allocation3 + $0xa] sm:$0x1] %v3583
    %v3586 = vld [vmem:[%s1150] ss:$8 sm:$0xf]
    %v3587 = vld [vmem:[%s1152] ss:$8 sm:$0xf]
    %v3590 = vcombine.low %v3582, %v3583
    %v3592 = vunpack.c.l.s4 1966171168
    %v3593 = vunpack.c.0.s8 %v3592
    %v3594 = vlaneseq
    %v3595 = vshrl.u32 %v3594, 7
    %v3596 = vsub.s32 %v3593, %v3595
    %v3597 = vrot.slane %v3590, %v3596
    %v3599 = vunpack.c.l.s4 1966171168
    %v3600 = vunpack.c.0.s8 %v3599
    %v3601 = vlaneseq
    %v3602 = vshrl.u32 %v3601, 7
    %v3603 = vsub.s32 %v3600, %v3602
    %v3604 = vrot.slane %v3597, %v3603
    %3606 = vmatprep.subr.mxu0 %v2803
    %3607 = vmatpush1.msra.mxu0 %v2802
    %3608 = vmatprep.subr.mxu0 %v2799
    %3609 = vmatpush1.msra.mxu0 %v2798
    %3610 = vmatprep.subr.mxu0 %v2795
    %3611 = vmatpush1.msra.mxu0 %v2794
    %3612 = vmatprep.subr.mxu0 %v2791
    %3613 = vmatpush1.msra.mxu0 %v2790
    %3614 = vmatprep.subr.mxu0 %v2787
    %3615 = vmatpush1.msra.mxu0 %v2786
    %3616 = vmatprep.subr.mxu0 %v2783
    %3617 = vmatpush1.msra.mxu0 %v2782
    %3618 = vmatprep.subr.mxu0 %v2779
    %3619 = vmatpush1.msra.mxu0 %v2778
    %3620 = vmatprep.subr.mxu0 %v2775
    %3621 = vmatpush1.msra.mxu0 %v2774
    %3622 = vmatprep.subr.mxu0 %v2771
    %3623 = vmatpush1.msra.mxu0 %v2770
    %3624 = vmatprep.subr.mxu0 %v2767
    %3625 = vmatpush1.msra.mxu0 %v2766
    %3626 = vmatprep.subr.mxu0 %v2763
    %3627 = vmatpush1.msra.mxu0 %v2762
    %3628 = vmatprep.subr.mxu0 %v2759
    %3629 = vmatpush1.msra.mxu0 %v2758
    %3630 = vmatprep.subr.mxu0 %v2755
    %3631 = vmatpush1.msra.mxu0 %v2754
    %3632 = vmatprep.subr.mxu0 %v2751
    %3633 = vmatpush1.msra.mxu0 %v2750
    %3634 = vmatprep.subr.mxu0 %v2747
    %3635 = vmatpush1.msra.mxu0 %v2746
    %3636 = vmatprep.subr.mxu0 %v2743
    %3637 = vmatpush1.msra.mxu0 %v2742
    %3638 = vmatprep.subr.mxu0 0.0
    %3639 = vmatpush2.msra.mxu0 0.0
    %3640 = vmatprep.subr.mxu0 0.0
    %3641 = vmatpush2.msra.mxu0 0.0
    %3642 = vmatprep.subr.mxu0 0.0
    %3643 = vmatpush2.msra.mxu0 0.0
    %3644 = vmatprep.subr.mxu0 0.0
    %3645 = vmatpush2.msra.mxu0 0.0
    %3646 = vmatprep.subr.mxu0 0.0
    %3647 = vmatpush2.msra.mxu0 0.0
    %3648 = vmatprep.subr.mxu0 0.0
    %3649 = vmatpush2.msra.mxu0 0.0
    %3650 = vmatprep.subr.mxu0 0.0
    %3651 = vmatpush2.msra.mxu0 0.0
    %3652 = vmatprep.subr.mxu0 0.0
    %3653 = vmatpush2.msra.mxu0 0.0
    %3654 = vmatprep.subr.mxu0 0.0
    %3655 = vmatpush2.msra.mxu0 0.0
    %3656 = vmatprep.subr.mxu0 0.0
    %3657 = vmatpush2.msra.mxu0 0.0
    %3658 = vmatprep.subr.mxu0 0.0
    %3659 = vmatpush2.msra.mxu0 0.0
    %3660 = vmatprep.subr.mxu0 0.0
    %3661 = vmatpush2.msra.mxu0 0.0
    %3662 = vmatprep.subr.mxu0 0.0
    %3663 = vmatpush2.msra.mxu0 0.0
    %3664 = vmatprep.subr.mxu0 0.0
    %3665 = vmatpush2.msra.mxu0 0.0
    %3666 = vmatprep.subr.mxu0 0.0
    %3667 = vmatpush2.msra.mxu0 0.0
    %3668 = vmatprep.subr.mxu0 0.0
    %3669 = vmatpush2.msra.mxu0 0.0
    %3670 = vmatprep.mubr.f32.mxu0 0.0
    %3671 = vmatmul.mubr.f32.gmra.mxu0 %v3604
    %v3672 = vpop.f32.mrf.mxu0
    %v3673 = vadd.f32 0.0, %v3672
    %v3674 = vpop.f32.mrf.mxu0
    %v3675 = vadd.f32 0.0, %v3674
    %3676 = vdwg.mxu0
    %3677 = vmatprep.subr.mxu0 %v2805
    %3678 = vmatpush1.msra.mxu0 %v2804
    %3679 = vmatprep.subr.mxu0 %v2801
    %3680 = vmatpush1.msra.mxu0 %v2800
    %3681 = vmatprep.subr.mxu0 %v2797
    %3682 = vmatpush1.msra.mxu0 %v2796
    %3683 = vmatprep.subr.mxu0 %v2793
    %3684 = vmatpush1.msra.mxu0 %v2792
    %3685 = vmatprep.subr.mxu0 %v2789
    %3686 = vmatpush1.msra.mxu0 %v2788
    %3687 = vmatprep.subr.mxu0 %v2785
    %3688 = vmatpush1.msra.mxu0 %v2784
    %3689 = vmatprep.subr.mxu0 %v2781
    %3690 = vmatpush1.msra.mxu0 %v2780
    %3691 = vmatprep.subr.mxu0 %v2777
    %3692 = vmatpush1.msra.mxu0 %v2776
    %3693 = vmatprep.subr.mxu0 %v2773
    %3694 = vmatpush1.msra.mxu0 %v2772
    %3695 = vmatprep.subr.mxu0 %v2769
    %3696 = vmatpush1.msra.mxu0 %v2768
    %3697 = vmatprep.subr.mxu0 %v2765
    %3698 = vmatpush1.msra.mxu0 %v2764
    %3699 = vmatprep.subr.mxu0 %v2761
    %3700 = vmatpush1.msra.mxu0 %v2760
    %3701 = vmatprep.subr.mxu0 %v2757
    %3702 = vmatpush1.msra.mxu0 %v2756
    %3703 = vmatprep.subr.mxu0 %v2753
    %3704 = vmatpush1.msra.mxu0 %v2752
    %3705 = vmatprep.subr.mxu0 %v2749
    %3706 = vmatpush1.msra.mxu0 %v2748
    %3707 = vmatprep.subr.mxu0 %v2745
    %3708 = vmatpush1.msra.mxu0 %v2744
    %3709 = vmatprep.subr.mxu0 0.0
    %3710 = vmatpush2.msra.mxu0 0.0
    %3711 = vmatprep.subr.mxu0 0.0
    %3712 = vmatpush2.msra.mxu0 0.0
    %3713 = vmatprep.subr.mxu0 0.0
    %3714 = vmatpush2.msra.mxu0 0.0
    %3715 = vmatprep.subr.mxu0 0.0
    %3716 = vmatpush2.msra.mxu0 0.0
    %3717 = vmatprep.subr.mxu0 0.0
    %3718 = vmatpush2.msra.mxu0 0.0
    %3719 = vmatprep.subr.mxu0 0.0
    %3720 = vmatpush2.msra.mxu0 0.0
    %3721 = vmatprep.subr.mxu0 0.0
    %3722 = vmatpush2.msra.mxu0 0.0
    %3723 = vmatprep.subr.mxu0 0.0
    %3724 = vmatpush2.msra.mxu0 0.0
    %3725 = vmatprep.subr.mxu0 0.0
    %3726 = vmatpush2.msra.mxu0 0.0
    %3727 = vmatprep.subr.mxu0 0.0
    %3728 = vmatpush2.msra.mxu0 0.0
    %3729 = vmatprep.subr.mxu0 0.0
    %3730 = vmatpush2.msra.mxu0 0.0
    %3731 = vmatprep.subr.mxu0 0.0
    %3732 = vmatpush2.msra.mxu0 0.0
    %3733 = vmatprep.subr.mxu0 0.0
    %3734 = vmatpush2.msra.mxu0 0.0
    %3735 = vmatprep.subr.mxu0 0.0
    %3736 = vmatpush2.msra.mxu0 0.0
    %3737 = vmatprep.subr.mxu0 0.0
    %3738 = vmatpush2.msra.mxu0 0.0
    %3739 = vmatprep.subr.mxu0 0.0
    %3740 = vmatpush2.msra.mxu0 0.0
    %3741 = vmatprep.mubr.f32.mxu0 0.0
    %3742 = vmatmul.mubr.f32.gmra.mxu0 %v3604
    %v3743 = vpop.f32.mrf.mxu0
    %v3744 = vadd.f32 0.0, %v3743
    %v3745 = vpop.f32.mrf.mxu0
    %v3746 = vadd.f32 0.0, %v3745
    %3747 = vdwg.mxu0
    %v3752 = vcombine.low %v3673, %v3675
    %v3753 = vcombine.low %v3744, %v3746
    %v3755 = vunpack.c.l.s4 1966171168
    %v3756 = vunpack.c.0.s8 %v3755
    %v3757 = vlaneseq
    %v3758 = vshrl.u32 %v3757, 7
    %v3759 = vsub.s32 %v3756, %v3758
    %v3760 = vrot.slane %v3752, %v3759
    %v3762 = vunpack.c.l.s4 1966171168
    %v3763 = vunpack.c.0.s8 %v3762
    %v3764 = vlaneseq
    %v3765 = vshrl.u32 %v3764, 7
    %v3766 = vsub.s32 %v3763, %v3765
    %v3767 = vrot.slane %v3753, %v3766
    %v3768 = vcombine.low %v3760, %v3767
    %v3769 = vcombine.high %v3760, %v3767
    %v3771 = vunpack.c.l.s4 1966171168
    %v3772 = vunpack.c.0.s8 %v3771
    %v3773 = vlaneseq
    %v3774 = vshrl.u32 %v3773, 7
    %v3775 = vsub.s32 %v3772, %v3774
    %v3776 = vrot.slane %v3768, %v3775
    %v3778 = vunpack.c.l.s4 1966171168
    %v3779 = vunpack.c.0.s8 %v3778
    %v3780 = vlaneseq
    %v3781 = vshrl.u32 %v3780, 7
    %v3782 = vsub.s32 %v3779, %v3781
    %v3783 = vrot.slane %v3769, %v3782
    %v3786 = vadd.f32 %v3586, %v3776
    %v3787 = vadd.f32 %v3587, %v3783
    %v3788 = vxor.u32 %v3786, 2147483648
    %v3789 = vxor.u32 %v3787, 2147483648
    %v3790 = vmul.f32 %v3788, 1.442695
    %v3791 = vpow.pop %v3790
    %v3792 = vmul.f32 %v3789, 1.442695
    %v3793 = vpow.pop %v3792
    %v3794 = vadd.f32 %v3791, 1.0
    %v3795 = vadd.f32 %v3793, 1.0
    %v3796 = vrcp.pop %v3794
    %v3797 = vmul.f32 1.0, %v3796
    %v3798 = vrcp.pop %v3795
    %v3799 = vmul.f32 1.0, %v3798
    %v3802 = vrot.slane %v3786, 1
    %v3803 = vrot.slane %v3787, 1
    %v3806 = vxor.u32 %v3802, 2147483648
    %v3807 = vxor.u32 %v3803, 2147483648
    %v3808 = vmul.f32 %v3806, 1.442695
    %v3809 = vpow.pop %v3808
    %v3810 = vmul.f32 %v3807, 1.442695
    %v3811 = vpow.pop %v3810
    %v3812 = vadd.f32 %v3809, 1.0
    %v3813 = vadd.f32 %v3811, 1.0
    %v3814 = vrcp.pop %v3812
    %v3815 = vmul.f32 1.0, %v3814
    %v3816 = vrcp.pop %v3813
    %v3817 = vmul.f32 1.0, %v3816
    %v3818 = vrot.slane %v3786, 2
    %v3819 = vrot.slane %v3787, 2
    %v3822 = vtanh.pop %v3818
    %v3823 = vtanh.pop %v3819
    %v3824 = vrot.slane %v3786, 3
    %v3825 = vrot.slane %v3787, 3
    %v3828 = vxor.u32 %v3824, 2147483648
    %v3829 = vxor.u32 %v3825, 2147483648
    %v3830 = vmul.f32 %v3828, 1.442695
    %v3831 = vpow.pop %v3830
    %v3832 = vmul.f32 %v3829, 1.442695
    %v3833 = vpow.pop %v3832
    %v3834 = vadd.f32 %v3831, 1.0
    %v3835 = vadd.f32 %v3833, 1.0
    %v3836 = vrcp.pop %v3834
    %v3837 = vmul.f32 1.0, %v3836
    %v3838 = vrcp.pop %v3835
    %v3839 = vmul.f32 1.0, %v3838
    %v3840 = vmul.f32 %v3815, %v3578
    %v3841 = vmul.f32 %v3817, %v3579
    %v3842 = vmul.f32 %v3797, %v3822
    %v3843 = vmul.f32 %v3799, %v3823
    %v3844 = vadd.f32 %v3840, %v3842
    %v3845 = vadd.f32 %v3841, %v3843
    %v3846 = vtanh.pop %v3844
    %v3847 = vtanh.pop %v3845
    %v3848 = vmul.f32 %v3837, %v3846
    %v3849 = vmul.f32 %v3839, %v3847
    %3850 = vst [vmem:[#allocation3 + $0x3] sm:$0x1] %v3848
    %3851 = vst [vmem:[#allocation3 + $0xb] sm:$0x1] %v3849
    %v3852 = vld [vmem:[%s1418] ss:$8 sm:$0xf]
    %v3853 = vld [vmem:[%s1420] ss:$8 sm:$0xf]
    %v3856 = vcombine.low %v3848, %v3849
    %v3858 = vunpack.c.l.s4 1966171168
    %v3859 = vunpack.c.0.s8 %v3858
    %v3860 = vlaneseq
    %v3861 = vshrl.u32 %v3860, 7
    %v3862 = vsub.s32 %v3859, %v3861
    %v3863 = vrot.slane %v3856, %v3862
    %v3865 = vunpack.c.l.s4 1966171168
    %v3866 = vunpack.c.0.s8 %v3865
    %v3867 = vlaneseq
    %v3868 = vshrl.u32 %v3867, 7
    %v3869 = vsub.s32 %v3866, %v3868
    %v3870 = vrot.slane %v3863, %v3869
    %3872 = vmatprep.subr.mxu0 %v2803
    %3873 = vmatpush1.msra.mxu0 %v2802
    %3874 = vmatprep.subr.mxu0 %v2799
    %3875 = vmatpush1.msra.mxu0 %v2798
    %3876 = vmatprep.subr.mxu0 %v2795
    %3877 = vmatpush1.msra.mxu0 %v2794
    %3878 = vmatprep.subr.mxu0 %v2791
    %3879 = vmatpush1.msra.mxu0 %v2790
    %3880 = vmatprep.subr.mxu0 %v2787
    %3881 = vmatpush1.msra.mxu0 %v2786
    %3882 = vmatprep.subr.mxu0 %v2783
    %3883 = vmatpush1.msra.mxu0 %v2782
    %3884 = vmatprep.subr.mxu0 %v2779
    %3885 = vmatpush1.msra.mxu0 %v2778
    %3886 = vmatprep.subr.mxu0 %v2775
    %3887 = vmatpush1.msra.mxu0 %v2774
    %3888 = vmatprep.subr.mxu0 %v2771
    %3889 = vmatpush1.msra.mxu0 %v2770
    %3890 = vmatprep.subr.mxu0 %v2767
    %3891 = vmatpush1.msra.mxu0 %v2766
    %3892 = vmatprep.subr.mxu0 %v2763
    %3893 = vmatpush1.msra.mxu0 %v2762
    %3894 = vmatprep.subr.mxu0 %v2759
    %3895 = vmatpush1.msra.mxu0 %v2758
    %3896 = vmatprep.subr.mxu0 %v2755
    %3897 = vmatpush1.msra.mxu0 %v2754
    %3898 = vmatprep.subr.mxu0 %v2751
    %3899 = vmatpush1.msra.mxu0 %v2750
    %3900 = vmatprep.subr.mxu0 %v2747
    %3901 = vmatpush1.msra.mxu0 %v2746
    %3902 = vmatprep.subr.mxu0 %v2743
    %3903 = vmatpush1.msra.mxu0 %v2742
    %3904 = vmatprep.subr.mxu0 0.0
    %3905 = vmatpush2.msra.mxu0 0.0
    %3906 = vmatprep.subr.mxu0 0.0
    %3907 = vmatpush2.msra.mxu0 0.0
    %3908 = vmatprep.subr.mxu0 0.0
    %3909 = vmatpush2.msra.mxu0 0.0
    %3910 = vmatprep.subr.mxu0 0.0
    %3911 = vmatpush2.msra.mxu0 0.0
    %3912 = vmatprep.subr.mxu0 0.0
    %3913 = vmatpush2.msra.mxu0 0.0
    %3914 = vmatprep.subr.mxu0 0.0
    %3915 = vmatpush2.msra.mxu0 0.0
    %3916 = vmatprep.subr.mxu0 0.0
    %3917 = vmatpush2.msra.mxu0 0.0
    %3918 = vmatprep.subr.mxu0 0.0
    %3919 = vmatpush2.msra.mxu0 0.0
    %3920 = vmatprep.subr.mxu0 0.0
    %3921 = vmatpush2.msra.mxu0 0.0
    %3922 = vmatprep.subr.mxu0 0.0
    %3923 = vmatpush2.msra.mxu0 0.0
    %3924 = vmatprep.subr.mxu0 0.0
    %3925 = vmatpush2.msra.mxu0 0.0
    %3926 = vmatprep.subr.mxu0 0.0
    %3927 = vmatpush2.msra.mxu0 0.0
    %3928 = vmatprep.subr.mxu0 0.0
    %3929 = vmatpush2.msra.mxu0 0.0
    %3930 = vmatprep.subr.mxu0 0.0
    %3931 = vmatpush2.msra.mxu0 0.0
    %3932 = vmatprep.subr.mxu0 0.0
    %3933 = vmatpush2.msra.mxu0 0.0
    %3934 = vmatprep.subr.mxu0 0.0
    %3935 = vmatpush2.msra.mxu0 0.0
    %3936 = vmatprep.mubr.f32.mxu0 0.0
    %3937 = vmatmul.mubr.f32.gmra.mxu0 %v3870
    %v3938 = vpop.f32.mrf.mxu0
    %v3939 = vadd.f32 0.0, %v3938
    %v3940 = vpop.f32.mrf.mxu0
    %v3941 = vadd.f32 0.0, %v3940
    %3942 = vdwg.mxu0
    %3943 = vmatprep.subr.mxu0 %v2805
    %3944 = vmatpush1.msra.mxu0 %v2804
    %3945 = vmatprep.subr.mxu0 %v2801
    %3946 = vmatpush1.msra.mxu0 %v2800
    %3947 = vmatprep.subr.mxu0 %v2797
    %3948 = vmatpush1.msra.mxu0 %v2796
    %3949 = vmatprep.subr.mxu0 %v2793
    %3950 = vmatpush1.msra.mxu0 %v2792
    %3951 = vmatprep.subr.mxu0 %v2789
    %3952 = vmatpush1.msra.mxu0 %v2788
    %3953 = vmatprep.subr.mxu0 %v2785
    %3954 = vmatpush1.msra.mxu0 %v2784
    %3955 = vmatprep.subr.mxu0 %v2781
    %3956 = vmatpush1.msra.mxu0 %v2780
    %3957 = vmatprep.subr.mxu0 %v2777
    %3958 = vmatpush1.msra.mxu0 %v2776
    %3959 = vmatprep.subr.mxu0 %v2773
    %3960 = vmatpush1.msra.mxu0 %v2772
    %3961 = vmatprep.subr.mxu0 %v2769
    %3962 = vmatpush1.msra.mxu0 %v2768
    %3963 = vmatprep.subr.mxu0 %v2765
    %3964 = vmatpush1.msra.mxu0 %v2764
    %3965 = vmatprep.subr.mxu0 %v2761
    %3966 = vmatpush1.msra.mxu0 %v2760
    %3967 = vmatprep.subr.mxu0 %v2757
    %3968 = vmatpush1.msra.mxu0 %v2756
    %3969 = vmatprep.subr.mxu0 %v2753
    %3970 = vmatpush1.msra.mxu0 %v2752
    %3971 = vmatprep.subr.mxu0 %v2749
    %3972 = vmatpush1.msra.mxu0 %v2748
    %3973 = vmatprep.subr.mxu0 %v2745
    %3974 = vmatpush1.msra.mxu0 %v2744
    %3975 = vmatprep.subr.mxu0 0.0
    %3976 = vmatpush2.msra.mxu0 0.0
    %3977 = vmatprep.subr.mxu0 0.0
    %3978 = vmatpush2.msra.mxu0 0.0
    %3979 = vmatprep.subr.mxu0 0.0
    %3980 = vmatpush2.msra.mxu0 0.0
    %3981 = vmatprep.subr.mxu0 0.0
    %3982 = vmatpush2.msra.mxu0 0.0
    %3983 = vmatprep.subr.mxu0 0.0
    %3984 = vmatpush2.msra.mxu0 0.0
    %3985 = vmatprep.subr.mxu0 0.0
    %3986 = vmatpush2.msra.mxu0 0.0
    %3987 = vmatprep.subr.mxu0 0.0
    %3988 = vmatpush2.msra.mxu0 0.0
    %3989 = vmatprep.subr.mxu0 0.0
    %3990 = vmatpush2.msra.mxu0 0.0
    %3991 = vmatprep.subr.mxu0 0.0
    %3992 = vmatpush2.msra.mxu0 0.0
    %3993 = vmatprep.subr.mxu0 0.0
    %3994 = vmatpush2.msra.mxu0 0.0
    %3995 = vmatprep.subr.mxu0 0.0
    %3996 = vmatpush2.msra.mxu0 0.0
    %3997 = vmatprep.subr.mxu0 0.0
    %3998 = vmatpush2.msra.mxu0 0.0
    %3999 = vmatprep.subr.mxu0 0.0
    %4000 = vmatpush2.msra.mxu0 0.0
    %4001 = vmatprep.subr.mxu0 0.0
    %4002 = vmatpush2.msra.mxu0 0.0
    %4003 = vmatprep.subr.mxu0 0.0
    %4004 = vmatpush2.msra.mxu0 0.0
    %4005 = vmatprep.subr.mxu0 0.0
    %4006 = vmatpush2.msra.mxu0 0.0
    %4007 = vmatprep.mubr.f32.mxu0 0.0
    %4008 = vmatmul.mubr.f32.gmra.mxu0 %v3870
    %v4009 = vpop.f32.mrf.mxu0
    %v4010 = vadd.f32 0.0, %v4009
    %v4011 = vpop.f32.mrf.mxu0
    %v4012 = vadd.f32 0.0, %v4011
    %4013 = vdwg.mxu0
    %v4018 = vcombine.low %v3939, %v3941
    %v4019 = vcombine.low %v4010, %v4012
    %v4021 = vunpack.c.l.s4 1966171168
    %v4022 = vunpack.c.0.s8 %v4021
    %v4023 = vlaneseq
    %v4024 = vshrl.u32 %v4023, 7
    %v4025 = vsub.s32 %v4022, %v4024
    %v4026 = vrot.slane %v4018, %v4025
    %v4028 = vunpack.c.l.s4 1966171168
    %v4029 = vunpack.c.0.s8 %v4028
    %v4030 = vlaneseq
    %v4031 = vshrl.u32 %v4030, 7
    %v4032 = vsub.s32 %v4029, %v4031
    %v4033 = vrot.slane %v4019, %v4032
    %v4034 = vcombine.low %v4026, %v4033
    %v4035 = vcombine.high %v4026, %v4033
    %v4037 = vunpack.c.l.s4 1966171168
    %v4038 = vunpack.c.0.s8 %v4037
    %v4039 = vlaneseq
    %v4040 = vshrl.u32 %v4039, 7
    %v4041 = vsub.s32 %v4038, %v4040
    %v4042 = vrot.slane %v4034, %v4041
    %v4044 = vunpack.c.l.s4 1966171168
    %v4045 = vunpack.c.0.s8 %v4044
    %v4046 = vlaneseq
    %v4047 = vshrl.u32 %v4046, 7
    %v4048 = vsub.s32 %v4045, %v4047
    %v4049 = vrot.slane %v4035, %v4048
    %v4052 = vadd.f32 %v3852, %v4042
    %v4053 = vadd.f32 %v3853, %v4049
    %v4054 = vxor.u32 %v4052, 2147483648
    %v4055 = vxor.u32 %v4053, 2147483648
    %v4056 = vmul.f32 %v4054, 1.442695
    %v4057 = vpow.pop %v4056
    %v4058 = vmul.f32 %v4055, 1.442695
    %v4059 = vpow.pop %v4058
    %v4060 = vadd.f32 %v4057, 1.0
    %v4061 = vadd.f32 %v4059, 1.0
    %v4062 = vrcp.pop %v4060
    %v4063 = vmul.f32 1.0, %v4062
    %v4064 = vrcp.pop %v4061
    %v4065 = vmul.f32 1.0, %v4064
    %v4068 = vrot.slane %v4052, 1
    %v4069 = vrot.slane %v4053, 1
    %v4072 = vxor.u32 %v4068, 2147483648
    %v4073 = vxor.u32 %v4069, 2147483648
    %v4074 = vmul.f32 %v4072, 1.442695
    %v4075 = vpow.pop %v4074
    %v4076 = vmul.f32 %v4073, 1.442695
    %v4077 = vpow.pop %v4076
    %v4078 = vadd.f32 %v4075, 1.0
    %v4079 = vadd.f32 %v4077, 1.0
    %v4080 = vrcp.pop %v4078
    %v4081 = vmul.f32 1.0, %v4080
    %v4082 = vrcp.pop %v4079
    %v4083 = vmul.f32 1.0, %v4082
    %v4084 = vrot.slane %v4052, 2
    %v4085 = vrot.slane %v4053, 2
    %v4088 = vtanh.pop %v4084
    %v4089 = vtanh.pop %v4085
    %v4090 = vrot.slane %v4052, 3
    %v4091 = vrot.slane %v4053, 3
    %v4094 = vxor.u32 %v4090, 2147483648
    %v4095 = vxor.u32 %v4091, 2147483648
    %v4096 = vmul.f32 %v4094, 1.442695
    %v4097 = vpow.pop %v4096
    %v4098 = vmul.f32 %v4095, 1.442695
    %v4099 = vpow.pop %v4098
    %v4100 = vadd.f32 %v4097, 1.0
    %v4101 = vadd.f32 %v4099, 1.0
    %v4102 = vrcp.pop %v4100
    %v4103 = vmul.f32 1.0, %v4102
    %v4104 = vrcp.pop %v4101
    %v4105 = vmul.f32 1.0, %v4104
    %v4106 = vmul.f32 %v4081, %v3844
    %v4107 = vmul.f32 %v4083, %v3845
    %v4108 = vmul.f32 %v4063, %v4088
    %v4109 = vmul.f32 %v4065, %v4089
    %v4110 = vadd.f32 %v4106, %v4108
    %v4111 = vadd.f32 %v4107, %v4109
    %v4112 = vtanh.pop %v4110
    %v4113 = vtanh.pop %v4111
    %v4114 = vmul.f32 %v4103, %v4112
    %v4115 = vmul.f32 %v4105, %v4113
    %4116 = vst [vmem:[#allocation3 + $0x4] sm:$0x1] %v4114
    %4117 = vst [vmem:[#allocation3 + $0xc] sm:$0x1] %v4115
    %v4118 = vld [vmem:[%s1686] ss:$8 sm:$0xf]
    %v4119 = vld [vmem:[%s1688] ss:$8 sm:$0xf]
    %v4122 = vcombine.low %v4114, %v4115
    %v4124 = vunpack.c.l.s4 1966171168
    %v4125 = vunpack.c.0.s8 %v4124
    %v4126 = vlaneseq
    %v4127 = vshrl.u32 %v4126, 7
    %v4128 = vsub.s32 %v4125, %v4127
    %v4129 = vrot.slane %v4122, %v4128
    %v4131 = vunpack.c.l.s4 1966171168
    %v4132 = vunpack.c.0.s8 %v4131
    %v4133 = vlaneseq
    %v4134 = vshrl.u32 %v4133, 7
    %v4135 = vsub.s32 %v4132, %v4134
    %v4136 = vrot.slane %v4129, %v4135
    %4138 = vmatprep.subr.mxu0 %v2803
    %4139 = vmatpush1.msra.mxu0 %v2802
    %4140 = vmatprep.subr.mxu0 %v2799
    %4141 = vmatpush1.msra.mxu0 %v2798
    %4142 = vmatprep.subr.mxu0 %v2795
    %4143 = vmatpush1.msra.mxu0 %v2794
    %4144 = vmatprep.subr.mxu0 %v2791
    %4145 = vmatpush1.msra.mxu0 %v2790
    %4146 = vmatprep.subr.mxu0 %v2787
    %4147 = vmatpush1.msra.mxu0 %v2786
    %4148 = vmatprep.subr.mxu0 %v2783
    %4149 = vmatpush1.msra.mxu0 %v2782
    %4150 = vmatprep.subr.mxu0 %v2779
    %4151 = vmatpush1.msra.mxu0 %v2778
    %4152 = vmatprep.subr.mxu0 %v2775
    %4153 = vmatpush1.msra.mxu0 %v2774
    %4154 = vmatprep.subr.mxu0 %v2771
    %4155 = vmatpush1.msra.mxu0 %v2770
    %4156 = vmatprep.subr.mxu0 %v2767
    %4157 = vmatpush1.msra.mxu0 %v2766
    %4158 = vmatprep.subr.mxu0 %v2763
    %4159 = vmatpush1.msra.mxu0 %v2762
    %4160 = vmatprep.subr.mxu0 %v2759
    %4161 = vmatpush1.msra.mxu0 %v2758
    %4162 = vmatprep.subr.mxu0 %v2755
    %4163 = vmatpush1.msra.mxu0 %v2754
    %4164 = vmatprep.subr.mxu0 %v2751
    %4165 = vmatpush1.msra.mxu0 %v2750
    %4166 = vmatprep.subr.mxu0 %v2747
    %4167 = vmatpush1.msra.mxu0 %v2746
    %4168 = vmatprep.subr.mxu0 %v2743
    %4169 = vmatpush1.msra.mxu0 %v2742
    %4170 = vmatprep.subr.mxu0 0.0
    %4171 = vmatpush2.msra.mxu0 0.0
    %4172 = vmatprep.subr.mxu0 0.0
    %4173 = vmatpush2.msra.mxu0 0.0
    %4174 = vmatprep.subr.mxu0 0.0
    %4175 = vmatpush2.msra.mxu0 0.0
    %4176 = vmatprep.subr.mxu0 0.0
    %4177 = vmatpush2.msra.mxu0 0.0
    %4178 = vmatprep.subr.mxu0 0.0
    %4179 = vmatpush2.msra.mxu0 0.0
    %4180 = vmatprep.subr.mxu0 0.0
    %4181 = vmatpush2.msra.mxu0 0.0
    %4182 = vmatprep.subr.mxu0 0.0
    %4183 = vmatpush2.msra.mxu0 0.0
    %4184 = vmatprep.subr.mxu0 0.0
    %4185 = vmatpush2.msra.mxu0 0.0
    %4186 = vmatprep.subr.mxu0 0.0
    %4187 = vmatpush2.msra.mxu0 0.0
    %4188 = vmatprep.subr.mxu0 0.0
    %4189 = vmatpush2.msra.mxu0 0.0
    %4190 = vmatprep.subr.mxu0 0.0
    %4191 = vmatpush2.msra.mxu0 0.0
    %4192 = vmatprep.subr.mxu0 0.0
    %4193 = vmatpush2.msra.mxu0 0.0
    %4194 = vmatprep.subr.mxu0 0.0
    %4195 = vmatpush2.msra.mxu0 0.0
    %4196 = vmatprep.subr.mxu0 0.0
    %4197 = vmatpush2.msra.mxu0 0.0
    %4198 = vmatprep.subr.mxu0 0.0
    %4199 = vmatpush2.msra.mxu0 0.0
    %4200 = vmatprep.subr.mxu0 0.0
    %4201 = vmatpush2.msra.mxu0 0.0
    %4202 = vmatprep.mubr.f32.mxu0 0.0
    %4203 = vmatmul.mubr.f32.gmra.mxu0 %v4136
    %v4204 = vpop.f32.mrf.mxu0
    %v4205 = vadd.f32 0.0, %v4204
    %v4206 = vpop.f32.mrf.mxu0
    %v4207 = vadd.f32 0.0, %v4206
    %4208 = vdwg.mxu0
    %4209 = vmatprep.subr.mxu0 %v2805
    %4210 = vmatpush1.msra.mxu0 %v2804
    %4211 = vmatprep.subr.mxu0 %v2801
    %4212 = vmatpush1.msra.mxu0 %v2800
    %4213 = vmatprep.subr.mxu0 %v2797
    %4214 = vmatpush1.msra.mxu0 %v2796
    %4215 = vmatprep.subr.mxu0 %v2793
    %4216 = vmatpush1.msra.mxu0 %v2792
    %4217 = vmatprep.subr.mxu0 %v2789
    %4218 = vmatpush1.msra.mxu0 %v2788
    %4219 = vmatprep.subr.mxu0 %v2785
    %4220 = vmatpush1.msra.mxu0 %v2784
    %4221 = vmatprep.subr.mxu0 %v2781
    %4222 = vmatpush1.msra.mxu0 %v2780
    %4223 = vmatprep.subr.mxu0 %v2777
    %4224 = vmatpush1.msra.mxu0 %v2776
    %4225 = vmatprep.subr.mxu0 %v2773
    %4226 = vmatpush1.msra.mxu0 %v2772
    %4227 = vmatprep.subr.mxu0 %v2769
    %4228 = vmatpush1.msra.mxu0 %v2768
    %4229 = vmatprep.subr.mxu0 %v2765
    %4230 = vmatpush1.msra.mxu0 %v2764
    %4231 = vmatprep.subr.mxu0 %v2761
    %4232 = vmatpush1.msra.mxu0 %v2760
    %4233 = vmatprep.subr.mxu0 %v2757
    %4234 = vmatpush1.msra.mxu0 %v2756
    %4235 = vmatprep.subr.mxu0 %v2753
    %4236 = vmatpush1.msra.mxu0 %v2752
    %4237 = vmatprep.subr.mxu0 %v2749
    %4238 = vmatpush1.msra.mxu0 %v2748
    %4239 = vmatprep.subr.mxu0 %v2745
    %4240 = vmatpush1.msra.mxu0 %v2744
    %4241 = vmatprep.subr.mxu0 0.0
    %4242 = vmatpush2.msra.mxu0 0.0
    %4243 = vmatprep.subr.mxu0 0.0
    %4244 = vmatpush2.msra.mxu0 0.0
    %4245 = vmatprep.subr.mxu0 0.0
    %4246 = vmatpush2.msra.mxu0 0.0
    %4247 = vmatprep.subr.mxu0 0.0
    %4248 = vmatpush2.msra.mxu0 0.0
    %4249 = vmatprep.subr.mxu0 0.0
    %4250 = vmatpush2.msra.mxu0 0.0
    %4251 = vmatprep.subr.mxu0 0.0
    %4252 = vmatpush2.msra.mxu0 0.0
    %4253 = vmatprep.subr.mxu0 0.0
    %4254 = vmatpush2.msra.mxu0 0.0
    %4255 = vmatprep.subr.mxu0 0.0
    %4256 = vmatpush2.msra.mxu0 0.0
    %4257 = vmatprep.subr.mxu0 0.0
    %4258 = vmatpush2.msra.mxu0 0.0
    %4259 = vmatprep.subr.mxu0 0.0
    %4260 = vmatpush2.msra.mxu0 0.0
    %4261 = vmatprep.subr.mxu0 0.0
    %4262 = vmatpush2.msra.mxu0 0.0
    %4263 = vmatprep.subr.mxu0 0.0
    %4264 = vmatpush2.msra.mxu0 0.0
    %4265 = vmatprep.subr.mxu0 0.0
    %4266 = vmatpush2.msra.mxu0 0.0
    %4267 = vmatprep.subr.mxu0 0.0
    %4268 = vmatpush2.msra.mxu0 0.0
    %4269 = vmatprep.subr.mxu0 0.0
    %4270 = vmatpush2.msra.mxu0 0.0
    %4271 = vmatprep.subr.mxu0 0.0
    %4272 = vmatpush2.msra.mxu0 0.0
    %4273 = vmatprep.mubr.f32.mxu0 0.0
    %4274 = vmatmul.mubr.f32.gmra.mxu0 %v4136
    %v4275 = vpop.f32.mrf.mxu0
    %v4276 = vadd.f32 0.0, %v4275
    %v4277 = vpop.f32.mrf.mxu0
    %v4278 = vadd.f32 0.0, %v4277
    %4279 = vdwg.mxu0
    %v4284 = vcombine.low %v4205, %v4207
    %v4285 = vcombine.low %v4276, %v4278
    %v4287 = vunpack.c.l.s4 1966171168
    %v4288 = vunpack.c.0.s8 %v4287
    %v4289 = vlaneseq
    %v4290 = vshrl.u32 %v4289, 7
    %v4291 = vsub.s32 %v4288, %v4290
    %v4292 = vrot.slane %v4284, %v4291
    %v4294 = vunpack.c.l.s4 1966171168
    %v4295 = vunpack.c.0.s8 %v4294
    %v4296 = vlaneseq
    %v4297 = vshrl.u32 %v4296, 7
    %v4298 = vsub.s32 %v4295, %v4297
    %v4299 = vrot.slane %v4285, %v4298
    %v4300 = vcombine.low %v4292, %v4299
    %v4301 = vcombine.high %v4292, %v4299
    %v4303 = vunpack.c.l.s4 1966171168
    %v4304 = vunpack.c.0.s8 %v4303
    %v4305 = vlaneseq
    %v4306 = vshrl.u32 %v4305, 7
    %v4307 = vsub.s32 %v4304, %v4306
    %v4308 = vrot.slane %v4300, %v4307
    %v4310 = vunpack.c.l.s4 1966171168
    %v4311 = vunpack.c.0.s8 %v4310
    %v4312 = vlaneseq
    %v4313 = vshrl.u32 %v4312, 7
    %v4314 = vsub.s32 %v4311, %v4313
    %v4315 = vrot.slane %v4301, %v4314
    %v4318 = vadd.f32 %v4118, %v4308
    %v4319 = vadd.f32 %v4119, %v4315
    %v4320 = vxor.u32 %v4318, 2147483648
    %v4321 = vxor.u32 %v4319, 2147483648
    %v4322 = vmul.f32 %v4320, 1.442695
    %v4323 = vpow.pop %v4322
    %v4324 = vmul.f32 %v4321, 1.442695
    %v4325 = vpow.pop %v4324
    %v4326 = vadd.f32 %v4323, 1.0
    %v4327 = vadd.f32 %v4325, 1.0
    %v4328 = vrcp.pop %v4326
    %v4329 = vmul.f32 1.0, %v4328
    %v4330 = vrcp.pop %v4327
    %v4331 = vmul.f32 1.0, %v4330
    %v4334 = vrot.slane %v4318, 1
    %v4335 = vrot.slane %v4319, 1
    %v4338 = vxor.u32 %v4334, 2147483648
    %v4339 = vxor.u32 %v4335, 2147483648
    %v4340 = vmul.f32 %v4338, 1.442695
    %v4341 = vpow.pop %v4340
    %v4342 = vmul.f32 %v4339, 1.442695
    %v4343 = vpow.pop %v4342
    %v4344 = vadd.f32 %v4341, 1.0
    %v4345 = vadd.f32 %v4343, 1.0
    %v4346 = vrcp.pop %v4344
    %v4347 = vmul.f32 1.0, %v4346
    %v4348 = vrcp.pop %v4345
    %v4349 = vmul.f32 1.0, %v4348
    %v4350 = vrot.slane %v4318, 2
    %v4351 = vrot.slane %v4319, 2
    %v4354 = vtanh.pop %v4350
    %v4355 = vtanh.pop %v4351
    %v4356 = vrot.slane %v4318, 3
    %v4357 = vrot.slane %v4319, 3
    %v4360 = vxor.u32 %v4356, 2147483648
    %v4361 = vxor.u32 %v4357, 2147483648
    %v4362 = vmul.f32 %v4360, 1.442695
    %v4363 = vpow.pop %v4362
    %v4364 = vmul.f32 %v4361, 1.442695
    %v4365 = vpow.pop %v4364
    %v4366 = vadd.f32 %v4363, 1.0
    %v4367 = vadd.f32 %v4365, 1.0
    %v4368 = vrcp.pop %v4366
    %v4369 = vmul.f32 1.0, %v4368
    %v4370 = vrcp.pop %v4367
    %v4371 = vmul.f32 1.0, %v4370
    %v4372 = vmul.f32 %v4347, %v4110
    %v4373 = vmul.f32 %v4349, %v4111
    %v4374 = vmul.f32 %v4329, %v4354
    %v4375 = vmul.f32 %v4331, %v4355
    %v4376 = vadd.f32 %v4372, %v4374
    %v4377 = vadd.f32 %v4373, %v4375
    %v4378 = vtanh.pop %v4376
    %v4379 = vtanh.pop %v4377
    %v4380 = vmul.f32 %v4369, %v4378
    %v4381 = vmul.f32 %v4371, %v4379
    %4382 = vst [vmem:[#allocation3 + $0x5] sm:$0x1] %v4380
    %4383 = vst [vmem:[#allocation3 + $0xd] sm:$0x1] %v4381
    %v4384 = vld [vmem:[%s1954] ss:$8 sm:$0xf]
    %v4385 = vld [vmem:[%s1956] ss:$8 sm:$0xf]
    %v4388 = vcombine.low %v4380, %v4381
    %v4390 = vunpack.c.l.s4 1966171168
    %v4391 = vunpack.c.0.s8 %v4390
    %v4392 = vlaneseq
    %v4393 = vshrl.u32 %v4392, 7
    %v4394 = vsub.s32 %v4391, %v4393
    %v4395 = vrot.slane %v4388, %v4394
    %v4397 = vunpack.c.l.s4 1966171168
    %v4398 = vunpack.c.0.s8 %v4397
    %v4399 = vlaneseq
    %v4400 = vshrl.u32 %v4399, 7
    %v4401 = vsub.s32 %v4398, %v4400
    %v4402 = vrot.slane %v4395, %v4401
    %4404 = vmatprep.subr.mxu0 %v2803
    %4405 = vmatpush1.msra.mxu0 %v2802
    %4406 = vmatprep.subr.mxu0 %v2799
    %4407 = vmatpush1.msra.mxu0 %v2798
    %4408 = vmatprep.subr.mxu0 %v2795
    %4409 = vmatpush1.msra.mxu0 %v2794
    %4410 = vmatprep.subr.mxu0 %v2791
    %4411 = vmatpush1.msra.mxu0 %v2790
    %4412 = vmatprep.subr.mxu0 %v2787
    %4413 = vmatpush1.msra.mxu0 %v2786
    %4414 = vmatprep.subr.mxu0 %v2783
    %4415 = vmatpush1.msra.mxu0 %v2782
    %4416 = vmatprep.subr.mxu0 %v2779
    %4417 = vmatpush1.msra.mxu0 %v2778
    %4418 = vmatprep.subr.mxu0 %v2775
    %4419 = vmatpush1.msra.mxu0 %v2774
    %4420 = vmatprep.subr.mxu0 %v2771
    %4421 = vmatpush1.msra.mxu0 %v2770
    %4422 = vmatprep.subr.mxu0 %v2767
    %4423 = vmatpush1.msra.mxu0 %v2766
    %4424 = vmatprep.subr.mxu0 %v2763
    %4425 = vmatpush1.msra.mxu0 %v2762
    %4426 = vmatprep.subr.mxu0 %v2759
    %4427 = vmatpush1.msra.mxu0 %v2758
    %4428 = vmatprep.subr.mxu0 %v2755
    %4429 = vmatpush1.msra.mxu0 %v2754
    %4430 = vmatprep.subr.mxu0 %v2751
    %4431 = vmatpush1.msra.mxu0 %v2750
    %4432 = vmatprep.subr.mxu0 %v2747
    %4433 = vmatpush1.msra.mxu0 %v2746
    %4434 = vmatprep.subr.mxu0 %v2743
    %4435 = vmatpush1.msra.mxu0 %v2742
    %4436 = vmatprep.subr.mxu0 0.0
    %4437 = vmatpush2.msra.mxu0 0.0
    %4438 = vmatprep.subr.mxu0 0.0
    %4439 = vmatpush2.msra.mxu0 0.0
    %4440 = vmatprep.subr.mxu0 0.0
    %4441 = vmatpush2.msra.mxu0 0.0
    %4442 = vmatprep.subr.mxu0 0.0
    %4443 = vmatpush2.msra.mxu0 0.0
    %4444 = vmatprep.subr.mxu0 0.0
    %4445 = vmatpush2.msra.mxu0 0.0
    %4446 = vmatprep.subr.mxu0 0.0
    %4447 = vmatpush2.msra.mxu0 0.0
    %4448 = vmatprep.subr.mxu0 0.0
    %4449 = vmatpush2.msra.mxu0 0.0
    %4450 = vmatprep.subr.mxu0 0.0
    %4451 = vmatpush2.msra.mxu0 0.0
    %4452 = vmatprep.subr.mxu0 0.0
    %4453 = vmatpush2.msra.mxu0 0.0
    %4454 = vmatprep.subr.mxu0 0.0
    %4455 = vmatpush2.msra.mxu0 0.0
    %4456 = vmatprep.subr.mxu0 0.0
    %4457 = vmatpush2.msra.mxu0 0.0
    %4458 = vmatprep.subr.mxu0 0.0
    %4459 = vmatpush2.msra.mxu0 0.0
    %4460 = vmatprep.subr.mxu0 0.0
    %4461 = vmatpush2.msra.mxu0 0.0
    %4462 = vmatprep.subr.mxu0 0.0
    %4463 = vmatpush2.msra.mxu0 0.0
    %4464 = vmatprep.subr.mxu0 0.0
    %4465 = vmatpush2.msra.mxu0 0.0
    %4466 = vmatprep.subr.mxu0 0.0
    %4467 = vmatpush2.msra.mxu0 0.0
    %4468 = vmatprep.mubr.f32.mxu0 0.0
    %4469 = vmatmul.mubr.f32.gmra.mxu0 %v4402
    %v4470 = vpop.f32.mrf.mxu0
    %v4471 = vadd.f32 0.0, %v4470
    %v4472 = vpop.f32.mrf.mxu0
    %v4473 = vadd.f32 0.0, %v4472
    %4474 = vdwg.mxu0
    %4475 = vmatprep.subr.mxu0 %v2805
    %4476 = vmatpush1.msra.mxu0 %v2804
    %4477 = vmatprep.subr.mxu0 %v2801
    %4478 = vmatpush1.msra.mxu0 %v2800
    %4479 = vmatprep.subr.mxu0 %v2797
    %4480 = vmatpush1.msra.mxu0 %v2796
    %4481 = vmatprep.subr.mxu0 %v2793
    %4482 = vmatpush1.msra.mxu0 %v2792
    %4483 = vmatprep.subr.mxu0 %v2789
    %4484 = vmatpush1.msra.mxu0 %v2788
    %4485 = vmatprep.subr.mxu0 %v2785
    %4486 = vmatpush1.msra.mxu0 %v2784
    %4487 = vmatprep.subr.mxu0 %v2781
    %4488 = vmatpush1.msra.mxu0 %v2780
    %4489 = vmatprep.subr.mxu0 %v2777
    %4490 = vmatpush1.msra.mxu0 %v2776
    %4491 = vmatprep.subr.mxu0 %v2773
    %4492 = vmatpush1.msra.mxu0 %v2772
    %4493 = vmatprep.subr.mxu0 %v2769
    %4494 = vmatpush1.msra.mxu0 %v2768
    %4495 = vmatprep.subr.mxu0 %v2765
    %4496 = vmatpush1.msra.mxu0 %v2764
    %4497 = vmatprep.subr.mxu0 %v2761
    %4498 = vmatpush1.msra.mxu0 %v2760
    %4499 = vmatprep.subr.mxu0 %v2757
    %4500 = vmatpush1.msra.mxu0 %v2756
    %4501 = vmatprep.subr.mxu0 %v2753
    %4502 = vmatpush1.msra.mxu0 %v2752
    %4503 = vmatprep.subr.mxu0 %v2749
    %4504 = vmatpush1.msra.mxu0 %v2748
    %4505 = vmatprep.subr.mxu0 %v2745
    %4506 = vmatpush1.msra.mxu0 %v2744
    %4507 = vmatprep.subr.mxu0 0.0
    %4508 = vmatpush2.msra.mxu0 0.0
    %4509 = vmatprep.subr.mxu0 0.0
    %4510 = vmatpush2.msra.mxu0 0.0
    %4511 = vmatprep.subr.mxu0 0.0
    %4512 = vmatpush2.msra.mxu0 0.0
    %4513 = vmatprep.subr.mxu0 0.0
    %4514 = vmatpush2.msra.mxu0 0.0
    %4515 = vmatprep.subr.mxu0 0.0
    %4516 = vmatpush2.msra.mxu0 0.0
    %4517 = vmatprep.subr.mxu0 0.0
    %4518 = vmatpush2.msra.mxu0 0.0
    %4519 = vmatprep.subr.mxu0 0.0
    %4520 = vmatpush2.msra.mxu0 0.0
    %4521 = vmatprep.subr.mxu0 0.0
    %4522 = vmatpush2.msra.mxu0 0.0
    %4523 = vmatprep.subr.mxu0 0.0
    %4524 = vmatpush2.msra.mxu0 0.0
    %4525 = vmatprep.subr.mxu0 0.0
    %4526 = vmatpush2.msra.mxu0 0.0
    %4527 = vmatprep.subr.mxu0 0.0
    %4528 = vmatpush2.msra.mxu0 0.0
    %4529 = vmatprep.subr.mxu0 0.0
    %4530 = vmatpush2.msra.mxu0 0.0
    %4531 = vmatprep.subr.mxu0 0.0
    %4532 = vmatpush2.msra.mxu0 0.0
    %4533 = vmatprep.subr.mxu0 0.0
    %4534 = vmatpush2.msra.mxu0 0.0
    %4535 = vmatprep.subr.mxu0 0.0
    %4536 = vmatpush2.msra.mxu0 0.0
    %4537 = vmatprep.subr.mxu0 0.0
    %4538 = vmatpush2.msra.mxu0 0.0
    %4539 = vmatprep.mubr.f32.mxu0 0.0
    %4540 = vmatmul.mubr.f32.gmra.mxu0 %v4402
    %v4541 = vpop.f32.mrf.mxu0
    %v4542 = vadd.f32 0.0, %v4541
    %v4543 = vpop.f32.mrf.mxu0
    %v4544 = vadd.f32 0.0, %v4543
    %4545 = vdwg.mxu0
    %v4550 = vcombine.low %v4471, %v4473
    %v4551 = vcombine.low %v4542, %v4544
    %v4553 = vunpack.c.l.s4 1966171168
    %v4554 = vunpack.c.0.s8 %v4553
    %v4555 = vlaneseq
    %v4556 = vshrl.u32 %v4555, 7
    %v4557 = vsub.s32 %v4554, %v4556
    %v4558 = vrot.slane %v4550, %v4557
    %v4560 = vunpack.c.l.s4 1966171168
    %v4561 = vunpack.c.0.s8 %v4560
    %v4562 = vlaneseq
    %v4563 = vshrl.u32 %v4562, 7
    %v4564 = vsub.s32 %v4561, %v4563
    %v4565 = vrot.slane %v4551, %v4564
    %v4566 = vcombine.low %v4558, %v4565
    %v4567 = vcombine.high %v4558, %v4565
    %v4569 = vunpack.c.l.s4 1966171168
    %v4570 = vunpack.c.0.s8 %v4569
    %v4571 = vlaneseq
    %v4572 = vshrl.u32 %v4571, 7
    %v4573 = vsub.s32 %v4570, %v4572
    %v4574 = vrot.slane %v4566, %v4573
    %v4576 = vunpack.c.l.s4 1966171168
    %v4577 = vunpack.c.0.s8 %v4576
    %v4578 = vlaneseq
    %v4579 = vshrl.u32 %v4578, 7
    %v4580 = vsub.s32 %v4577, %v4579
    %v4581 = vrot.slane %v4567, %v4580
    %v4584 = vadd.f32 %v4384, %v4574
    %v4585 = vadd.f32 %v4385, %v4581
    %v4586 = vxor.u32 %v4584, 2147483648
    %v4587 = vxor.u32 %v4585, 2147483648
    %v4588 = vmul.f32 %v4586, 1.442695
    %v4589 = vpow.pop %v4588
    %v4590 = vmul.f32 %v4587, 1.442695
    %v4591 = vpow.pop %v4590
    %v4592 = vadd.f32 %v4589, 1.0
    %v4593 = vadd.f32 %v4591, 1.0
    %v4594 = vrcp.pop %v4592
    %v4595 = vmul.f32 1.0, %v4594
    %v4596 = vrcp.pop %v4593
    %v4597 = vmul.f32 1.0, %v4596
    %v4600 = vrot.slane %v4584, 1
    %v4601 = vrot.slane %v4585, 1
    %v4604 = vxor.u32 %v4600, 2147483648
    %v4605 = vxor.u32 %v4601, 2147483648
    %v4606 = vmul.f32 %v4604, 1.442695
    %v4607 = vpow.pop %v4606
    %v4608 = vmul.f32 %v4605, 1.442695
    %v4609 = vpow.pop %v4608
    %v4610 = vadd.f32 %v4607, 1.0
    %v4611 = vadd.f32 %v4609, 1.0
    %v4612 = vrcp.pop %v4610
    %v4613 = vmul.f32 1.0, %v4612
    %v4614 = vrcp.pop %v4611
    %v4615 = vmul.f32 1.0, %v4614
    %v4616 = vrot.slane %v4584, 2
    %v4617 = vrot.slane %v4585, 2
    %v4620 = vtanh.pop %v4616
    %v4621 = vtanh.pop %v4617
    %v4622 = vrot.slane %v4584, 3
    %v4623 = vrot.slane %v4585, 3
    %v4626 = vxor.u32 %v4622, 2147483648
    %v4627 = vxor.u32 %v4623, 2147483648
    %v4628 = vmul.f32 %v4626, 1.442695
    %v4629 = vpow.pop %v4628
    %v4630 = vmul.f32 %v4627, 1.442695
    %v4631 = vpow.pop %v4630
    %v4632 = vadd.f32 %v4629, 1.0
    %v4633 = vadd.f32 %v4631, 1.0
    %v4634 = vrcp.pop %v4632
    %v4635 = vmul.f32 1.0, %v4634
    %v4636 = vrcp.pop %v4633
    %v4637 = vmul.f32 1.0, %v4636
    %v4638 = vmul.f32 %v4613, %v4376
    %v4639 = vmul.f32 %v4615, %v4377
    %v4640 = vmul.f32 %v4595, %v4620
    %v4641 = vmul.f32 %v4597, %v4621
    %v4642 = vadd.f32 %v4638, %v4640
    %v4643 = vadd.f32 %v4639, %v4641
    %v4644 = vtanh.pop %v4642
    %v4645 = vtanh.pop %v4643
    %v4646 = vmul.f32 %v4635, %v4644
    %v4647 = vmul.f32 %v4637, %v4645
    %4648 = vst [vmem:[#allocation3 + $0x6] sm:$0x1] %v4646
    %4649 = vst [vmem:[#allocation3 + $0xe] sm:$0x1] %v4647
    %v4650 = vld [vmem:[%s2222] ss:$8 sm:$0xf]
    %v4651 = vld [vmem:[%s2224] ss:$8 sm:$0xf]
    %v4654 = vcombine.low %v4646, %v4647
    %v4656 = vunpack.c.l.s4 1966171168
    %v4657 = vunpack.c.0.s8 %v4656
    %v4658 = vlaneseq
    %v4659 = vshrl.u32 %v4658, 7
    %v4660 = vsub.s32 %v4657, %v4659
    %v4661 = vrot.slane %v4654, %v4660
    %v4663 = vunpack.c.l.s4 1966171168
    %v4664 = vunpack.c.0.s8 %v4663
    %v4665 = vlaneseq
    %v4666 = vshrl.u32 %v4665, 7
    %v4667 = vsub.s32 %v4664, %v4666
    %v4668 = vrot.slane %v4661, %v4667
    %4670 = vmatprep.subr.mxu0 %v2803
    %4671 = vmatpush1.msra.mxu0 %v2802
    %4672 = vmatprep.subr.mxu0 %v2799
    %4673 = vmatpush1.msra.mxu0 %v2798
    %4674 = vmatprep.subr.mxu0 %v2795
    %4675 = vmatpush1.msra.mxu0 %v2794
    %4676 = vmatprep.subr.mxu0 %v2791
    %4677 = vmatpush1.msra.mxu0 %v2790
    %4678 = vmatprep.subr.mxu0 %v2787
    %4679 = vmatpush1.msra.mxu0 %v2786
    %4680 = vmatprep.subr.mxu0 %v2783
    %4681 = vmatpush1.msra.mxu0 %v2782
    %4682 = vmatprep.subr.mxu0 %v2779
    %4683 = vmatpush1.msra.mxu0 %v2778
    %4684 = vmatprep.subr.mxu0 %v2775
    %4685 = vmatpush1.msra.mxu0 %v2774
    %4686 = vmatprep.subr.mxu0 %v2771
    %4687 = vmatpush1.msra.mxu0 %v2770
    %4688 = vmatprep.subr.mxu0 %v2767
    %4689 = vmatpush1.msra.mxu0 %v2766
    %4690 = vmatprep.subr.mxu0 %v2763
    %4691 = vmatpush1.msra.mxu0 %v2762
    %4692 = vmatprep.subr.mxu0 %v2759
    %4693 = vmatpush1.msra.mxu0 %v2758
    %4694 = vmatprep.subr.mxu0 %v2755
    %4695 = vmatpush1.msra.mxu0 %v2754
    %4696 = vmatprep.subr.mxu0 %v2751
    %4697 = vmatpush1.msra.mxu0 %v2750
    %4698 = vmatprep.subr.mxu0 %v2747
    %4699 = vmatpush1.msra.mxu0 %v2746
    %4700 = vmatprep.subr.mxu0 %v2743
    %4701 = vmatpush1.msra.mxu0 %v2742
    %4702 = vmatprep.subr.mxu0 0.0
    %4703 = vmatpush2.msra.mxu0 0.0
    %4704 = vmatprep.subr.mxu0 0.0
    %4705 = vmatpush2.msra.mxu0 0.0
    %4706 = vmatprep.subr.mxu0 0.0
    %4707 = vmatpush2.msra.mxu0 0.0
    %4708 = vmatprep.subr.mxu0 0.0
    %4709 = vmatpush2.msra.mxu0 0.0
    %4710 = vmatprep.subr.mxu0 0.0
    %4711 = vmatpush2.msra.mxu0 0.0
    %4712 = vmatprep.subr.mxu0 0.0
    %4713 = vmatpush2.msra.mxu0 0.0
    %4714 = vmatprep.subr.mxu0 0.0
    %4715 = vmatpush2.msra.mxu0 0.0
    %4716 = vmatprep.subr.mxu0 0.0
    %4717 = vmatpush2.msra.mxu0 0.0
    %4718 = vmatprep.subr.mxu0 0.0
    %4719 = vmatpush2.msra.mxu0 0.0
    %4720 = vmatprep.subr.mxu0 0.0
    %4721 = vmatpush2.msra.mxu0 0.0
    %4722 = vmatprep.subr.mxu0 0.0
    %4723 = vmatpush2.msra.mxu0 0.0
    %4724 = vmatprep.subr.mxu0 0.0
    %4725 = vmatpush2.msra.mxu0 0.0
    %4726 = vmatprep.subr.mxu0 0.0
    %4727 = vmatpush2.msra.mxu0 0.0
    %4728 = vmatprep.subr.mxu0 0.0
    %4729 = vmatpush2.msra.mxu0 0.0
    %4730 = vmatprep.subr.mxu0 0.0
    %4731 = vmatpush2.msra.mxu0 0.0
    %4732 = vmatprep.subr.mxu0 0.0
    %4733 = vmatpush2.msra.mxu0 0.0
    %4734 = vmatprep.mubr.f32.mxu0 0.0
    %4735 = vmatmul.mubr.f32.gmra.mxu0 %v4668
    %v4736 = vpop.f32.mrf.mxu0
    %v4737 = vadd.f32 0.0, %v4736
    %v4738 = vpop.f32.mrf.mxu0
    %v4739 = vadd.f32 0.0, %v4738
    %4740 = vdwg.mxu0
    %4741 = vmatprep.subr.mxu0 %v2805
    %4742 = vmatpush1.msra.mxu0 %v2804
    %4743 = vmatprep.subr.mxu0 %v2801
    %4744 = vmatpush1.msra.mxu0 %v2800
    %4745 = vmatprep.subr.mxu0 %v2797
    %4746 = vmatpush1.msra.mxu0 %v2796
    %4747 = vmatprep.subr.mxu0 %v2793
    %4748 = vmatpush1.msra.mxu0 %v2792
    %4749 = vmatprep.subr.mxu0 %v2789
    %4750 = vmatpush1.msra.mxu0 %v2788
    %4751 = vmatprep.subr.mxu0 %v2785
    %4752 = vmatpush1.msra.mxu0 %v2784
    %4753 = vmatprep.subr.mxu0 %v2781
    %4754 = vmatpush1.msra.mxu0 %v2780
    %4755 = vmatprep.subr.mxu0 %v2777
    %4756 = vmatpush1.msra.mxu0 %v2776
    %4757 = vmatprep.subr.mxu0 %v2773
    %4758 = vmatpush1.msra.mxu0 %v2772
    %4759 = vmatprep.subr.mxu0 %v2769
    %4760 = vmatpush1.msra.mxu0 %v2768
    %4761 = vmatprep.subr.mxu0 %v2765
    %4762 = vmatpush1.msra.mxu0 %v2764
    %4763 = vmatprep.subr.mxu0 %v2761
    %4764 = vmatpush1.msra.mxu0 %v2760
    %4765 = vmatprep.subr.mxu0 %v2757
    %4766 = vmatpush1.msra.mxu0 %v2756
    %4767 = vmatprep.subr.mxu0 %v2753
    %4768 = vmatpush1.msra.mxu0 %v2752
    %4769 = vmatprep.subr.mxu0 %v2749
    %4770 = vmatpush1.msra.mxu0 %v2748
    %4771 = vmatprep.subr.mxu0 %v2745
    %4772 = vmatpush1.msra.mxu0 %v2744
    %4773 = vmatprep.subr.mxu0 0.0
    %4774 = vmatpush2.msra.mxu0 0.0
    %4775 = vmatprep.subr.mxu0 0.0
    %4776 = vmatpush2.msra.mxu0 0.0
    %4777 = vmatprep.subr.mxu0 0.0
    %4778 = vmatpush2.msra.mxu0 0.0
    %4779 = vmatprep.subr.mxu0 0.0
    %4780 = vmatpush2.msra.mxu0 0.0
    %4781 = vmatprep.subr.mxu0 0.0
    %4782 = vmatpush2.msra.mxu0 0.0
    %4783 = vmatprep.subr.mxu0 0.0
    %4784 = vmatpush2.msra.mxu0 0.0
    %4785 = vmatprep.subr.mxu0 0.0
    %4786 = vmatpush2.msra.mxu0 0.0
    %4787 = vmatprep.subr.mxu0 0.0
    %4788 = vmatpush2.msra.mxu0 0.0
    %4789 = vmatprep.subr.mxu0 0.0
    %4790 = vmatpush2.msra.mxu0 0.0
    %4791 = vmatprep.subr.mxu0 0.0
    %4792 = vmatpush2.msra.mxu0 0.0
    %4793 = vmatprep.subr.mxu0 0.0
    %4794 = vmatpush2.msra.mxu0 0.0
    %4795 = vmatprep.subr.mxu0 0.0
    %4796 = vmatpush2.msra.mxu0 0.0
    %4797 = vmatprep.subr.mxu0 0.0
    %4798 = vmatpush2.msra.mxu0 0.0
    %4799 = vmatprep.subr.mxu0 0.0
    %4800 = vmatpush2.msra.mxu0 0.0
    %4801 = vmatprep.subr.mxu0 0.0
    %4802 = vmatpush2.msra.mxu0 0.0
    %4803 = vmatprep.subr.mxu0 0.0
    %4804 = vmatpush2.msra.mxu0 0.0
    %4805 = vmatprep.mubr.f32.mxu0 0.0
    %4806 = vmatmul.mubr.f32.gmra.mxu0 %v4668
    %v4807 = vpop.f32.mrf.mxu0
    %v4808 = vadd.f32 0.0, %v4807
    %v4809 = vpop.f32.mrf.mxu0
    %v4810 = vadd.f32 0.0, %v4809
    %4811 = vdwg.mxu0
    %v4816 = vcombine.low %v4737, %v4739
    %v4817 = vcombine.low %v4808, %v4810
    %v4819 = vunpack.c.l.s4 1966171168
    %v4820 = vunpack.c.0.s8 %v4819
    %v4821 = vlaneseq
    %v4822 = vshrl.u32 %v4821, 7
    %v4823 = vsub.s32 %v4820, %v4822
    %v4824 = vrot.slane %v4816, %v4823
    %v4826 = vunpack.c.l.s4 1966171168
    %v4827 = vunpack.c.0.s8 %v4826
    %v4828 = vlaneseq
    %v4829 = vshrl.u32 %v4828, 7
    %v4830 = vsub.s32 %v4827, %v4829
    %v4831 = vrot.slane %v4817, %v4830
    %v4832 = vcombine.low %v4824, %v4831
    %v4833 = vcombine.high %v4824, %v4831
    %v4835 = vunpack.c.l.s4 1966171168
    %v4836 = vunpack.c.0.s8 %v4835
    %v4837 = vlaneseq
    %v4838 = vshrl.u32 %v4837, 7
    %v4839 = vsub.s32 %v4836, %v4838
    %v4840 = vrot.slane %v4832, %v4839
    %v4842 = vunpack.c.l.s4 1966171168
    %v4843 = vunpack.c.0.s8 %v4842
    %v4844 = vlaneseq
    %v4845 = vshrl.u32 %v4844, 7
    %v4846 = vsub.s32 %v4843, %v4845
    %v4847 = vrot.slane %v4833, %v4846
    %v4850 = vadd.f32 %v4650, %v4840
    %v4851 = vadd.f32 %v4651, %v4847
    %v4852 = vxor.u32 %v4850, 2147483648
    %v4853 = vxor.u32 %v4851, 2147483648
    %v4854 = vmul.f32 %v4852, 1.442695
    %v4855 = vpow.pop %v4854
    %v4856 = vmul.f32 %v4853, 1.442695
    %v4857 = vpow.pop %v4856
    %v4858 = vadd.f32 %v4855, 1.0
    %v4859 = vadd.f32 %v4857, 1.0
    %v4860 = vrcp.pop %v4858
    %v4861 = vmul.f32 1.0, %v4860
    %v4862 = vrcp.pop %v4859
    %v4863 = vmul.f32 1.0, %v4862
    %v4866 = vrot.slane %v4850, 1
    %v4867 = vrot.slane %v4851, 1
    %v4870 = vxor.u32 %v4866, 2147483648
    %v4871 = vxor.u32 %v4867, 2147483648
    %v4872 = vmul.f32 %v4870, 1.442695
    %v4873 = vpow.pop %v4872
    %v4874 = vmul.f32 %v4871, 1.442695
    %v4875 = vpow.pop %v4874
    %v4876 = vadd.f32 %v4873, 1.0
    %v4877 = vadd.f32 %v4875, 1.0
    %v4878 = vrcp.pop %v4876
    %v4879 = vmul.f32 1.0, %v4878
    %v4880 = vrcp.pop %v4877
    %v4881 = vmul.f32 1.0, %v4880
    %v4882 = vrot.slane %v4850, 2
    %v4883 = vrot.slane %v4851, 2
    %v4886 = vtanh.pop %v4882
    %v4887 = vtanh.pop %v4883
    %v4888 = vrot.slane %v4850, 3
    %v4889 = vrot.slane %v4851, 3
    %v4892 = vxor.u32 %v4888, 2147483648
    %v4893 = vxor.u32 %v4889, 2147483648
    %v4894 = vmul.f32 %v4892, 1.442695
    %v4895 = vpow.pop %v4894
    %v4896 = vmul.f32 %v4893, 1.442695
    %v4897 = vpow.pop %v4896
    %v4898 = vadd.f32 %v4895, 1.0
    %v4899 = vadd.f32 %v4897, 1.0
    %v4900 = vrcp.pop %v4898
    %v4901 = vmul.f32 1.0, %v4900
    %v4902 = vrcp.pop %v4899
    %v4903 = vmul.f32 1.0, %v4902
    %v4904 = vmul.f32 %v4879, %v4642
    %v4905 = vmul.f32 %v4881, %v4643
    %v4906 = vmul.f32 %v4861, %v4886
    %v4907 = vmul.f32 %v4863, %v4887
    %v4908 = vadd.f32 %v4904, %v4906
    %v4909 = vadd.f32 %v4905, %v4907
    %v4910 = vtanh.pop %v4908
    %v4911 = vtanh.pop %v4909
    %v4912 = vmul.f32 %v4901, %v4910
    %v4913 = vmul.f32 %v4903, %v4911
    %4914 = vst [vmem:[#allocation3 + $0x7] sm:$0x1] %v4912
    %4915 = vst [vmem:[#allocation3 + $0xf] sm:$0x1] %v4913
    %v4916 = vld [vmem:[#allocation3] sm:$0xff]
    %v4917 = vld [vmem:[#allocation3 + $0x8] sm:$0xff]
    %s4918 = scalar_lea.vmem %s2, 512
    %v4919 = vld [vmem:[%s4918] sm:$0xff]
    %v4920 = vld [vmem:[%s4918 + $0x8] sm:$0xff]
    %v4921 = vld [vmem:[%s4918 + $0x10] sm:$0xff]
    %v4922 = vld [vmem:[%s4918 + $0x18] sm:$0xff]
    %v4923 = vld [vmem:[%s4918 + $0x20] sm:$0xff]
    %v4924 = vld [vmem:[%s4918 + $0x28] sm:$0xff]
    %v4925 = vld [vmem:[%s4918 + $0x30] sm:$0xff]
    %v4926 = vld [vmem:[%s4918 + $0x38] sm:$0xff]
    %v4927 = vld [vmem:[%s4918 + $0x40] sm:$0xff]
    %v4928 = vld [vmem:[%s4918 + $0x48] sm:$0xff]
    %v4929 = vld [vmem:[%s4918 + $0x50] sm:$0xff]
    %v4930 = vld [vmem:[%s4918 + $0x58] sm:$0xff]
    %v4931 = vld [vmem:[%s4918 + $0x60] sm:$0xff]
    %v4932 = vld [vmem:[%s4918 + $0x68] sm:$0xff]
    %v4933 = vld [vmem:[%s4918 + $0x70] sm:$0xff]
    %v4934 = vld [vmem:[%s4918 + $0x78] sm:$0xff]
    %v4935 = vld [vmem:[%s4918 + $0x80] sm:$0xff]
    %v4936 = vld [vmem:[%s4918 + $0x88] sm:$0xff]
    %v4937 = vld [vmem:[%s4918 + $0x90] sm:$0xff]
    %v4938 = vld [vmem:[%s4918 + $0x98] sm:$0xff]
    %v4939 = vld [vmem:[%s4918 + $0xa0] sm:$0xff]
    %v4940 = vld [vmem:[%s4918 + $0xa8] sm:$0xff]
    %v4941 = vld [vmem:[%s4918 + $0xb0] sm:$0xff]
    %v4942 = vld [vmem:[%s4918 + $0xb8] sm:$0xff]
    %v4943 = vld [vmem:[%s4918 + $0xc0] sm:$0xff]
    %v4944 = vld [vmem:[%s4918 + $0xc8] sm:$0xff]
    %v4945 = vld [vmem:[%s4918 + $0xd0] sm:$0xff]
    %v4946 = vld [vmem:[%s4918 + $0xd8] sm:$0xff]
    %v4947 = vld [vmem:[%s4918 + $0xe0] sm:$0xff]
    %v4948 = vld [vmem:[%s4918 + $0xe8] sm:$0xff]
    %v4949 = vld [vmem:[%s4918 + $0xf0] sm:$0xff]
    %v4950 = vld [vmem:[%s4918 + $0xf8] sm:$0xff]
    %v4951 = vld [vmem:[%s4918 + $0x100] sm:$0xff]
    %v4952 = vld [vmem:[%s4918 + $0x108] sm:$0xff]
    %v4953 = vld [vmem:[%s4918 + $0x110] sm:$0xff]
    %v4954 = vld [vmem:[%s4918 + $0x118] sm:$0xff]
    %v4955 = vld [vmem:[%s4918 + $0x120] sm:$0xff]
    %v4956 = vld [vmem:[%s4918 + $0x128] sm:$0xff]
    %v4957 = vld [vmem:[%s4918 + $0x130] sm:$0xff]
    %v4958 = vld [vmem:[%s4918 + $0x138] sm:$0xff]
    %v4959 = vld [vmem:[%s4918 + $0x140] sm:$0xff]
    %v4960 = vld [vmem:[%s4918 + $0x148] sm:$0xff]
    %v4961 = vld [vmem:[%s4918 + $0x150] sm:$0xff]
    %v4962 = vld [vmem:[%s4918 + $0x158] sm:$0xff]
    %v4963 = vld [vmem:[%s4918 + $0x160] sm:$0xff]
    %v4964 = vld [vmem:[%s4918 + $0x168] sm:$0xff]
    %v4965 = vld [vmem:[%s4918 + $0x170] sm:$0xff]
    %v4966 = vld [vmem:[%s4918 + $0x178] sm:$0xff]
    %v4967 = vld [vmem:[%s4918 + $0x180] sm:$0xff]
    %v4968 = vld [vmem:[%s4918 + $0x188] sm:$0xff]
    %v4969 = vld [vmem:[%s4918 + $0x190] sm:$0xff]
    %v4970 = vld [vmem:[%s4918 + $0x198] sm:$0xff]
    %v4971 = vld [vmem:[%s4918 + $0x1a0] sm:$0xff]
    %v4972 = vld [vmem:[%s4918 + $0x1a8] sm:$0xff]
    %v4973 = vld [vmem:[%s4918 + $0x1b0] sm:$0xff]
    %v4974 = vld [vmem:[%s4918 + $0x1b8] sm:$0xff]
    %v4975 = vld [vmem:[%s4918 + $0x1c0] sm:$0xff]
    %v4976 = vld [vmem:[%s4918 + $0x1c8] sm:$0xff]
    %v4977 = vld [vmem:[%s4918 + $0x1d0] sm:$0xff]
    %v4978 = vld [vmem:[%s4918 + $0x1d8] sm:$0xff]
    %v4979 = vld [vmem:[%s4918 + $0x1e0] sm:$0xff]
    %v4980 = vld [vmem:[%s4918 + $0x1e8] sm:$0xff]
    %v4981 = vld [vmem:[%s4918 + $0x1f0] sm:$0xff]
    %v4982 = vld [vmem:[%s4918 + $0x1f8] sm:$0xff]
    %s4983 = scalar_lea.vmem %s4, 8
    %v4984 = vld [vmem:[%s4983] sm:$0xf]
    %v4986 = vlaneseq
    %v4987 = vshrl.u32 %v4986, 7
    %v4988 = vsub.s32 0, %v4987
    %v4989 = vrot.slane %v4984, %v4988
    %v4990 = vlaneseq
    %v4991 = vshrl.u32 %v4990, 7
    %v4992 = vsub.s32 1, %v4991
    %v4993 = vrot.slane %v4984, %v4992
    %v4994 = vlaneseq
    %v4995 = vshrl.u32 %v4994, 7
    %v4996 = vsub.s32 2, %v4995
    %v4997 = vrot.slane %v4984, %v4996
    %v4998 = vlaneseq
    %v4999 = vshrl.u32 %v4998, 7
    %v5000 = vsub.s32 3, %v4999
    %v5001 = vrot.slane %v4984, %v5000
    %5006 = vmatprep.subr.mxu0 %v4980
    %5007 = vmatpush1.msra.mxu0 %v4979
    %5008 = vmatprep.subr.mxu0 %v4976
    %5009 = vmatpush1.msra.mxu0 %v4975
    %5010 = vmatprep.subr.mxu0 %v4972
    %5011 = vmatpush1.msra.mxu0 %v4971
    %5012 = vmatprep.subr.mxu0 %v4968
    %5013 = vmatpush1.msra.mxu0 %v4967
    %5014 = vmatprep.subr.mxu0 %v4964
    %5015 = vmatpush1.msra.mxu0 %v4963
    %5016 = vmatprep.subr.mxu0 %v4960
    %5017 = vmatpush1.msra.mxu0 %v4959
    %5018 = vmatprep.subr.mxu0 %v4956
    %5019 = vmatpush1.msra.mxu0 %v4955
    %5020 = vmatprep.subr.mxu0 %v4952
    %5021 = vmatpush1.msra.mxu0 %v4951
    %5022 = vmatprep.subr.mxu0 %v4948
    %5023 = vmatpush1.msra.mxu0 %v4947
    %5024 = vmatprep.subr.mxu0 %v4944
    %5025 = vmatpush1.msra.mxu0 %v4943
    %5026 = vmatprep.subr.mxu0 %v4940
    %5027 = vmatpush1.msra.mxu0 %v4939
    %5028 = vmatprep.subr.mxu0 %v4936
    %5029 = vmatpush1.msra.mxu0 %v4935
    %5030 = vmatprep.subr.mxu0 %v4932
    %5031 = vmatpush1.msra.mxu0 %v4931
    %5032 = vmatprep.subr.mxu0 %v4928
    %5033 = vmatpush1.msra.mxu0 %v4927
    %5034 = vmatprep.subr.mxu0 %v4924
    %5035 = vmatpush1.msra.mxu0 %v4923
    %5036 = vmatprep.subr.mxu0 %v4920
    %5037 = vmatpush1.msra.mxu0 %v4919
    %5038 = vmatprep.subr.mxu0 0.0
    %5039 = vmatpush2.msra.mxu0 0.0
    %5040 = vmatprep.subr.mxu0 0.0
    %5041 = vmatpush2.msra.mxu0 0.0
    %5042 = vmatprep.subr.mxu0 0.0
    %5043 = vmatpush2.msra.mxu0 0.0
    %5044 = vmatprep.subr.mxu0 0.0
    %5045 = vmatpush2.msra.mxu0 0.0
    %5046 = vmatprep.subr.mxu0 0.0
    %5047 = vmatpush2.msra.mxu0 0.0
    %5048 = vmatprep.subr.mxu0 0.0
    %5049 = vmatpush2.msra.mxu0 0.0
    %5050 = vmatprep.subr.mxu0 0.0
    %5051 = vmatpush2.msra.mxu0 0.0
    %5052 = vmatprep.subr.mxu0 0.0
    %5053 = vmatpush2.msra.mxu0 0.0
    %5054 = vmatprep.subr.mxu0 0.0
    %5055 = vmatpush2.msra.mxu0 0.0
    %5056 = vmatprep.subr.mxu0 0.0
    %5057 = vmatpush2.msra.mxu0 0.0
    %5058 = vmatprep.subr.mxu0 0.0
    %5059 = vmatpush2.msra.mxu0 0.0
    %5060 = vmatprep.subr.mxu0 0.0
    %5061 = vmatpush2.msra.mxu0 0.0
    %5062 = vmatprep.subr.mxu0 0.0
    %5063 = vmatpush2.msra.mxu0 0.0
    %5064 = vmatprep.subr.mxu0 0.0
    %5065 = vmatpush2.msra.mxu0 0.0
    %5066 = vmatprep.subr.mxu0 0.0
    %5067 = vmatpush2.msra.mxu0 0.0
    %5068 = vmatprep.subr.mxu0 0.0
    %5069 = vmatpush2.msra.mxu0 0.0
    %5070 = vmatprep.mubr.f32.mxu0 0.0
    %5071 = vmatmul.mubr.f32.gmra.mxu0 %v4916
    %v5072 = vpop.f32.mrf.mxu0
    %v5073 = vadd.f32 %v4989, %v5072
    %v5074 = vpop.f32.mrf.mxu0
    %v5075 = vadd.f32 %v4993, %v5074
    %5076 = vmatprep.mubr.f32.mxu0 0.0
    %5077 = vmatmul.mubr.f32.gmra.mxu0 %v4917
    %v5078 = vpop.f32.mrf.mxu0
    %v5079 = vadd.f32 %v4989, %v5078
    %v5080 = vpop.f32.mrf.mxu0
    %v5081 = vadd.f32 %v4993, %v5080
    %5082 = vdwg.mxu0
    %5083 = vmatprep.subr.mxu0 %v4982
    %5084 = vmatpush1.msra.mxu0 %v4981
    %5085 = vmatprep.subr.mxu0 %v4978
    %5086 = vmatpush1.msra.mxu0 %v4977
    %5087 = vmatprep.subr.mxu0 %v4974
    %5088 = vmatpush1.msra.mxu0 %v4973
    %5089 = vmatprep.subr.mxu0 %v4970
    %5090 = vmatpush1.msra.mxu0 %v4969
    %5091 = vmatprep.subr.mxu0 %v4966
    %5092 = vmatpush1.msra.mxu0 %v4965
    %5093 = vmatprep.subr.mxu0 %v4962
    %5094 = vmatpush1.msra.mxu0 %v4961
    %5095 = vmatprep.subr.mxu0 %v4958
    %5096 = vmatpush1.msra.mxu0 %v4957
    %5097 = vmatprep.subr.mxu0 %v4954
    %5098 = vmatpush1.msra.mxu0 %v4953
    %5099 = vmatprep.subr.mxu0 %v4950
    %5100 = vmatpush1.msra.mxu0 %v4949
    %5101 = vmatprep.subr.mxu0 %v4946
    %5102 = vmatpush1.msra.mxu0 %v4945
    %5103 = vmatprep.subr.mxu0 %v4942
    %5104 = vmatpush1.msra.mxu0 %v4941
    %5105 = vmatprep.subr.mxu0 %v4938
    %5106 = vmatpush1.msra.mxu0 %v4937
    %5107 = vmatprep.subr.mxu0 %v4934
    %5108 = vmatpush1.msra.mxu0 %v4933
    %5109 = vmatprep.subr.mxu0 %v4930
    %5110 = vmatpush1.msra.mxu0 %v4929
    %5111 = vmatprep.subr.mxu0 %v4926
    %5112 = vmatpush1.msra.mxu0 %v4925
    %5113 = vmatprep.subr.mxu0 %v4922
    %5114 = vmatpush1.msra.mxu0 %v4921
    %5115 = vmatprep.subr.mxu0 0.0
    %5116 = vmatpush2.msra.mxu0 0.0
    %5117 = vmatprep.subr.mxu0 0.0
    %5118 = vmatpush2.msra.mxu0 0.0
    %5119 = vmatprep.subr.mxu0 0.0
    %5120 = vmatpush2.msra.mxu0 0.0
    %5121 = vmatprep.subr.mxu0 0.0
    %5122 = vmatpush2.msra.mxu0 0.0
    %5123 = vmatprep.subr.mxu0 0.0
    %5124 = vmatpush2.msra.mxu0 0.0
    %5125 = vmatprep.subr.mxu0 0.0
    %5126 = vmatpush2.msra.mxu0 0.0
    %5127 = vmatprep.subr.mxu0 0.0
    %5128 = vmatpush2.msra.mxu0 0.0
    %5129 = vmatprep.subr.mxu0 0.0
    %5130 = vmatpush2.msra.mxu0 0.0
    %5131 = vmatprep.subr.mxu0 0.0
    %5132 = vmatpush2.msra.mxu0 0.0
    %5133 = vmatprep.subr.mxu0 0.0
    %5134 = vmatpush2.msra.mxu0 0.0
    %5135 = vmatprep.subr.mxu0 0.0
    %5136 = vmatpush2.msra.mxu0 0.0
    %5137 = vmatprep.subr.mxu0 0.0
    %5138 = vmatpush2.msra.mxu0 0.0
    %5139 = vmatprep.subr.mxu0 0.0
    %5140 = vmatpush2.msra.mxu0 0.0
    %5141 = vmatprep.subr.mxu0 0.0
    %5142 = vmatpush2.msra.mxu0 0.0
    %5143 = vmatprep.subr.mxu0 0.0
    %5144 = vmatpush2.msra.mxu0 0.0
    %5145 = vmatprep.subr.mxu0 0.0
    %5146 = vmatpush2.msra.mxu0 0.0
    %5147 = vmatprep.mubr.f32.mxu0 0.0
    %5148 = vmatmul.mubr.f32.gmra.mxu0 %v4916
    %v5149 = vpop.f32.mrf.mxu0
    %v5150 = vadd.f32 %v4997, %v5149
    %v5151 = vpop.f32.mrf.mxu0
    %v5152 = vadd.f32 %v5001, %v5151
    %5153 = vmatprep.mubr.f32.mxu0 0.0
    %5154 = vmatmul.mubr.f32.gmra.mxu0 %v4917
    %v5155 = vpop.f32.mrf.mxu0
    %v5156 = vadd.f32 %v4997, %v5155
    %v5157 = vpop.f32.mrf.mxu0
    %v5158 = vadd.f32 %v5001, %v5157
    %5159 = vdwg.mxu0
    %5160 = vst [vmem:[#allocation2] sm:$0xff] %v5073
    %5161 = vst [vmem:[#allocation2 + $0x8] sm:$0xff] %v5075
    %5162 = vst [vmem:[#allocation2 + $0x10] sm:$0xff] %v5150
    %5163 = vst [vmem:[#allocation2 + $0x18] sm:$0xff] %v5152
    %5164 = vst [vmem:[#allocation2 + $0x20] sm:$0xff] %v5079
    %5165 = vst [vmem:[#allocation2 + $0x28] sm:$0xff] %v5081
    %5166 = vst [vmem:[#allocation2 + $0x30] sm:$0xff] %v5156
    %5167 = vst [vmem:[#allocation2 + $0x38] sm:$0xff] %v5158
    %s5168 = scalar_lea.vmem %s3, 1024
    %v5169 = vld [vmem:[%s5168] sm:$0xff]
    %v5170 = vld [vmem:[%s5168 + $0x8] sm:$0xff]
    %v5171 = vld [vmem:[%s5168 + $0x10] sm:$0xff]
    %v5172 = vld [vmem:[%s5168 + $0x18] sm:$0xff]
    %v5173 = vld [vmem:[%s5168 + $0x20] sm:$0xff]
    %v5174 = vld [vmem:[%s5168 + $0x28] sm:$0xff]
    %v5175 = vld [vmem:[%s5168 + $0x30] sm:$0xff]
    %v5176 = vld [vmem:[%s5168 + $0x38] sm:$0xff]
    %v5177 = vld [vmem:[%s5168 + $0x40] sm:$0xff]
    %v5178 = vld [vmem:[%s5168 + $0x48] sm:$0xff]
    %v5179 = vld [vmem:[%s5168 + $0x50] sm:$0xff]
    %v5180 = vld [vmem:[%s5168 + $0x58] sm:$0xff]
    %v5181 = vld [vmem:[%s5168 + $0x60] sm:$0xff]
    %v5182 = vld [vmem:[%s5168 + $0x68] sm:$0xff]
    %v5183 = vld [vmem:[%s5168 + $0x70] sm:$0xff]
    %v5184 = vld [vmem:[%s5168 + $0x78] sm:$0xff]
    %v5185 = vld [vmem:[%s5168 + $0x80] sm:$0xff]
    %v5186 = vld [vmem:[%s5168 + $0x88] sm:$0xff]
    %v5187 = vld [vmem:[%s5168 + $0x90] sm:$0xff]
    %v5188 = vld [vmem:[%s5168 + $0x98] sm:$0xff]
    %v5189 = vld [vmem:[%s5168 + $0xa0] sm:$0xff]
    %v5190 = vld [vmem:[%s5168 + $0xa8] sm:$0xff]
    %v5191 = vld [vmem:[%s5168 + $0xb0] sm:$0xff]
    %v5192 = vld [vmem:[%s5168 + $0xb8] sm:$0xff]
    %v5193 = vld [vmem:[%s5168 + $0xc0] sm:$0xff]
    %v5194 = vld [vmem:[%s5168 + $0xc8] sm:$0xff]
    %v5195 = vld [vmem:[%s5168 + $0xd0] sm:$0xff]
    %v5196 = vld [vmem:[%s5168 + $0xd8] sm:$0xff]
    %v5197 = vld [vmem:[%s5168 + $0xe0] sm:$0xff]
    %v5198 = vld [vmem:[%s5168 + $0xe8] sm:$0xff]
    %v5199 = vld [vmem:[%s5168 + $0xf0] sm:$0xff]
    %v5200 = vld [vmem:[%s5168 + $0xf8] sm:$0xff]
    %v5201 = vld [vmem:[%s5168 + $0x100] sm:$0xff]
    %v5202 = vld [vmem:[%s5168 + $0x108] sm:$0xff]
    %v5203 = vld [vmem:[%s5168 + $0x110] sm:$0xff]
    %v5204 = vld [vmem:[%s5168 + $0x118] sm:$0xff]
    %v5205 = vld [vmem:[%s5168 + $0x120] sm:$0xff]
    %v5206 = vld [vmem:[%s5168 + $0x128] sm:$0xff]
    %v5207 = vld [vmem:[%s5168 + $0x130] sm:$0xff]
    %v5208 = vld [vmem:[%s5168 + $0x138] sm:$0xff]
    %v5209 = vld [vmem:[%s5168 + $0x140] sm:$0xff]
    %v5210 = vld [vmem:[%s5168 + $0x148] sm:$0xff]
    %v5211 = vld [vmem:[%s5168 + $0x150] sm:$0xff]
    %v5212 = vld [vmem:[%s5168 + $0x158] sm:$0xff]
    %v5213 = vld [vmem:[%s5168 + $0x160] sm:$0xff]
    %v5214 = vld [vmem:[%s5168 + $0x168] sm:$0xff]
    %v5215 = vld [vmem:[%s5168 + $0x170] sm:$0xff]
    %v5216 = vld [vmem:[%s5168 + $0x178] sm:$0xff]
    %v5217 = vld [vmem:[%s5168 + $0x180] sm:$0xff]
    %v5218 = vld [vmem:[%s5168 + $0x188] sm:$0xff]
    %v5219 = vld [vmem:[%s5168 + $0x190] sm:$0xff]
    %v5220 = vld [vmem:[%s5168 + $0x198] sm:$0xff]
    %v5221 = vld [vmem:[%s5168 + $0x1a0] sm:$0xff]
    %v5222 = vld [vmem:[%s5168 + $0x1a8] sm:$0xff]
    %v5223 = vld [vmem:[%s5168 + $0x1b0] sm:$0xff]
    %v5224 = vld [vmem:[%s5168 + $0x1b8] sm:$0xff]
    %v5225 = vld [vmem:[%s5168 + $0x1c0] sm:$0xff]
    %v5226 = vld [vmem:[%s5168 + $0x1c8] sm:$0xff]
    %v5227 = vld [vmem:[%s5168 + $0x1d0] sm:$0xff]
    %v5228 = vld [vmem:[%s5168 + $0x1d8] sm:$0xff]
    %v5229 = vld [vmem:[%s5168 + $0x1e0] sm:$0xff]
    %v5230 = vld [vmem:[%s5168 + $0x1e8] sm:$0xff]
    %v5231 = vld [vmem:[%s5168 + $0x1f0] sm:$0xff]
    %v5232 = vld [vmem:[%s5168 + $0x1f8] sm:$0xff]
    %v5233 = vld [vmem:[#allocation2] ss:$8 sm:$0xf]
    %v5234 = vld [vmem:[%s366] ss:$8 sm:$0xf]
    %5235 = vmatprep.subr.mxu0 %v5230
    %5236 = vmatpush1.msra.mxu0 %v5229
    %5237 = vmatprep.subr.mxu0 %v5226
    %5238 = vmatpush1.msra.mxu0 %v5225
    %5239 = vmatprep.subr.mxu0 %v5222
    %5240 = vmatpush1.msra.mxu0 %v5221
    %5241 = vmatprep.subr.mxu0 %v5218
    %5242 = vmatpush1.msra.mxu0 %v5217
    %5243 = vmatprep.subr.mxu0 %v5214
    %5244 = vmatpush1.msra.mxu0 %v5213
    %5245 = vmatprep.subr.mxu0 %v5210
    %5246 = vmatpush1.msra.mxu0 %v5209
    %5247 = vmatprep.subr.mxu0 %v5206
    %5248 = vmatpush1.msra.mxu0 %v5205
    %5249 = vmatprep.subr.mxu0 %v5202
    %5250 = vmatpush1.msra.mxu0 %v5201
    %5251 = vmatprep.subr.mxu0 %v5198
    %5252 = vmatpush1.msra.mxu0 %v5197
    %5253 = vmatprep.subr.mxu0 %v5194
    %5254 = vmatpush1.msra.mxu0 %v5193
    %5255 = vmatprep.subr.mxu0 %v5190
    %5256 = vmatpush1.msra.mxu0 %v5189
    %5257 = vmatprep.subr.mxu0 %v5186
    %5258 = vmatpush1.msra.mxu0 %v5185
    %5259 = vmatprep.subr.mxu0 %v5182
    %5260 = vmatpush1.msra.mxu0 %v5181
    %5261 = vmatprep.subr.mxu0 %v5178
    %5262 = vmatpush1.msra.mxu0 %v5177
    %5263 = vmatprep.subr.mxu0 %v5174
    %5264 = vmatpush1.msra.mxu0 %v5173
    %5265 = vmatprep.subr.mxu0 %v5170
    %5266 = vmatpush1.msra.mxu0 %v5169
    %5267 = vmatprep.subr.mxu0 0.0
    %5268 = vmatpush2.msra.mxu0 0.0
    %5269 = vmatprep.subr.mxu0 0.0
    %5270 = vmatpush2.msra.mxu0 0.0
    %5271 = vmatprep.subr.mxu0 0.0
    %5272 = vmatpush2.msra.mxu0 0.0
    %5273 = vmatprep.subr.mxu0 0.0
    %5274 = vmatpush2.msra.mxu0 0.0
    %5275 = vmatprep.subr.mxu0 0.0
    %5276 = vmatpush2.msra.mxu0 0.0
    %5277 = vmatprep.subr.mxu0 0.0
    %5278 = vmatpush2.msra.mxu0 0.0
    %5279 = vmatprep.subr.mxu0 0.0
    %5280 = vmatpush2.msra.mxu0 0.0
    %5281 = vmatprep.subr.mxu0 0.0
    %5282 = vmatpush2.msra.mxu0 0.0
    %5283 = vmatprep.subr.mxu0 0.0
    %5284 = vmatpush2.msra.mxu0 0.0
    %5285 = vmatprep.subr.mxu0 0.0
    %5286 = vmatpush2.msra.mxu0 0.0
    %5287 = vmatprep.subr.mxu0 0.0
    %5288 = vmatpush2.msra.mxu0 0.0
    %5289 = vmatprep.subr.mxu0 0.0
    %5290 = vmatpush2.msra.mxu0 0.0
    %5291 = vmatprep.subr.mxu0 0.0
    %5292 = vmatpush2.msra.mxu0 0.0
    %5293 = vmatprep.subr.mxu0 0.0
    %5294 = vmatpush2.msra.mxu0 0.0
    %5295 = vmatprep.subr.mxu0 0.0
    %5296 = vmatpush2.msra.mxu0 0.0
    %5297 = vmatprep.subr.mxu0 0.0
    %5298 = vmatpush2.msra.mxu0 0.0
    %5299 = vmatprep.mubr.f32.mxu0 0.0
    %5300 = vmatmul.mubr.f32.gmra.mxu0 0.0
    %v5301 = vpop.f32.mrf.mxu0
    %v5302 = vadd.f32 0.0, %v5301
    %v5303 = vpop.f32.mrf.mxu0
    %v5304 = vadd.f32 0.0, %v5303
    %5305 = vdwg.mxu0
    %5306 = vmatprep.subr.mxu0 %v5232
    %5307 = vmatpush1.msra.mxu0 %v5231
    %5308 = vmatprep.subr.mxu0 %v5228
    %5309 = vmatpush1.msra.mxu0 %v5227
    %5310 = vmatprep.subr.mxu0 %v5224
    %5311 = vmatpush1.msra.mxu0 %v5223
    %5312 = vmatprep.subr.mxu0 %v5220
    %5313 = vmatpush1.msra.mxu0 %v5219
    %5314 = vmatprep.subr.mxu0 %v5216
    %5315 = vmatpush1.msra.mxu0 %v5215
    %5316 = vmatprep.subr.mxu0 %v5212
    %5317 = vmatpush1.msra.mxu0 %v5211
    %5318 = vmatprep.subr.mxu0 %v5208
    %5319 = vmatpush1.msra.mxu0 %v5207
    %5320 = vmatprep.subr.mxu0 %v5204
    %5321 = vmatpush1.msra.mxu0 %v5203
    %5322 = vmatprep.subr.mxu0 %v5200
    %5323 = vmatpush1.msra.mxu0 %v5199
    %5324 = vmatprep.subr.mxu0 %v5196
    %5325 = vmatpush1.msra.mxu0 %v5195
    %5326 = vmatprep.subr.mxu0 %v5192
    %5327 = vmatpush1.msra.mxu0 %v5191
    %5328 = vmatprep.subr.mxu0 %v5188
    %5329 = vmatpush1.msra.mxu0 %v5187
    %5330 = vmatprep.subr.mxu0 %v5184
    %5331 = vmatpush1.msra.mxu0 %v5183
    %5332 = vmatprep.subr.mxu0 %v5180
    %5333 = vmatpush1.msra.mxu0 %v5179
    %5334 = vmatprep.subr.mxu0 %v5176
    %5335 = vmatpush1.msra.mxu0 %v5175
    %5336 = vmatprep.subr.mxu0 %v5172
    %5337 = vmatpush1.msra.mxu0 %v5171
    %5338 = vmatprep.subr.mxu0 0.0
    %5339 = vmatpush2.msra.mxu0 0.0
    %5340 = vmatprep.subr.mxu0 0.0
    %5341 = vmatpush2.msra.mxu0 0.0
    %5342 = vmatprep.subr.mxu0 0.0
    %5343 = vmatpush2.msra.mxu0 0.0
    %5344 = vmatprep.subr.mxu0 0.0
    %5345 = vmatpush2.msra.mxu0 0.0
    %5346 = vmatprep.subr.mxu0 0.0
    %5347 = vmatpush2.msra.mxu0 0.0
    %5348 = vmatprep.subr.mxu0 0.0
    %5349 = vmatpush2.msra.mxu0 0.0
    %5350 = vmatprep.subr.mxu0 0.0
    %5351 = vmatpush2.msra.mxu0 0.0
    %5352 = vmatprep.subr.mxu0 0.0
    %5353 = vmatpush2.msra.mxu0 0.0
    %5354 = vmatprep.subr.mxu0 0.0
    %5355 = vmatpush2.msra.mxu0 0.0
    %5356 = vmatprep.subr.mxu0 0.0
    %5357 = vmatpush2.msra.mxu0 0.0
    %5358 = vmatprep.subr.mxu0 0.0
    %5359 = vmatpush2.msra.mxu0 0.0
    %5360 = vmatprep.subr.mxu0 0.0
    %5361 = vmatpush2.msra.mxu0 0.0
    %5362 = vmatprep.subr.mxu0 0.0
    %5363 = vmatpush2.msra.mxu0 0.0
    %5364 = vmatprep.subr.mxu0 0.0
    %5365 = vmatpush2.msra.mxu0 0.0
    %5366 = vmatprep.subr.mxu0 0.0
    %5367 = vmatpush2.msra.mxu0 0.0
    %5368 = vmatprep.subr.mxu0 0.0
    %5369 = vmatpush2.msra.mxu0 0.0
    %5370 = vmatprep.mubr.f32.mxu0 0.0
    %5371 = vmatmul.mubr.f32.gmra.mxu0 0.0
    %v5372 = vpop.f32.mrf.mxu0
    %v5373 = vadd.f32 0.0, %v5372
    %v5374 = vpop.f32.mrf.mxu0
    %v5375 = vadd.f32 0.0, %v5374
    %5376 = vdwg.mxu0
    %v5381 = vcombine.low %v5302, %v5304
    %v5382 = vcombine.low %v5373, %v5375
    %v5384 = vunpack.c.l.s4 1966171168
    %v5385 = vunpack.c.0.s8 %v5384
    %v5386 = vlaneseq
    %v5387 = vshrl.u32 %v5386, 7
    %v5388 = vsub.s32 %v5385, %v5387
    %v5389 = vrot.slane %v5381, %v5388
    %v5391 = vunpack.c.l.s4 1966171168
    %v5392 = vunpack.c.0.s8 %v5391
    %v5393 = vlaneseq
    %v5394 = vshrl.u32 %v5393, 7
    %v5395 = vsub.s32 %v5392, %v5394
    %v5396 = vrot.slane %v5382, %v5395
    %v5397 = vcombine.low %v5389, %v5396
    %v5398 = vcombine.high %v5389, %v5396
    %v5400 = vunpack.c.l.s4 1966171168
    %v5401 = vunpack.c.0.s8 %v5400
    %v5402 = vlaneseq
    %v5403 = vshrl.u32 %v5402, 7
    %v5404 = vsub.s32 %v5401, %v5403
    %v5405 = vrot.slane %v5397, %v5404
    %v5407 = vunpack.c.l.s4 1966171168
    %v5408 = vunpack.c.0.s8 %v5407
    %v5409 = vlaneseq
    %v5410 = vshrl.u32 %v5409, 7
    %v5411 = vsub.s32 %v5408, %v5410
    %v5412 = vrot.slane %v5398, %v5411
    %v5415 = vadd.f32 %v5233, %v5405
    %v5416 = vadd.f32 %v5234, %v5412
    %v5417 = vxor.u32 %v5415, 2147483648
    %v5418 = vxor.u32 %v5416, 2147483648
    %v5419 = vmul.f32 %v5417, 1.442695
    %v5420 = vpow.pop %v5419
    %v5421 = vmul.f32 %v5418, 1.442695
    %v5422 = vpow.pop %v5421
    %v5423 = vadd.f32 %v5420, 1.0
    %v5424 = vadd.f32 %v5422, 1.0
    %v5425 = vrcp.pop %v5423
    %v5426 = vmul.f32 1.0, %v5425
    %v5427 = vrcp.pop %v5424
    %v5428 = vmul.f32 1.0, %v5427
    %v5431 = vrot.slane %v5415, 1
    %v5432 = vrot.slane %v5416, 1
    %v5435 = vxor.u32 %v5431, 2147483648
    %v5436 = vxor.u32 %v5432, 2147483648
    %v5437 = vmul.f32 %v5435, 1.442695
    %v5438 = vpow.pop %v5437
    %v5439 = vmul.f32 %v5436, 1.442695
    %v5440 = vpow.pop %v5439
    %v5441 = vadd.f32 %v5438, 1.0
    %v5442 = vadd.f32 %v5440, 1.0
    %v5443 = vrcp.pop %v5441
    %v5444 = vmul.f32 1.0, %v5443
    %v5445 = vrcp.pop %v5442
    %v5446 = vmul.f32 1.0, %v5445
    %v5447 = vrot.slane %v5415, 2
    %v5448 = vrot.slane %v5416, 2
    %v5451 = vtanh.pop %v5447
    %v5452 = vtanh.pop %v5448
    %v5453 = vrot.slane %v5415, 3
    %v5454 = vrot.slane %v5416, 3
    %v5457 = vxor.u32 %v5453, 2147483648
    %v5458 = vxor.u32 %v5454, 2147483648
    %v5459 = vmul.f32 %v5457, 1.442695
    %v5460 = vpow.pop %v5459
    %v5461 = vmul.f32 %v5458, 1.442695
    %v5462 = vpow.pop %v5461
    %v5463 = vadd.f32 %v5460, 1.0
    %v5464 = vadd.f32 %v5462, 1.0
    %v5465 = vrcp.pop %v5463
    %v5466 = vmul.f32 1.0, %v5465
    %v5467 = vrcp.pop %v5464
    %v5468 = vmul.f32 1.0, %v5467
    %v5469 = vmul.f32 %v5444, 0.0
    %v5470 = vmul.f32 %v5446, 0.0
    %v5471 = vmul.f32 %v5426, %v5451
    %v5472 = vmul.f32 %v5428, %v5452
    %v5473 = vadd.f32 %v5469, %v5471
    %v5474 = vadd.f32 %v5470, %v5472
    %v5475 = vtanh.pop %v5473
    %v5476 = vtanh.pop %v5474
    %v5477 = vmul.f32 %v5466, %v5475
    %v5478 = vmul.f32 %v5468, %v5476
    %v5479 = vld [vmem:[%s614] ss:$8 sm:$0xf]
    %v5480 = vld [vmem:[%s616] ss:$8 sm:$0xf]
    %v5483 = vcombine.low %v5477, %v5478
    %v5485 = vunpack.c.l.s4 1966171168
    %v5486 = vunpack.c.0.s8 %v5485
    %v5487 = vlaneseq
    %v5488 = vshrl.u32 %v5487, 7
    %v5489 = vsub.s32 %v5486, %v5488
    %v5490 = vrot.slane %v5483, %v5489
    %v5492 = vunpack.c.l.s4 1966171168
    %v5493 = vunpack.c.0.s8 %v5492
    %v5494 = vlaneseq
    %v5495 = vshrl.u32 %v5494, 7
    %v5496 = vsub.s32 %v5493, %v5495
    %v5497 = vrot.slane %v5490, %v5496
    %5499 = vmatprep.subr.mxu0 %v5230
    %5500 = vmatpush1.msra.mxu0 %v5229
    %5501 = vmatprep.subr.mxu0 %v5226
    %5502 = vmatpush1.msra.mxu0 %v5225
    %5503 = vmatprep.subr.mxu0 %v5222
    %5504 = vmatpush1.msra.mxu0 %v5221
    %5505 = vmatprep.subr.mxu0 %v5218
    %5506 = vmatpush1.msra.mxu0 %v5217
    %5507 = vmatprep.subr.mxu0 %v5214
    %5508 = vmatpush1.msra.mxu0 %v5213
    %5509 = vmatprep.subr.mxu0 %v5210
    %5510 = vmatpush1.msra.mxu0 %v5209
    %5511 = vmatprep.subr.mxu0 %v5206
    %5512 = vmatpush1.msra.mxu0 %v5205
    %5513 = vmatprep.subr.mxu0 %v5202
    %5514 = vmatpush1.msra.mxu0 %v5201
    %5515 = vmatprep.subr.mxu0 %v5198
    %5516 = vmatpush1.msra.mxu0 %v5197
    %5517 = vmatprep.subr.mxu0 %v5194
    %5518 = vmatpush1.msra.mxu0 %v5193
    %5519 = vmatprep.subr.mxu0 %v5190
    %5520 = vmatpush1.msra.mxu0 %v5189
    %5521 = vmatprep.subr.mxu0 %v5186
    %5522 = vmatpush1.msra.mxu0 %v5185
    %5523 = vmatprep.subr.mxu0 %v5182
    %5524 = vmatpush1.msra.mxu0 %v5181
    %5525 = vmatprep.subr.mxu0 %v5178
    %5526 = vmatpush1.msra.mxu0 %v5177
    %5527 = vmatprep.subr.mxu0 %v5174
    %5528 = vmatpush1.msra.mxu0 %v5173
    %5529 = vmatprep.subr.mxu0 %v5170
    %5530 = vmatpush1.msra.mxu0 %v5169
    %5531 = vmatprep.subr.mxu0 0.0
    %5532 = vmatpush2.msra.mxu0 0.0
    %5533 = vmatprep.subr.mxu0 0.0
    %5534 = vmatpush2.msra.mxu0 0.0
    %5535 = vmatprep.subr.mxu0 0.0
    %5536 = vmatpush2.msra.mxu0 0.0
    %5537 = vmatprep.subr.mxu0 0.0
    %5538 = vmatpush2.msra.mxu0 0.0
    %5539 = vmatprep.subr.mxu0 0.0
    %5540 = vmatpush2.msra.mxu0 0.0
    %5541 = vmatprep.subr.mxu0 0.0
    %5542 = vmatpush2.msra.mxu0 0.0
    %5543 = vmatprep.subr.mxu0 0.0
    %5544 = vmatpush2.msra.mxu0 0.0
    %5545 = vmatprep.subr.mxu0 0.0
    %5546 = vmatpush2.msra.mxu0 0.0
    %5547 = vmatprep.subr.mxu0 0.0
    %5548 = vmatpush2.msra.mxu0 0.0
    %5549 = vmatprep.subr.mxu0 0.0
    %5550 = vmatpush2.msra.mxu0 0.0
    %5551 = vmatprep.subr.mxu0 0.0
    %5552 = vmatpush2.msra.mxu0 0.0
    %5553 = vmatprep.subr.mxu0 0.0
    %5554 = vmatpush2.msra.mxu0 0.0
    %5555 = vmatprep.subr.mxu0 0.0
    %5556 = vmatpush2.msra.mxu0 0.0
    %5557 = vmatprep.subr.mxu0 0.0
    %5558 = vmatpush2.msra.mxu0 0.0
    %5559 = vmatprep.subr.mxu0 0.0
    %5560 = vmatpush2.msra.mxu0 0.0
    %5561 = vmatprep.subr.mxu0 0.0
    %5562 = vmatpush2.msra.mxu0 0.0
    %5563 = vmatprep.mubr.f32.mxu0 0.0
    %5564 = vmatmul.mubr.f32.gmra.mxu0 %v5497
    %v5565 = vpop.f32.mrf.mxu0
    %v5566 = vadd.f32 0.0, %v5565
    %v5567 = vpop.f32.mrf.mxu0
    %v5568 = vadd.f32 0.0, %v5567
    %5569 = vdwg.mxu0
    %5570 = vmatprep.subr.mxu0 %v5232
    %5571 = vmatpush1.msra.mxu0 %v5231
    %5572 = vmatprep.subr.mxu0 %v5228
    %5573 = vmatpush1.msra.mxu0 %v5227
    %5574 = vmatprep.subr.mxu0 %v5224
    %5575 = vmatpush1.msra.mxu0 %v5223
    %5576 = vmatprep.subr.mxu0 %v5220
    %5577 = vmatpush1.msra.mxu0 %v5219
    %5578 = vmatprep.subr.mxu0 %v5216
    %5579 = vmatpush1.msra.mxu0 %v5215
    %5580 = vmatprep.subr.mxu0 %v5212
    %5581 = vmatpush1.msra.mxu0 %v5211
    %5582 = vmatprep.subr.mxu0 %v5208
    %5583 = vmatpush1.msra.mxu0 %v5207
    %5584 = vmatprep.subr.mxu0 %v5204
    %5585 = vmatpush1.msra.mxu0 %v5203
    %5586 = vmatprep.subr.mxu0 %v5200
    %5587 = vmatpush1.msra.mxu0 %v5199
    %5588 = vmatprep.subr.mxu0 %v5196
    %5589 = vmatpush1.msra.mxu0 %v5195
    %5590 = vmatprep.subr.mxu0 %v5192
    %5591 = vmatpush1.msra.mxu0 %v5191
    %5592 = vmatprep.subr.mxu0 %v5188
    %5593 = vmatpush1.msra.mxu0 %v5187
    %5594 = vmatprep.subr.mxu0 %v5184
    %5595 = vmatpush1.msra.mxu0 %v5183
    %5596 = vmatprep.subr.mxu0 %v5180
    %5597 = vmatpush1.msra.mxu0 %v5179
    %5598 = vmatprep.subr.mxu0 %v5176
    %5599 = vmatpush1.msra.mxu0 %v5175
    %5600 = vmatprep.subr.mxu0 %v5172
    %5601 = vmatpush1.msra.mxu0 %v5171
    %5602 = vmatprep.subr.mxu0 0.0
    %5603 = vmatpush2.msra.mxu0 0.0
    %5604 = vmatprep.subr.mxu0 0.0
    %5605 = vmatpush2.msra.mxu0 0.0
    %5606 = vmatprep.subr.mxu0 0.0
    %5607 = vmatpush2.msra.mxu0 0.0
    %5608 = vmatprep.subr.mxu0 0.0
    %5609 = vmatpush2.msra.mxu0 0.0
    %5610 = vmatprep.subr.mxu0 0.0
    %5611 = vmatpush2.msra.mxu0 0.0
    %5612 = vmatprep.subr.mxu0 0.0
    %5613 = vmatpush2.msra.mxu0 0.0
    %5614 = vmatprep.subr.mxu0 0.0
    %5615 = vmatpush2.msra.mxu0 0.0
    %5616 = vmatprep.subr.mxu0 0.0
    %5617 = vmatpush2.msra.mxu0 0.0
    %5618 = vmatprep.subr.mxu0 0.0
    %5619 = vmatpush2.msra.mxu0 0.0
    %5620 = vmatprep.subr.mxu0 0.0
    %5621 = vmatpush2.msra.mxu0 0.0
    %5622 = vmatprep.subr.mxu0 0.0
    %5623 = vmatpush2.msra.mxu0 0.0
    %5624 = vmatprep.subr.mxu0 0.0
    %5625 = vmatpush2.msra.mxu0 0.0
    %5626 = vmatprep.subr.mxu0 0.0
    %5627 = vmatpush2.msra.mxu0 0.0
    %5628 = vmatprep.subr.mxu0 0.0
    %5629 = vmatpush2.msra.mxu0 0.0
    %5630 = vmatprep.subr.mxu0 0.0
    %5631 = vmatpush2.msra.mxu0 0.0
    %5632 = vmatprep.subr.mxu0 0.0
    %5633 = vmatpush2.msra.mxu0 0.0
    %5634 = vmatprep.mubr.f32.mxu0 0.0
    %5635 = vmatmul.mubr.f32.gmra.mxu0 %v5497
    %v5636 = vpop.f32.mrf.mxu0
    %v5637 = vadd.f32 0.0, %v5636
    %v5638 = vpop.f32.mrf.mxu0
    %v5639 = vadd.f32 0.0, %v5638
    %5640 = vdwg.mxu0
    %v5645 = vcombine.low %v5566, %v5568
    %v5646 = vcombine.low %v5637, %v5639
    %v5648 = vunpack.c.l.s4 1966171168
    %v5649 = vunpack.c.0.s8 %v5648
    %v5650 = vlaneseq
    %v5651 = vshrl.u32 %v5650, 7
    %v5652 = vsub.s32 %v5649, %v5651
    %v5653 = vrot.slane %v5645, %v5652
    %v5655 = vunpack.c.l.s4 1966171168
    %v5656 = vunpack.c.0.s8 %v5655
    %v5657 = vlaneseq
    %v5658 = vshrl.u32 %v5657, 7
    %v5659 = vsub.s32 %v5656, %v5658
    %v5660 = vrot.slane %v5646, %v5659
    %v5661 = vcombine.low %v5653, %v5660
    %v5662 = vcombine.high %v5653, %v5660
    %v5664 = vunpack.c.l.s4 1966171168
    %v5665 = vunpack.c.0.s8 %v5664
    %v5666 = vlaneseq
    %v5667 = vshrl.u32 %v5666, 7
    %v5668 = vsub.s32 %v5665, %v5667
    %v5669 = vrot.slane %v5661, %v5668
    %v5671 = vunpack.c.l.s4 1966171168
    %v5672 = vunpack.c.0.s8 %v5671
    %v5673 = vlaneseq
    %v5674 = vshrl.u32 %v5673, 7
    %v5675 = vsub.s32 %v5672, %v5674
    %v5676 = vrot.slane %v5662, %v5675
    %v5679 = vadd.f32 %v5479, %v5669
    %v5680 = vadd.f32 %v5480, %v5676
    %v5681 = vxor.u32 %v5679, 2147483648
    %v5682 = vxor.u32 %v5680, 2147483648
    %v5683 = vmul.f32 %v5681, 1.442695
    %v5684 = vpow.pop %v5683
    %v5685 = vmul.f32 %v5682, 1.442695
    %v5686 = vpow.pop %v5685
    %v5687 = vadd.f32 %v5684, 1.0
    %v5688 = vadd.f32 %v5686, 1.0
    %v5689 = vrcp.pop %v5687
    %v5690 = vmul.f32 1.0, %v5689
    %v5691 = vrcp.pop %v5688
    %v5692 = vmul.f32 1.0, %v5691
    %v5695 = vrot.slane %v5679, 1
    %v5696 = vrot.slane %v5680, 1
    %v5699 = vxor.u32 %v5695, 2147483648
    %v5700 = vxor.u32 %v5696, 2147483648
    %v5701 = vmul.f32 %v5699, 1.442695
    %v5702 = vpow.pop %v5701
    %v5703 = vmul.f32 %v5700, 1.442695
    %v5704 = vpow.pop %v5703
    %v5705 = vadd.f32 %v5702, 1.0
    %v5706 = vadd.f32 %v5704, 1.0
    %v5707 = vrcp.pop %v5705
    %v5708 = vmul.f32 1.0, %v5707
    %v5709 = vrcp.pop %v5706
    %v5710 = vmul.f32 1.0, %v5709
    %v5711 = vrot.slane %v5679, 2
    %v5712 = vrot.slane %v5680, 2
    %v5715 = vtanh.pop %v5711
    %v5716 = vtanh.pop %v5712
    %v5717 = vrot.slane %v5679, 3
    %v5718 = vrot.slane %v5680, 3
    %v5721 = vxor.u32 %v5717, 2147483648
    %v5722 = vxor.u32 %v5718, 2147483648
    %v5723 = vmul.f32 %v5721, 1.442695
    %v5724 = vpow.pop %v5723
    %v5725 = vmul.f32 %v5722, 1.442695
    %v5726 = vpow.pop %v5725
    %v5727 = vadd.f32 %v5724, 1.0
    %v5728 = vadd.f32 %v5726, 1.0
    %v5729 = vrcp.pop %v5727
    %v5730 = vmul.f32 1.0, %v5729
    %v5731 = vrcp.pop %v5728
    %v5732 = vmul.f32 1.0, %v5731
    %v5733 = vmul.f32 %v5708, %v5473
    %v5734 = vmul.f32 %v5710, %v5474
    %v5735 = vmul.f32 %v5690, %v5715
    %v5736 = vmul.f32 %v5692, %v5716
    %v5737 = vadd.f32 %v5733, %v5735
    %v5738 = vadd.f32 %v5734, %v5736
    %v5739 = vtanh.pop %v5737
    %v5740 = vtanh.pop %v5738
    %v5741 = vmul.f32 %v5730, %v5739
    %v5742 = vmul.f32 %v5732, %v5740
    %v5743 = vld [vmem:[%s882] ss:$8 sm:$0xf]
    %v5744 = vld [vmem:[%s884] ss:$8 sm:$0xf]
    %v5747 = vcombine.low %v5741, %v5742
    %v5749 = vunpack.c.l.s4 1966171168
    %v5750 = vunpack.c.0.s8 %v5749
    %v5751 = vlaneseq
    %v5752 = vshrl.u32 %v5751, 7
    %v5753 = vsub.s32 %v5750, %v5752
    %v5754 = vrot.slane %v5747, %v5753
    %v5756 = vunpack.c.l.s4 1966171168
    %v5757 = vunpack.c.0.s8 %v5756
    %v5758 = vlaneseq
    %v5759 = vshrl.u32 %v5758, 7
    %v5760 = vsub.s32 %v5757, %v5759
    %v5761 = vrot.slane %v5754, %v5760
    %5763 = vmatprep.subr.mxu0 %v5230
    %5764 = vmatpush1.msra.mxu0 %v5229
    %5765 = vmatprep.subr.mxu0 %v5226
    %5766 = vmatpush1.msra.mxu0 %v5225
    %5767 = vmatprep.subr.mxu0 %v5222
    %5768 = vmatpush1.msra.mxu0 %v5221
    %5769 = vmatprep.subr.mxu0 %v5218
    %5770 = vmatpush1.msra.mxu0 %v5217
    %5771 = vmatprep.subr.mxu0 %v5214
    %5772 = vmatpush1.msra.mxu0 %v5213
    %5773 = vmatprep.subr.mxu0 %v5210
    %5774 = vmatpush1.msra.mxu0 %v5209
    %5775 = vmatprep.subr.mxu0 %v5206
    %5776 = vmatpush1.msra.mxu0 %v5205
    %5777 = vmatprep.subr.mxu0 %v5202
    %5778 = vmatpush1.msra.mxu0 %v5201
    %5779 = vmatprep.subr.mxu0 %v5198
    %5780 = vmatpush1.msra.mxu0 %v5197
    %5781 = vmatprep.subr.mxu0 %v5194
    %5782 = vmatpush1.msra.mxu0 %v5193
    %5783 = vmatprep.subr.mxu0 %v5190
    %5784 = vmatpush1.msra.mxu0 %v5189
    %5785 = vmatprep.subr.mxu0 %v5186
    %5786 = vmatpush1.msra.mxu0 %v5185
    %5787 = vmatprep.subr.mxu0 %v5182
    %5788 = vmatpush1.msra.mxu0 %v5181
    %5789 = vmatprep.subr.mxu0 %v5178
    %5790 = vmatpush1.msra.mxu0 %v5177
    %5791 = vmatprep.subr.mxu0 %v5174
    %5792 = vmatpush1.msra.mxu0 %v5173
    %5793 = vmatprep.subr.mxu0 %v5170
    %5794 = vmatpush1.msra.mxu0 %v5169
    %5795 = vmatprep.subr.mxu0 0.0
    %5796 = vmatpush2.msra.mxu0 0.0
    %5797 = vmatprep.subr.mxu0 0.0
    %5798 = vmatpush2.msra.mxu0 0.0
    %5799 = vmatprep.subr.mxu0 0.0
    %5800 = vmatpush2.msra.mxu0 0.0
    %5801 = vmatprep.subr.mxu0 0.0
    %5802 = vmatpush2.msra.mxu0 0.0
    %5803 = vmatprep.subr.mxu0 0.0
    %5804 = vmatpush2.msra.mxu0 0.0
    %5805 = vmatprep.subr.mxu0 0.0
    %5806 = vmatpush2.msra.mxu0 0.0
    %5807 = vmatprep.subr.mxu0 0.0
    %5808 = vmatpush2.msra.mxu0 0.0
    %5809 = vmatprep.subr.mxu0 0.0
    %5810 = vmatpush2.msra.mxu0 0.0
    %5811 = vmatprep.subr.mxu0 0.0
    %5812 = vmatpush2.msra.mxu0 0.0
    %5813 = vmatprep.subr.mxu0 0.0
    %5814 = vmatpush2.msra.mxu0 0.0
    %5815 = vmatprep.subr.mxu0 0.0
    %5816 = vmatpush2.msra.mxu0 0.0
    %5817 = vmatprep.subr.mxu0 0.0
    %5818 = vmatpush2.msra.mxu0 0.0
    %5819 = vmatprep.subr.mxu0 0.0
    %5820 = vmatpush2.msra.mxu0 0.0
    %5821 = vmatprep.subr.mxu0 0.0
    %5822 = vmatpush2.msra.mxu0 0.0
    %5823 = vmatprep.subr.mxu0 0.0
    %5824 = vmatpush2.msra.mxu0 0.0
    %5825 = vmatprep.subr.mxu0 0.0
    %5826 = vmatpush2.msra.mxu0 0.0
    %5827 = vmatprep.mubr.f32.mxu0 0.0
    %5828 = vmatmul.mubr.f32.gmra.mxu0 %v5761
    %v5829 = vpop.f32.mrf.mxu0
    %v5830 = vadd.f32 0.0, %v5829
    %v5831 = vpop.f32.mrf.mxu0
    %v5832 = vadd.f32 0.0, %v5831
    %5833 = vdwg.mxu0
    %5834 = vmatprep.subr.mxu0 %v5232
    %5835 = vmatpush1.msra.mxu0 %v5231
    %5836 = vmatprep.subr.mxu0 %v5228
    %5837 = vmatpush1.msra.mxu0 %v5227
    %5838 = vmatprep.subr.mxu0 %v5224
    %5839 = vmatpush1.msra.mxu0 %v5223
    %5840 = vmatprep.subr.mxu0 %v5220
    %5841 = vmatpush1.msra.mxu0 %v5219
    %5842 = vmatprep.subr.mxu0 %v5216
    %5843 = vmatpush1.msra.mxu0 %v5215
    %5844 = vmatprep.subr.mxu0 %v5212
    %5845 = vmatpush1.msra.mxu0 %v5211
    %5846 = vmatprep.subr.mxu0 %v5208
    %5847 = vmatpush1.msra.mxu0 %v5207
    %5848 = vmatprep.subr.mxu0 %v5204
    %5849 = vmatpush1.msra.mxu0 %v5203
    %5850 = vmatprep.subr.mxu0 %v5200
    %5851 = vmatpush1.msra.mxu0 %v5199
    %5852 = vmatprep.subr.mxu0 %v5196
    %5853 = vmatpush1.msra.mxu0 %v5195
    %5854 = vmatprep.subr.mxu0 %v5192
    %5855 = vmatpush1.msra.mxu0 %v5191
    %5856 = vmatprep.subr.mxu0 %v5188
    %5857 = vmatpush1.msra.mxu0 %v5187
    %5858 = vmatprep.subr.mxu0 %v5184
    %5859 = vmatpush1.msra.mxu0 %v5183
    %5860 = vmatprep.subr.mxu0 %v5180
    %5861 = vmatpush1.msra.mxu0 %v5179
    %5862 = vmatprep.subr.mxu0 %v5176
    %5863 = vmatpush1.msra.mxu0 %v5175
    %5864 = vmatprep.subr.mxu0 %v5172
    %5865 = vmatpush1.msra.mxu0 %v5171
    %5866 = vmatprep.subr.mxu0 0.0
    %5867 = vmatpush2.msra.mxu0 0.0
    %5868 = vmatprep.subr.mxu0 0.0
    %5869 = vmatpush2.msra.mxu0 0.0
    %5870 = vmatprep.subr.mxu0 0.0
    %5871 = vmatpush2.msra.mxu0 0.0
    %5872 = vmatprep.subr.mxu0 0.0
    %5873 = vmatpush2.msra.mxu0 0.0
    %5874 = vmatprep.subr.mxu0 0.0
    %5875 = vmatpush2.msra.mxu0 0.0
    %5876 = vmatprep.subr.mxu0 0.0
    %5877 = vmatpush2.msra.mxu0 0.0
    %5878 = vmatprep.subr.mxu0 0.0
    %5879 = vmatpush2.msra.mxu0 0.0
    %5880 = vmatprep.subr.mxu0 0.0
    %5881 = vmatpush2.msra.mxu0 0.0
    %5882 = vmatprep.subr.mxu0 0.0
    %5883 = vmatpush2.msra.mxu0 0.0
    %5884 = vmatprep.subr.mxu0 0.0
    %5885 = vmatpush2.msra.mxu0 0.0
    %5886 = vmatprep.subr.mxu0 0.0
    %5887 = vmatpush2.msra.mxu0 0.0
    %5888 = vmatprep.subr.mxu0 0.0
    %5889 = vmatpush2.msra.mxu0 0.0
    %5890 = vmatprep.subr.mxu0 0.0
    %5891 = vmatpush2.msra.mxu0 0.0
    %5892 = vmatprep.subr.mxu0 0.0
    %5893 = vmatpush2.msra.mxu0 0.0
    %5894 = vmatprep.subr.mxu0 0.0
    %5895 = vmatpush2.msra.mxu0 0.0
    %5896 = vmatprep.subr.mxu0 0.0
    %5897 = vmatpush2.msra.mxu0 0.0
    %5898 = vmatprep.mubr.f32.mxu0 0.0
    %5899 = vmatmul.mubr.f32.gmra.mxu0 %v5761
    %v5900 = vpop.f32.mrf.mxu0
    %v5901 = vadd.f32 0.0, %v5900
    %v5902 = vpop.f32.mrf.mxu0
    %v5903 = vadd.f32 0.0, %v5902
    %5904 = vdwg.mxu0
    %v5909 = vcombine.low %v5830, %v5832
    %v5910 = vcombine.low %v5901, %v5903
    %v5912 = vunpack.c.l.s4 1966171168
    %v5913 = vunpack.c.0.s8 %v5912
    %v5914 = vlaneseq
    %v5915 = vshrl.u32 %v5914, 7
    %v5916 = vsub.s32 %v5913, %v5915
    %v5917 = vrot.slane %v5909, %v5916
    %v5919 = vunpack.c.l.s4 1966171168
    %v5920 = vunpack.c.0.s8 %v5919
    %v5921 = vlaneseq
    %v5922 = vshrl.u32 %v5921, 7
    %v5923 = vsub.s32 %v5920, %v5922
    %v5924 = vrot.slane %v5910, %v5923
    %v5925 = vcombine.low %v5917, %v5924
    %v5926 = vcombine.high %v5917, %v5924
    %v5928 = vunpack.c.l.s4 1966171168
    %v5929 = vunpack.c.0.s8 %v5928
    %v5930 = vlaneseq
    %v5931 = vshrl.u32 %v5930, 7
    %v5932 = vsub.s32 %v5929, %v5931
    %v5933 = vrot.slane %v5925, %v5932
    %v5935 = vunpack.c.l.s4 1966171168
    %v5936 = vunpack.c.0.s8 %v5935
    %v5937 = vlaneseq
    %v5938 = vshrl.u32 %v5937, 7
    %v5939 = vsub.s32 %v5936, %v5938
    %v5940 = vrot.slane %v5926, %v5939
    %v5943 = vadd.f32 %v5743, %v5933
    %v5944 = vadd.f32 %v5744, %v5940
    %v5945 = vxor.u32 %v5943, 2147483648
    %v5946 = vxor.u32 %v5944, 2147483648
    %v5947 = vmul.f32 %v5945, 1.442695
    %v5948 = vpow.pop %v5947
    %v5949 = vmul.f32 %v5946, 1.442695
    %v5950 = vpow.pop %v5949
    %v5951 = vadd.f32 %v5948, 1.0
    %v5952 = vadd.f32 %v5950, 1.0
    %v5953 = vrcp.pop %v5951
    %v5954 = vmul.f32 1.0, %v5953
    %v5955 = vrcp.pop %v5952
    %v5956 = vmul.f32 1.0, %v5955
    %v5959 = vrot.slane %v5943, 1
    %v5960 = vrot.slane %v5944, 1
    %v5963 = vxor.u32 %v5959, 2147483648
    %v5964 = vxor.u32 %v5960, 2147483648
    %v5965 = vmul.f32 %v5963, 1.442695
    %v5966 = vpow.pop %v5965
    %v5967 = vmul.f32 %v5964, 1.442695
    %v5968 = vpow.pop %v5967
    %v5969 = vadd.f32 %v5966, 1.0
    %v5970 = vadd.f32 %v5968, 1.0
    %v5971 = vrcp.pop %v5969
    %v5972 = vmul.f32 1.0, %v5971
    %v5973 = vrcp.pop %v5970
    %v5974 = vmul.f32 1.0, %v5973
    %v5975 = vrot.slane %v5943, 2
    %v5976 = vrot.slane %v5944, 2
    %v5979 = vtanh.pop %v5975
    %v5980 = vtanh.pop %v5976
    %v5981 = vrot.slane %v5943, 3
    %v5982 = vrot.slane %v5944, 3
    %v5985 = vxor.u32 %v5981, 2147483648
    %v5986 = vxor.u32 %v5982, 2147483648
    %v5987 = vmul.f32 %v5985, 1.442695
    %v5988 = vpow.pop %v5987
    %v5989 = vmul.f32 %v5986, 1.442695
    %v5990 = vpow.pop %v5989
    %v5991 = vadd.f32 %v5988, 1.0
    %v5992 = vadd.f32 %v5990, 1.0
    %v5993 = vrcp.pop %v5991
    %v5994 = vmul.f32 1.0, %v5993
    %v5995 = vrcp.pop %v5992
    %v5996 = vmul.f32 1.0, %v5995
    %v5997 = vmul.f32 %v5972, %v5737
    %v5998 = vmul.f32 %v5974, %v5738
    %v5999 = vmul.f32 %v5954, %v5979
    %v6000 = vmul.f32 %v5956, %v5980
    %v6001 = vadd.f32 %v5997, %v5999
    %v6002 = vadd.f32 %v5998, %v6000
    %v6003 = vtanh.pop %v6001
    %v6004 = vtanh.pop %v6002
    %v6005 = vmul.f32 %v5994, %v6003
    %v6006 = vmul.f32 %v5996, %v6004
    %v6007 = vld [vmem:[%s1150] ss:$8 sm:$0xf]
    %v6008 = vld [vmem:[%s1152] ss:$8 sm:$0xf]
    %v6011 = vcombine.low %v6005, %v6006
    %v6013 = vunpack.c.l.s4 1966171168
    %v6014 = vunpack.c.0.s8 %v6013
    %v6015 = vlaneseq
    %v6016 = vshrl.u32 %v6015, 7
    %v6017 = vsub.s32 %v6014, %v6016
    %v6018 = vrot.slane %v6011, %v6017
    %v6020 = vunpack.c.l.s4 1966171168
    %v6021 = vunpack.c.0.s8 %v6020
    %v6022 = vlaneseq
    %v6023 = vshrl.u32 %v6022, 7
    %v6024 = vsub.s32 %v6021, %v6023
    %v6025 = vrot.slane %v6018, %v6024
    %6027 = vmatprep.subr.mxu0 %v5230
    %6028 = vmatpush1.msra.mxu0 %v5229
    %6029 = vmatprep.subr.mxu0 %v5226
    %6030 = vmatpush1.msra.mxu0 %v5225
    %6031 = vmatprep.subr.mxu0 %v5222
    %6032 = vmatpush1.msra.mxu0 %v5221
    %6033 = vmatprep.subr.mxu0 %v5218
    %6034 = vmatpush1.msra.mxu0 %v5217
    %6035 = vmatprep.subr.mxu0 %v5214
    %6036 = vmatpush1.msra.mxu0 %v5213
    %6037 = vmatprep.subr.mxu0 %v5210
    %6038 = vmatpush1.msra.mxu0 %v5209
    %6039 = vmatprep.subr.mxu0 %v5206
    %6040 = vmatpush1.msra.mxu0 %v5205
    %6041 = vmatprep.subr.mxu0 %v5202
    %6042 = vmatpush1.msra.mxu0 %v5201
    %6043 = vmatprep.subr.mxu0 %v5198
    %6044 = vmatpush1.msra.mxu0 %v5197
    %6045 = vmatprep.subr.mxu0 %v5194
    %6046 = vmatpush1.msra.mxu0 %v5193
    %6047 = vmatprep.subr.mxu0 %v5190
    %6048 = vmatpush1.msra.mxu0 %v5189
    %6049 = vmatprep.subr.mxu0 %v5186
    %6050 = vmatpush1.msra.mxu0 %v5185
    %6051 = vmatprep.subr.mxu0 %v5182
    %6052 = vmatpush1.msra.mxu0 %v5181
    %6053 = vmatprep.subr.mxu0 %v5178
    %6054 = vmatpush1.msra.mxu0 %v5177
    %6055 = vmatprep.subr.mxu0 %v5174
    %6056 = vmatpush1.msra.mxu0 %v5173
    %6057 = vmatprep.subr.mxu0 %v5170
    %6058 = vmatpush1.msra.mxu0 %v5169
    %6059 = vmatprep.subr.mxu0 0.0
    %6060 = vmatpush2.msra.mxu0 0.0
    %6061 = vmatprep.subr.mxu0 0.0
    %6062 = vmatpush2.msra.mxu0 0.0
    %6063 = vmatprep.subr.mxu0 0.0
    %6064 = vmatpush2.msra.mxu0 0.0
    %6065 = vmatprep.subr.mxu0 0.0
    %6066 = vmatpush2.msra.mxu0 0.0
    %6067 = vmatprep.subr.mxu0 0.0
    %6068 = vmatpush2.msra.mxu0 0.0
    %6069 = vmatprep.subr.mxu0 0.0
    %6070 = vmatpush2.msra.mxu0 0.0
    %6071 = vmatprep.subr.mxu0 0.0
    %6072 = vmatpush2.msra.mxu0 0.0
    %6073 = vmatprep.subr.mxu0 0.0
    %6074 = vmatpush2.msra.mxu0 0.0
    %6075 = vmatprep.subr.mxu0 0.0
    %6076 = vmatpush2.msra.mxu0 0.0
    %6077 = vmatprep.subr.mxu0 0.0
    %6078 = vmatpush2.msra.mxu0 0.0
    %6079 = vmatprep.subr.mxu0 0.0
    %6080 = vmatpush2.msra.mxu0 0.0
    %6081 = vmatprep.subr.mxu0 0.0
    %6082 = vmatpush2.msra.mxu0 0.0
    %6083 = vmatprep.subr.mxu0 0.0
    %6084 = vmatpush2.msra.mxu0 0.0
    %6085 = vmatprep.subr.mxu0 0.0
    %6086 = vmatpush2.msra.mxu0 0.0
    %6087 = vmatprep.subr.mxu0 0.0
    %6088 = vmatpush2.msra.mxu0 0.0
    %6089 = vmatprep.subr.mxu0 0.0
    %6090 = vmatpush2.msra.mxu0 0.0
    %6091 = vmatprep.mubr.f32.mxu0 0.0
    %6092 = vmatmul.mubr.f32.gmra.mxu0 %v6025
    %v6093 = vpop.f32.mrf.mxu0
    %v6094 = vadd.f32 0.0, %v6093
    %v6095 = vpop.f32.mrf.mxu0
    %v6096 = vadd.f32 0.0, %v6095
    %6097 = vdwg.mxu0
    %6098 = vmatprep.subr.mxu0 %v5232
    %6099 = vmatpush1.msra.mxu0 %v5231
    %6100 = vmatprep.subr.mxu0 %v5228
    %6101 = vmatpush1.msra.mxu0 %v5227
    %6102 = vmatprep.subr.mxu0 %v5224
    %6103 = vmatpush1.msra.mxu0 %v5223
    %6104 = vmatprep.subr.mxu0 %v5220
    %6105 = vmatpush1.msra.mxu0 %v5219
    %6106 = vmatprep.subr.mxu0 %v5216
    %6107 = vmatpush1.msra.mxu0 %v5215
    %6108 = vmatprep.subr.mxu0 %v5212
    %6109 = vmatpush1.msra.mxu0 %v5211
    %6110 = vmatprep.subr.mxu0 %v5208
    %6111 = vmatpush1.msra.mxu0 %v5207
    %6112 = vmatprep.subr.mxu0 %v5204
    %6113 = vmatpush1.msra.mxu0 %v5203
    %6114 = vmatprep.subr.mxu0 %v5200
    %6115 = vmatpush1.msra.mxu0 %v5199
    %6116 = vmatprep.subr.mxu0 %v5196
    %6117 = vmatpush1.msra.mxu0 %v5195
    %6118 = vmatprep.subr.mxu0 %v5192
    %6119 = vmatpush1.msra.mxu0 %v5191
    %6120 = vmatprep.subr.mxu0 %v5188
    %6121 = vmatpush1.msra.mxu0 %v5187
    %6122 = vmatprep.subr.mxu0 %v5184
    %6123 = vmatpush1.msra.mxu0 %v5183
    %6124 = vmatprep.subr.mxu0 %v5180
    %6125 = vmatpush1.msra.mxu0 %v5179
    %6126 = vmatprep.subr.mxu0 %v5176
    %6127 = vmatpush1.msra.mxu0 %v5175
    %6128 = vmatprep.subr.mxu0 %v5172
    %6129 = vmatpush1.msra.mxu0 %v5171
    %6130 = vmatprep.subr.mxu0 0.0
    %6131 = vmatpush2.msra.mxu0 0.0
    %6132 = vmatprep.subr.mxu0 0.0
    %6133 = vmatpush2.msra.mxu0 0.0
    %6134 = vmatprep.subr.mxu0 0.0
    %6135 = vmatpush2.msra.mxu0 0.0
    %6136 = vmatprep.subr.mxu0 0.0
    %6137 = vmatpush2.msra.mxu0 0.0
    %6138 = vmatprep.subr.mxu0 0.0
    %6139 = vmatpush2.msra.mxu0 0.0
    %6140 = vmatprep.subr.mxu0 0.0
    %6141 = vmatpush2.msra.mxu0 0.0
    %6142 = vmatprep.subr.mxu0 0.0
    %6143 = vmatpush2.msra.mxu0 0.0
    %6144 = vmatprep.subr.mxu0 0.0
    %6145 = vmatpush2.msra.mxu0 0.0
    %6146 = vmatprep.subr.mxu0 0.0
    %6147 = vmatpush2.msra.mxu0 0.0
    %6148 = vmatprep.subr.mxu0 0.0
    %6149 = vmatpush2.msra.mxu0 0.0
    %6150 = vmatprep.subr.mxu0 0.0
    %6151 = vmatpush2.msra.mxu0 0.0
    %6152 = vmatprep.subr.mxu0 0.0
    %6153 = vmatpush2.msra.mxu0 0.0
    %6154 = vmatprep.subr.mxu0 0.0
    %6155 = vmatpush2.msra.mxu0 0.0
    %6156 = vmatprep.subr.mxu0 0.0
    %6157 = vmatpush2.msra.mxu0 0.0
    %6158 = vmatprep.subr.mxu0 0.0
    %6159 = vmatpush2.msra.mxu0 0.0
    %6160 = vmatprep.subr.mxu0 0.0
    %6161 = vmatpush2.msra.mxu0 0.0
    %6162 = vmatprep.mubr.f32.mxu0 0.0
    %6163 = vmatmul.mubr.f32.gmra.mxu0 %v6025
    %v6164 = vpop.f32.mrf.mxu0
    %v6165 = vadd.f32 0.0, %v6164
    %v6166 = vpop.f32.mrf.mxu0
    %v6167 = vadd.f32 0.0, %v6166
    %6168 = vdwg.mxu0
    %v6173 = vcombine.low %v6094, %v6096
    %v6174 = vcombine.low %v6165, %v6167
    %v6176 = vunpack.c.l.s4 1966171168
    %v6177 = vunpack.c.0.s8 %v6176
    %v6178 = vlaneseq
    %v6179 = vshrl.u32 %v6178, 7
    %v6180 = vsub.s32 %v6177, %v6179
    %v6181 = vrot.slane %v6173, %v6180
    %v6183 = vunpack.c.l.s4 1966171168
    %v6184 = vunpack.c.0.s8 %v6183
    %v6185 = vlaneseq
    %v6186 = vshrl.u32 %v6185, 7
    %v6187 = vsub.s32 %v6184, %v6186
    %v6188 = vrot.slane %v6174, %v6187
    %v6189 = vcombine.low %v6181, %v6188
    %v6190 = vcombine.high %v6181, %v6188
    %v6192 = vunpack.c.l.s4 1966171168
    %v6193 = vunpack.c.0.s8 %v6192
    %v6194 = vlaneseq
    %v6195 = vshrl.u32 %v6194, 7
    %v6196 = vsub.s32 %v6193, %v6195
    %v6197 = vrot.slane %v6189, %v6196
    %v6199 = vunpack.c.l.s4 1966171168
    %v6200 = vunpack.c.0.s8 %v6199
    %v6201 = vlaneseq
    %v6202 = vshrl.u32 %v6201, 7
    %v6203 = vsub.s32 %v6200, %v6202
    %v6204 = vrot.slane %v6190, %v6203
    %v6207 = vadd.f32 %v6007, %v6197
    %v6208 = vadd.f32 %v6008, %v6204
    %v6209 = vxor.u32 %v6207, 2147483648
    %v6210 = vxor.u32 %v6208, 2147483648
    %v6211 = vmul.f32 %v6209, 1.442695
    %v6212 = vpow.pop %v6211
    %v6213 = vmul.f32 %v6210, 1.442695
    %v6214 = vpow.pop %v6213
    %v6215 = vadd.f32 %v6212, 1.0
    %v6216 = vadd.f32 %v6214, 1.0
    %v6217 = vrcp.pop %v6215
    %v6218 = vmul.f32 1.0, %v6217
    %v6219 = vrcp.pop %v6216
    %v6220 = vmul.f32 1.0, %v6219
    %v6223 = vrot.slane %v6207, 1
    %v6224 = vrot.slane %v6208, 1
    %v6227 = vxor.u32 %v6223, 2147483648
    %v6228 = vxor.u32 %v6224, 2147483648
    %v6229 = vmul.f32 %v6227, 1.442695
    %v6230 = vpow.pop %v6229
    %v6231 = vmul.f32 %v6228, 1.442695
    %v6232 = vpow.pop %v6231
    %v6233 = vadd.f32 %v6230, 1.0
    %v6234 = vadd.f32 %v6232, 1.0
    %v6235 = vrcp.pop %v6233
    %v6236 = vmul.f32 1.0, %v6235
    %v6237 = vrcp.pop %v6234
    %v6238 = vmul.f32 1.0, %v6237
    %v6239 = vrot.slane %v6207, 2
    %v6240 = vrot.slane %v6208, 2
    %v6243 = vtanh.pop %v6239
    %v6244 = vtanh.pop %v6240
    %v6245 = vrot.slane %v6207, 3
    %v6246 = vrot.slane %v6208, 3
    %v6249 = vxor.u32 %v6245, 2147483648
    %v6250 = vxor.u32 %v6246, 2147483648
    %v6251 = vmul.f32 %v6249, 1.442695
    %v6252 = vpow.pop %v6251
    %v6253 = vmul.f32 %v6250, 1.442695
    %v6254 = vpow.pop %v6253
    %v6255 = vadd.f32 %v6252, 1.0
    %v6256 = vadd.f32 %v6254, 1.0
    %v6257 = vrcp.pop %v6255
    %v6258 = vmul.f32 1.0, %v6257
    %v6259 = vrcp.pop %v6256
    %v6260 = vmul.f32 1.0, %v6259
    %v6261 = vmul.f32 %v6236, %v6001
    %v6262 = vmul.f32 %v6238, %v6002
    %v6263 = vmul.f32 %v6218, %v6243
    %v6264 = vmul.f32 %v6220, %v6244
    %v6265 = vadd.f32 %v6261, %v6263
    %v6266 = vadd.f32 %v6262, %v6264
    %v6267 = vtanh.pop %v6265
    %v6268 = vtanh.pop %v6266
    %v6269 = vmul.f32 %v6258, %v6267
    %v6270 = vmul.f32 %v6260, %v6268
    %v6271 = vld [vmem:[%s1418] ss:$8 sm:$0xf]
    %v6272 = vld [vmem:[%s1420] ss:$8 sm:$0xf]
    %v6275 = vcombine.low %v6269, %v6270
    %v6277 = vunpack.c.l.s4 1966171168
    %v6278 = vunpack.c.0.s8 %v6277
    %v6279 = vlaneseq
    %v6280 = vshrl.u32 %v6279, 7
    %v6281 = vsub.s32 %v6278, %v6280
    %v6282 = vrot.slane %v6275, %v6281
    %v6284 = vunpack.c.l.s4 1966171168
    %v6285 = vunpack.c.0.s8 %v6284
    %v6286 = vlaneseq
    %v6287 = vshrl.u32 %v6286, 7
    %v6288 = vsub.s32 %v6285, %v6287
    %v6289 = vrot.slane %v6282, %v6288
    %6291 = vmatprep.subr.mxu0 %v5230
    %6292 = vmatpush1.msra.mxu0 %v5229
    %6293 = vmatprep.subr.mxu0 %v5226
    %6294 = vmatpush1.msra.mxu0 %v5225
    %6295 = vmatprep.subr.mxu0 %v5222
    %6296 = vmatpush1.msra.mxu0 %v5221
    %6297 = vmatprep.subr.mxu0 %v5218
    %6298 = vmatpush1.msra.mxu0 %v5217
    %6299 = vmatprep.subr.mxu0 %v5214
    %6300 = vmatpush1.msra.mxu0 %v5213
    %6301 = vmatprep.subr.mxu0 %v5210
    %6302 = vmatpush1.msra.mxu0 %v5209
    %6303 = vmatprep.subr.mxu0 %v5206
    %6304 = vmatpush1.msra.mxu0 %v5205
    %6305 = vmatprep.subr.mxu0 %v5202
    %6306 = vmatpush1.msra.mxu0 %v5201
    %6307 = vmatprep.subr.mxu0 %v5198
    %6308 = vmatpush1.msra.mxu0 %v5197
    %6309 = vmatprep.subr.mxu0 %v5194
    %6310 = vmatpush1.msra.mxu0 %v5193
    %6311 = vmatprep.subr.mxu0 %v5190
    %6312 = vmatpush1.msra.mxu0 %v5189
    %6313 = vmatprep.subr.mxu0 %v5186
    %6314 = vmatpush1.msra.mxu0 %v5185
    %6315 = vmatprep.subr.mxu0 %v5182
    %6316 = vmatpush1.msra.mxu0 %v5181
    %6317 = vmatprep.subr.mxu0 %v5178
    %6318 = vmatpush1.msra.mxu0 %v5177
    %6319 = vmatprep.subr.mxu0 %v5174
    %6320 = vmatpush1.msra.mxu0 %v5173
    %6321 = vmatprep.subr.mxu0 %v5170
    %6322 = vmatpush1.msra.mxu0 %v5169
    %6323 = vmatprep.subr.mxu0 0.0
    %6324 = vmatpush2.msra.mxu0 0.0
    %6325 = vmatprep.subr.mxu0 0.0
    %6326 = vmatpush2.msra.mxu0 0.0
    %6327 = vmatprep.subr.mxu0 0.0
    %6328 = vmatpush2.msra.mxu0 0.0
    %6329 = vmatprep.subr.mxu0 0.0
    %6330 = vmatpush2.msra.mxu0 0.0
    %6331 = vmatprep.subr.mxu0 0.0
    %6332 = vmatpush2.msra.mxu0 0.0
    %6333 = vmatprep.subr.mxu0 0.0
    %6334 = vmatpush2.msra.mxu0 0.0
    %6335 = vmatprep.subr.mxu0 0.0
    %6336 = vmatpush2.msra.mxu0 0.0
    %6337 = vmatprep.subr.mxu0 0.0
    %6338 = vmatpush2.msra.mxu0 0.0
    %6339 = vmatprep.subr.mxu0 0.0
    %6340 = vmatpush2.msra.mxu0 0.0
    %6341 = vmatprep.subr.mxu0 0.0
    %6342 = vmatpush2.msra.mxu0 0.0
    %6343 = vmatprep.subr.mxu0 0.0
    %6344 = vmatpush2.msra.mxu0 0.0
    %6345 = vmatprep.subr.mxu0 0.0
    %6346 = vmatpush2.msra.mxu0 0.0
    %6347 = vmatprep.subr.mxu0 0.0
    %6348 = vmatpush2.msra.mxu0 0.0
    %6349 = vmatprep.subr.mxu0 0.0
    %6350 = vmatpush2.msra.mxu0 0.0
    %6351 = vmatprep.subr.mxu0 0.0
    %6352 = vmatpush2.msra.mxu0 0.0
    %6353 = vmatprep.subr.mxu0 0.0
    %6354 = vmatpush2.msra.mxu0 0.0
    %6355 = vmatprep.mubr.f32.mxu0 0.0
    %6356 = vmatmul.mubr.f32.gmra.mxu0 %v6289
    %v6357 = vpop.f32.mrf.mxu0
    %v6358 = vadd.f32 0.0, %v6357
    %v6359 = vpop.f32.mrf.mxu0
    %v6360 = vadd.f32 0.0, %v6359
    %6361 = vdwg.mxu0
    %6362 = vmatprep.subr.mxu0 %v5232
    %6363 = vmatpush1.msra.mxu0 %v5231
    %6364 = vmatprep.subr.mxu0 %v5228
    %6365 = vmatpush1.msra.mxu0 %v5227
    %6366 = vmatprep.subr.mxu0 %v5224
    %6367 = vmatpush1.msra.mxu0 %v5223
    %6368 = vmatprep.subr.mxu0 %v5220
    %6369 = vmatpush1.msra.mxu0 %v5219
    %6370 = vmatprep.subr.mxu0 %v5216
    %6371 = vmatpush1.msra.mxu0 %v5215
    %6372 = vmatprep.subr.mxu0 %v5212
    %6373 = vmatpush1.msra.mxu0 %v5211
    %6374 = vmatprep.subr.mxu0 %v5208
    %6375 = vmatpush1.msra.mxu0 %v5207
    %6376 = vmatprep.subr.mxu0 %v5204
    %6377 = vmatpush1.msra.mxu0 %v5203
    %6378 = vmatprep.subr.mxu0 %v5200
    %6379 = vmatpush1.msra.mxu0 %v5199
    %6380 = vmatprep.subr.mxu0 %v5196
    %6381 = vmatpush1.msra.mxu0 %v5195
    %6382 = vmatprep.subr.mxu0 %v5192
    %6383 = vmatpush1.msra.mxu0 %v5191
    %6384 = vmatprep.subr.mxu0 %v5188
    %6385 = vmatpush1.msra.mxu0 %v5187
    %6386 = vmatprep.subr.mxu0 %v5184
    %6387 = vmatpush1.msra.mxu0 %v5183
    %6388 = vmatprep.subr.mxu0 %v5180
    %6389 = vmatpush1.msra.mxu0 %v5179
    %6390 = vmatprep.subr.mxu0 %v5176
    %6391 = vmatpush1.msra.mxu0 %v5175
    %6392 = vmatprep.subr.mxu0 %v5172
    %6393 = vmatpush1.msra.mxu0 %v5171
    %6394 = vmatprep.subr.mxu0 0.0
    %6395 = vmatpush2.msra.mxu0 0.0
    %6396 = vmatprep.subr.mxu0 0.0
    %6397 = vmatpush2.msra.mxu0 0.0
    %6398 = vmatprep.subr.mxu0 0.0
    %6399 = vmatpush2.msra.mxu0 0.0
    %6400 = vmatprep.subr.mxu0 0.0
    %6401 = vmatpush2.msra.mxu0 0.0
    %6402 = vmatprep.subr.mxu0 0.0
    %6403 = vmatpush2.msra.mxu0 0.0
    %6404 = vmatprep.subr.mxu0 0.0
    %6405 = vmatpush2.msra.mxu0 0.0
    %6406 = vmatprep.subr.mxu0 0.0
    %6407 = vmatpush2.msra.mxu0 0.0
    %6408 = vmatprep.subr.mxu0 0.0
    %6409 = vmatpush2.msra.mxu0 0.0
    %6410 = vmatprep.subr.mxu0 0.0
    %6411 = vmatpush2.msra.mxu0 0.0
    %6412 = vmatprep.subr.mxu0 0.0
    %6413 = vmatpush2.msra.mxu0 0.0
    %6414 = vmatprep.subr.mxu0 0.0
    %6415 = vmatpush2.msra.mxu0 0.0
    %6416 = vmatprep.subr.mxu0 0.0
    %6417 = vmatpush2.msra.mxu0 0.0
    %6418 = vmatprep.subr.mxu0 0.0
    %6419 = vmatpush2.msra.mxu0 0.0
    %6420 = vmatprep.subr.mxu0 0.0
    %6421 = vmatpush2.msra.mxu0 0.0
    %6422 = vmatprep.subr.mxu0 0.0
    %6423 = vmatpush2.msra.mxu0 0.0
    %6424 = vmatprep.subr.mxu0 0.0
    %6425 = vmatpush2.msra.mxu0 0.0
    %6426 = vmatprep.mubr.f32.mxu0 0.0
    %6427 = vmatmul.mubr.f32.gmra.mxu0 %v6289
    %v6428 = vpop.f32.mrf.mxu0
    %v6429 = vadd.f32 0.0, %v6428
    %v6430 = vpop.f32.mrf.mxu0
    %v6431 = vadd.f32 0.0, %v6430
    %6432 = vdwg.mxu0
    %v6437 = vcombine.low %v6358, %v6360
    %v6438 = vcombine.low %v6429, %v6431
    %v6440 = vunpack.c.l.s4 1966171168
    %v6441 = vunpack.c.0.s8 %v6440
    %v6442 = vlaneseq
    %v6443 = vshrl.u32 %v6442, 7
    %v6444 = vsub.s32 %v6441, %v6443
    %v6445 = vrot.slane %v6437, %v6444
    %v6447 = vunpack.c.l.s4 1966171168
    %v6448 = vunpack.c.0.s8 %v6447
    %v6449 = vlaneseq
    %v6450 = vshrl.u32 %v6449, 7
    %v6451 = vsub.s32 %v6448, %v6450
    %v6452 = vrot.slane %v6438, %v6451
    %v6453 = vcombine.low %v6445, %v6452
    %v6454 = vcombine.high %v6445, %v6452
    %v6456 = vunpack.c.l.s4 1966171168
    %v6457 = vunpack.c.0.s8 %v6456
    %v6458 = vlaneseq
    %v6459 = vshrl.u32 %v6458, 7
    %v6460 = vsub.s32 %v6457, %v6459
    %v6461 = vrot.slane %v6453, %v6460
    %v6463 = vunpack.c.l.s4 1966171168
    %v6464 = vunpack.c.0.s8 %v6463
    %v6465 = vlaneseq
    %v6466 = vshrl.u32 %v6465, 7
    %v6467 = vsub.s32 %v6464, %v6466
    %v6468 = vrot.slane %v6454, %v6467
    %v6471 = vadd.f32 %v6271, %v6461
    %v6472 = vadd.f32 %v6272, %v6468
    %v6473 = vxor.u32 %v6471, 2147483648
    %v6474 = vxor.u32 %v6472, 2147483648
    %v6475 = vmul.f32 %v6473, 1.442695
    %v6476 = vpow.pop %v6475
    %v6477 = vmul.f32 %v6474, 1.442695
    %v6478 = vpow.pop %v6477
    %v6479 = vadd.f32 %v6476, 1.0
    %v6480 = vadd.f32 %v6478, 1.0
    %v6481 = vrcp.pop %v6479
    %v6482 = vmul.f32 1.0, %v6481
    %v6483 = vrcp.pop %v6480
    %v6484 = vmul.f32 1.0, %v6483
    %v6487 = vrot.slane %v6471, 1
    %v6488 = vrot.slane %v6472, 1
    %v6491 = vxor.u32 %v6487, 2147483648
    %v6492 = vxor.u32 %v6488, 2147483648
    %v6493 = vmul.f32 %v6491, 1.442695
    %v6494 = vpow.pop %v6493
    %v6495 = vmul.f32 %v6492, 1.442695
    %v6496 = vpow.pop %v6495
    %v6497 = vadd.f32 %v6494, 1.0
    %v6498 = vadd.f32 %v6496, 1.0
    %v6499 = vrcp.pop %v6497
    %v6500 = vmul.f32 1.0, %v6499
    %v6501 = vrcp.pop %v6498
    %v6502 = vmul.f32 1.0, %v6501
    %v6503 = vrot.slane %v6471, 2
    %v6504 = vrot.slane %v6472, 2
    %v6507 = vtanh.pop %v6503
    %v6508 = vtanh.pop %v6504
    %v6509 = vrot.slane %v6471, 3
    %v6510 = vrot.slane %v6472, 3
    %v6513 = vxor.u32 %v6509, 2147483648
    %v6514 = vxor.u32 %v6510, 2147483648
    %v6515 = vmul.f32 %v6513, 1.442695
    %v6516 = vpow.pop %v6515
    %v6517 = vmul.f32 %v6514, 1.442695
    %v6518 = vpow.pop %v6517
    %v6519 = vadd.f32 %v6516, 1.0
    %v6520 = vadd.f32 %v6518, 1.0
    %v6521 = vrcp.pop %v6519
    %v6522 = vmul.f32 1.0, %v6521
    %v6523 = vrcp.pop %v6520
    %v6524 = vmul.f32 1.0, %v6523
    %v6525 = vmul.f32 %v6500, %v6265
    %v6526 = vmul.f32 %v6502, %v6266
    %v6527 = vmul.f32 %v6482, %v6507
    %v6528 = vmul.f32 %v6484, %v6508
    %v6529 = vadd.f32 %v6525, %v6527
    %v6530 = vadd.f32 %v6526, %v6528
    %v6531 = vtanh.pop %v6529
    %v6532 = vtanh.pop %v6530
    %v6533 = vmul.f32 %v6522, %v6531
    %v6534 = vmul.f32 %v6524, %v6532
    %v6535 = vld [vmem:[%s1686] ss:$8 sm:$0xf]
    %v6536 = vld [vmem:[%s1688] ss:$8 sm:$0xf]
    %v6539 = vcombine.low %v6533, %v6534
    %v6541 = vunpack.c.l.s4 1966171168
    %v6542 = vunpack.c.0.s8 %v6541
    %v6543 = vlaneseq
    %v6544 = vshrl.u32 %v6543, 7
    %v6545 = vsub.s32 %v6542, %v6544
    %v6546 = vrot.slane %v6539, %v6545
    %v6548 = vunpack.c.l.s4 1966171168
    %v6549 = vunpack.c.0.s8 %v6548
    %v6550 = vlaneseq
    %v6551 = vshrl.u32 %v6550, 7
    %v6552 = vsub.s32 %v6549, %v6551
    %v6553 = vrot.slane %v6546, %v6552
    %6555 = vmatprep.subr.mxu0 %v5230
    %6556 = vmatpush1.msra.mxu0 %v5229
    %6557 = vmatprep.subr.mxu0 %v5226
    %6558 = vmatpush1.msra.mxu0 %v5225
    %6559 = vmatprep.subr.mxu0 %v5222
    %6560 = vmatpush1.msra.mxu0 %v5221
    %6561 = vmatprep.subr.mxu0 %v5218
    %6562 = vmatpush1.msra.mxu0 %v5217
    %6563 = vmatprep.subr.mxu0 %v5214
    %6564 = vmatpush1.msra.mxu0 %v5213
    %6565 = vmatprep.subr.mxu0 %v5210
    %6566 = vmatpush1.msra.mxu0 %v5209
    %6567 = vmatprep.subr.mxu0 %v5206
    %6568 = vmatpush1.msra.mxu0 %v5205
    %6569 = vmatprep.subr.mxu0 %v5202
    %6570 = vmatpush1.msra.mxu0 %v5201
    %6571 = vmatprep.subr.mxu0 %v5198
    %6572 = vmatpush1.msra.mxu0 %v5197
    %6573 = vmatprep.subr.mxu0 %v5194
    %6574 = vmatpush1.msra.mxu0 %v5193
    %6575 = vmatprep.subr.mxu0 %v5190
    %6576 = vmatpush1.msra.mxu0 %v5189
    %6577 = vmatprep.subr.mxu0 %v5186
    %6578 = vmatpush1.msra.mxu0 %v5185
    %6579 = vmatprep.subr.mxu0 %v5182
    %6580 = vmatpush1.msra.mxu0 %v5181
    %6581 = vmatprep.subr.mxu0 %v5178
    %6582 = vmatpush1.msra.mxu0 %v5177
    %6583 = vmatprep.subr.mxu0 %v5174
    %6584 = vmatpush1.msra.mxu0 %v5173
    %6585 = vmatprep.subr.mxu0 %v5170
    %6586 = vmatpush1.msra.mxu0 %v5169
    %6587 = vmatprep.subr.mxu0 0.0
    %6588 = vmatpush2.msra.mxu0 0.0
    %6589 = vmatprep.subr.mxu0 0.0
    %6590 = vmatpush2.msra.mxu0 0.0
    %6591 = vmatprep.subr.mxu0 0.0
    %6592 = vmatpush2.msra.mxu0 0.0
    %6593 = vmatprep.subr.mxu0 0.0
    %6594 = vmatpush2.msra.mxu0 0.0
    %6595 = vmatprep.subr.mxu0 0.0
    %6596 = vmatpush2.msra.mxu0 0.0
    %6597 = vmatprep.subr.mxu0 0.0
    %6598 = vmatpush2.msra.mxu0 0.0
    %6599 = vmatprep.subr.mxu0 0.0
    %6600 = vmatpush2.msra.mxu0 0.0
    %6601 = vmatprep.subr.mxu0 0.0
    %6602 = vmatpush2.msra.mxu0 0.0
    %6603 = vmatprep.subr.mxu0 0.0
    %6604 = vmatpush2.msra.mxu0 0.0
    %6605 = vmatprep.subr.mxu0 0.0
    %6606 = vmatpush2.msra.mxu0 0.0
    %6607 = vmatprep.subr.mxu0 0.0
    %6608 = vmatpush2.msra.mxu0 0.0
    %6609 = vmatprep.subr.mxu0 0.0
    %6610 = vmatpush2.msra.mxu0 0.0
    %6611 = vmatprep.subr.mxu0 0.0
    %6612 = vmatpush2.msra.mxu0 0.0
    %6613 = vmatprep.subr.mxu0 0.0
    %6614 = vmatpush2.msra.mxu0 0.0
    %6615 = vmatprep.subr.mxu0 0.0
    %6616 = vmatpush2.msra.mxu0 0.0
    %6617 = vmatprep.subr.mxu0 0.0
    %6618 = vmatpush2.msra.mxu0 0.0
    %6619 = vmatprep.mubr.f32.mxu0 0.0
    %6620 = vmatmul.mubr.f32.gmra.mxu0 %v6553
    %v6621 = vpop.f32.mrf.mxu0
    %v6622 = vadd.f32 0.0, %v6621
    %v6623 = vpop.f32.mrf.mxu0
    %v6624 = vadd.f32 0.0, %v6623
    %6625 = vdwg.mxu0
    %6626 = vmatprep.subr.mxu0 %v5232
    %6627 = vmatpush1.msra.mxu0 %v5231
    %6628 = vmatprep.subr.mxu0 %v5228
    %6629 = vmatpush1.msra.mxu0 %v5227
    %6630 = vmatprep.subr.mxu0 %v5224
    %6631 = vmatpush1.msra.mxu0 %v5223
    %6632 = vmatprep.subr.mxu0 %v5220
    %6633 = vmatpush1.msra.mxu0 %v5219
    %6634 = vmatprep.subr.mxu0 %v5216
    %6635 = vmatpush1.msra.mxu0 %v5215
    %6636 = vmatprep.subr.mxu0 %v5212
    %6637 = vmatpush1.msra.mxu0 %v5211
    %6638 = vmatprep.subr.mxu0 %v5208
    %6639 = vmatpush1.msra.mxu0 %v5207
    %6640 = vmatprep.subr.mxu0 %v5204
    %6641 = vmatpush1.msra.mxu0 %v5203
    %6642 = vmatprep.subr.mxu0 %v5200
    %6643 = vmatpush1.msra.mxu0 %v5199
    %6644 = vmatprep.subr.mxu0 %v5196
    %6645 = vmatpush1.msra.mxu0 %v5195
    %6646 = vmatprep.subr.mxu0 %v5192
    %6647 = vmatpush1.msra.mxu0 %v5191
    %6648 = vmatprep.subr.mxu0 %v5188
    %6649 = vmatpush1.msra.mxu0 %v5187
    %6650 = vmatprep.subr.mxu0 %v5184
    %6651 = vmatpush1.msra.mxu0 %v5183
    %6652 = vmatprep.subr.mxu0 %v5180
    %6653 = vmatpush1.msra.mxu0 %v5179
    %6654 = vmatprep.subr.mxu0 %v5176
    %6655 = vmatpush1.msra.mxu0 %v5175
    %6656 = vmatprep.subr.mxu0 %v5172
    %6657 = vmatpush1.msra.mxu0 %v5171
    %6658 = vmatprep.subr.mxu0 0.0
    %6659 = vmatpush2.msra.mxu0 0.0
    %6660 = vmatprep.subr.mxu0 0.0
    %6661 = vmatpush2.msra.mxu0 0.0
    %6662 = vmatprep.subr.mxu0 0.0
    %6663 = vmatpush2.msra.mxu0 0.0
    %6664 = vmatprep.subr.mxu0 0.0
    %6665 = vmatpush2.msra.mxu0 0.0
    %6666 = vmatprep.subr.mxu0 0.0
    %6667 = vmatpush2.msra.mxu0 0.0
    %6668 = vmatprep.subr.mxu0 0.0
    %6669 = vmatpush2.msra.mxu0 0.0
    %6670 = vmatprep.subr.mxu0 0.0
    %6671 = vmatpush2.msra.mxu0 0.0
    %6672 = vmatprep.subr.mxu0 0.0
    %6673 = vmatpush2.msra.mxu0 0.0
    %6674 = vmatprep.subr.mxu0 0.0
    %6675 = vmatpush2.msra.mxu0 0.0
    %6676 = vmatprep.subr.mxu0 0.0
    %6677 = vmatpush2.msra.mxu0 0.0
    %6678 = vmatprep.subr.mxu0 0.0
    %6679 = vmatpush2.msra.mxu0 0.0
    %6680 = vmatprep.subr.mxu0 0.0
    %6681 = vmatpush2.msra.mxu0 0.0
    %6682 = vmatprep.subr.mxu0 0.0
    %6683 = vmatpush2.msra.mxu0 0.0
    %6684 = vmatprep.subr.mxu0 0.0
    %6685 = vmatpush2.msra.mxu0 0.0
    %6686 = vmatprep.subr.mxu0 0.0
    %6687 = vmatpush2.msra.mxu0 0.0
    %6688 = vmatprep.subr.mxu0 0.0
    %6689 = vmatpush2.msra.mxu0 0.0
    %6690 = vmatprep.mubr.f32.mxu0 0.0
    %6691 = vmatmul.mubr.f32.gmra.mxu0 %v6553
    %v6692 = vpop.f32.mrf.mxu0
    %v6693 = vadd.f32 0.0, %v6692
    %v6694 = vpop.f32.mrf.mxu0
    %v6695 = vadd.f32 0.0, %v6694
    %6696 = vdwg.mxu0
    %v6701 = vcombine.low %v6622, %v6624
    %v6702 = vcombine.low %v6693, %v6695
    %v6704 = vunpack.c.l.s4 1966171168
    %v6705 = vunpack.c.0.s8 %v6704
    %v6706 = vlaneseq
    %v6707 = vshrl.u32 %v6706, 7
    %v6708 = vsub.s32 %v6705, %v6707
    %v6709 = vrot.slane %v6701, %v6708
    %v6711 = vunpack.c.l.s4 1966171168
    %v6712 = vunpack.c.0.s8 %v6711
    %v6713 = vlaneseq
    %v6714 = vshrl.u32 %v6713, 7
    %v6715 = vsub.s32 %v6712, %v6714
    %v6716 = vrot.slane %v6702, %v6715
    %v6717 = vcombine.low %v6709, %v6716
    %v6718 = vcombine.high %v6709, %v6716
    %v6720 = vunpack.c.l.s4 1966171168
    %v6721 = vunpack.c.0.s8 %v6720
    %v6722 = vlaneseq
    %v6723 = vshrl.u32 %v6722, 7
    %v6724 = vsub.s32 %v6721, %v6723
    %v6725 = vrot.slane %v6717, %v6724
    %v6727 = vunpack.c.l.s4 1966171168
    %v6728 = vunpack.c.0.s8 %v6727
    %v6729 = vlaneseq
    %v6730 = vshrl.u32 %v6729, 7
    %v6731 = vsub.s32 %v6728, %v6730
    %v6732 = vrot.slane %v6718, %v6731
    %v6735 = vadd.f32 %v6535, %v6725
    %v6736 = vadd.f32 %v6536, %v6732
    %v6737 = vxor.u32 %v6735, 2147483648
    %v6738 = vxor.u32 %v6736, 2147483648
    %v6739 = vmul.f32 %v6737, 1.442695
    %v6740 = vpow.pop %v6739
    %v6741 = vmul.f32 %v6738, 1.442695
    %v6742 = vpow.pop %v6741
    %v6743 = vadd.f32 %v6740, 1.0
    %v6744 = vadd.f32 %v6742, 1.0
    %v6745 = vrcp.pop %v6743
    %v6746 = vmul.f32 1.0, %v6745
    %v6747 = vrcp.pop %v6744
    %v6748 = vmul.f32 1.0, %v6747
    %v6751 = vrot.slane %v6735, 1
    %v6752 = vrot.slane %v6736, 1
    %v6755 = vxor.u32 %v6751, 2147483648
    %v6756 = vxor.u32 %v6752, 2147483648
    %v6757 = vmul.f32 %v6755, 1.442695
    %v6758 = vpow.pop %v6757
    %v6759 = vmul.f32 %v6756, 1.442695
    %v6760 = vpow.pop %v6759
    %v6761 = vadd.f32 %v6758, 1.0
    %v6762 = vadd.f32 %v6760, 1.0
    %v6763 = vrcp.pop %v6761
    %v6764 = vmul.f32 1.0, %v6763
    %v6765 = vrcp.pop %v6762
    %v6766 = vmul.f32 1.0, %v6765
    %v6767 = vrot.slane %v6735, 2
    %v6768 = vrot.slane %v6736, 2
    %v6771 = vtanh.pop %v6767
    %v6772 = vtanh.pop %v6768
    %v6773 = vrot.slane %v6735, 3
    %v6774 = vrot.slane %v6736, 3
    %v6777 = vxor.u32 %v6773, 2147483648
    %v6778 = vxor.u32 %v6774, 2147483648
    %v6779 = vmul.f32 %v6777, 1.442695
    %v6780 = vpow.pop %v6779
    %v6781 = vmul.f32 %v6778, 1.442695
    %v6782 = vpow.pop %v6781
    %v6783 = vadd.f32 %v6780, 1.0
    %v6784 = vadd.f32 %v6782, 1.0
    %v6785 = vrcp.pop %v6783
    %v6786 = vmul.f32 1.0, %v6785
    %v6787 = vrcp.pop %v6784
    %v6788 = vmul.f32 1.0, %v6787
    %v6789 = vmul.f32 %v6764, %v6529
    %v6790 = vmul.f32 %v6766, %v6530
    %v6791 = vmul.f32 %v6746, %v6771
    %v6792 = vmul.f32 %v6748, %v6772
    %v6793 = vadd.f32 %v6789, %v6791
    %v6794 = vadd.f32 %v6790, %v6792
    %v6795 = vtanh.pop %v6793
    %v6796 = vtanh.pop %v6794
    %v6797 = vmul.f32 %v6786, %v6795
    %v6798 = vmul.f32 %v6788, %v6796
    %v6799 = vld [vmem:[%s1954] ss:$8 sm:$0xf]
    %v6800 = vld [vmem:[%s1956] ss:$8 sm:$0xf]
    %v6803 = vcombine.low %v6797, %v6798
    %v6805 = vunpack.c.l.s4 1966171168
    %v6806 = vunpack.c.0.s8 %v6805
    %v6807 = vlaneseq
    %v6808 = vshrl.u32 %v6807, 7
    %v6809 = vsub.s32 %v6806, %v6808
    %v6810 = vrot.slane %v6803, %v6809
    %v6812 = vunpack.c.l.s4 1966171168
    %v6813 = vunpack.c.0.s8 %v6812
    %v6814 = vlaneseq
    %v6815 = vshrl.u32 %v6814, 7
    %v6816 = vsub.s32 %v6813, %v6815
    %v6817 = vrot.slane %v6810, %v6816
    %6819 = vmatprep.subr.mxu0 %v5230
    %6820 = vmatpush1.msra.mxu0 %v5229
    %6821 = vmatprep.subr.mxu0 %v5226
    %6822 = vmatpush1.msra.mxu0 %v5225
    %6823 = vmatprep.subr.mxu0 %v5222
    %6824 = vmatpush1.msra.mxu0 %v5221
    %6825 = vmatprep.subr.mxu0 %v5218
    %6826 = vmatpush1.msra.mxu0 %v5217
    %6827 = vmatprep.subr.mxu0 %v5214
    %6828 = vmatpush1.msra.mxu0 %v5213
    %6829 = vmatprep.subr.mxu0 %v5210
    %6830 = vmatpush1.msra.mxu0 %v5209
    %6831 = vmatprep.subr.mxu0 %v5206
    %6832 = vmatpush1.msra.mxu0 %v5205
    %6833 = vmatprep.subr.mxu0 %v5202
    %6834 = vmatpush1.msra.mxu0 %v5201
    %6835 = vmatprep.subr.mxu0 %v5198
    %6836 = vmatpush1.msra.mxu0 %v5197
    %6837 = vmatprep.subr.mxu0 %v5194
    %6838 = vmatpush1.msra.mxu0 %v5193
    %6839 = vmatprep.subr.mxu0 %v5190
    %6840 = vmatpush1.msra.mxu0 %v5189
    %6841 = vmatprep.subr.mxu0 %v5186
    %6842 = vmatpush1.msra.mxu0 %v5185
    %6843 = vmatprep.subr.mxu0 %v5182
    %6844 = vmatpush1.msra.mxu0 %v5181
    %6845 = vmatprep.subr.mxu0 %v5178
    %6846 = vmatpush1.msra.mxu0 %v5177
    %6847 = vmatprep.subr.mxu0 %v5174
    %6848 = vmatpush1.msra.mxu0 %v5173
    %6849 = vmatprep.subr.mxu0 %v5170
    %6850 = vmatpush1.msra.mxu0 %v5169
    %6851 = vmatprep.subr.mxu0 0.0
    %6852 = vmatpush2.msra.mxu0 0.0
    %6853 = vmatprep.subr.mxu0 0.0
    %6854 = vmatpush2.msra.mxu0 0.0
    %6855 = vmatprep.subr.mxu0 0.0
    %6856 = vmatpush2.msra.mxu0 0.0
    %6857 = vmatprep.subr.mxu0 0.0
    %6858 = vmatpush2.msra.mxu0 0.0
    %6859 = vmatprep.subr.mxu0 0.0
    %6860 = vmatpush2.msra.mxu0 0.0
    %6861 = vmatprep.subr.mxu0 0.0
    %6862 = vmatpush2.msra.mxu0 0.0
    %6863 = vmatprep.subr.mxu0 0.0
    %6864 = vmatpush2.msra.mxu0 0.0
    %6865 = vmatprep.subr.mxu0 0.0
    %6866 = vmatpush2.msra.mxu0 0.0
    %6867 = vmatprep.subr.mxu0 0.0
    %6868 = vmatpush2.msra.mxu0 0.0
    %6869 = vmatprep.subr.mxu0 0.0
    %6870 = vmatpush2.msra.mxu0 0.0
    %6871 = vmatprep.subr.mxu0 0.0
    %6872 = vmatpush2.msra.mxu0 0.0
    %6873 = vmatprep.subr.mxu0 0.0
    %6874 = vmatpush2.msra.mxu0 0.0
    %6875 = vmatprep.subr.mxu0 0.0
    %6876 = vmatpush2.msra.mxu0 0.0
    %6877 = vmatprep.subr.mxu0 0.0
    %6878 = vmatpush2.msra.mxu0 0.0
    %6879 = vmatprep.subr.mxu0 0.0
    %6880 = vmatpush2.msra.mxu0 0.0
    %6881 = vmatprep.subr.mxu0 0.0
    %6882 = vmatpush2.msra.mxu0 0.0
    %6883 = vmatprep.mubr.f32.mxu0 0.0
    %6884 = vmatmul.mubr.f32.gmra.mxu0 %v6817
    %v6885 = vpop.f32.mrf.mxu0
    %v6886 = vadd.f32 0.0, %v6885
    %v6887 = vpop.f32.mrf.mxu0
    %v6888 = vadd.f32 0.0, %v6887
    %6889 = vdwg.mxu0
    %6890 = vmatprep.subr.mxu0 %v5232
    %6891 = vmatpush1.msra.mxu0 %v5231
    %6892 = vmatprep.subr.mxu0 %v5228
    %6893 = vmatpush1.msra.mxu0 %v5227
    %6894 = vmatprep.subr.mxu0 %v5224
    %6895 = vmatpush1.msra.mxu0 %v5223
    %6896 = vmatprep.subr.mxu0 %v5220
    %6897 = vmatpush1.msra.mxu0 %v5219
    %6898 = vmatprep.subr.mxu0 %v5216
    %6899 = vmatpush1.msra.mxu0 %v5215
    %6900 = vmatprep.subr.mxu0 %v5212
    %6901 = vmatpush1.msra.mxu0 %v5211
    %6902 = vmatprep.subr.mxu0 %v5208
    %6903 = vmatpush1.msra.mxu0 %v5207
    %6904 = vmatprep.subr.mxu0 %v5204
    %6905 = vmatpush1.msra.mxu0 %v5203
    %6906 = vmatprep.subr.mxu0 %v5200
    %6907 = vmatpush1.msra.mxu0 %v5199
    %6908 = vmatprep.subr.mxu0 %v5196
    %6909 = vmatpush1.msra.mxu0 %v5195
    %6910 = vmatprep.subr.mxu0 %v5192
    %6911 = vmatpush1.msra.mxu0 %v5191
    %6912 = vmatprep.subr.mxu0 %v5188
    %6913 = vmatpush1.msra.mxu0 %v5187
    %6914 = vmatprep.subr.mxu0 %v5184
    %6915 = vmatpush1.msra.mxu0 %v5183
    %6916 = vmatprep.subr.mxu0 %v5180
    %6917 = vmatpush1.msra.mxu0 %v5179
    %6918 = vmatprep.subr.mxu0 %v5176
    %6919 = vmatpush1.msra.mxu0 %v5175
    %6920 = vmatprep.subr.mxu0 %v5172
    %6921 = vmatpush1.msra.mxu0 %v5171
    %6922 = vmatprep.subr.mxu0 0.0
    %6923 = vmatpush2.msra.mxu0 0.0
    %6924 = vmatprep.subr.mxu0 0.0
    %6925 = vmatpush2.msra.mxu0 0.0
    %6926 = vmatprep.subr.mxu0 0.0
    %6927 = vmatpush2.msra.mxu0 0.0
    %6928 = vmatprep.subr.mxu0 0.0
    %6929 = vmatpush2.msra.mxu0 0.0
    %6930 = vmatprep.subr.mxu0 0.0
    %6931 = vmatpush2.msra.mxu0 0.0
    %6932 = vmatprep.subr.mxu0 0.0
    %6933 = vmatpush2.msra.mxu0 0.0
    %6934 = vmatprep.subr.mxu0 0.0
    %6935 = vmatpush2.msra.mxu0 0.0
    %6936 = vmatprep.subr.mxu0 0.0
    %6937 = vmatpush2.msra.mxu0 0.0
    %6938 = vmatprep.subr.mxu0 0.0
    %6939 = vmatpush2.msra.mxu0 0.0
    %6940 = vmatprep.subr.mxu0 0.0
    %6941 = vmatpush2.msra.mxu0 0.0
    %6942 = vmatprep.subr.mxu0 0.0
    %6943 = vmatpush2.msra.mxu0 0.0
    %6944 = vmatprep.subr.mxu0 0.0
    %6945 = vmatpush2.msra.mxu0 0.0
    %6946 = vmatprep.subr.mxu0 0.0
    %6947 = vmatpush2.msra.mxu0 0.0
    %6948 = vmatprep.subr.mxu0 0.0
    %6949 = vmatpush2.msra.mxu0 0.0
    %6950 = vmatprep.subr.mxu0 0.0
    %6951 = vmatpush2.msra.mxu0 0.0
    %6952 = vmatprep.subr.mxu0 0.0
    %6953 = vmatpush2.msra.mxu0 0.0
    %6954 = vmatprep.mubr.f32.mxu0 0.0
    %6955 = vmatmul.mubr.f32.gmra.mxu0 %v6817
    %v6956 = vpop.f32.mrf.mxu0
    %v6957 = vadd.f32 0.0, %v6956
    %v6958 = vpop.f32.mrf.mxu0
    %v6959 = vadd.f32 0.0, %v6958
    %6960 = vdwg.mxu0
    %v6965 = vcombine.low %v6886, %v6888
    %v6966 = vcombine.low %v6957, %v6959
    %v6968 = vunpack.c.l.s4 1966171168
    %v6969 = vunpack.c.0.s8 %v6968
    %v6970 = vlaneseq
    %v6971 = vshrl.u32 %v6970, 7
    %v6972 = vsub.s32 %v6969, %v6971
    %v6973 = vrot.slane %v6965, %v6972
    %v6975 = vunpack.c.l.s4 1966171168
    %v6976 = vunpack.c.0.s8 %v6975
    %v6977 = vlaneseq
    %v6978 = vshrl.u32 %v6977, 7
    %v6979 = vsub.s32 %v6976, %v6978
    %v6980 = vrot.slane %v6966, %v6979
    %v6981 = vcombine.low %v6973, %v6980
    %v6982 = vcombine.high %v6973, %v6980
    %v6984 = vunpack.c.l.s4 1966171168
    %v6985 = vunpack.c.0.s8 %v6984
    %v6986 = vlaneseq
    %v6987 = vshrl.u32 %v6986, 7
    %v6988 = vsub.s32 %v6985, %v6987
    %v6989 = vrot.slane %v6981, %v6988
    %v6991 = vunpack.c.l.s4 1966171168
    %v6992 = vunpack.c.0.s8 %v6991
    %v6993 = vlaneseq
    %v6994 = vshrl.u32 %v6993, 7
    %v6995 = vsub.s32 %v6992, %v6994
    %v6996 = vrot.slane %v6982, %v6995
    %v6999 = vadd.f32 %v6799, %v6989
    %v7000 = vadd.f32 %v6800, %v6996
    %v7001 = vxor.u32 %v6999, 2147483648
    %v7002 = vxor.u32 %v7000, 2147483648
    %v7003 = vmul.f32 %v7001, 1.442695
    %v7004 = vpow.pop %v7003
    %v7005 = vmul.f32 %v7002, 1.442695
    %v7006 = vpow.pop %v7005
    %v7007 = vadd.f32 %v7004, 1.0
    %v7008 = vadd.f32 %v7006, 1.0
    %v7009 = vrcp.pop %v7007
    %v7010 = vmul.f32 1.0, %v7009
    %v7011 = vrcp.pop %v7008
    %v7012 = vmul.f32 1.0, %v7011
    %v7015 = vrot.slane %v6999, 1
    %v7016 = vrot.slane %v7000, 1
    %v7019 = vxor.u32 %v7015, 2147483648
    %v7020 = vxor.u32 %v7016, 2147483648
    %v7021 = vmul.f32 %v7019, 1.442695
    %v7022 = vpow.pop %v7021
    %v7023 = vmul.f32 %v7020, 1.442695
    %v7024 = vpow.pop %v7023
    %v7025 = vadd.f32 %v7022, 1.0
    %v7026 = vadd.f32 %v7024, 1.0
    %v7027 = vrcp.pop %v7025
    %v7028 = vmul.f32 1.0, %v7027
    %v7029 = vrcp.pop %v7026
    %v7030 = vmul.f32 1.0, %v7029
    %v7031 = vrot.slane %v6999, 2
    %v7032 = vrot.slane %v7000, 2
    %v7035 = vtanh.pop %v7031
    %v7036 = vtanh.pop %v7032
    %v7037 = vrot.slane %v6999, 3
    %v7038 = vrot.slane %v7000, 3
    %v7041 = vxor.u32 %v7037, 2147483648
    %v7042 = vxor.u32 %v7038, 2147483648
    %v7043 = vmul.f32 %v7041, 1.442695
    %v7044 = vpow.pop %v7043
    %v7045 = vmul.f32 %v7042, 1.442695
    %v7046 = vpow.pop %v7045
    %v7047 = vadd.f32 %v7044, 1.0
    %v7048 = vadd.f32 %v7046, 1.0
    %v7049 = vrcp.pop %v7047
    %v7050 = vmul.f32 1.0, %v7049
    %v7051 = vrcp.pop %v7048
    %v7052 = vmul.f32 1.0, %v7051
    %v7053 = vmul.f32 %v7028, %v6793
    %v7054 = vmul.f32 %v7030, %v6794
    %v7055 = vmul.f32 %v7010, %v7035
    %v7056 = vmul.f32 %v7012, %v7036
    %v7057 = vadd.f32 %v7053, %v7055
    %v7058 = vadd.f32 %v7054, %v7056
    %v7059 = vtanh.pop %v7057
    %v7060 = vtanh.pop %v7058
    %v7061 = vmul.f32 %v7050, %v7059
    %v7062 = vmul.f32 %v7052, %v7060
    %v7063 = vld [vmem:[%s2222] ss:$8 sm:$0xf]
    %v7064 = vld [vmem:[%s2224] ss:$8 sm:$0xf]
    %v7067 = vcombine.low %v7061, %v7062
    %v7069 = vunpack.c.l.s4 1966171168
    %v7070 = vunpack.c.0.s8 %v7069
    %v7071 = vlaneseq
    %v7072 = vshrl.u32 %v7071, 7
    %v7073 = vsub.s32 %v7070, %v7072
    %v7074 = vrot.slane %v7067, %v7073
    %v7076 = vunpack.c.l.s4 1966171168
    %v7077 = vunpack.c.0.s8 %v7076
    %v7078 = vlaneseq
    %v7079 = vshrl.u32 %v7078, 7
    %v7080 = vsub.s32 %v7077, %v7079
    %v7081 = vrot.slane %v7074, %v7080
    %7083 = vmatprep.subr.mxu0 %v5230
    %7084 = vmatpush1.msra.mxu0 %v5229
    %7085 = vmatprep.subr.mxu0 %v5226
    %7086 = vmatpush1.msra.mxu0 %v5225
    %7087 = vmatprep.subr.mxu0 %v5222
    %7088 = vmatpush1.msra.mxu0 %v5221
    %7089 = vmatprep.subr.mxu0 %v5218
    %7090 = vmatpush1.msra.mxu0 %v5217
    %7091 = vmatprep.subr.mxu0 %v5214
    %7092 = vmatpush1.msra.mxu0 %v5213
    %7093 = vmatprep.subr.mxu0 %v5210
    %7094 = vmatpush1.msra.mxu0 %v5209
    %7095 = vmatprep.subr.mxu0 %v5206
    %7096 = vmatpush1.msra.mxu0 %v5205
    %7097 = vmatprep.subr.mxu0 %v5202
    %7098 = vmatpush1.msra.mxu0 %v5201
    %7099 = vmatprep.subr.mxu0 %v5198
    %7100 = vmatpush1.msra.mxu0 %v5197
    %7101 = vmatprep.subr.mxu0 %v5194
    %7102 = vmatpush1.msra.mxu0 %v5193
    %7103 = vmatprep.subr.mxu0 %v5190
    %7104 = vmatpush1.msra.mxu0 %v5189
    %7105 = vmatprep.subr.mxu0 %v5186
    %7106 = vmatpush1.msra.mxu0 %v5185
    %7107 = vmatprep.subr.mxu0 %v5182
    %7108 = vmatpush1.msra.mxu0 %v5181
    %7109 = vmatprep.subr.mxu0 %v5178
    %7110 = vmatpush1.msra.mxu0 %v5177
    %7111 = vmatprep.subr.mxu0 %v5174
    %7112 = vmatpush1.msra.mxu0 %v5173
    %7113 = vmatprep.subr.mxu0 %v5170
    %7114 = vmatpush1.msra.mxu0 %v5169
    %7115 = vmatprep.subr.mxu0 0.0
    %7116 = vmatpush2.msra.mxu0 0.0
    %7117 = vmatprep.subr.mxu0 0.0
    %7118 = vmatpush2.msra.mxu0 0.0
    %7119 = vmatprep.subr.mxu0 0.0
    %7120 = vmatpush2.msra.mxu0 0.0
    %7121 = vmatprep.subr.mxu0 0.0
    %7122 = vmatpush2.msra.mxu0 0.0
    %7123 = vmatprep.subr.mxu0 0.0
    %7124 = vmatpush2.msra.mxu0 0.0
    %7125 = vmatprep.subr.mxu0 0.0
    %7126 = vmatpush2.msra.mxu0 0.0
    %7127 = vmatprep.subr.mxu0 0.0
    %7128 = vmatpush2.msra.mxu0 0.0
    %7129 = vmatprep.subr.mxu0 0.0
    %7130 = vmatpush2.msra.mxu0 0.0
    %7131 = vmatprep.subr.mxu0 0.0
    %7132 = vmatpush2.msra.mxu0 0.0
    %7133 = vmatprep.subr.mxu0 0.0
    %7134 = vmatpush2.msra.mxu0 0.0
    %7135 = vmatprep.subr.mxu0 0.0
    %7136 = vmatpush2.msra.mxu0 0.0
    %7137 = vmatprep.subr.mxu0 0.0
    %7138 = vmatpush2.msra.mxu0 0.0
    %7139 = vmatprep.subr.mxu0 0.0
    %7140 = vmatpush2.msra.mxu0 0.0
    %7141 = vmatprep.subr.mxu0 0.0
    %7142 = vmatpush2.msra.mxu0 0.0
    %7143 = vmatprep.subr.mxu0 0.0
    %7144 = vmatpush2.msra.mxu0 0.0
    %7145 = vmatprep.subr.mxu0 0.0
    %7146 = vmatpush2.msra.mxu0 0.0
    %7147 = vmatprep.mubr.f32.mxu0 0.0
    %7148 = vmatmul.mubr.f32.gmra.mxu0 %v7081
    %v7149 = vpop.f32.mrf.mxu0
    %v7150 = vadd.f32 0.0, %v7149
    %v7151 = vpop.f32.mrf.mxu0
    %v7152 = vadd.f32 0.0, %v7151
    %7153 = vdwg.mxu0
    %7154 = vmatprep.subr.mxu0 %v5232
    %7155 = vmatpush1.msra.mxu0 %v5231
    %7156 = vmatprep.subr.mxu0 %v5228
    %7157 = vmatpush1.msra.mxu0 %v5227
    %7158 = vmatprep.subr.mxu0 %v5224
    %7159 = vmatpush1.msra.mxu0 %v5223
    %7160 = vmatprep.subr.mxu0 %v5220
    %7161 = vmatpush1.msra.mxu0 %v5219
    %7162 = vmatprep.subr.mxu0 %v5216
    %7163 = vmatpush1.msra.mxu0 %v5215
    %7164 = vmatprep.subr.mxu0 %v5212
    %7165 = vmatpush1.msra.mxu0 %v5211
    %7166 = vmatprep.subr.mxu0 %v5208
    %7167 = vmatpush1.msra.mxu0 %v5207
    %7168 = vmatprep.subr.mxu0 %v5204
    %7169 = vmatpush1.msra.mxu0 %v5203
    %7170 = vmatprep.subr.mxu0 %v5200
    %7171 = vmatpush1.msra.mxu0 %v5199
    %7172 = vmatprep.subr.mxu0 %v5196
    %7173 = vmatpush1.msra.mxu0 %v5195
    %7174 = vmatprep.subr.mxu0 %v5192
    %7175 = vmatpush1.msra.mxu0 %v5191
    %7176 = vmatprep.subr.mxu0 %v5188
    %7177 = vmatpush1.msra.mxu0 %v5187
    %7178 = vmatprep.subr.mxu0 %v5184
    %7179 = vmatpush1.msra.mxu0 %v5183
    %7180 = vmatprep.subr.mxu0 %v5180
    %7181 = vmatpush1.msra.mxu0 %v5179
    %7182 = vmatprep.subr.mxu0 %v5176
    %7183 = vmatpush1.msra.mxu0 %v5175
    %7184 = vmatprep.subr.mxu0 %v5172
    %7185 = vmatpush1.msra.mxu0 %v5171
    %7186 = vmatprep.subr.mxu0 0.0
    %7187 = vmatpush2.msra.mxu0 0.0
    %7188 = vmatprep.subr.mxu0 0.0
    %7189 = vmatpush2.msra.mxu0 0.0
    %7190 = vmatprep.subr.mxu0 0.0
    %7191 = vmatpush2.msra.mxu0 0.0
    %7192 = vmatprep.subr.mxu0 0.0
    %7193 = vmatpush2.msra.mxu0 0.0
    %7194 = vmatprep.subr.mxu0 0.0
    %7195 = vmatpush2.msra.mxu0 0.0
    %7196 = vmatprep.subr.mxu0 0.0
    %7197 = vmatpush2.msra.mxu0 0.0
    %7198 = vmatprep.subr.mxu0 0.0
    %7199 = vmatpush2.msra.mxu0 0.0
    %7200 = vmatprep.subr.mxu0 0.0
    %7201 = vmatpush2.msra.mxu0 0.0
    %7202 = vmatprep.subr.mxu0 0.0
    %7203 = vmatpush2.msra.mxu0 0.0
    %7204 = vmatprep.subr.mxu0 0.0
    %7205 = vmatpush2.msra.mxu0 0.0
    %7206 = vmatprep.subr.mxu0 0.0
    %7207 = vmatpush2.msra.mxu0 0.0
    %7208 = vmatprep.subr.mxu0 0.0
    %7209 = vmatpush2.msra.mxu0 0.0
    %7210 = vmatprep.subr.mxu0 0.0
    %7211 = vmatpush2.msra.mxu0 0.0
    %7212 = vmatprep.subr.mxu0 0.0
    %7213 = vmatpush2.msra.mxu0 0.0
    %7214 = vmatprep.subr.mxu0 0.0
    %7215 = vmatpush2.msra.mxu0 0.0
    %7216 = vmatprep.subr.mxu0 0.0
    %7217 = vmatpush2.msra.mxu0 0.0
    %7218 = vmatprep.mubr.f32.mxu0 0.0
    %7219 = vmatmul.mubr.f32.gmra.mxu0 %v7081
    %v7220 = vpop.f32.mrf.mxu0
    %v7221 = vadd.f32 0.0, %v7220
    %v7222 = vpop.f32.mrf.mxu0
    %v7223 = vadd.f32 0.0, %v7222
    %7224 = vdwg.mxu0
    %v7229 = vcombine.low %v7150, %v7152
    %v7230 = vcombine.low %v7221, %v7223
    %v7232 = vunpack.c.l.s4 1966171168
    %v7233 = vunpack.c.0.s8 %v7232
    %v7234 = vlaneseq
    %v7235 = vshrl.u32 %v7234, 7
    %v7236 = vsub.s32 %v7233, %v7235
    %v7237 = vrot.slane %v7229, %v7236
    %v7239 = vunpack.c.l.s4 1966171168
    %v7240 = vunpack.c.0.s8 %v7239
    %v7241 = vlaneseq
    %v7242 = vshrl.u32 %v7241, 7
    %v7243 = vsub.s32 %v7240, %v7242
    %v7244 = vrot.slane %v7230, %v7243
    %v7245 = vcombine.low %v7237, %v7244
    %v7246 = vcombine.high %v7237, %v7244
    %v7248 = vunpack.c.l.s4 1966171168
    %v7249 = vunpack.c.0.s8 %v7248
    %v7250 = vlaneseq
    %v7251 = vshrl.u32 %v7250, 7
    %v7252 = vsub.s32 %v7249, %v7251
    %v7253 = vrot.slane %v7245, %v7252
    %v7255 = vunpack.c.l.s4 1966171168
    %v7256 = vunpack.c.0.s8 %v7255
    %v7257 = vlaneseq
    %v7258 = vshrl.u32 %v7257, 7
    %v7259 = vsub.s32 %v7256, %v7258
    %v7260 = vrot.slane %v7246, %v7259
    %v7263 = vadd.f32 %v7063, %v7253
    %v7264 = vadd.f32 %v7064, %v7260
    %v7265 = vxor.u32 %v7263, 2147483648
    %v7266 = vxor.u32 %v7264, 2147483648
    %v7267 = vmul.f32 %v7265, 1.442695
    %v7268 = vpow.pop %v7267
    %v7269 = vmul.f32 %v7266, 1.442695
    %v7270 = vpow.pop %v7269
    %v7271 = vadd.f32 %v7268, 1.0
    %v7272 = vadd.f32 %v7270, 1.0
    %v7273 = vrcp.pop %v7271
    %v7274 = vmul.f32 1.0, %v7273
    %v7275 = vrcp.pop %v7272
    %v7276 = vmul.f32 1.0, %v7275
    %v7279 = vrot.slane %v7263, 1
    %v7280 = vrot.slane %v7264, 1
    %v7283 = vxor.u32 %v7279, 2147483648
    %v7284 = vxor.u32 %v7280, 2147483648
    %v7285 = vmul.f32 %v7283, 1.442695
    %v7286 = vpow.pop %v7285
    %v7287 = vmul.f32 %v7284, 1.442695
    %v7288 = vpow.pop %v7287
    %v7289 = vadd.f32 %v7286, 1.0
    %v7290 = vadd.f32 %v7288, 1.0
    %v7291 = vrcp.pop %v7289
    %v7292 = vmul.f32 1.0, %v7291
    %v7293 = vrcp.pop %v7290
    %v7294 = vmul.f32 1.0, %v7293
    %v7295 = vrot.slane %v7263, 2
    %v7296 = vrot.slane %v7264, 2
    %v7299 = vtanh.pop %v7295
    %v7300 = vtanh.pop %v7296
    %v7301 = vrot.slane %v7263, 3
    %v7302 = vrot.slane %v7264, 3
    %v7305 = vxor.u32 %v7301, 2147483648
    %v7306 = vxor.u32 %v7302, 2147483648
    %v7307 = vmul.f32 %v7305, 1.442695
    %v7308 = vpow.pop %v7307
    %v7309 = vmul.f32 %v7306, 1.442695
    %v7310 = vpow.pop %v7309
    %v7311 = vadd.f32 %v7308, 1.0
    %v7312 = vadd.f32 %v7310, 1.0
    %v7313 = vrcp.pop %v7311
    %v7314 = vmul.f32 1.0, %v7313
    %v7315 = vrcp.pop %v7312
    %v7316 = vmul.f32 1.0, %v7315
    %v7317 = vmul.f32 %v7292, %v7057
    %v7318 = vmul.f32 %v7294, %v7058
    %v7319 = vmul.f32 %v7274, %v7299
    %v7320 = vmul.f32 %v7276, %v7300
    %v7321 = vadd.f32 %v7317, %v7319
    %v7322 = vadd.f32 %v7318, %v7320
    %v7323 = vtanh.pop %v7321
    %v7324 = vtanh.pop %v7322
    %v7325 = vmul.f32 %v7314, %v7323
    %v7326 = vmul.f32 %v7316, %v7324
    %v7329 = vcombine.low %v7325, %v7326
    %v7331 = vunpack.c.l.s4 1966171168
    %v7332 = vunpack.c.0.s8 %v7331
    %v7333 = vlaneseq
    %v7334 = vshrl.u32 %v7333, 7
    %v7335 = vsub.s32 %v7332, %v7334
    %v7336 = vrot.slane %v7329, %v7335
    %v7338 = vunpack.c.l.s4 1966171168
    %v7339 = vunpack.c.0.s8 %v7338
    %v7340 = vlaneseq
    %v7341 = vshrl.u32 %v7340, 7
    %v7342 = vsub.s32 %v7339, %v7341
    %v7343 = vrot.slane %v7336, %v7342
    %vm7345 = vcmask 181248
    %7346 = vst.msk [vmem:[#allocation4] sm:$0x3] %vm7345, %v7343
    // Predicated region
    $region22: #{lstm_forward.1} parent=1 // pred_check
      _
    $region23: #{lstm_forward.1} parent=1 // pred_check_branch
      %7348 = sbr.rel (0) target = $region25
    $region24: #{lstm_forward.1} parent=1 // pred_region
      %s7350 = ssub.s32 32, 32
      %7351 = vsyncadd [#allocation5], %s7350
      %s7353 = sshll.u32 [#allocation4], 4
      %s7354 = int_to_ptr.vmem [resolvable:$true] %s7353
      %7356 = dma.vmem_to_hbm [thread:$0]  %s7354, 32, %s5, [#allocation5]
    $region25: #{lstm_forward.1} parent=1 // pred_fallthru
      _
    // Predicated region
    $region26: #{lstm_forward.1} parent=1 // pred_check
      _
    $region27: #{lstm_forward.1} parent=1 // pred_check_branch
      %7358 = sbr.rel (0) target = $region29
    $region28: #{lstm_forward.1} parent=1 // pred_region
      %7359 = dma.done [#allocation5], 32
    $region29: #{lstm_forward.1} parent=1 // pred_fallthru
      _
    %7360 = vsyncpa [#allocation5], 1

</llo_original>
